<compile_context>
chip_gen: v7x
topology: tpu7x:2x2x1
jax: 0.10.0
libtpu: 0.0.40
codegen_flags: <defaults>
</compile_context>

<pallas_src>
import jax
import jax.numpy as jnp
from jax.experimental import pallas as pl
from jax.experimental.pallas import tpu as pltpu

K = 16            # knn neighbours (hardwired in SkipFoldingNetEncoder)
FEAT_DIMS = 32    # feat_dims used for this synthetic run
M_FOLD = 2048     # decoder folding-grid size = 32 x 64 plane (hardwired in module)
GRID_Y_N = 64
GX_MIN, GX_STEP = -0.3, 0.6 / 31.0    # np.linspace(-0.3, 0.3, 32)
GY_MIN, GY_STEP = -0.6, 1.2 / 63.0    # np.linspace(-0.6, 0.6, 64)


# ------------------------------ knn (plain XLA) ------------------------------

def knn_indices(pts, k):
    """pts: (B, N, 3) -> (B, N, K) int32 neighbour indices (largest -||xi-xj||^2 first)."""
    inner = jnp.einsum('bnd,bmd->bnm', pts, pts)
    xx = jnp.sum(pts * pts, axis=-1)
    neg_sqdist = 2.0 * inner - xx[:, :, None] - xx[:, None, :]
    # TODO(synk): top_k (sorting) has no clean Pallas TPU equivalent; kept in XLA, which
    # also lets XLA fuse the tiny pairwise-distance computation straight into it.
    _, idx = jax.lax.top_k(neg_sqdist, k)
    return idx


# ----------------------- kernel 1: fully fused encoder -----------------------
# One grid step per batch element. All intermediates (one-hot selectors, local_cov, mlp1,
# both graph_layer gather+max stages, conv2's (N, 1024) features, the global max-pool)
# stay in VMEM; the only HBM write is the (1, feat_dims) code.
#
# Packed-weight row layout (built by _encoder_weights):
#   wa (208,  64) f32 : w1a[0:12] w1b[12:76] w1c[76:140] wl1[140:204] b1a[204] b1b[205] b1c[206] bl1[207]
#   wb (194, 128) f32 : wv1[0:64] wl2[64:192] bv1[192] bl2[193]
#   wc (129,1024) bf16: wv2[0:128] bv2[128]
#   wd (1090+F, F) f32: w2a[0:1088] (=[lf1 rows 0:64 | lf2 rows 64:1088]) w2b[1088:1088+F] b2a[1088+F] b2b[1089+F]

def _encoder_kernel(pts_ref, idx_ref, wa_ref, wb_ref, wc_ref, wd_ref, out_ref):
    pts = pts_ref[0]                                    # (N, 3) f32
    idx = idx_ref[0]                                    # (N, K) int32, values in [0, N)
    n = pts.shape[0]
    f = wd_ref.shape[1]

    # One-hot neighbour selectors, built once and reused by every gather:
    # sel_all[k*N + i, j] = (idx[i, k] == j).
    col = jax.lax.broadcasted_iota(jnp.int32, (n, n), 1)
    sel_all = jnp.concatenate(
        [(idx[:, k:k + 1] == col).astype(jnp.float32) for k in range(K)], axis=0)  # (K*N, N)

    def gather_max(x):
        # local_maxpool: one (K*N, N) @ (N, C) MXU matmul, then a K-way elementwise max.
        g = jnp.dot(sel_all, x, preferred_element_type=jnp.float32)                # (K*N, C)
        m = g[0:n]
        for k in range(1, K):
            m = jnp.maximum(m, g[k * n:(k + 1) * n])
        return m

    # local_cov fused into mlp1 layer 1 (no lane concat): with cov9[3i+j] = nbr0_i * nbr1_j,
    #   [pts | cov9] @ W1 = pts @ Wp + sum_i nbr0_i * (nbr1 @ Wc_i)
    nbr01 = jnp.dot(sel_all[0:2 * n], pts, preferred_element_type=jnp.float32)     # (2N, 3)
    nbr0 = nbr01[0:n]      # neighbour 0 (self, for distinct points)
    nbr1 = nbr01[n:2 * n]  # nearest other point

    h = jnp.dot(pts, wa_ref[0:3], preferred_element_type=jnp.float32) + wa_ref[204:205]
    h = h + nbr0[:, 0:1] * jnp.dot(nbr1, wa_ref[3:6], preferred_element_type=jnp.float32)
    h = h + nbr0[:, 1:2] * jnp.dot(nbr1, wa_ref[6:9], preferred_element_type=jnp.float32)
    h = h + nbr0[:, 2:3] * jnp.dot(nbr1, wa_ref[9:12], preferred_element_type=jnp.float32)
    h = jnp.maximum(h, 0.0)
    h = jnp.maximum(jnp.dot(h, wa_ref[12:76], preferred_element_type=jnp.float32)
                    + wa_ref[205:206], 0.0)
    lf1 = jnp.maximum(jnp.dot(h, wa_ref[76:140], preferred_element_type=jnp.float32)
                      + wa_ref[206:207], 0.0)                                       # (N, 64)

    # graph_layer: maxpool -> linear1 -> conv1+relu -> maxpool -> linear2 -> conv2
    g = gather_max(lf1)                                                             # (N, 64)
    h = jnp.dot(g, wa_ref[140:204], preferred_element_type=jnp.float32) + wa_ref[207:208]
    h = jnp.maximum(jnp.dot(h, wb_ref[0:64], preferred_element_type=jnp.float32)
                    + wb_ref[192:193], 0.0)                                         # conv1
    g = gather_max(h)                                                               # (N, 128)
    h = jnp.dot(g, wb_ref[64:192], preferred_element_type=jnp.float32) + wb_ref[193:194]
    lf2 = (jnp.dot(h.astype(jnp.bfloat16), wc_ref[0:128],
                   preferred_element_type=jnp.float32)
           + wc_ref[128:129].astype(jnp.float32))                                   # conv2 (N, 1024)

    # global max-pool over points + mlp2 (the torch cat([lf1, lf2]) is folded into split rows)
    g1 = jnp.max(lf1, axis=0, keepdims=True)                                        # (1, 64)
    g2 = jnp.max(lf2, axis=0, keepdims=True)                                        # (1, 1024)
    h = (jnp.dot(g1, wd_ref[0:64], preferred_element_type=jnp.float32) +
         jnp.dot(g2, wd_ref[64:1088], preferred_element_type=jnp.float32) +
         wd_ref[1088 + f:1089 + f])
    h = jnp.maximum(h, 0.0)
    out_ref[0] = (jnp.dot(h, wd_ref[1088:1088 + f], preferred_element_type=jnp.float32)
                  + wd_ref[1089 + f:1090 + f])                                      # (1, F)


def _encoder_weights(params):
    (w1a, b1a), (w1b, b1b), (w1c, b1c) = params['mlp1']
    (wl1, bl1), = params['linear1']
    (wv1, bv1), = params['conv1']
    (wl2, bl2), = params['linear2']
    (wv2, bv2), = params['conv2']
    (w2a, b2a), (w2b, b2b) = params['mlp2']
    row = lambda v: v.reshape(1, -1)
    pack_a = jnp.concatenate([w1a, w1b, w1c, wl1,
                              row(b1a), row(b1b), row(b1c), row(bl1)], axis=0)      # (208, 64)
    pack_b = jnp.concatenate([wv1, wl2, row(bv1), row(bl2)], axis=0)                # (194, 128)
    pack_c = jnp.concatenate([wv2, row(bv2)], axis=0).astype(jnp.bfloat16)          # (129, 1024)
    pack_d = jnp.concatenate([w2a, w2b, row(b2a), row(b2b)], axis=0)                # (1090+F, F)
    return pack_a, pack_b, pack_c, pack_d


def run_encoder(pts, idx, packs, feat_dims):
    B, N, _ = pts.shape
    in_specs = [pl.BlockSpec((1, N, 3), lambda b: (b, 0, 0)),
                pl.BlockSpec((1, N, K), lambda b: (b, 0, 0))]
    in_specs += [pl.BlockSpec(p.shape, lambda b: (0, 0)) for p in packs]
    return pl.pallas_call(
        _encoder_kernel,
        out_shape=jax.ShapeDtypeStruct((B, 1, feat_dims), jnp.float32),
        grid=(B,),
        in_specs=in_specs,
        out_specs=pl.BlockSpec((1, 1, feat_dims), lambda b: (b, 0, 0)),
        compiler_params=pltpu.CompilerParams(dimension_semantics=("parallel",)),
    )(pts, idx, *packs)


# ----------------------- kernel 2: fully fused decoder -----------------------
# Channel-major: activations are (F, M_FOLD) with the 2048 folded points on lanes, so
# every layer is W^T @ h with a lane-dense output, and the two results are written as
# (B, 3, M_FOLD) with unmasked lane-dense stores. Grid / feature-repeat are generated
# in-kernel; nothing but the two (3, M) results is written back.
#
# Packed-weight column layout (built by _decoder_weights), all transposed to (out, in):
#   we (F, 4F+9): w1f[0:F] wgx[F] wgy[F+1] b1a[F+2] w1b[F+3:2F+3] b1b[2F+3]
#                 w2f[2F+4:3F+4] w2p[3F+4:3F+7] b2a[3F+7] w2b[3F+8:4F+8] b2b[4F+8]
#   w3 (3, 2F+2): w1c[0:F] b1c[F] w2c[F+1:2F+1] b2c[2F+1]

def _decoder_kernel(feat_ref, we_ref, w3_ref, f2_ref, f1_ref):
    f = feat_ref.shape[1]
    m = f1_ref.shape[2]
    fv = feat_ref[0]                                            # (F, 1) f32

    # 32 x 64 plane grid, row-major over itertools.product(x, y):
    #   point p -> (x[p // 64], y[p % 64]); exact f32 arithmetic (all values are small ints).
    p = jax.lax.broadcasted_iota(jnp.int32, (1, m), 1).astype(jnp.float32)
    gxi = jnp.floor(p * (1.0 / GRID_Y_N))
    gyi = p - gxi * GRID_Y_N
    gx = GX_MIN + gxi * GX_STEP                                 # (1, M)
    gy = GY_MIN + gyi * GY_STEP                                 # (1, M)

    # folding1: cat([feat_rep, grid]) folded into split weights (feat part is a column broadcast)
    hf = jnp.dot(we_ref[:, 0:f], fv, preferred_element_type=jnp.float32) + we_ref[:, f + 2:f + 3]
    h = jnp.maximum(hf + we_ref[:, f:f + 1] * gx + we_ref[:, f + 1:f + 2] * gy, 0.0)   # (F, M)
    h = jnp.maximum(jnp.dot(we_ref[:, f + 3:2 * f + 3], h, preferred_element_type=jnp.float32)
                    + we_ref[:, 2 * f + 3:2 * f + 4], 0.0)
    fold1 = (jnp.dot(w3_ref[:, 0:f], h, preferred_element_type=jnp.float32)
             + w3_ref[:, f:f + 1])                                                      # (3, M)
    f1_ref[0] = fold1

    # folding2: cat([feat_rep, fold1]) folded the same way
    hf = (jnp.dot(we_ref[:, 2 * f + 4:3 * f + 4], fv, preferred_element_type=jnp.float32)
          + we_ref[:, 3 * f + 7:3 * f + 8])
    h = jnp.maximum(hf + jnp.dot(we_ref[:, 3 * f + 4:3 * f + 7], fold1,
                                 preferred_element_type=jnp.float32), 0.0)              # (F, M)
    h = jnp.maximum(jnp.dot(we_ref[:, 3 * f + 8:4 * f + 8], h, preferred_element_type=jnp.float32)
                    + we_ref[:, 4 * f + 8:4 * f + 9], 0.0)
    f2_ref[0] = (jnp.dot(w3_ref[:, f + 1:2 * f + 1], h, preferred_element_type=jnp.float32)
                 + w3_ref[:, 2 * f + 1:2 * f + 2])                                      # (3, M)


def _decoder_weights(params, feat_dims):
    (wa, ba), (wb, bb), (wc, bc) = params['folding1']
    (wd, bd), (we, be), (wf, bf) = params['folding2']
    F = feat_dims
    col = lambda v: v.reshape(-1, 1)
    pack_e = jnp.concatenate([
        wa[:F].T, wa[F:F + 1].T, wa[F + 1:F + 2].T, col(ba),   # folding1 layer1 (feat/gx/gy split)
        wb.T, col(bb),                                         # folding1 layer2
        wd[:F].T, wd[F:].T, col(bd),                           # folding2 layer1 (feat/fold1 split)
        we.T, col(be)], axis=1)                                # folding2 layer2 -> (F, 4F+9)
    pack_3 = jnp.concatenate([wc.T, col(bc), wf.T, col(bf)], axis=1)   # (3, 2F+2)
    return pack_e, pack_3


def run_decoder(feat, packs):
    B, _, F = feat.shape
    feat_col = jnp.transpose(feat, (0, 2, 1))                  # (B, F, 1)
    pack_e, pack_3 = packs
    out_spec = pl.BlockSpec((1, 3, M_FOLD), lambda b: (b, 0, 0))
    f2_cm, f1_cm = pl.pallas_call(
        _decoder_kernel,
        out_shape=(jax.ShapeDtypeStruct((B, 3, M_FOLD), jnp.float32),
                   jax.ShapeDtypeStruct((B, 3, M_FOLD), jnp.float32)),
        grid=(B,),
        in_specs=[pl.BlockSpec((1, F, 1), lambda b: (b, 0, 0)),
                  pl.BlockSpec(pack_e.shape, lambda b: (0, 0)),
                  pl.BlockSpec(pack_3.shape, lambda b: (0, 0))],
        out_specs=(out_spec, out_spec),
        compiler_params=pltpu.CompilerParams(dimension_semantics=("parallel",)),
    )(feat_col, pack_e, pack_3)
    # Kernel writes lane-dense (B, 3, M); module-semantics (B, M, 3) via a cheap XLA transpose.
    return jnp.transpose(f2_cm, (0, 2, 1)), jnp.transpose(f1_cm, (0, 2, 1))


# ------------------------------- forward pass -------------------------------

def skip_foldingnet_forward(pts, params):
    """pts: (B, N, 3) f32 -> (folding2 (B,2048,3), folding1 (B,2048,3), feature (B,1,F))."""
    F = FEAT_DIMS
    idx = knn_indices(pts, K)                                              # (B, N, K) XLA
    feat = run_encoder(pts, idx, _encoder_weights(params), F)              # (B, 1, F)
    folding2, folding1 = run_decoder(feat, _decoder_weights(params, F))    # (B, M, 3) x2
    return folding2, folding1, feat


# --------------------------- deterministic params ---------------------------

def _init_affine(key, cin, cout):
    kw, kb = jax.random.split(key)
    s = 1.0 / jnp.sqrt(jnp.float32(cin))
    W = jax.random.uniform(kw, (cin, cout), jnp.float32, -s, s)
    b = jax.random.uniform(kb, (cout,), jnp.float32, -s, s)
    return W, b


def init_params(key, feat_dims):
    keys = iter(jax.random.split(key, 32))
    p = {}
    p['mlp1'] = [_init_affine(next(keys), 12, 64),
                 _init_affine(next(keys), 64, 64),
                 _init_affine(next(keys), 64, 64)]
    p['linear1'] = [_init_affine(next(keys), 64, 64)]
    p['conv1'] = [_init_affine(next(keys), 64, 128)]
    p['linear2'] = [_init_affine(next(keys), 128, 128)]
    p['conv2'] = [_init_affine(next(keys), 128, 1024)]
    p['mlp2'] = [_init_affine(next(keys), 1024 + 64, feat_dims),
                 _init_affine(next(keys), feat_dims, feat_dims)]
    p['folding1'] = [_init_affine(next(keys), feat_dims + 2, feat_dims),
                     _init_affine(next(keys), feat_dims, feat_dims),
                     _init_affine(next(keys), feat_dims, 3)]
    p['folding2'] = [_init_affine(next(keys), feat_dims + 3, feat_dims),
                     _init_affine(next(keys), feat_dims, feat_dims),
                     _init_affine(next(keys), feat_dims, 3)]
    return p


if __name__ == "__main__":
    B, N = 2, 64
    key = jax.random.PRNGKey(0)
    k_in, k_par = jax.random.split(key)
    pts = jax.random.normal(k_in, (B, N, 3), jnp.float32)   # module input: (B, n_points, 3)
    params = init_params(k_par, FEAT_DIMS)

    fwd = jax.jit(skip_foldingnet_forward)
    folding2, folding1, feature = fwd(pts, params)
    jax.block_until_ready((folding2, folding1, feature))

    assert folding2.shape == (B, M_FOLD, 3)
    assert folding1.shape == (B, M_FOLD, 3)
    assert feature.shape == (B, 1, FEAT_DIMS)
    assert jnp.all(jnp.isfinite(folding2))
    assert jnp.all(jnp.isfinite(folding1))
    assert jnp.all(jnp.isfinite(feature))
    print("KERNEL_OK")
</pallas_src>

<mosaic_0001>
module attributes {stable_mosaic.version = 11 : i64} {
  func.func @_encoder_kernel(%arg0: i32, %arg1: memref<1x64x3xf32, #tpu.memory_space<vmem>>, %arg2: memref<1x64x16xi32, #tpu.memory_space<vmem>>, %arg3: memref<208x64xf32, #tpu.memory_space<vmem>>, %arg4: memref<194x128xf32, #tpu.memory_space<vmem>>, %arg5: memref<129x1024xbf16, #tpu.memory_space<vmem>>, %arg6: memref<1122x32xf32, #tpu.memory_space<vmem>>, %arg7: memref<1x1x32xf32, #tpu.memory_space<vmem>>) attributes {dimension_semantics = [#tpu.dimension_semantics<parallel>], iteration_bounds = array<i64: 2>, scalar_prefetch = 0 : i64, scratch_operands = 0 : i64, tpu.core_type = #tpu.core_type<tc>, window_params = [{transform_indices = @transform_0, window_bounds = array<i64: 1, 64, 3>}, {transform_indices = @transform_1, window_bounds = array<i64: 1, 64, 16>}, {pipeline_mode = #tpu.pipeline_mode<synchronous>, transform_indices = @transform_2, window_bounds = array<i64: 208, 64>}, {pipeline_mode = #tpu.pipeline_mode<synchronous>, transform_indices = @transform_3, window_bounds = array<i64: 194, 128>}, {pipeline_mode = #tpu.pipeline_mode<synchronous>, transform_indices = @transform_4, window_bounds = array<i64: 129, 1024>}, {pipeline_mode = #tpu.pipeline_mode<synchronous>, transform_indices = @transform_5, window_bounds = array<i64: 1122, 32>}, {transform_indices = @transform_6, window_bounds = array<i64: 1, 1, 32>}]} {
    %c0 = arith.constant 0 : index
    %c0_0 = arith.constant 0 : index
    %c0_1 = arith.constant 0 : index
    %0 = vector.load %arg1[%c0, %c0_0, %c0_1] : memref<1x64x3xf32, #tpu.memory_space<vmem>>, vector<1x64x3xf32>
    %1 = vector.shape_cast %0 : vector<1x64x3xf32> to vector<64x3xf32>
    %c0_2 = arith.constant 0 : index
    %c0_3 = arith.constant 0 : index
    %c0_4 = arith.constant 0 : index
    %2 = vector.load %arg2[%c0_2, %c0_3, %c0_4] : memref<1x64x16xi32, #tpu.memory_space<vmem>>, vector<1x64x16xi32>
    %3 = vector.shape_cast %2 : vector<1x64x16xi32> to vector<64x16xi32>
    %4 = tpu.iota {dimensions = array<i32: 1>} : vector<64x64xi32>
    %5 = vector.extract_strided_slice %3 {offsets = [0, 0], sizes = [64, 1], strides = [1, 1]} : vector<64x16xi32> to vector<64x1xi32>
    %6 = vector.broadcast %5 : vector<64x1xi32> to vector<64x64xi32>
    %7 = arith.cmpi eq, %6, %4 : vector<64x64xi32>
    %8 = arith.extui %7 : vector<64x64xi1> to vector<64x64xi32>
    %9 = arith.sitofp %8 : vector<64x64xi32> to vector<64x64xf32>
    %10 = vector.extract_strided_slice %3 {offsets = [0, 1], sizes = [64, 1], strides = [1, 1]} : vector<64x16xi32> to vector<64x1xi32>
    %11 = vector.broadcast %10 : vector<64x1xi32> to vector<64x64xi32>
    %12 = arith.cmpi eq, %11, %4 : vector<64x64xi32>
    %13 = arith.extui %12 : vector<64x64xi1> to vector<64x64xi32>
    %14 = arith.sitofp %13 : vector<64x64xi32> to vector<64x64xf32>
    %15 = vector.extract_strided_slice %3 {offsets = [0, 2], sizes = [64, 1], strides = [1, 1]} : vector<64x16xi32> to vector<64x1xi32>
    %16 = vector.broadcast %15 : vector<64x1xi32> to vector<64x64xi32>
    %17 = arith.cmpi eq, %16, %4 : vector<64x64xi32>
    %18 = arith.extui %17 : vector<64x64xi1> to vector<64x64xi32>
    %19 = arith.sitofp %18 : vector<64x64xi32> to vector<64x64xf32>
    %20 = vector.extract_strided_slice %3 {offsets = [0, 3], sizes = [64, 1], strides = [1, 1]} : vector<64x16xi32> to vector<64x1xi32>
    %21 = vector.broadcast %20 : vector<64x1xi32> to vector<64x64xi32>
    %22 = arith.cmpi eq, %21, %4 : vector<64x64xi32>
    %23 = arith.extui %22 : vector<64x64xi1> to vector<64x64xi32>
    %24 = arith.sitofp %23 : vector<64x64xi32> to vector<64x64xf32>
    %25 = vector.extract_strided_slice %3 {offsets = [0, 4], sizes = [64, 1], strides = [1, 1]} : vector<64x16xi32> to vector<64x1xi32>
    %26 = vector.broadcast %25 : vector<64x1xi32> to vector<64x64xi32>
    %27 = arith.cmpi eq, %26, %4 : vector<64x64xi32>
    %28 = arith.extui %27 : vector<64x64xi1> to vector<64x64xi32>
    %29 = arith.sitofp %28 : vector<64x64xi32> to vector<64x64xf32>
    %30 = vector.extract_strided_slice %3 {offsets = [0, 5], sizes = [64, 1], strides = [1, 1]} : vector<64x16xi32> to vector<64x1xi32>
    %31 = vector.broadcast %30 : vector<64x1xi32> to vector<64x64xi32>
    %32 = arith.cmpi eq, %31, %4 : vector<64x64xi32>
    %33 = arith.extui %32 : vector<64x64xi1> to vector<64x64xi32>
    %34 = arith.sitofp %33 : vector<64x64xi32> to vector<64x64xf32>
    %35 = vector.extract_strided_slice %3 {offsets = [0, 6], sizes = [64, 1], strides = [1, 1]} : vector<64x16xi32> to vector<64x1xi32>
    %36 = vector.broadcast %35 : vector<64x1xi32> to vector<64x64xi32>
    %37 = arith.cmpi eq, %36, %4 : vector<64x64xi32>
    %38 = arith.extui %37 : vector<64x64xi1> to vector<64x64xi32>
    %39 = arith.sitofp %38 : vector<64x64xi32> to vector<64x64xf32>
    %40 = vector.extract_strided_slice %3 {offsets = [0, 7], sizes = [64, 1], strides = [1, 1]} : vector<64x16xi32> to vector<64x1xi32>
    %41 = vector.broadcast %40 : vector<64x1xi32> to vector<64x64xi32>
    %42 = arith.cmpi eq, %41, %4 : vector<64x64xi32>
    %43 = arith.extui %42 : vector<64x64xi1> to vector<64x64xi32>
    %44 = arith.sitofp %43 : vector<64x64xi32> to vector<64x64xf32>
    %45 = vector.extract_strided_slice %3 {offsets = [0, 8], sizes = [64, 1], strides = [1, 1]} : vector<64x16xi32> to vector<64x1xi32>
    %46 = vector.broadcast %45 : vector<64x1xi32> to vector<64x64xi32>
    %47 = arith.cmpi eq, %46, %4 : vector<64x64xi32>
    %48 = arith.extui %47 : vector<64x64xi1> to vector<64x64xi32>
    %49 = arith.sitofp %48 : vector<64x64xi32> to vector<64x64xf32>
    %50 = vector.extract_strided_slice %3 {offsets = [0, 9], sizes = [64, 1], strides = [1, 1]} : vector<64x16xi32> to vector<64x1xi32>
    %51 = vector.broadcast %50 : vector<64x1xi32> to vector<64x64xi32>
    %52 = arith.cmpi eq, %51, %4 : vector<64x64xi32>
    %53 = arith.extui %52 : vector<64x64xi1> to vector<64x64xi32>
    %54 = arith.sitofp %53 : vector<64x64xi32> to vector<64x64xf32>
    %55 = vector.extract_strided_slice %3 {offsets = [0, 10], sizes = [64, 1], strides = [1, 1]} : vector<64x16xi32> to vector<64x1xi32>
    %56 = vector.broadcast %55 : vector<64x1xi32> to vector<64x64xi32>
    %57 = arith.cmpi eq, %56, %4 : vector<64x64xi32>
    %58 = arith.extui %57 : vector<64x64xi1> to vector<64x64xi32>
    %59 = arith.sitofp %58 : vector<64x64xi32> to vector<64x64xf32>
    %60 = vector.extract_strided_slice %3 {offsets = [0, 11], sizes = [64, 1], strides = [1, 1]} : vector<64x16xi32> to vector<64x1xi32>
    %61 = vector.broadcast %60 : vector<64x1xi32> to vector<64x64xi32>
    %62 = arith.cmpi eq, %61, %4 : vector<64x64xi32>
    %63 = arith.extui %62 : vector<64x64xi1> to vector<64x64xi32>
    %64 = arith.sitofp %63 : vector<64x64xi32> to vector<64x64xf32>
    %65 = vector.extract_strided_slice %3 {offsets = [0, 12], sizes = [64, 1], strides = [1, 1]} : vector<64x16xi32> to vector<64x1xi32>
    %66 = vector.broadcast %65 : vector<64x1xi32> to vector<64x64xi32>
    %67 = arith.cmpi eq, %66, %4 : vector<64x64xi32>
    %68 = arith.extui %67 : vector<64x64xi1> to vector<64x64xi32>
    %69 = arith.sitofp %68 : vector<64x64xi32> to vector<64x64xf32>
    %70 = vector.extract_strided_slice %3 {offsets = [0, 13], sizes = [64, 1], strides = [1, 1]} : vector<64x16xi32> to vector<64x1xi32>
    %71 = vector.broadcast %70 : vector<64x1xi32> to vector<64x64xi32>
    %72 = arith.cmpi eq, %71, %4 : vector<64x64xi32>
    %73 = arith.extui %72 : vector<64x64xi1> to vector<64x64xi32>
    %74 = arith.sitofp %73 : vector<64x64xi32> to vector<64x64xf32>
    %75 = vector.extract_strided_slice %3 {offsets = [0, 14], sizes = [64, 1], strides = [1, 1]} : vector<64x16xi32> to vector<64x1xi32>
    %76 = vector.broadcast %75 : vector<64x1xi32> to vector<64x64xi32>
    %77 = arith.cmpi eq, %76, %4 : vector<64x64xi32>
    %78 = arith.extui %77 : vector<64x64xi1> to vector<64x64xi32>
    %79 = arith.sitofp %78 : vector<64x64xi32> to vector<64x64xf32>
    %80 = vector.extract_strided_slice %3 {offsets = [0, 15], sizes = [64, 1], strides = [1, 1]} : vector<64x16xi32> to vector<64x1xi32>
    %81 = vector.broadcast %80 : vector<64x1xi32> to vector<64x64xi32>
    %82 = arith.cmpi eq, %81, %4 : vector<64x64xi32>
    %83 = arith.extui %82 : vector<64x64xi1> to vector<64x64xi32>
    %84 = arith.sitofp %83 : vector<64x64xi32> to vector<64x64xf32>
    %85 = tpu.concatenate %9, %14, %19, %24, %29, %34, %39, %44, %49, %54, %59, %64, %69, %74, %79, %84 in 0 : vector<64x64xf32>, vector<64x64xf32>, vector<64x64xf32>, vector<64x64xf32>, vector<64x64xf32>, vector<64x64xf32>, vector<64x64xf32>, vector<64x64xf32>, vector<64x64xf32>, vector<64x64xf32>, vector<64x64xf32>, vector<64x64xf32>, vector<64x64xf32>, vector<64x64xf32>, vector<64x64xf32>, vector<64x64xf32> -> vector<1024x64xf32>
    %86 = vector.extract_strided_slice %85 {offsets = [0, 0], sizes = [128, 64], strides = [1, 1]} : vector<1024x64xf32> to vector<128x64xf32>
    %cst = arith.constant dense<0.000000e+00> : vector<128x3xf32>
    %87 = tpu.matmul %86, %1, %cst {dimension_numbers = #tpu.dot_dimension_numbers<[1], [0], [0], [1], [0, 0, 1, 1], [], []>} : vector<128x64xf32>, vector<64x3xf32>, vector<128x3xf32> -> vector<128x3xf32>
    %88 = vector.extract_strided_slice %87 {offsets = [0, 0], sizes = [64, 3], strides = [1, 1]} : vector<128x3xf32> to vector<64x3xf32>
    %89 = vector.extract_strided_slice %87 {offsets = [64, 0], sizes = [64, 3], strides = [1, 1]} : vector<128x3xf32> to vector<64x3xf32>
    %c0_5 = arith.constant 0 : index
    %c0_6 = arith.constant 0 : index
    %90 = vector.load %arg3[%c0_5, %c0_6] : memref<208x64xf32, #tpu.memory_space<vmem>>, vector<3x64xf32>
    %cst_7 = arith.constant dense<0.000000e+00> : vector<64x64xf32>
    %91 = tpu.matmul %1, %90, %cst_7 {dimension_numbers = #tpu.dot_dimension_numbers<[1], [0], [0], [1], [0, 0, 1, 1], [], []>} : vector<64x3xf32>, vector<3x64xf32>, vector<64x64xf32> -> vector<64x64xf32>
    %c204 = arith.constant 204 : index
    %c0_8 = arith.constant 0 : index
    %92 = vector.load %arg3[%c204, %c0_8] : memref<208x64xf32, #tpu.memory_space<vmem>>, vector<1x64xf32>
    %93 = vector.broadcast %92 : vector<1x64xf32> to vector<64x64xf32>
    %94 = arith.addf %91, %93 : vector<64x64xf32>
    %95 = vector.extract_strided_slice %88 {offsets = [0, 0], sizes = [64, 1], strides = [1, 1]} : vector<64x3xf32> to vector<64x1xf32>
    %c3 = arith.constant 3 : index
    %c0_9 = arith.constant 0 : index
    %96 = vector.load %arg3[%c3, %c0_9] : memref<208x64xf32, #tpu.memory_space<vmem>>, vector<3x64xf32>
    %cst_10 = arith.constant dense<0.000000e+00> : vector<64x64xf32>
    %97 = tpu.matmul %89, %96, %cst_10 {dimension_numbers = #tpu.dot_dimension_numbers<[1], [0], [0], [1], [0, 0, 1, 1], [], []>} : vector<64x3xf32>, vector<3x64xf32>, vector<64x64xf32> -> vector<64x64xf32>
    %98 = vector.broadcast %95 : vector<64x1xf32> to vector<64x64xf32>
    %99 = arith.mulf %98, %97 : vector<64x64xf32>
    %100 = arith.addf %94, %99 : vector<64x64xf32>
    %101 = vector.extract_strided_slice %88 {offsets = [0, 1], sizes = [64, 1], strides = [1, 1]} : vector<64x3xf32> to vector<64x1xf32>
    %c6 = arith.constant 6 : index
    %c0_11 = arith.constant 0 : index
    %102 = vector.load %arg3[%c6, %c0_11] : memref<208x64xf32, #tpu.memory_space<vmem>>, vector<3x64xf32>
    %cst_12 = arith.constant dense<0.000000e+00> : vector<64x64xf32>
    %103 = tpu.matmul %89, %102, %cst_12 {dimension_numbers = #tpu.dot_dimension_numbers<[1], [0], [0], [1], [0, 0, 1, 1], [], []>} : vector<64x3xf32>, vector<3x64xf32>, vector<64x64xf32> -> vector<64x64xf32>
    %104 = vector.broadcast %101 : vector<64x1xf32> to vector<64x64xf32>
    %105 = arith.mulf %104, %103 : vector<64x64xf32>
    %106 = arith.addf %100, %105 : vector<64x64xf32>
    %107 = vector.extract_strided_slice %88 {offsets = [0, 2], sizes = [64, 1], strides = [1, 1]} : vector<64x3xf32> to vector<64x1xf32>
    %c9 = arith.constant 9 : index
    %c0_13 = arith.constant 0 : index
    %108 = vector.load %arg3[%c9, %c0_13] : memref<208x64xf32, #tpu.memory_space<vmem>>, vector<3x64xf32>
    %cst_14 = arith.constant dense<0.000000e+00> : vector<64x64xf32>
    %109 = tpu.matmul %89, %108, %cst_14 {dimension_numbers = #tpu.dot_dimension_numbers<[1], [0], [0], [1], [0, 0, 1, 1], [], []>} : vector<64x3xf32>, vector<3x64xf32>, vector<64x64xf32> -> vector<64x64xf32>
    %110 = vector.broadcast %107 : vector<64x1xf32> to vector<64x64xf32>
    %111 = arith.mulf %110, %109 : vector<64x64xf32>
    %112 = arith.addf %106, %111 : vector<64x64xf32>
    %cst_15 = arith.constant 0.000000e+00 : f32
    %113 = vector.broadcast %cst_15 : f32 to vector<64x64xf32>
    %114 = arith.maximumf %112, %113 : vector<64x64xf32>
    %c12 = arith.constant 12 : index
    %c0_16 = arith.constant 0 : index
    %115 = vector.load %arg3[%c12, %c0_16] : memref<208x64xf32, #tpu.memory_space<vmem>>, vector<64x64xf32>
    %cst_17 = arith.constant dense<0.000000e+00> : vector<64x64xf32>
    %116 = tpu.matmul %114, %115, %cst_17 {dimension_numbers = #tpu.dot_dimension_numbers<[1], [0], [0], [1], [0, 0, 1, 1], [], []>} : vector<64x64xf32>, vector<64x64xf32>, vector<64x64xf32> -> vector<64x64xf32>
    %c205 = arith.constant 205 : index
    %c0_18 = arith.constant 0 : index
    %117 = vector.load %arg3[%c205, %c0_18] : memref<208x64xf32, #tpu.memory_space<vmem>>, vector<1x64xf32>
    %118 = vector.broadcast %117 : vector<1x64xf32> to vector<64x64xf32>
    %119 = arith.addf %116, %118 : vector<64x64xf32>
    %cst_19 = arith.constant 0.000000e+00 : f32
    %120 = vector.broadcast %cst_19 : f32 to vector<64x64xf32>
    %121 = arith.maximumf %119, %120 : vector<64x64xf32>
    %c76 = arith.constant 76 : index
    %c0_20 = arith.constant 0 : index
    %122 = vector.load %arg3[%c76, %c0_20] : memref<208x64xf32, #tpu.memory_space<vmem>>, vector<64x64xf32>
    %cst_21 = arith.constant dense<0.000000e+00> : vector<64x64xf32>
    %123 = tpu.matmul %121, %122, %cst_21 {dimension_numbers = #tpu.dot_dimension_numbers<[1], [0], [0], [1], [0, 0, 1, 1], [], []>} : vector<64x64xf32>, vector<64x64xf32>, vector<64x64xf32> -> vector<64x64xf32>
    %c206 = arith.constant 206 : index
    %c0_22 = arith.constant 0 : index
    %124 = vector.load %arg3[%c206, %c0_22] : memref<208x64xf32, #tpu.memory_space<vmem>>, vector<1x64xf32>
    %125 = vector.broadcast %124 : vector<1x64xf32> to vector<64x64xf32>
    %126 = arith.addf %123, %125 : vector<64x64xf32>
    %cst_23 = arith.constant 0.000000e+00 : f32
    %127 = vector.broadcast %cst_23 : f32 to vector<64x64xf32>
    %128 = arith.maximumf %126, %127 : vector<64x64xf32>
    %cst_24 = arith.constant dense<0.000000e+00> : vector<1024x64xf32>
    %129 = tpu.matmul %85, %128, %cst_24 {dimension_numbers = #tpu.dot_dimension_numbers<[1], [0], [0], [1], [0, 0, 1, 1], [], []>} : vector<1024x64xf32>, vector<64x64xf32>, vector<1024x64xf32> -> vector<1024x64xf32>
    %130 = vector.extract_strided_slice %129 {offsets = [0, 0], sizes = [64, 64], strides = [1, 1]} : vector<1024x64xf32> to vector<64x64xf32>
    %131 = vector.extract_strided_slice %129 {offsets = [64, 0], sizes = [64, 64], strides = [1, 1]} : vector<1024x64xf32> to vector<64x64xf32>
    %132 = arith.maximumf %130, %131 : vector<64x64xf32>
    %133 = vector.extract_strided_slice %129 {offsets = [128, 0], sizes = [64, 64], strides = [1, 1]} : vector<1024x64xf32> to vector<64x64xf32>
    %134 = arith.maximumf %132, %133 : vector<64x64xf32>
    %135 = vector.extract_strided_slice %129 {offsets = [192, 0], sizes = [64, 64], strides = [1, 1]} : vector<1024x64xf32> to vector<64x64xf32>
    %136 = arith.maximumf %134, %135 : vector<64x64xf32>
    %137 = vector.extract_strided_slice %129 {offsets = [256, 0], sizes = [64, 64], strides = [1, 1]} : vector<1024x64xf32> to vector<64x64xf32>
    %138 = arith.maximumf %136, %137 : vector<64x64xf32>
    %139 = vector.extract_strided_slice %129 {offsets = [320, 0], sizes = [64, 64], strides = [1, 1]} : vector<1024x64xf32> to vector<64x64xf32>
    %140 = arith.maximumf %138, %139 : vector<64x64xf32>
    %141 = vector.extract_strided_slice %129 {offsets = [384, 0], sizes = [64, 64], strides = [1, 1]} : vector<1024x64xf32> to vector<64x64xf32>
    %142 = arith.maximumf %140, %141 : vector<64x64xf32>
    %143 = vector.extract_strided_slice %129 {offsets = [448, 0], sizes = [64, 64], strides = [1, 1]} : vector<1024x64xf32> to vector<64x64xf32>
    %144 = arith.maximumf %142, %143 : vector<64x64xf32>
    %145 = vector.extract_strided_slice %129 {offsets = [512, 0], sizes = [64, 64], strides = [1, 1]} : vector<1024x64xf32> to vector<64x64xf32>
    %146 = arith.maximumf %144, %145 : vector<64x64xf32>
    %147 = vector.extract_strided_slice %129 {offsets = [576, 0], sizes = [64, 64], strides = [1, 1]} : vector<1024x64xf32> to vector<64x64xf32>
    %148 = arith.maximumf %146, %147 : vector<64x64xf32>
    %149 = vector.extract_strided_slice %129 {offsets = [640, 0], sizes = [64, 64], strides = [1, 1]} : vector<1024x64xf32> to vector<64x64xf32>
    %150 = arith.maximumf %148, %149 : vector<64x64xf32>
    %151 = vector.extract_strided_slice %129 {offsets = [704, 0], sizes = [64, 64], strides = [1, 1]} : vector<1024x64xf32> to vector<64x64xf32>
    %152 = arith.maximumf %150, %151 : vector<64x64xf32>
    %153 = vector.extract_strided_slice %129 {offsets = [768, 0], sizes = [64, 64], strides = [1, 1]} : vector<1024x64xf32> to vector<64x64xf32>
    %154 = arith.maximumf %152, %153 : vector<64x64xf32>
    %155 = vector.extract_strided_slice %129 {offsets = [832, 0], sizes = [64, 64], strides = [1, 1]} : vector<1024x64xf32> to vector<64x64xf32>
    %156 = arith.maximumf %154, %155 : vector<64x64xf32>
    %157 = vector.extract_strided_slice %129 {offsets = [896, 0], sizes = [64, 64], strides = [1, 1]} : vector<1024x64xf32> to vector<64x64xf32>
    %158 = arith.maximumf %156, %157 : vector<64x64xf32>
    %159 = vector.extract_strided_slice %129 {offsets = [960, 0], sizes = [64, 64], strides = [1, 1]} : vector<1024x64xf32> to vector<64x64xf32>
    %160 = arith.maximumf %158, %159 : vector<64x64xf32>
    %c140 = arith.constant 140 : index
    %c0_25 = arith.constant 0 : index
    %161 = vector.load %arg3[%c140, %c0_25] : memref<208x64xf32, #tpu.memory_space<vmem>>, vector<64x64xf32>
    %cst_26 = arith.constant dense<0.000000e+00> : vector<64x64xf32>
    %162 = tpu.matmul %160, %161, %cst_26 {dimension_numbers = #tpu.dot_dimension_numbers<[1], [0], [0], [1], [0, 0, 1, 1], [], []>} : vector<64x64xf32>, vector<64x64xf32>, vector<64x64xf32> -> vector<64x64xf32>
    %c207 = arith.constant 207 : index
    %c0_27 = arith.constant 0 : index
    %163 = vector.load %arg3[%c207, %c0_27] : memref<208x64xf32, #tpu.memory_space<vmem>>, vector<1x64xf32>
    %164 = vector.broadcast %163 : vector<1x64xf32> to vector<64x64xf32>
    %165 = arith.addf %162, %164 : vector<64x64xf32>
    %c0_28 = arith.constant 0 : index
    %c0_29 = arith.constant 0 : index
    %166 = vector.load %arg4[%c0_28, %c0_29] : memref<194x128xf32, #tpu.memory_space<vmem>>, vector<64x128xf32>
    %cst_30 = arith.constant dense<0.000000e+00> : vector<64x128xf32>
    %167 = tpu.matmul %165, %166, %cst_30 {dimension_numbers = #tpu.dot_dimension_numbers<[1], [0], [0], [1], [0, 0, 1, 1], [], []>} : vector<64x64xf32>, vector<64x128xf32>, vector<64x128xf32> -> vector<64x128xf32>
    %c192 = arith.constant 192 : index
    %c0_31 = arith.constant 0 : index
    %168 = vector.load %arg4[%c192, %c0_31] : memref<194x128xf32, #tpu.memory_space<vmem>>, vector<1x128xf32>
    %169 = vector.broadcast %168 : vector<1x128xf32> to vector<64x128xf32>
    %170 = arith.addf %167, %169 : vector<64x128xf32>
    %cst_32 = arith.constant 0.000000e+00 : f32
    %171 = vector.broadcast %cst_32 : f32 to vector<64x128xf32>
    %172 = arith.maximumf %170, %171 : vector<64x128xf32>
    %cst_33 = arith.constant dense<0.000000e+00> : vector<1024x128xf32>
    %173 = tpu.matmul %85, %172, %cst_33 {dimension_numbers = #tpu.dot_dimension_numbers<[1], [0], [0], [1], [0, 0, 1, 1], [], []>} : vector<1024x64xf32>, vector<64x128xf32>, vector<1024x128xf32> -> vector<1024x128xf32>
    %174 = vector.extract_strided_slice %173 {offsets = [0, 0], sizes = [64, 128], strides = [1, 1]} : vector<1024x128xf32> to vector<64x128xf32>
    %175 = vector.extract_strided_slice %173 {offsets = [64, 0], sizes = [64, 128], strides = [1, 1]} : vector<1024x128xf32> to vector<64x128xf32>
    %176 = arith.maximumf %174, %175 : vector<64x128xf32>
    %177 = vector.extract_strided_slice %173 {offsets = [128, 0], sizes = [64, 128], strides = [1, 1]} : vector<1024x128xf32> to vector<64x128xf32>
    %178 = arith.maximumf %176, %177 : vector<64x128xf32>
    %179 = vector.extract_strided_slice %173 {offsets = [192, 0], sizes = [64, 128], strides = [1, 1]} : vector<1024x128xf32> to vector<64x128xf32>
    %180 = arith.maximumf %178, %179 : vector<64x128xf32>
    %181 = vector.extract_strided_slice %173 {offsets = [256, 0], sizes = [64, 128], strides = [1, 1]} : vector<1024x128xf32> to vector<64x128xf32>
    %182 = arith.maximumf %180, %181 : vector<64x128xf32>
    %183 = vector.extract_strided_slice %173 {offsets = [320, 0], sizes = [64, 128], strides = [1, 1]} : vector<1024x128xf32> to vector<64x128xf32>
    %184 = arith.maximumf %182, %183 : vector<64x128xf32>
    %185 = vector.extract_strided_slice %173 {offsets = [384, 0], sizes = [64, 128], strides = [1, 1]} : vector<1024x128xf32> to vector<64x128xf32>
    %186 = arith.maximumf %184, %185 : vector<64x128xf32>
    %187 = vector.extract_strided_slice %173 {offsets = [448, 0], sizes = [64, 128], strides = [1, 1]} : vector<1024x128xf32> to vector<64x128xf32>
    %188 = arith.maximumf %186, %187 : vector<64x128xf32>
    %189 = vector.extract_strided_slice %173 {offsets = [512, 0], sizes = [64, 128], strides = [1, 1]} : vector<1024x128xf32> to vector<64x128xf32>
    %190 = arith.maximumf %188, %189 : vector<64x128xf32>
    %191 = vector.extract_strided_slice %173 {offsets = [576, 0], sizes = [64, 128], strides = [1, 1]} : vector<1024x128xf32> to vector<64x128xf32>
    %192 = arith.maximumf %190, %191 : vector<64x128xf32>
    %193 = vector.extract_strided_slice %173 {offsets = [640, 0], sizes = [64, 128], strides = [1, 1]} : vector<1024x128xf32> to vector<64x128xf32>
    %194 = arith.maximumf %192, %193 : vector<64x128xf32>
    %195 = vector.extract_strided_slice %173 {offsets = [704, 0], sizes = [64, 128], strides = [1, 1]} : vector<1024x128xf32> to vector<64x128xf32>
    %196 = arith.maximumf %194, %195 : vector<64x128xf32>
    %197 = vector.extract_strided_slice %173 {offsets = [768, 0], sizes = [64, 128], strides = [1, 1]} : vector<1024x128xf32> to vector<64x128xf32>
    %198 = arith.maximumf %196, %197 : vector<64x128xf32>
    %199 = vector.extract_strided_slice %173 {offsets = [832, 0], sizes = [64, 128], strides = [1, 1]} : vector<1024x128xf32> to vector<64x128xf32>
    %200 = arith.maximumf %198, %199 : vector<64x128xf32>
    %201 = vector.extract_strided_slice %173 {offsets = [896, 0], sizes = [64, 128], strides = [1, 1]} : vector<1024x128xf32> to vector<64x128xf32>
    %202 = arith.maximumf %200, %201 : vector<64x128xf32>
    %203 = vector.extract_strided_slice %173 {offsets = [960, 0], sizes = [64, 128], strides = [1, 1]} : vector<1024x128xf32> to vector<64x128xf32>
    %204 = arith.maximumf %202, %203 : vector<64x128xf32>
    %c64 = arith.constant 64 : index
    %c0_34 = arith.constant 0 : index
    %205 = vector.load %arg4[%c64, %c0_34] : memref<194x128xf32, #tpu.memory_space<vmem>>, vector<128x128xf32>
    %cst_35 = arith.constant dense<0.000000e+00> : vector<64x128xf32>
    %206 = tpu.matmul %204, %205, %cst_35 {dimension_numbers = #tpu.dot_dimension_numbers<[1], [0], [0], [1], [0, 0, 1, 1], [], []>} : vector<64x128xf32>, vector<128x128xf32>, vector<64x128xf32> -> vector<64x128xf32>
    %c193 = arith.constant 193 : index
    %c0_36 = arith.constant 0 : index
    %207 = vector.load %arg4[%c193, %c0_36] : memref<194x128xf32, #tpu.memory_space<vmem>>, vector<1x128xf32>
    %208 = vector.broadcast %207 : vector<1x128xf32> to vector<64x128xf32>
    %209 = arith.addf %206, %208 : vector<64x128xf32>
    %210 = arith.truncf %209 : vector<64x128xf32> to vector<64x128xbf16>
    %c0_37 = arith.constant 0 : index
    %c0_38 = arith.constant 0 : index
    %211 = vector.load %arg5[%c0_37, %c0_38] : memref<129x1024xbf16, #tpu.memory_space<vmem>>, vector<128x1024xbf16>
    %cst_39 = arith.constant dense<0.000000e+00> : vector<64x1024xf32>
    %212 = tpu.matmul %210, %211, %cst_39 {dimension_numbers = #tpu.dot_dimension_numbers<[1], [0], [0], [1], [0, 0, 1, 1], [], []>} : vector<64x128xbf16>, vector<128x1024xbf16>, vector<64x1024xf32> -> vector<64x1024xf32>
    %c128 = arith.constant 128 : index
    %c0_40 = arith.constant 0 : index
    %213 = vector.load %arg5[%c128, %c0_40] : memref<129x1024xbf16, #tpu.memory_space<vmem>>, vector<1x1024xbf16>
    %214 = arith.extf %213 : vector<1x1024xbf16> to vector<1x1024xf32>
    %215 = vector.broadcast %214 : vector<1x1024xf32> to vector<64x1024xf32>
    %216 = arith.addf %212, %215 : vector<64x1024xf32>
    %cst_41 = arith.constant dense<0xFF800000> : vector<64xf32>
    %217 = vector.multi_reduction <maximumf>, %128, %cst_41 [0] : vector<64x64xf32> to vector<64xf32>
    %218 = vector.shape_cast %217 : vector<64xf32> to vector<1x64xf32>
    %cst_42 = arith.constant dense<0xFF800000> : vector<1024xf32>
    %219 = vector.multi_reduction <maximumf>, %216, %cst_42 [0] : vector<64x1024xf32> to vector<1024xf32>
    %220 = vector.shape_cast %219 : vector<1024xf32> to vector<1x1024xf32>
    %c0_43 = arith.constant 0 : index
    %c0_44 = arith.constant 0 : index
    %221 = vector.load %arg6[%c0_43, %c0_44] : memref<1122x32xf32, #tpu.memory_space<vmem>>, vector<64x32xf32>
    %cst_45 = arith.constant dense<0.000000e+00> : vector<1x32xf32>
    %222 = tpu.matmul %218, %221, %cst_45 {dimension_numbers = #tpu.dot_dimension_numbers<[1], [0], [0], [1], [0, 0, 1, 1], [], []>} : vector<1x64xf32>, vector<64x32xf32>, vector<1x32xf32> -> vector<1x32xf32>
    %c64_46 = arith.constant 64 : index
    %c0_47 = arith.constant 0 : index
    %223 = vector.load %arg6[%c64_46, %c0_47] : memref<1122x32xf32, #tpu.memory_space<vmem>>, vector<1024x32xf32>
    %cst_48 = arith.constant dense<0.000000e+00> : vector<1x32xf32>
    %224 = tpu.matmul %220, %223, %cst_48 {dimension_numbers = #tpu.dot_dimension_numbers<[1], [0], [0], [1], [0, 0, 1, 1], [], []>} : vector<1x1024xf32>, vector<1024x32xf32>, vector<1x32xf32> -> vector<1x32xf32>
    %225 = arith.addf %222, %224 : vector<1x32xf32>
    %c1120 = arith.constant 1120 : index
    %c0_49 = arith.constant 0 : index
    %226 = vector.load %arg6[%c1120, %c0_49] : memref<1122x32xf32, #tpu.memory_space<vmem>>, vector<1x32xf32>
    %227 = arith.addf %225, %226 : vector<1x32xf32>
    %cst_50 = arith.constant 0.000000e+00 : f32
    %228 = vector.broadcast %cst_50 : f32 to vector<1x32xf32>
    %229 = arith.maximumf %227, %228 : vector<1x32xf32>
    %c1088 = arith.constant 1088 : index
    %c0_51 = arith.constant 0 : index
    %230 = vector.load %arg6[%c1088, %c0_51] : memref<1122x32xf32, #tpu.memory_space<vmem>>, vector<32x32xf32>
    %cst_52 = arith.constant dense<0.000000e+00> : vector<1x32xf32>
    %231 = tpu.matmul %229, %230, %cst_52 {dimension_numbers = #tpu.dot_dimension_numbers<[1], [0], [0], [1], [0, 0, 1, 1], [], []>} : vector<1x32xf32>, vector<32x32xf32>, vector<1x32xf32> -> vector<1x32xf32>
    %c1121 = arith.constant 1121 : index
    %c0_53 = arith.constant 0 : index
    %232 = vector.load %arg6[%c1121, %c0_53] : memref<1122x32xf32, #tpu.memory_space<vmem>>, vector<1x32xf32>
    %233 = arith.addf %231, %232 : vector<1x32xf32>
    %c0_54 = arith.constant 0 : index
    %c0_55 = arith.constant 0 : index
    %c0_56 = arith.constant 0 : index
    %234 = vector.load %arg7[%c0_54, %c0_55, %c0_56] : memref<1x1x32xf32, #tpu.memory_space<vmem>>, vector<1x1x32xf32>
    %235 = vector.shape_cast %234 : vector<1x1x32xf32> to vector<1x32xf32>
    %236 = vector.shape_cast %233 : vector<1x32xf32> to vector<1x1x32xf32>
    tpu.vector_store %arg7[%c0_54, %c0_55, %c0_56], %236 {strides = array<i32>} : memref<1x1x32xf32, #tpu.memory_space<vmem>>, vector<1x1x32xf32>,
    return
  }
  func.func @transform_0(%arg0: i32) -> (i32, i32, i32) {
    %c0_i32 = arith.constant 0 : i32
    %c0_i32_0 = arith.constant 0 : i32
    %c0_i32_1 = arith.constant 0 : i32
    return %arg0, %c0_i32, %c0_i32_0 : i32, i32, i32
  }
  func.func @transform_1(%arg0: i32) -> (i32, i32, i32) {
    %c0_i32 = arith.constant 0 : i32
    %c0_i32_0 = arith.constant 0 : i32
    %c0_i32_1 = arith.constant 0 : i32
    return %arg0, %c0_i32, %c0_i32_0 : i32, i32, i32
  }
  func.func @transform_2(%arg0: i32) -> (i32, i32) {
    %c0_i32 = arith.constant 0 : i32
    %c0_i32_0 = arith.constant 0 : i32
    %c0_i32_1 = arith.constant 0 : i32
    return %c0_i32, %c0_i32_0 : i32, i32
  }
  func.func @transform_3(%arg0: i32) -> (i32, i32) {
    %c0_i32 = arith.constant 0 : i32
    %c0_i32_0 = arith.constant 0 : i32
    %c0_i32_1 = arith.constant 0 : i32
    return %c0_i32, %c0_i32_0 : i32, i32
  }
  func.func @transform_4(%arg0: i32) -> (i32, i32) {
    %c0_i32 = arith.constant 0 : i32
    %c0_i32_0 = arith.constant 0 : i32
    %c0_i32_1 = arith.constant 0 : i32
    return %c0_i32, %c0_i32_0 : i32, i32
  }
  func.func @transform_5(%arg0: i32) -> (i32, i32) {
    %c0_i32 = arith.constant 0 : i32
    %c0_i32_0 = arith.constant 0 : i32
    %c0_i32_1 = arith.constant 0 : i32
    return %c0_i32, %c0_i32_0 : i32, i32
  }
  func.func @transform_6(%arg0: i32) -> (i32, i32, i32) {
    %c0_i32 = arith.constant 0 : i32
    %c0_i32_0 = arith.constant 0 : i32
    %c0_i32_1 = arith.constant 0 : i32
    return %arg0, %c0_i32, %c0_i32_0 : i32, i32, i32
  }
}

module attributes {stable_mosaic.version = 11 : i64} {
  func.func @_decoder_kernel(%arg0: i32, %arg1: memref<1x32x1xf32, #tpu.memory_space<vmem>>, %arg2: memref<32x137xf32, #tpu.memory_space<vmem>>, %arg3: memref<3x66xf32, #tpu.memory_space<vmem>>, %arg4: memref<1x3x2048xf32, #tpu.memory_space<vmem>>, %arg5: memref<1x3x2048xf32, #tpu.memory_space<vmem>>) attributes {dimension_semantics = [#tpu.dimension_semantics<parallel>], iteration_bounds = array<i64: 2>, scalar_prefetch = 0 : i64, scratch_operands = 0 : i64, tpu.core_type = #tpu.core_type<tc>, window_params = [{transform_indices = @transform_0, window_bounds = array<i64: 1, 32, 1>}, {pipeline_mode = #tpu.pipeline_mode<synchronous>, transform_indices = @transform_1, window_bounds = array<i64: 32, 137>}, {pipeline_mode = #tpu.pipeline_mode<synchronous>, transform_indices = @transform_2, window_bounds = array<i64: 3, 66>}, {transform_indices = @transform_3, window_bounds = array<i64: 1, 3, 2048>}, {transform_indices = @transform_4, window_bounds = array<i64: 1, 3, 2048>}]} {
    %c0 = arith.constant 0 : index
    %c0_0 = arith.constant 0 : index
    %c0_1 = arith.constant 0 : index
    %0 = vector.load %arg1[%c0, %c0_0, %c0_1] : memref<1x32x1xf32, #tpu.memory_space<vmem>>, vector<1x32x1xf32>
    %1 = vector.shape_cast %0 : vector<1x32x1xf32> to vector<32x1xf32>
    %2 = tpu.iota {dimensions = array<i32: 1>} : vector<1x2048xi32>
    %3 = arith.sitofp %2 : vector<1x2048xi32> to vector<1x2048xf32>
    %cst = arith.constant 1.562500e-02 : f32
    %4 = vector.broadcast %cst : f32 to vector<1x2048xf32>
    %5 = arith.mulf %3, %4 : vector<1x2048xf32>
    %6 = math.floor %5 : vector<1x2048xf32>
    %cst_2 = arith.constant 6.400000e+01 : f32
    %7 = vector.broadcast %cst_2 : f32 to vector<1x2048xf32>
    %8 = arith.mulf %6, %7 : vector<1x2048xf32>
    %9 = arith.subf %3, %8 : vector<1x2048xf32>
    %cst_3 = arith.constant 0.0193548389 : f32
    %10 = vector.broadcast %cst_3 : f32 to vector<1x2048xf32>
    %11 = arith.mulf %6, %10 : vector<1x2048xf32>
    %cst_4 = arith.constant -3.000000e-01 : f32
    %12 = vector.broadcast %cst_4 : f32 to vector<1x2048xf32>
    %13 = arith.addf %12, %11 : vector<1x2048xf32>
    %cst_5 = arith.constant 0.0190476198 : f32
    %14 = vector.broadcast %cst_5 : f32 to vector<1x2048xf32>
    %15 = arith.mulf %9, %14 : vector<1x2048xf32>
    %cst_6 = arith.constant -6.000000e-01 : f32
    %16 = vector.broadcast %cst_6 : f32 to vector<1x2048xf32>
    %17 = arith.addf %16, %15 : vector<1x2048xf32>
    %c0_7 = arith.constant 0 : index
    %c0_8 = arith.constant 0 : index
    %18 = vector.load %arg2[%c0_7, %c0_8] : memref<32x137xf32, #tpu.memory_space<vmem>>, vector<32x32xf32>
    %cst_9 = arith.constant dense<0.000000e+00> : vector<32x1xf32>
    %19 = tpu.matmul %18, %1, %cst_9 {dimension_numbers = #tpu.dot_dimension_numbers<[1], [0], [0], [1], [0, 0, 1, 1], [], []>} : vector<32x32xf32>, vector<32x1xf32>, vector<32x1xf32> -> vector<32x1xf32>
    %c0_10 = arith.constant 0 : index
    %c34 = arith.constant 34 : index
    %20 = vector.load %arg2[%c0_10, %c34] : memref<32x137xf32, #tpu.memory_space<vmem>>, vector<32x1xf32>
    %21 = arith.addf %19, %20 : vector<32x1xf32>
    %c0_11 = arith.constant 0 : index
    %c32 = arith.constant 32 : index
    %22 = vector.load %arg2[%c0_11, %c32] : memref<32x137xf32, #tpu.memory_space<vmem>>, vector<32x1xf32>
    %23 = vector.broadcast %22 : vector<32x1xf32> to vector<32x2048xf32>
    %24 = vector.broadcast %13 : vector<1x2048xf32> to vector<32x2048xf32>
    %25 = arith.mulf %23, %24 : vector<32x2048xf32>
    %26 = vector.broadcast %21 : vector<32x1xf32> to vector<32x2048xf32>
    %27 = arith.addf %26, %25 : vector<32x2048xf32>
    %c0_12 = arith.constant 0 : index
    %c33 = arith.constant 33 : index
    %28 = vector.load %arg2[%c0_12, %c33] : memref<32x137xf32, #tpu.memory_space<vmem>>, vector<32x1xf32>
    %29 = vector.broadcast %28 : vector<32x1xf32> to vector<32x2048xf32>
    %30 = vector.broadcast %17 : vector<1x2048xf32> to vector<32x2048xf32>
    %31 = arith.mulf %29, %30 : vector<32x2048xf32>
    %32 = arith.addf %27, %31 : vector<32x2048xf32>
    %cst_13 = arith.constant 0.000000e+00 : f32
    %33 = vector.broadcast %cst_13 : f32 to vector<32x2048xf32>
    %34 = arith.maximumf %32, %33 : vector<32x2048xf32>
    %c0_14 = arith.constant 0 : index
    %c35 = arith.constant 35 : index
    %35 = vector.load %arg2[%c0_14, %c35] : memref<32x137xf32, #tpu.memory_space<vmem>>, vector<32x32xf32>
    %cst_15 = arith.constant dense<0.000000e+00> : vector<32x2048xf32>
    %36 = tpu.matmul %35, %34, %cst_15 {dimension_numbers = #tpu.dot_dimension_numbers<[1], [0], [0], [1], [0, 0, 1, 1], [], []>} : vector<32x32xf32>, vector<32x2048xf32>, vector<32x2048xf32> -> vector<32x2048xf32>
    %c0_16 = arith.constant 0 : index
    %c67 = arith.constant 67 : index
    %37 = vector.load %arg2[%c0_16, %c67] : memref<32x137xf32, #tpu.memory_space<vmem>>, vector<32x1xf32>
    %38 = vector.broadcast %37 : vector<32x1xf32> to vector<32x2048xf32>
    %39 = arith.addf %36, %38 : vector<32x2048xf32>
    %cst_17 = arith.constant 0.000000e+00 : f32
    %40 = vector.broadcast %cst_17 : f32 to vector<32x2048xf32>
    %41 = arith.maximumf %39, %40 : vector<32x2048xf32>
    %c0_18 = arith.constant 0 : index
    %c0_19 = arith.constant 0 : index
    %42 = vector.load %arg3[%c0_18, %c0_19] : memref<3x66xf32, #tpu.memory_space<vmem>>, vector<3x32xf32>
    %cst_20 = arith.constant dense<0.000000e+00> : vector<3x2048xf32>
    %43 = tpu.matmul %42, %41, %cst_20 {dimension_numbers = #tpu.dot_dimension_numbers<[1], [0], [0], [1], [0, 0, 1, 1], [], []>} : vector<3x32xf32>, vector<32x2048xf32>, vector<3x2048xf32> -> vector<3x2048xf32>
    %c0_21 = arith.constant 0 : index
    %c32_22 = arith.constant 32 : index
    %44 = vector.load %arg3[%c0_21, %c32_22] : memref<3x66xf32, #tpu.memory_space<vmem>>, vector<3x1xf32>
    %45 = vector.broadcast %44 : vector<3x1xf32> to vector<3x2048xf32>
    %46 = arith.addf %43, %45 : vector<3x2048xf32>
    %c0_23 = arith.constant 0 : index
    %c0_24 = arith.constant 0 : index
    %c0_25 = arith.constant 0 : index
    %47 = vector.load %arg5[%c0_23, %c0_24, %c0_25] : memref<1x3x2048xf32, #tpu.memory_space<vmem>>, vector<1x3x2048xf32>
    %48 = vector.shape_cast %47 : vector<1x3x2048xf32> to vector<3x2048xf32>
    %49 = vector.shape_cast %46 : vector<3x2048xf32> to vector<1x3x2048xf32>
    tpu.vector_store %arg5[%c0_23, %c0_24, %c0_25], %49 {strides = array<i32>} : memref<1x3x2048xf32, #tpu.memory_space<vmem>>, vector<1x3x2048xf32>,
    %c0_26 = arith.constant 0 : index
    %c68 = arith.constant 68 : index
    %50 = vector.load %arg2[%c0_26, %c68] : memref<32x137xf32, #tpu.memory_space<vmem>>, vector<32x32xf32>
    %cst_27 = arith.constant dense<0.000000e+00> : vector<32x1xf32>
    %51 = tpu.matmul %50, %1, %cst_27 {dimension_numbers = #tpu.dot_dimension_numbers<[1], [0], [0], [1], [0, 0, 1, 1], [], []>} : vector<32x32xf32>, vector<32x1xf32>, vector<32x1xf32> -> vector<32x1xf32>
    %c0_28 = arith.constant 0 : index
    %c103 = arith.constant 103 : index
    %52 = vector.load %arg2[%c0_28, %c103] : memref<32x137xf32, #tpu.memory_space<vmem>>, vector<32x1xf32>
    %53 = arith.addf %51, %52 : vector<32x1xf32>
    %c0_29 = arith.constant 0 : index
    %c100 = arith.constant 100 : index
    %54 = vector.load %arg2[%c0_29, %c100] : memref<32x137xf32, #tpu.memory_space<vmem>>, vector<32x3xf32>
    %cst_30 = arith.constant dense<0.000000e+00> : vector<32x2048xf32>
    %55 = tpu.matmul %54, %46, %cst_30 {dimension_numbers = #tpu.dot_dimension_numbers<[1], [0], [0], [1], [0, 0, 1, 1], [], []>} : vector<32x3xf32>, vector<3x2048xf32>, vector<32x2048xf32> -> vector<32x2048xf32>
    %56 = vector.broadcast %53 : vector<32x1xf32> to vector<32x2048xf32>
    %57 = arith.addf %56, %55 : vector<32x2048xf32>
    %cst_31 = arith.constant 0.000000e+00 : f32
    %58 = vector.broadcast %cst_31 : f32 to vector<32x2048xf32>
    %59 = arith.maximumf %57, %58 : vector<32x2048xf32>
    %c0_32 = arith.constant 0 : index
    %c104 = arith.constant 104 : index
    %60 = vector.load %arg2[%c0_32, %c104] : memref<32x137xf32, #tpu.memory_space<vmem>>, vector<32x32xf32>
    %cst_33 = arith.constant dense<0.000000e+00> : vector<32x2048xf32>
    %61 = tpu.matmul %60, %59, %cst_33 {dimension_numbers = #tpu.dot_dimension_numbers<[1], [0], [0], [1], [0, 0, 1, 1], [], []>} : vector<32x32xf32>, vector<32x2048xf32>, vector<32x2048xf32> -> vector<32x2048xf32>
    %c0_34 = arith.constant 0 : index
    %c136 = arith.constant 136 : index
    %62 = vector.load %arg2[%c0_34, %c136] : memref<32x137xf32, #tpu.memory_space<vmem>>, vector<32x1xf32>
    %63 = vector.broadcast %62 : vector<32x1xf32> to vector<32x2048xf32>
    %64 = arith.addf %61, %63 : vector<32x2048xf32>
    %cst_35 = arith.constant 0.000000e+00 : f32
    %65 = vector.broadcast %cst_35 : f32 to vector<32x2048xf32>
    %66 = arith.maximumf %64, %65 : vector<32x2048xf32>
    %c0_36 = arith.constant 0 : index
    %c33_37 = arith.constant 33 : index
    %67 = vector.load %arg3[%c0_36, %c33_37] : memref<3x66xf32, #tpu.memory_space<vmem>>, vector<3x32xf32>
    %cst_38 = arith.constant dense<0.000000e+00> : vector<3x2048xf32>
    %68 = tpu.matmul %67, %66, %cst_38 {dimension_numbers = #tpu.dot_dimension_numbers<[1], [0], [0], [1], [0, 0, 1, 1], [], []>} : vector<3x32xf32>, vector<32x2048xf32>, vector<3x2048xf32> -> vector<3x2048xf32>
    %c0_39 = arith.constant 0 : index
    %c65 = arith.constant 65 : index
    %69 = vector.load %arg3[%c0_39, %c65] : memref<3x66xf32, #tpu.memory_space<vmem>>, vector<3x1xf32>
    %70 = vector.broadcast %69 : vector<3x1xf32> to vector<3x2048xf32>
    %71 = arith.addf %68, %70 : vector<3x2048xf32>
    %c0_40 = arith.constant 0 : index
    %c0_41 = arith.constant 0 : index
    %c0_42 = arith.constant 0 : index
    %72 = vector.load %arg4[%c0_40, %c0_41, %c0_42] : memref<1x3x2048xf32, #tpu.memory_space<vmem>>, vector<1x3x2048xf32>
    %73 = vector.shape_cast %72 : vector<1x3x2048xf32> to vector<3x2048xf32>
    %74 = vector.shape_cast %71 : vector<3x2048xf32> to vector<1x3x2048xf32>
    tpu.vector_store %arg4[%c0_40, %c0_41, %c0_42], %74 {strides = array<i32>} : memref<1x3x2048xf32, #tpu.memory_space<vmem>>, vector<1x3x2048xf32>,
    return
  }
  func.func @transform_0(%arg0: i32) -> (i32, i32, i32) {
    %c0_i32 = arith.constant 0 : i32
    %c0_i32_0 = arith.constant 0 : i32
    %c0_i32_1 = arith.constant 0 : i32
    return %arg0, %c0_i32, %c0_i32_0 : i32, i32, i32
  }
  func.func @transform_1(%arg0: i32) -> (i32, i32) {
    %c0_i32 = arith.constant 0 : i32
    %c0_i32_0 = arith.constant 0 : i32
    %c0_i32_1 = arith.constant 0 : i32
    return %c0_i32, %c0_i32_0 : i32, i32
  }
  func.func @transform_2(%arg0: i32) -> (i32, i32) {
    %c0_i32 = arith.constant 0 : i32
    %c0_i32_0 = arith.constant 0 : i32
    %c0_i32_1 = arith.constant 0 : i32
    return %c0_i32, %c0_i32_0 : i32, i32
  }
  func.func @transform_3(%arg0: i32) -> (i32, i32, i32) {
    %c0_i32 = arith.constant 0 : i32
    %c0_i32_0 = arith.constant 0 : i32
    %c0_i32_1 = arith.constant 0 : i32
    return %arg0, %c0_i32, %c0_i32_0 : i32, i32, i32
  }
  func.func @transform_4(%arg0: i32) -> (i32, i32, i32) {
    %c0_i32 = arith.constant 0 : i32
    %c0_i32_0 = arith.constant 0 : i32
    %c0_i32_1 = arith.constant 0 : i32
    return %arg0, %c0_i32, %c0_i32_0 : i32, i32, i32
  }
}

</mosaic_0001>

<llo_original>
// kernel: skip_foldingnet_forward.3
$region0: #{skip_foldingnet_forward.3}
  #allocation0 [shape = 'u32[]', space=smem, size = 0x4, offset = 0x4, fixed_abs, tag = 'smem constant byte address 0x4 - core index']
  #allocation1 [shape = 'u32[144,128]{1,0:T(1,128)}', space=vmem, size = 0x12000, scoped, tag = 'internal scratch']
  %s0 = inlined_call_operand.vmem [shape: f32[2,32,1], index: 0, kind: input, shape index: {}]
  %s1 = inlined_call_operand.vmem [shape: f32[32,137], index: 1, kind: input, shape index: {}]
  %s2 = inlined_call_operand.vmem [shape: f32[3,66], index: 2, kind: input, shape index: {}]
  %s3 = inlined_call_operand.vmem [shape: f32[2,3,2048], index: 3, kind: output, shape index: {0}]
  %s4 = inlined_call_operand.vmem [shape: f32[2,3,2048], index: 4, kind: output, shape index: {1}]
  %5 = xla_tuple %s3, %s4
  %s6 = sld [smem:[#allocation0]]
  $region53: #{skip_foldingnet_forward.3} parent=0
    _
  %s8 = ssub.s32 1, %s6
  %s9 = scalar_select 0, %s8, %s6
  loop: start=0, step=1, limit=4
  $region2: #{skip_foldingnet_forward.3} parent=0 // loop_pre_header
    _
  $region3: #{skip_foldingnet_forward.3} parent=0 // loop_header
    %s11 = sphi 0, %s15
    %p12 = scmp.ge.s32.totalorder %s11, 4
    %s21 = sphi 0, %s23
    %s24 = sphi 0, %s21
    %s25 = sphi 0, %s24
    %s41 = sphi 0, %s25
    %s45 = sphi 0, %s45
    %s47 = sphi 0, %s45
    %s48 = sphi 0, %s47
    %s62 = sphi 0, %s48
    %s66 = sphi 0, %s66
    %s68 = sphi 0, %s66
    %s69 = sphi 0, %s68
    %s83 = sphi 0, %s69
    %s89 = sphi 0, %s91
    %s92 = sphi 0, %s89
    %s93 = sphi 0, %s92
    %s109 = sphi 0, %s93
    %s115 = sphi 0, %s117
    %s118 = sphi 0, %s115
    %s119 = sphi 0, %s118
    %s135 = sphi 0, %s119
  $region4: #{skip_foldingnet_forward.3} parent=0 // loop_header_branch
    %14 = sbr.rel (%p12) target = $region8
  $region5: #{skip_foldingnet_forward.3} parent=0 // loop_body
    %s16 = ssub.s32 %s11, 1
    %s17 = ssub.s32 %s11, 2
    %s18 = sadd.s32 %s11, 1
    %s19 = ssub.s32 %s11, %s18
    %p20 = scmp.eq.s32.totalorder %s19, 0
    %s22 = sadd.s32 %s21, 1
    %s23 = scalar_select %p20, %s21, %s22
    %p26 = pneg %p20
    %p27 = scmp.eq.s32.totalorder %s11, 1
    %p28 = por %p26, %p27
    %p29 = scmp.ne.s32.totalorder %s21, %s24
    %p30 = scmp.eq.s32.totalorder %s11, 0
    %p31 = por %p29, %p30
    %p32 = scmp.ne.s32.totalorder %s21, %s24
    %p33 = scmp.eq.s32.totalorder %s16, 1
    %p34 = por %p32, %p33
    %p35 = scmp.ne.s32.totalorder %s24, %s25
    %p36 = scmp.eq.s32.totalorder %s16, 0
    %p37 = por %p35, %p36
    %p38 = scmp.ne.s32.totalorder %s24, %s25
    %p39 = scmp.eq.s32.totalorder %s17, 1
    %p40 = por %p38, %p39
    %p42 = scmp.ne.s32.totalorder %s25, %s41
    %p43 = scmp.eq.s32.totalorder %s17, 0
    %p44 = por %p42, %p43
    %s46 = sadd.s32 %s45, 1
    %p49 = scmp.eq.s32.totalorder %s11, 1
    %p50 = scmp.ne.s32.totalorder %s45, %s47
    %p51 = scmp.eq.s32.totalorder %s11, 0
    %p52 = por %p50, %p51
    %p53 = scmp.ne.s32.totalorder %s45, %s47
    %p54 = scmp.eq.s32.totalorder %s16, 1
    %p55 = por %p53, %p54
    %p56 = scmp.ne.s32.totalorder %s47, %s48
    %p57 = scmp.eq.s32.totalorder %s16, 0
    %p58 = por %p56, %p57
    %p59 = scmp.ne.s32.totalorder %s47, %s48
    %p60 = scmp.eq.s32.totalorder %s17, 1
    %p61 = por %p59, %p60
    %p63 = scmp.ne.s32.totalorder %s48, %s62
    %p64 = scmp.eq.s32.totalorder %s17, 0
    %p65 = por %p63, %p64
    %s67 = sadd.s32 %s66, 1
    %p70 = scmp.eq.s32.totalorder %s11, 1
    %p71 = scmp.ne.s32.totalorder %s66, %s68
    %p72 = scmp.eq.s32.totalorder %s11, 0
    %p73 = por %p71, %p72
    %p74 = scmp.ne.s32.totalorder %s66, %s68
    %p75 = scmp.eq.s32.totalorder %s16, 1
    %p76 = por %p74, %p75
    %p77 = scmp.ne.s32.totalorder %s68, %s69
    %p78 = scmp.eq.s32.totalorder %s16, 0
    %p79 = por %p77, %p78
    %p80 = scmp.ne.s32.totalorder %s68, %s69
    %p81 = scmp.eq.s32.totalorder %s17, 1
    %p82 = por %p80, %p81
    %p84 = scmp.ne.s32.totalorder %s69, %s83
    %p85 = scmp.eq.s32.totalorder %s17, 0
    %p86 = por %p84, %p85
    %s87 = ssub.s32 %s11, %s18
    %p88 = scmp.eq.s32.totalorder %s87, 0
    %s90 = sadd.s32 %s89, 1
    %s91 = scalar_select %p88, %s89, %s90
    %p94 = pneg %p88
    %p95 = scmp.eq.s32.totalorder %s11, 1
    %p96 = por %p94, %p95
    %p97 = scmp.ne.s32.totalorder %s89, %s92
    %p98 = scmp.eq.s32.totalorder %s11, 0
    %p99 = por %p97, %p98
    %p100 = scmp.ne.s32.totalorder %s89, %s92
    %p101 = scmp.eq.s32.totalorder %s16, 1
    %p102 = por %p100, %p101
    %p103 = scmp.ne.s32.totalorder %s92, %s93
    %p104 = scmp.eq.s32.totalorder %s16, 0
    %p105 = por %p103, %p104
    %p106 = scmp.ne.s32.totalorder %s92, %s93
    %p107 = scmp.eq.s32.totalorder %s17, 1
    %p108 = por %p106, %p107
    %p110 = scmp.ne.s32.totalorder %s93, %s109
    %p111 = scmp.eq.s32.totalorder %s17, 0
    %p112 = por %p110, %p111
    %s113 = ssub.s32 %s11, %s18
    %p114 = scmp.eq.s32.totalorder %s113, 0
    %s116 = sadd.s32 %s115, 1
    %s117 = scalar_select %p114, %s115, %s116
    %p120 = pneg %p114
    %p121 = scmp.eq.s32.totalorder %s11, 1
    %p122 = por %p120, %p121
    %p123 = scmp.ne.s32.totalorder %s115, %s118
    %p124 = scmp.eq.s32.totalorder %s11, 0
    %p125 = por %p123, %p124
    %p126 = scmp.ne.s32.totalorder %s115, %s118
    %p127 = scmp.eq.s32.totalorder %s16, 1
    %p128 = por %p126, %p127
    %p129 = scmp.ne.s32.totalorder %s118, %s119
    %p130 = scmp.eq.s32.totalorder %s16, 0
    %p131 = por %p129, %p130
    %p132 = scmp.ne.s32.totalorder %s118, %s119
    %p133 = scmp.eq.s32.totalorder %s17, 1
    %p134 = por %p132, %p133
    %p136 = scmp.ne.s32.totalorder %s119, %s135
    %p137 = scmp.eq.s32.totalorder %s17, 0
    %p138 = por %p136, %p137
    %p139 = scmp.le.s32.totalorder 1, %s11
    %p140 = scmp.lt.s32.totalorder %s11, 3
    %p141 = pnand %p139, %p140
    %p142 = pneg %p141
    // Predicated region
    $region9: #{skip_foldingnet_forward.3} parent=5 // pred_check
      _
    $region10: #{skip_foldingnet_forward.3} parent=5 // pred_check_branch
      %144 = sbr.rel (%p141) target = $region12
    $region11: #{skip_foldingnet_forward.3} parent=5 // pred_region
      %s145 = ssub.s32 %s11, 1
      // Predicated region
      $region13: #{skip_foldingnet_forward.3} parent=11 // pred_check
        %p146 = pneg %p58
      $region14: #{skip_foldingnet_forward.3} parent=11 // pred_check_branch
        %148 = sbr.rel (%p146) target = $region16
      $region15: #{skip_foldingnet_forward.3} parent=11 // pred_region
        _
      $region16: #{skip_foldingnet_forward.3} parent=11 // pred_fallthru
        _
      // Predicated region
      $region17: #{skip_foldingnet_forward.3} parent=11 // pred_check
        %p149 = pneg %p79
      $region18: #{skip_foldingnet_forward.3} parent=11 // pred_check_branch
        %151 = sbr.rel (%p149) target = $region20
      $region19: #{skip_foldingnet_forward.3} parent=11 // pred_region
        _
      $region20: #{skip_foldingnet_forward.3} parent=11 // pred_fallthru
        _
    $region12: #{skip_foldingnet_forward.3} parent=5 // pred_fallthru
      _
    %p152 = scmp.lt.s32.totalorder %s11, 2
    // Predicated region
    $region21: #{skip_foldingnet_forward.3} parent=5 // pred_check
      %p153 = pneg %p152
    $region22: #{skip_foldingnet_forward.3} parent=5 // pred_check_branch
      %155 = sbr.rel (%p153) target = $region24
    $region23: #{skip_foldingnet_forward.3} parent=5 // pred_region
      // Predicated region
      $region25: #{skip_foldingnet_forward.3} parent=23 // pred_check
        %p156 = pneg %p31
      $region26: #{skip_foldingnet_forward.3} parent=23 // pred_check_branch
        %158 = sbr.rel (%p156) target = $region28
      $region27: #{skip_foldingnet_forward.3} parent=23 // pred_region
        %p159 = scmp.lt.s32.totalorder %s11, 1
        %s160 = scalar_select %p159, %s11, 1
        %s161 = smul.addr %s160, 4
        %s162 = smul.addr %s161, 8
        %s163 = scalar_lea.vmem %s0, %s162
      $region28: #{skip_foldingnet_forward.3} parent=23 // pred_fallthru
        _
    $region24: #{skip_foldingnet_forward.3} parent=5 // pred_fallthru
      _
    %p164 = scmp.le.s32.totalorder 1, %s11
    %p165 = scmp.lt.s32.totalorder %s11, 3
    %p166 = pnand %p164, %p165
    %p167 = pneg %p166
    // Predicated region
    $region29: #{skip_foldingnet_forward.3} parent=5 // pred_check
      _
    $region30: #{skip_foldingnet_forward.3} parent=5 // pred_check_branch
      %169 = sbr.rel (%p166) target = $region32
    $region31: #{skip_foldingnet_forward.3} parent=5 // pred_region
      %s170 = ssub.s32 %s11, 1
      %p171 = scmp.lt.s32.totalorder %s16, 1
      %s172 = scalar_select %p171, %s16, 1
      %s173 = smul.addr %s172, 4
      %s174 = smul.addr %s173, 8
      %s175 = scalar_lea.vmem %s0, %s174
      %p176 = pneg %p37
      %p177 = pneg %p34
      %p178 = pneg %p58
      %p179 = pneg %p55
      %p180 = pneg %p79
      %p181 = pneg %p76
      %p182 = pneg %p105
      %p183 = pneg %p102
      %p184 = scmp.lt.s32.totalorder %s16, 1
      %s185 = scalar_select %p184, %s16, 1
      %s186 = smul.addr %s185, 16
      %s187 = smul.addr %s186, 4
      %s188 = scalar_lea.vmem %s3, %s187
      %p189 = pneg %p131
      %p190 = pneg %p128
      %p191 = scmp.lt.s32.totalorder %s16, 1
      %s192 = scalar_select %p191, %s16, 1
      %s193 = smul.addr %s192, 16
      %s194 = smul.addr %s193, 4
      %s195 = scalar_lea.vmem %s4, %s194
      %p196 = scmp.lt.s32.totalorder %s16, 1
      %s197 = scalar_select %p196, %s16, 1
      %s198 = smul.addr %s197, 4
      %s199 = smul.addr %s198, 8
      %s200 = scalar_lea.vmem %s0, %s199
      %p201 = scmp.lt.s32.totalorder %s16, 1
      %s202 = scalar_select %p201, %s16, 1
      %s203 = smul.addr %s202, 16
      %s204 = smul.addr %s203, 4
      %s205 = scalar_lea.vmem %s3, %s204
      %p206 = scmp.lt.s32.totalorder %s16, 1
      %s207 = scalar_select %p206, %s16, 1
      %s208 = smul.addr %s207, 16
      %s209 = smul.addr %s208, 4
      %s210 = scalar_lea.vmem %s4, %s209
      %v211 = vld [vmem:[%s200] sm:$0xff]
      %v212 = vld [vmem:[%s200 + $0x8] sm:$0xff]
      %v213 = vld [vmem:[%s200 + $0x10] sm:$0xff]
      %v214 = vld [vmem:[%s200 + $0x18] sm:$0xff]
      %v215 = vlaneseq
      %v216 = vand.u32 %v215, 127
      %v217 = vadd.s32 %v216, 128
      %v218 = vadd.s32 %v216, 256
      %v219 = vadd.s32 %v216, 384
      %v220 = vadd.s32 %v216, 512
      %v221 = vadd.s32 %v216, 640
      %v222 = vadd.s32 %v216, 768
      %v223 = vadd.s32 %v216, 896
      %v224 = vadd.s32 %v216, 1024
      %v225 = vadd.s32 %v216, 1152
      %v226 = vadd.s32 %v216, 1280
      %v227 = vadd.s32 %v216, 1408
      %v228 = vadd.s32 %v216, 1536
      %v229 = vadd.s32 %v216, 1664
      %v230 = vadd.s32 %v216, 1792
      %v231 = vadd.s32 %v216, 1920
      %v232 = vcvt.s32.f32 %v216
      %v233 = vcvt.s32.f32 %v217
      %v234 = vcvt.s32.f32 %v218
      %v235 = vcvt.s32.f32 %v219
      %v236 = vcvt.s32.f32 %v220
      %v237 = vcvt.s32.f32 %v221
      %v238 = vcvt.s32.f32 %v222
      %v239 = vcvt.s32.f32 %v223
      %v240 = vcvt.s32.f32 %v224
      %v241 = vcvt.s32.f32 %v225
      %v242 = vcvt.s32.f32 %v226
      %v243 = vcvt.s32.f32 %v227
      %v244 = vcvt.s32.f32 %v228
      %v245 = vcvt.s32.f32 %v229
      %v246 = vcvt.s32.f32 %v230
      %v247 = vcvt.s32.f32 %v231
      %v248 = vmul.f32 %v232, 0.015625
      %v249 = vmul.f32 %v233, 0.015625
      %v250 = vmul.f32 %v234, 0.015625
      %v251 = vmul.f32 %v235, 0.015625
      %v252 = vmul.f32 %v236, 0.015625
      %v253 = vmul.f32 %v237, 0.015625
      %v254 = vmul.f32 %v238, 0.015625
      %v255 = vmul.f32 %v239, 0.015625
      %v256 = vmul.f32 %v240, 0.015625
      %v257 = vmul.f32 %v241, 0.015625
      %v258 = vmul.f32 %v242, 0.015625
      %v259 = vmul.f32 %v243, 0.015625
      %v260 = vmul.f32 %v244, 0.015625
      %v261 = vmul.f32 %v245, 0.015625
      %v262 = vmul.f32 %v246, 0.015625
      %v263 = vmul.f32 %v247, 0.015625
      %v264 = vfloor.f32 %v248
      %v265 = vfloor.f32 %v249
      %v266 = vfloor.f32 %v250
      %v267 = vfloor.f32 %v251
      %v268 = vfloor.f32 %v252
      %v269 = vfloor.f32 %v253
      %v270 = vfloor.f32 %v254
      %v271 = vfloor.f32 %v255
      %v272 = vfloor.f32 %v256
      %v273 = vfloor.f32 %v257
      %v274 = vfloor.f32 %v258
      %v275 = vfloor.f32 %v259
      %v276 = vfloor.f32 %v260
      %v277 = vfloor.f32 %v261
      %v278 = vfloor.f32 %v262
      %v279 = vfloor.f32 %v263
      %v280 = vmul.f32 %v264, 64.0
      %v281 = vmul.f32 %v265, 64.0
      %v282 = vmul.f32 %v266, 64.0
      %v283 = vmul.f32 %v267, 64.0
      %v284 = vmul.f32 %v268, 64.0
      %v285 = vmul.f32 %v269, 64.0
      %v286 = vmul.f32 %v270, 64.0
      %v287 = vmul.f32 %v271, 64.0
      %v288 = vmul.f32 %v272, 64.0
      %v289 = vmul.f32 %v273, 64.0
      %v290 = vmul.f32 %v274, 64.0
      %v291 = vmul.f32 %v275, 64.0
      %v292 = vmul.f32 %v276, 64.0
      %v293 = vmul.f32 %v277, 64.0
      %v294 = vmul.f32 %v278, 64.0
      %v295 = vmul.f32 %v279, 64.0
      %v296 = vsub.f32 %v232, %v280
      %v297 = vsub.f32 %v233, %v281
      %v298 = vsub.f32 %v234, %v282
      %v299 = vsub.f32 %v235, %v283
      %v300 = vsub.f32 %v236, %v284
      %v301 = vsub.f32 %v237, %v285
      %v302 = vsub.f32 %v238, %v286
      %v303 = vsub.f32 %v239, %v287
      %v304 = vsub.f32 %v240, %v288
      %v305 = vsub.f32 %v241, %v289
      %v306 = vsub.f32 %v242, %v290
      %v307 = vsub.f32 %v243, %v291
      %v308 = vsub.f32 %v244, %v292
      %v309 = vsub.f32 %v245, %v293
      %v310 = vsub.f32 %v246, %v294
      %v311 = vsub.f32 %v247, %v295
      %v312 = vmul.f32 %v264, 0.019354839
      %v313 = vmul.f32 %v265, 0.019354839
      %v314 = vmul.f32 %v266, 0.019354839
      %v315 = vmul.f32 %v267, 0.019354839
      %v316 = vmul.f32 %v268, 0.019354839
      %v317 = vmul.f32 %v269, 0.019354839
      %v318 = vmul.f32 %v270, 0.019354839
      %v319 = vmul.f32 %v271, 0.019354839
      %v320 = vmul.f32 %v272, 0.019354839
      %v321 = vmul.f32 %v273, 0.019354839
      %v322 = vmul.f32 %v274, 0.019354839
      %v323 = vmul.f32 %v275, 0.019354839
      %v324 = vmul.f32 %v276, 0.019354839
      %v325 = vmul.f32 %v277, 0.019354839
      %v326 = vmul.f32 %v278, 0.019354839
      %v327 = vmul.f32 %v279, 0.019354839
      %v328 = vadd.f32 %v312, -0.3
      %v329 = vadd.f32 %v313, -0.3
      %v330 = vadd.f32 %v314, -0.3
      %v331 = vadd.f32 %v315, -0.3
      %v332 = vadd.f32 %v316, -0.3
      %v333 = vadd.f32 %v317, -0.3
      %v334 = vadd.f32 %v318, -0.3
      %v335 = vadd.f32 %v319, -0.3
      %v336 = vadd.f32 %v320, -0.3
      %v337 = vadd.f32 %v321, -0.3
      %v338 = vadd.f32 %v322, -0.3
      %v339 = vadd.f32 %v323, -0.3
      %v340 = vadd.f32 %v324, -0.3
      %v341 = vadd.f32 %v325, -0.3
      %v342 = vadd.f32 %v326, -0.3
      %v343 = vadd.f32 %v327, -0.3
      %v344 = vmul.f32 %v296, 0.01904762
      %v345 = vmul.f32 %v297, 0.01904762
      %v346 = vmul.f32 %v298, 0.01904762
      %v347 = vmul.f32 %v299, 0.01904762
      %v348 = vmul.f32 %v300, 0.01904762
      %v349 = vmul.f32 %v301, 0.01904762
      %v350 = vmul.f32 %v302, 0.01904762
      %v351 = vmul.f32 %v303, 0.01904762
      %v352 = vmul.f32 %v304, 0.01904762
      %v353 = vmul.f32 %v305, 0.01904762
      %v354 = vmul.f32 %v306, 0.01904762
      %v355 = vmul.f32 %v307, 0.01904762
      %v356 = vmul.f32 %v308, 0.01904762
      %v357 = vmul.f32 %v309, 0.01904762
      %v358 = vmul.f32 %v310, 0.01904762
      %v359 = vmul.f32 %v311, 0.01904762
      %v360 = vadd.f32 %v344, -0.6
      %v361 = vadd.f32 %v345, -0.6
      %v362 = vadd.f32 %v346, -0.6
      %v363 = vadd.f32 %v347, -0.6
      %v364 = vadd.f32 %v348, -0.6
      %v365 = vadd.f32 %v349, -0.6
      %v366 = vadd.f32 %v350, -0.6
      %v367 = vadd.f32 %v351, -0.6
      %v368 = vadd.f32 %v352, -0.6
      %v369 = vadd.f32 %v353, -0.6
      %v370 = vadd.f32 %v354, -0.6
      %v371 = vadd.f32 %v355, -0.6
      %v372 = vadd.f32 %v356, -0.6
      %v373 = vadd.f32 %v357, -0.6
      %v374 = vadd.f32 %v358, -0.6
      %v375 = vadd.f32 %v359, -0.6
      %v376 = vld [vmem:[%s1] sm:$0xff]
      %v377 = vld [vmem:[%s1 + $0x10] sm:$0xff]
      %v378 = vld [vmem:[%s1 + $0x20] sm:$0xff]
      %v379 = vld [vmem:[%s1 + $0x30] sm:$0xff]
      %384 = vrot.lane.b32.xlu0 %v376, 94
      %v385 = vpop.permute.xlu0 %384
      %386 = vrot.lane.b32.xlu0 %v377, 94
      %v387 = vpop.permute.xlu0 %386
      %388 = vrot.lane.b32.xlu0 %v378, 94
      %v389 = vpop.permute.xlu0 %388
      %390 = vrot.lane.b32.xlu0 %v379, 94
      %v391 = vpop.permute.xlu0 %390
      %vm396 = vcmask 261120
      %v397 = vsel %vm396, %v376, 0
      %v399 = vsel %vm396, %v377, 0
      %v401 = vsel %vm396, %v378, 0
      %v403 = vsel %vm396, %v379, 0
      %405 = vmatprep.subr.mxu0 0.0
      %406 = vmatpush1.msra.mxu0 %v211
      %407 = vmatprep.subr.mxu0 0.0
      %408 = vmatpush1.msra.mxu0 %v212
      %409 = vmatprep.subr.mxu0 0.0
      %410 = vmatpush1.msra.mxu0 %v213
      %411 = vmatprep.subr.mxu0 0.0
      %412 = vmatpush1.msra.mxu0 %v214
      %413 = vmatprep.subr.mxu0 0.0
      %414 = vmatpush1.msra.mxu0 0.0
      %415 = vmatprep.subr.mxu0 0.0
      %416 = vmatpush1.msra.mxu0 0.0
      %417 = vmatprep.subr.mxu0 0.0
      %418 = vmatpush1.msra.mxu0 0.0
      %419 = vmatprep.subr.mxu0 0.0
      %420 = vmatpush1.msra.mxu0 0.0
      %421 = vmatprep.subr.mxu0 0.0
      %422 = vmatpush1.msra.mxu0 0.0
      %423 = vmatprep.subr.mxu0 0.0
      %424 = vmatpush1.msra.mxu0 0.0
      %425 = vmatprep.subr.mxu0 0.0
      %426 = vmatpush1.msra.mxu0 0.0
      %427 = vmatprep.subr.mxu0 0.0
      %428 = vmatpush1.msra.mxu0 0.0
      %429 = vmatprep.subr.mxu0 0.0
      %430 = vmatpush1.msra.mxu0 0.0
      %431 = vmatprep.subr.mxu0 0.0
      %432 = vmatpush1.msra.mxu0 0.0
      %433 = vmatprep.subr.mxu0 0.0
      %434 = vmatpush1.msra.mxu0 0.0
      %435 = vmatprep.subr.mxu0 0.0
      %436 = vmatpush1.msra.mxu0 0.0
      %437 = vmatprep.subr.mxu0 0.0
      %438 = vmatpush1.msra.mxu0 0.0
      %439 = vmatprep.subr.mxu0 0.0
      %440 = vmatpush1.msra.mxu0 0.0
      %441 = vmatprep.subr.mxu0 0.0
      %442 = vmatpush1.msra.mxu0 0.0
      %443 = vmatprep.subr.mxu0 0.0
      %444 = vmatpush1.msra.mxu0 0.0
      %445 = vmatprep.subr.mxu0 0.0
      %446 = vmatpush1.msra.mxu0 0.0
      %447 = vmatprep.subr.mxu0 0.0
      %448 = vmatpush1.msra.mxu0 0.0
      %449 = vmatprep.subr.mxu0 0.0
      %450 = vmatpush1.msra.mxu0 0.0
      %451 = vmatprep.subr.mxu0 0.0
      %452 = vmatpush1.msra.mxu0 0.0
      %453 = vmatprep.subr.mxu0 0.0
      %454 = vmatpush1.msra.mxu0 0.0
      %455 = vmatprep.subr.mxu0 0.0
      %456 = vmatpush1.msra.mxu0 0.0
      %457 = vmatprep.subr.mxu0 0.0
      %458 = vmatpush1.msra.mxu0 0.0
      %459 = vmatprep.subr.mxu0 0.0
      %460 = vmatpush1.msra.mxu0 0.0
      %461 = vmatprep.subr.mxu0 0.0
      %462 = vmatpush1.msra.mxu0 0.0
      %463 = vmatprep.subr.mxu0 0.0
      %464 = vmatpush1.msra.mxu0 0.0
      %465 = vmatprep.subr.mxu0 0.0
      %466 = vmatpush1.msra.mxu0 0.0
      %467 = vmatprep.subr.mxu0 0.0
      %468 = vmatpush1.msra.mxu0 0.0
      %469 = vmatprep.mubr.f32.mxu0 0.0
      %470 = vmatmul.mubr.f32.gmra.mrb[0].mxu0 %v397
      %v471 = vpop.f32.mrb[0].mxu0
      %v472 = vadd.f32 %v385, %v471
      %v473 = vpop.f32.mrb[0].mxu0
      %474 = vmatprep.mubr.f32.mxu0 0.0
      %475 = vmatmul.mubr.f32.gmra.mrb[0].mxu0 %v399
      %v476 = vpop.f32.mrb[0].mxu0
      %v477 = vadd.f32 %v387, %v476
      %v478 = vpop.f32.mrb[0].mxu0
      %479 = vmatprep.mubr.f32.mxu0 0.0
      %480 = vmatmul.mubr.f32.gmra.mrb[0].mxu0 %v401
      %v481 = vpop.f32.mrb[0].mxu0
      %v482 = vadd.f32 %v389, %v481
      %v483 = vpop.f32.mrb[0].mxu0
      %484 = vmatprep.mubr.f32.mxu0 0.0
      %485 = vmatmul.mubr.f32.gmra.mrb[0].mxu0 %v403
      %v486 = vpop.f32.mrb[0].mxu0
      %v487 = vadd.f32 %v391, %v486
      %v488 = vpop.f32.mrb[0].mxu0
      %489 = vdwg.mxu0
      %490 = vset.pattern.permute.xlu0 32
      %491 = vperm.xlu0 %490, %v376
      %v492 = vpop.permute.xlu0 %491
      %494 = vset.pattern.permute.xlu0 32
      %495 = vperm.xlu0 %494, %v377
      %v496 = vpop.permute.xlu0 %495
      %498 = vset.pattern.permute.xlu0 32
      %499 = vperm.xlu0 %498, %v378
      %v500 = vpop.permute.xlu0 %499
      %502 = vset.pattern.permute.xlu0 32
      %503 = vperm.xlu0 %502, %v379
      %v504 = vpop.permute.xlu0 %503
      %v506 = vmul.f32 %v492, %v328
      %v507 = vmul.f32 %v492, %v329
      %v508 = vmul.f32 %v492, %v330
      %v509 = vmul.f32 %v492, %v331
      %v510 = vmul.f32 %v492, %v332
      %v511 = vmul.f32 %v492, %v333
      %v512 = vmul.f32 %v492, %v334
      %v513 = vmul.f32 %v492, %v335
      %v514 = vmul.f32 %v492, %v336
      %v515 = vmul.f32 %v492, %v337
      %v516 = vmul.f32 %v492, %v338
      %v517 = vmul.f32 %v492, %v339
      %v518 = vmul.f32 %v492, %v340
      %v519 = vmul.f32 %v492, %v341
      %v520 = vmul.f32 %v492, %v342
      %v521 = vmul.f32 %v492, %v343
      %v522 = vmul.f32 %v496, %v328
      %v523 = vmul.f32 %v496, %v329
      %v524 = vmul.f32 %v496, %v330
      %v525 = vmul.f32 %v496, %v331
      %v526 = vmul.f32 %v496, %v332
      %v527 = vmul.f32 %v496, %v333
      %v528 = vmul.f32 %v496, %v334
      %v529 = vmul.f32 %v496, %v335
      %v530 = vmul.f32 %v496, %v336
      %v531 = vmul.f32 %v496, %v337
      %v532 = vmul.f32 %v496, %v338
      %v533 = vmul.f32 %v496, %v339
      %v534 = vmul.f32 %v496, %v340
      %v535 = vmul.f32 %v496, %v341
      %v536 = vmul.f32 %v496, %v342
      %v537 = vmul.f32 %v496, %v343
      %v538 = vmul.f32 %v500, %v328
      %v539 = vmul.f32 %v500, %v329
      %v540 = vmul.f32 %v500, %v330
      %v541 = vmul.f32 %v500, %v331
      %v542 = vmul.f32 %v500, %v332
      %v543 = vmul.f32 %v500, %v333
      %v544 = vmul.f32 %v500, %v334
      %v545 = vmul.f32 %v500, %v335
      %v546 = vmul.f32 %v500, %v336
      %v547 = vmul.f32 %v500, %v337
      %v548 = vmul.f32 %v500, %v338
      %v549 = vmul.f32 %v500, %v339
      %v550 = vmul.f32 %v500, %v340
      %v551 = vmul.f32 %v500, %v341
      %v552 = vmul.f32 %v500, %v342
      %v553 = vmul.f32 %v500, %v343
      %v554 = vmul.f32 %v504, %v328
      %v555 = vmul.f32 %v504, %v329
      %v556 = vmul.f32 %v504, %v330
      %v557 = vmul.f32 %v504, %v331
      %v558 = vmul.f32 %v504, %v332
      %v559 = vmul.f32 %v504, %v333
      %v560 = vmul.f32 %v504, %v334
      %v561 = vmul.f32 %v504, %v335
      %v562 = vmul.f32 %v504, %v336
      %v563 = vmul.f32 %v504, %v337
      %v564 = vmul.f32 %v504, %v338
      %v565 = vmul.f32 %v504, %v339
      %v566 = vmul.f32 %v504, %v340
      %v567 = vmul.f32 %v504, %v341
      %v568 = vmul.f32 %v504, %v342
      %v569 = vmul.f32 %v504, %v343
      %571 = vset.pattern.permute.xlu0 0
      %572 = vperm.xlu0 %571, %v472
      %v573 = vpop.permute.xlu0 %572
      %576 = vset.pattern.permute.xlu0 0
      %577 = vperm.xlu0 %576, %v477
      %v578 = vpop.permute.xlu0 %577
      %581 = vset.pattern.permute.xlu0 0
      %582 = vperm.xlu0 %581, %v482
      %v583 = vpop.permute.xlu0 %582
      %586 = vset.pattern.permute.xlu0 0
      %587 = vperm.xlu0 %586, %v487
      %v588 = vpop.permute.xlu0 %587
      %v590 = vadd.f32 %v573, %v506
      %v591 = vadd.f32 %v573, %v507
      %v592 = vadd.f32 %v573, %v508
      %v593 = vadd.f32 %v573, %v509
      %v594 = vadd.f32 %v573, %v510
      %v595 = vadd.f32 %v573, %v511
      %v596 = vadd.f32 %v573, %v512
      %v597 = vadd.f32 %v573, %v513
      %v598 = vadd.f32 %v573, %v514
      %v599 = vadd.f32 %v573, %v515
      %v600 = vadd.f32 %v573, %v516
      %v601 = vadd.f32 %v573, %v517
      %v602 = vadd.f32 %v573, %v518
      %v603 = vadd.f32 %v573, %v519
      %v604 = vadd.f32 %v573, %v520
      %v605 = vadd.f32 %v573, %v521
      %v606 = vadd.f32 %v578, %v522
      %v607 = vadd.f32 %v578, %v523
      %v608 = vadd.f32 %v578, %v524
      %v609 = vadd.f32 %v578, %v525
      %v610 = vadd.f32 %v578, %v526
      %v611 = vadd.f32 %v578, %v527
      %v612 = vadd.f32 %v578, %v528
      %v613 = vadd.f32 %v578, %v529
      %v614 = vadd.f32 %v578, %v530
      %v615 = vadd.f32 %v578, %v531
      %v616 = vadd.f32 %v578, %v532
      %v617 = vadd.f32 %v578, %v533
      %v618 = vadd.f32 %v578, %v534
      %v619 = vadd.f32 %v578, %v535
      %v620 = vadd.f32 %v578, %v536
      %v621 = vadd.f32 %v578, %v537
      %v622 = vadd.f32 %v583, %v538
      %v623 = vadd.f32 %v583, %v539
      %v624 = vadd.f32 %v583, %v540
      %v625 = vadd.f32 %v583, %v541
      %v626 = vadd.f32 %v583, %v542
      %v627 = vadd.f32 %v583, %v543
      %v628 = vadd.f32 %v583, %v544
      %v629 = vadd.f32 %v583, %v545
      %v630 = vadd.f32 %v583, %v546
      %v631 = vadd.f32 %v583, %v547
      %v632 = vadd.f32 %v583, %v548
      %v633 = vadd.f32 %v583, %v549
      %v634 = vadd.f32 %v583, %v550
      %v635 = vadd.f32 %v583, %v551
      %v636 = vadd.f32 %v583, %v552
      %v637 = vadd.f32 %v583, %v553
      %v638 = vadd.f32 %v588, %v554
      %v639 = vadd.f32 %v588, %v555
      %v640 = vadd.f32 %v588, %v556
      %v641 = vadd.f32 %v588, %v557
      %v642 = vadd.f32 %v588, %v558
      %v643 = vadd.f32 %v588, %v559
      %v644 = vadd.f32 %v588, %v560
      %v645 = vadd.f32 %v588, %v561
      %v646 = vadd.f32 %v588, %v562
      %v647 = vadd.f32 %v588, %v563
      %v648 = vadd.f32 %v588, %v564
      %v649 = vadd.f32 %v588, %v565
      %v650 = vadd.f32 %v588, %v566
      %v651 = vadd.f32 %v588, %v567
      %v652 = vadd.f32 %v588, %v568
      %v653 = vadd.f32 %v588, %v569
      %654 = vset.pattern.permute.xlu0 33
      %655 = vperm.xlu0 %654, %v376
      %v656 = vpop.permute.xlu0 %655
      %658 = vset.pattern.permute.xlu0 33
      %659 = vperm.xlu0 %658, %v377
      %v660 = vpop.permute.xlu0 %659
      %662 = vset.pattern.permute.xlu0 33
      %663 = vperm.xlu0 %662, %v378
      %v664 = vpop.permute.xlu0 %663
      %666 = vset.pattern.permute.xlu0 33
      %667 = vperm.xlu0 %666, %v379
      %v668 = vpop.permute.xlu0 %667
      %v670 = vmul.f32 %v656, %v360
      %v671 = vmul.f32 %v656, %v361
      %v672 = vmul.f32 %v656, %v362
      %v673 = vmul.f32 %v656, %v363
      %v674 = vmul.f32 %v656, %v364
      %v675 = vmul.f32 %v656, %v365
      %v676 = vmul.f32 %v656, %v366
      %v677 = vmul.f32 %v656, %v367
      %v678 = vmul.f32 %v656, %v368
      %v679 = vmul.f32 %v656, %v369
      %v680 = vmul.f32 %v656, %v370
      %v681 = vmul.f32 %v656, %v371
      %v682 = vmul.f32 %v656, %v372
      %v683 = vmul.f32 %v656, %v373
      %v684 = vmul.f32 %v656, %v374
      %v685 = vmul.f32 %v656, %v375
      %v686 = vmul.f32 %v660, %v360
      %v687 = vmul.f32 %v660, %v361
      %v688 = vmul.f32 %v660, %v362
      %v689 = vmul.f32 %v660, %v363
      %v690 = vmul.f32 %v660, %v364
      %v691 = vmul.f32 %v660, %v365
      %v692 = vmul.f32 %v660, %v366
      %v693 = vmul.f32 %v660, %v367
      %v694 = vmul.f32 %v660, %v368
      %v695 = vmul.f32 %v660, %v369
      %v696 = vmul.f32 %v660, %v370
      %v697 = vmul.f32 %v660, %v371
      %v698 = vmul.f32 %v660, %v372
      %v699 = vmul.f32 %v660, %v373
      %v700 = vmul.f32 %v660, %v374
      %v701 = vmul.f32 %v660, %v375
      %v702 = vmul.f32 %v664, %v360
      %v703 = vmul.f32 %v664, %v361
      %v704 = vmul.f32 %v664, %v362
      %v705 = vmul.f32 %v664, %v363
      %v706 = vmul.f32 %v664, %v364
      %v707 = vmul.f32 %v664, %v365
      %v708 = vmul.f32 %v664, %v366
      %v709 = vmul.f32 %v664, %v367
      %v710 = vmul.f32 %v664, %v368
      %v711 = vmul.f32 %v664, %v369
      %v712 = vmul.f32 %v664, %v370
      %v713 = vmul.f32 %v664, %v371
      %v714 = vmul.f32 %v664, %v372
      %v715 = vmul.f32 %v664, %v373
      %v716 = vmul.f32 %v664, %v374
      %v717 = vmul.f32 %v664, %v375
      %v718 = vmul.f32 %v668, %v360
      %v719 = vmul.f32 %v668, %v361
      %v720 = vmul.f32 %v668, %v362
      %v721 = vmul.f32 %v668, %v363
      %v722 = vmul.f32 %v668, %v364
      %v723 = vmul.f32 %v668, %v365
      %v724 = vmul.f32 %v668, %v366
      %v725 = vmul.f32 %v668, %v367
      %v726 = vmul.f32 %v668, %v368
      %v727 = vmul.f32 %v668, %v369
      %v728 = vmul.f32 %v668, %v370
      %v729 = vmul.f32 %v668, %v371
      %v730 = vmul.f32 %v668, %v372
      %v731 = vmul.f32 %v668, %v373
      %v732 = vmul.f32 %v668, %v374
      %v733 = vmul.f32 %v668, %v375
      %v734 = vadd.f32 %v590, %v670
      %v735 = vadd.f32 %v591, %v671
      %v736 = vadd.f32 %v592, %v672
      %v737 = vadd.f32 %v593, %v673
      %v738 = vadd.f32 %v594, %v674
      %v739 = vadd.f32 %v595, %v675
      %v740 = vadd.f32 %v596, %v676
      %v741 = vadd.f32 %v597, %v677
      %v742 = vadd.f32 %v598, %v678
      %v743 = vadd.f32 %v599, %v679
      %v744 = vadd.f32 %v600, %v680
      %v745 = vadd.f32 %v601, %v681
      %v746 = vadd.f32 %v602, %v682
      %v747 = vadd.f32 %v603, %v683
      %v748 = vadd.f32 %v604, %v684
      %v749 = vadd.f32 %v605, %v685
      %v750 = vadd.f32 %v606, %v686
      %v751 = vadd.f32 %v607, %v687
      %v752 = vadd.f32 %v608, %v688
      %v753 = vadd.f32 %v609, %v689
      %v754 = vadd.f32 %v610, %v690
      %v755 = vadd.f32 %v611, %v691
      %v756 = vadd.f32 %v612, %v692
      %v757 = vadd.f32 %v613, %v693
      %v758 = vadd.f32 %v614, %v694
      %v759 = vadd.f32 %v615, %v695
      %v760 = vadd.f32 %v616, %v696
      %v761 = vadd.f32 %v617, %v697
      %v762 = vadd.f32 %v618, %v698
      %v763 = vadd.f32 %v619, %v699
      %v764 = vadd.f32 %v620, %v700
      %v765 = vadd.f32 %v621, %v701
      %v766 = vadd.f32 %v622, %v702
      %v767 = vadd.f32 %v623, %v703
      %v768 = vadd.f32 %v624, %v704
      %v769 = vadd.f32 %v625, %v705
      %v770 = vadd.f32 %v626, %v706
      %v771 = vadd.f32 %v627, %v707
      %v772 = vadd.f32 %v628, %v708
      %v773 = vadd.f32 %v629, %v709
      %v774 = vadd.f32 %v630, %v710
      %v775 = vadd.f32 %v631, %v711
      %v776 = vadd.f32 %v632, %v712
      %v777 = vadd.f32 %v633, %v713
      %v778 = vadd.f32 %v634, %v714
      %v779 = vadd.f32 %v635, %v715
      %v780 = vadd.f32 %v636, %v716
      %v781 = vadd.f32 %v637, %v717
      %v782 = vadd.f32 %v638, %v718
      %v783 = vadd.f32 %v639, %v719
      %v784 = vadd.f32 %v640, %v720
      %v785 = vadd.f32 %v641, %v721
      %v786 = vadd.f32 %v642, %v722
      %v787 = vadd.f32 %v643, %v723
      %v788 = vadd.f32 %v644, %v724
      %v789 = vadd.f32 %v645, %v725
      %v790 = vadd.f32 %v646, %v726
      %v791 = vadd.f32 %v647, %v727
      %v792 = vadd.f32 %v648, %v728
      %v793 = vadd.f32 %v649, %v729
      %v794 = vadd.f32 %v650, %v730
      %v795 = vadd.f32 %v651, %v731
      %v796 = vadd.f32 %v652, %v732
      %v797 = vadd.f32 %v653, %v733
      %v798 = vmax.f32 %v734, 0.0
      %v799 = vmax.f32 %v735, 0.0
      %v800 = vmax.f32 %v736, 0.0
      %v801 = vmax.f32 %v737, 0.0
      %v802 = vmax.f32 %v738, 0.0
      %v803 = vmax.f32 %v739, 0.0
      %v804 = vmax.f32 %v740, 0.0
      %v805 = vmax.f32 %v741, 0.0
      %v806 = vmax.f32 %v742, 0.0
      %v807 = vmax.f32 %v743, 0.0
      %v808 = vmax.f32 %v744, 0.0
      %v809 = vmax.f32 %v745, 0.0
      %v810 = vmax.f32 %v746, 0.0
      %v811 = vmax.f32 %v747, 0.0
      %v812 = vmax.f32 %v748, 0.0
      %v813 = vmax.f32 %v749, 0.0
      %v814 = vmax.f32 %v750, 0.0
      %v815 = vmax.f32 %v751, 0.0
      %v816 = vmax.f32 %v752, 0.0
      %v817 = vmax.f32 %v753, 0.0
      %v818 = vmax.f32 %v754, 0.0
      %v819 = vmax.f32 %v755, 0.0
      %v820 = vmax.f32 %v756, 0.0
      %v821 = vmax.f32 %v757, 0.0
      %v822 = vmax.f32 %v758, 0.0
      %v823 = vmax.f32 %v759, 0.0
      %v824 = vmax.f32 %v760, 0.0
      %v825 = vmax.f32 %v761, 0.0
      %v826 = vmax.f32 %v762, 0.0
      %v827 = vmax.f32 %v763, 0.0
      %v828 = vmax.f32 %v764, 0.0
      %v829 = vmax.f32 %v765, 0.0
      %v830 = vmax.f32 %v766, 0.0
      %v831 = vmax.f32 %v767, 0.0
      %v832 = vmax.f32 %v768, 0.0
      %v833 = vmax.f32 %v769, 0.0
      %v834 = vmax.f32 %v770, 0.0
      %v835 = vmax.f32 %v771, 0.0
      %v836 = vmax.f32 %v772, 0.0
      %v837 = vmax.f32 %v773, 0.0
      %v838 = vmax.f32 %v774, 0.0
      %v839 = vmax.f32 %v775, 0.0
      %v840 = vmax.f32 %v776, 0.0
      %v841 = vmax.f32 %v777, 0.0
      %v842 = vmax.f32 %v778, 0.0
      %v843 = vmax.f32 %v779, 0.0
      %v844 = vmax.f32 %v780, 0.0
      %v845 = vmax.f32 %v781, 0.0
      %v846 = vmax.f32 %v782, 0.0
      %v847 = vmax.f32 %v783, 0.0
      %v848 = vmax.f32 %v784, 0.0
      %v849 = vmax.f32 %v785, 0.0
      %v850 = vmax.f32 %v786, 0.0
      %v851 = vmax.f32 %v787, 0.0
      %v852 = vmax.f32 %v788, 0.0
      %v853 = vmax.f32 %v789, 0.0
      %v854 = vmax.f32 %v790, 0.0
      %v855 = vmax.f32 %v791, 0.0
      %v856 = vmax.f32 %v792, 0.0
      %v857 = vmax.f32 %v793, 0.0
      %v858 = vmax.f32 %v794, 0.0
      %v859 = vmax.f32 %v795, 0.0
      %v860 = vmax.f32 %v796, 0.0
      %v861 = vmax.f32 %v797, 0.0
      %862 = vset.pattern.permute.xlu0 67
      %863 = vperm.xlu0 %862, %v376
      %v864 = vpop.permute.xlu0 %863
      %866 = vset.pattern.permute.xlu0 67
      %867 = vperm.xlu0 %866, %v377
      %v868 = vpop.permute.xlu0 %867
      %870 = vset.pattern.permute.xlu0 67
      %871 = vperm.xlu0 %870, %v378
      %v872 = vpop.permute.xlu0 %871
      %874 = vset.pattern.permute.xlu0 67
      %875 = vperm.xlu0 %874, %v379
      %v876 = vpop.permute.xlu0 %875
      %878 = vrot.lane.b32.xlu0 %v376, 93
      %v879 = vpop.permute.xlu0 %878
      %880 = vrot.lane.b32.xlu0 %v377, 93
      %v881 = vpop.permute.xlu0 %880
      %882 = vrot.lane.b32.xlu0 %v378, 93
      %v883 = vpop.permute.xlu0 %882
      %884 = vrot.lane.b32.xlu0 %v379, 93
      %v885 = vpop.permute.xlu0 %884
      %v886 = vsel %vm396, %v879, 0
      %v888 = vsel %vm396, %v881, 0
      %v890 = vsel %vm396, %v883, 0
      %v892 = vsel %vm396, %v885, 0
      %894 = vmatprep.subr.mxu0 %v799
      %895 = vmatpush1.msra.mxu0 %v798
      %896 = vmatprep.subr.mxu0 %v815
      %897 = vmatpush1.msra.mxu0 %v814
      %898 = vmatprep.subr.mxu0 %v831
      %899 = vmatpush1.msra.mxu0 %v830
      %900 = vmatprep.subr.mxu0 %v847
      %901 = vmatpush1.msra.mxu0 %v846
      %902 = vmatprep.subr.mxu0 0.0
      %903 = vmatpush1.msra.mxu0 0.0
      %904 = vmatprep.subr.mxu0 0.0
      %905 = vmatpush1.msra.mxu0 0.0
      %906 = vmatprep.subr.mxu0 0.0
      %907 = vmatpush1.msra.mxu0 0.0
      %908 = vmatprep.subr.mxu0 0.0
      %909 = vmatpush1.msra.mxu0 0.0
      %910 = vmatprep.subr.mxu0 0.0
      %911 = vmatpush1.msra.mxu0 0.0
      %912 = vmatprep.subr.mxu0 0.0
      %913 = vmatpush1.msra.mxu0 0.0
      %914 = vmatprep.subr.mxu0 0.0
      %915 = vmatpush1.msra.mxu0 0.0
      %916 = vmatprep.subr.mxu0 0.0
      %917 = vmatpush1.msra.mxu0 0.0
      %918 = vmatprep.subr.mxu0 0.0
      %919 = vmatpush1.msra.mxu0 0.0
      %920 = vmatprep.subr.mxu0 0.0
      %921 = vmatpush1.msra.mxu0 0.0
      %922 = vmatprep.subr.mxu0 0.0
      %923 = vmatpush1.msra.mxu0 0.0
      %924 = vmatprep.subr.mxu0 0.0
      %925 = vmatpush1.msra.mxu0 0.0
      %926 = vmatprep.subr.mxu0 0.0
      %927 = vmatpush1.msra.mxu0 0.0
      %928 = vmatprep.subr.mxu0 0.0
      %929 = vmatpush1.msra.mxu0 0.0
      %930 = vmatprep.subr.mxu0 0.0
      %931 = vmatpush1.msra.mxu0 0.0
      %932 = vmatprep.subr.mxu0 0.0
      %933 = vmatpush1.msra.mxu0 0.0
      %934 = vmatprep.subr.mxu0 0.0
      %935 = vmatpush1.msra.mxu0 0.0
      %936 = vmatprep.subr.mxu0 0.0
      %937 = vmatpush1.msra.mxu0 0.0
      %938 = vmatprep.subr.mxu0 0.0
      %939 = vmatpush1.msra.mxu0 0.0
      %940 = vmatprep.subr.mxu0 0.0
      %941 = vmatpush1.msra.mxu0 0.0
      %942 = vmatprep.subr.mxu0 0.0
      %943 = vmatpush1.msra.mxu0 0.0
      %944 = vmatprep.subr.mxu0 0.0
      %945 = vmatpush1.msra.mxu0 0.0
      %946 = vmatprep.subr.mxu0 0.0
      %947 = vmatpush1.msra.mxu0 0.0
      %948 = vmatprep.subr.mxu0 0.0
      %949 = vmatpush1.msra.mxu0 0.0
      %950 = vmatprep.subr.mxu0 0.0
      %951 = vmatpush1.msra.mxu0 0.0
      %952 = vmatprep.subr.mxu0 0.0
      %953 = vmatpush1.msra.mxu0 0.0
      %954 = vmatprep.subr.mxu0 0.0
      %955 = vmatpush1.msra.mxu0 0.0
      %956 = vmatprep.subr.mxu0 0.0
      %957 = vmatpush1.msra.mxu0 0.0
      %958 = vmatprep.mubr.f32.mxu0 0.0
      %959 = vmatmul.mubr.f32.gmra.mrb[0].mxu0 %v886
      %v960 = vpop.f32.mrb[0].mxu0
      %v961 = vadd.f32 %v864, %v960
      %v962 = vpop.f32.mrb[0].mxu0
      %v963 = vadd.f32 %v864, %v962
      %964 = vmatprep.mubr.f32.mxu0 0.0
      %965 = vmatmul.mubr.f32.gmra.mrb[0].mxu0 %v888
      %v966 = vpop.f32.mrb[0].mxu0
      %v967 = vadd.f32 %v868, %v966
      %v968 = vpop.f32.mrb[0].mxu0
      %v969 = vadd.f32 %v868, %v968
      %970 = vmatprep.mubr.f32.mxu0 0.0
      %971 = vmatmul.mubr.f32.gmra.mrb[0].mxu0 %v890
      %v972 = vpop.f32.mrb[0].mxu0
      %v973 = vadd.f32 %v872, %v972
      %v974 = vpop.f32.mrb[0].mxu0
      %v975 = vadd.f32 %v872, %v974
      %976 = vmatprep.mubr.f32.mxu0 0.0
      %977 = vmatmul.mubr.f32.gmra.mrb[0].mxu0 %v892
      %v978 = vpop.f32.mrb[0].mxu0
      %v979 = vadd.f32 %v876, %v978
      %v980 = vpop.f32.mrb[0].mxu0
      %v981 = vadd.f32 %v876, %v980
      %982 = vdwg.mxu0
      %983 = vmatprep.subr.mxu0 %v801
      %984 = vmatpush1.msra.mxu0 %v800
      %985 = vmatprep.subr.mxu0 %v817
      %986 = vmatpush1.msra.mxu0 %v816
      %987 = vmatprep.subr.mxu0 %v833
      %988 = vmatpush1.msra.mxu0 %v832
      %989 = vmatprep.subr.mxu0 %v849
      %990 = vmatpush1.msra.mxu0 %v848
      %991 = vmatprep.subr.mxu0 0.0
      %992 = vmatpush1.msra.mxu0 0.0
      %993 = vmatprep.subr.mxu0 0.0
      %994 = vmatpush1.msra.mxu0 0.0
      %995 = vmatprep.subr.mxu0 0.0
      %996 = vmatpush1.msra.mxu0 0.0
      %997 = vmatprep.subr.mxu0 0.0
      %998 = vmatpush1.msra.mxu0 0.0
      %999 = vmatprep.subr.mxu0 0.0
      %1000 = vmatpush1.msra.mxu0 0.0
      %1001 = vmatprep.subr.mxu0 0.0
      %1002 = vmatpush1.msra.mxu0 0.0
      %1003 = vmatprep.subr.mxu0 0.0
      %1004 = vmatpush1.msra.mxu0 0.0
      %1005 = vmatprep.subr.mxu0 0.0
      %1006 = vmatpush1.msra.mxu0 0.0
      %1007 = vmatprep.subr.mxu0 0.0
      %1008 = vmatpush1.msra.mxu0 0.0
      %1009 = vmatprep.subr.mxu0 0.0
      %1010 = vmatpush1.msra.mxu0 0.0
      %1011 = vmatprep.subr.mxu0 0.0
      %1012 = vmatpush1.msra.mxu0 0.0
      %1013 = vmatprep.subr.mxu0 0.0
      %1014 = vmatpush1.msra.mxu0 0.0
      %1015 = vmatprep.subr.mxu0 0.0
      %1016 = vmatpush1.msra.mxu0 0.0
      %1017 = vmatprep.subr.mxu0 0.0
      %1018 = vmatpush1.msra.mxu0 0.0
      %1019 = vmatprep.subr.mxu0 0.0
      %1020 = vmatpush1.msra.mxu0 0.0
      %1021 = vmatprep.subr.mxu0 0.0
      %1022 = vmatpush1.msra.mxu0 0.0
      %1023 = vmatprep.subr.mxu0 0.0
      %1024 = vmatpush1.msra.mxu0 0.0
      %1025 = vmatprep.subr.mxu0 0.0
      %1026 = vmatpush1.msra.mxu0 0.0
      %1027 = vmatprep.subr.mxu0 0.0
      %1028 = vmatpush1.msra.mxu0 0.0
      %1029 = vmatprep.subr.mxu0 0.0
      %1030 = vmatpush1.msra.mxu0 0.0
      %1031 = vmatprep.subr.mxu0 0.0
      %1032 = vmatpush1.msra.mxu0 0.0
      %1033 = vmatprep.subr.mxu0 0.0
      %1034 = vmatpush1.msra.mxu0 0.0
      %1035 = vmatprep.subr.mxu0 0.0
      %1036 = vmatpush1.msra.mxu0 0.0
      %1037 = vmatprep.subr.mxu0 0.0
      %1038 = vmatpush1.msra.mxu0 0.0
      %1039 = vmatprep.subr.mxu0 0.0
      %1040 = vmatpush1.msra.mxu0 0.0
      %1041 = vmatprep.subr.mxu0 0.0
      %1042 = vmatpush1.msra.mxu0 0.0
      %1043 = vmatprep.subr.mxu0 0.0
      %1044 = vmatpush1.msra.mxu0 0.0
      %1045 = vmatprep.subr.mxu0 0.0
      %1046 = vmatpush1.msra.mxu0 0.0
      %1047 = vmatprep.mubr.f32.mxu0 0.0
      %1048 = vmatmul.mubr.f32.gmra.mrb[0].mxu0 %v886
      %v1049 = vpop.f32.mrb[0].mxu0
      %v1050 = vadd.f32 %v864, %v1049
      %v1051 = vpop.f32.mrb[0].mxu0
      %v1052 = vadd.f32 %v864, %v1051
      %1053 = vmatprep.mubr.f32.mxu0 0.0
      %1054 = vmatmul.mubr.f32.gmra.mrb[0].mxu0 %v888
      %v1055 = vpop.f32.mrb[0].mxu0
      %v1056 = vadd.f32 %v868, %v1055
      %v1057 = vpop.f32.mrb[0].mxu0
      %v1058 = vadd.f32 %v868, %v1057
      %1059 = vmatprep.mubr.f32.mxu0 0.0
      %1060 = vmatmul.mubr.f32.gmra.mrb[0].mxu0 %v890
      %v1061 = vpop.f32.mrb[0].mxu0
      %v1062 = vadd.f32 %v872, %v1061
      %v1063 = vpop.f32.mrb[0].mxu0
      %v1064 = vadd.f32 %v872, %v1063
      %1065 = vmatprep.mubr.f32.mxu0 0.0
      %1066 = vmatmul.mubr.f32.gmra.mrb[0].mxu0 %v892
      %v1067 = vpop.f32.mrb[0].mxu0
      %v1068 = vadd.f32 %v876, %v1067
      %v1069 = vpop.f32.mrb[0].mxu0
      %v1070 = vadd.f32 %v876, %v1069
      %1071 = vdwg.mxu0
      %1072 = vmatprep.subr.mxu0 %v803
      %1073 = vmatpush1.msra.mxu0 %v802
      %1074 = vmatprep.subr.mxu0 %v819
      %1075 = vmatpush1.msra.mxu0 %v818
      %1076 = vmatprep.subr.mxu0 %v835
      %1077 = vmatpush1.msra.mxu0 %v834
      %1078 = vmatprep.subr.mxu0 %v851
      %1079 = vmatpush1.msra.mxu0 %v850
      %1080 = vmatprep.subr.mxu0 0.0
      %1081 = vmatpush1.msra.mxu0 0.0
      %1082 = vmatprep.subr.mxu0 0.0
      %1083 = vmatpush1.msra.mxu0 0.0
      %1084 = vmatprep.subr.mxu0 0.0
      %1085 = vmatpush1.msra.mxu0 0.0
      %1086 = vmatprep.subr.mxu0 0.0
      %1087 = vmatpush1.msra.mxu0 0.0
      %1088 = vmatprep.subr.mxu0 0.0
      %1089 = vmatpush1.msra.mxu0 0.0
      %1090 = vmatprep.subr.mxu0 0.0
      %1091 = vmatpush1.msra.mxu0 0.0
      %1092 = vmatprep.subr.mxu0 0.0
      %1093 = vmatpush1.msra.mxu0 0.0
      %1094 = vmatprep.subr.mxu0 0.0
      %1095 = vmatpush1.msra.mxu0 0.0
      %1096 = vmatprep.subr.mxu0 0.0
      %1097 = vmatpush1.msra.mxu0 0.0
      %1098 = vmatprep.subr.mxu0 0.0
      %1099 = vmatpush1.msra.mxu0 0.0
      %1100 = vmatprep.subr.mxu0 0.0
      %1101 = vmatpush1.msra.mxu0 0.0
      %1102 = vmatprep.subr.mxu0 0.0
      %1103 = vmatpush1.msra.mxu0 0.0
      %1104 = vmatprep.subr.mxu0 0.0
      %1105 = vmatpush1.msra.mxu0 0.0
      %1106 = vmatprep.subr.mxu0 0.0
      %1107 = vmatpush1.msra.mxu0 0.0
      %1108 = vmatprep.subr.mxu0 0.0
      %1109 = vmatpush1.msra.mxu0 0.0
      %1110 = vmatprep.subr.mxu0 0.0
      %1111 = vmatpush1.msra.mxu0 0.0
      %1112 = vmatprep.subr.mxu0 0.0
      %1113 = vmatpush1.msra.mxu0 0.0
      %1114 = vmatprep.subr.mxu0 0.0
      %1115 = vmatpush1.msra.mxu0 0.0
      %1116 = vmatprep.subr.mxu0 0.0
      %1117 = vmatpush1.msra.mxu0 0.0
      %1118 = vmatprep.subr.mxu0 0.0
      %1119 = vmatpush1.msra.mxu0 0.0
      %1120 = vmatprep.subr.mxu0 0.0
      %1121 = vmatpush1.msra.mxu0 0.0
      %1122 = vmatprep.subr.mxu0 0.0
      %1123 = vmatpush1.msra.mxu0 0.0
      %1124 = vmatprep.subr.mxu0 0.0
      %1125 = vmatpush1.msra.mxu0 0.0
      %1126 = vmatprep.subr.mxu0 0.0
      %1127 = vmatpush1.msra.mxu0 0.0
      %1128 = vmatprep.subr.mxu0 0.0
      %1129 = vmatpush1.msra.mxu0 0.0
      %1130 = vmatprep.subr.mxu0 0.0
      %1131 = vmatpush1.msra.mxu0 0.0
      %1132 = vmatprep.subr.mxu0 0.0
      %1133 = vmatpush1.msra.mxu0 0.0
      %1134 = vmatprep.subr.mxu0 0.0
      %1135 = vmatpush1.msra.mxu0 0.0
      %1136 = vmatprep.mubr.f32.mxu0 0.0
      %1137 = vmatmul.mubr.f32.gmra.mrb[0].mxu0 %v886
      %v1138 = vpop.f32.mrb[0].mxu0
      %v1139 = vadd.f32 %v864, %v1138
      %v1140 = vpop.f32.mrb[0].mxu0
      %v1141 = vadd.f32 %v864, %v1140
      %1142 = vmatprep.mubr.f32.mxu0 0.0
      %1143 = vmatmul.mubr.f32.gmra.mrb[0].mxu0 %v888
      %v1144 = vpop.f32.mrb[0].mxu0
      %v1145 = vadd.f32 %v868, %v1144
      %v1146 = vpop.f32.mrb[0].mxu0
      %v1147 = vadd.f32 %v868, %v1146
      %1148 = vmatprep.mubr.f32.mxu0 0.0
      %1149 = vmatmul.mubr.f32.gmra.mrb[0].mxu0 %v890
      %v1150 = vpop.f32.mrb[0].mxu0
      %v1151 = vadd.f32 %v872, %v1150
      %v1152 = vpop.f32.mrb[0].mxu0
      %v1153 = vadd.f32 %v872, %v1152
      %1154 = vmatprep.mubr.f32.mxu0 0.0
      %1155 = vmatmul.mubr.f32.gmra.mrb[0].mxu0 %v892
      %v1156 = vpop.f32.mrb[0].mxu0
      %v1157 = vadd.f32 %v876, %v1156
      %v1158 = vpop.f32.mrb[0].mxu0
      %v1159 = vadd.f32 %v876, %v1158
      %1160 = vdwg.mxu0
      %1161 = vmatprep.subr.mxu0 %v805
      %1162 = vmatpush1.msra.mxu0 %v804
      %1163 = vmatprep.subr.mxu0 %v821
      %1164 = vmatpush1.msra.mxu0 %v820
      %1165 = vmatprep.subr.mxu0 %v837
      %1166 = vmatpush1.msra.mxu0 %v836
      %1167 = vmatprep.subr.mxu0 %v853
      %1168 = vmatpush1.msra.mxu0 %v852
      %1169 = vmatprep.subr.mxu0 0.0
      %1170 = vmatpush1.msra.mxu0 0.0
      %1171 = vmatprep.subr.mxu0 0.0
      %1172 = vmatpush1.msra.mxu0 0.0
      %1173 = vmatprep.subr.mxu0 0.0
      %1174 = vmatpush1.msra.mxu0 0.0
      %1175 = vmatprep.subr.mxu0 0.0
      %1176 = vmatpush1.msra.mxu0 0.0
      %1177 = vmatprep.subr.mxu0 0.0
      %1178 = vmatpush1.msra.mxu0 0.0
      %1179 = vmatprep.subr.mxu0 0.0
      %1180 = vmatpush1.msra.mxu0 0.0
      %1181 = vmatprep.subr.mxu0 0.0
      %1182 = vmatpush1.msra.mxu0 0.0
      %1183 = vmatprep.subr.mxu0 0.0
      %1184 = vmatpush1.msra.mxu0 0.0
      %1185 = vmatprep.subr.mxu0 0.0
      %1186 = vmatpush1.msra.mxu0 0.0
      %1187 = vmatprep.subr.mxu0 0.0
      %1188 = vmatpush1.msra.mxu0 0.0
      %1189 = vmatprep.subr.mxu0 0.0
      %1190 = vmatpush1.msra.mxu0 0.0
      %1191 = vmatprep.subr.mxu0 0.0
      %1192 = vmatpush1.msra.mxu0 0.0
      %1193 = vmatprep.subr.mxu0 0.0
      %1194 = vmatpush1.msra.mxu0 0.0
      %1195 = vmatprep.subr.mxu0 0.0
      %1196 = vmatpush1.msra.mxu0 0.0
      %1197 = vmatprep.subr.mxu0 0.0
      %1198 = vmatpush1.msra.mxu0 0.0
      %1199 = vmatprep.subr.mxu0 0.0
      %1200 = vmatpush1.msra.mxu0 0.0
      %1201 = vmatprep.subr.mxu0 0.0
      %1202 = vmatpush1.msra.mxu0 0.0
      %1203 = vmatprep.subr.mxu0 0.0
      %1204 = vmatpush1.msra.mxu0 0.0
      %1205 = vmatprep.subr.mxu0 0.0
      %1206 = vmatpush1.msra.mxu0 0.0
      %1207 = vmatprep.subr.mxu0 0.0
      %1208 = vmatpush1.msra.mxu0 0.0
      %1209 = vmatprep.subr.mxu0 0.0
      %1210 = vmatpush1.msra.mxu0 0.0
      %1211 = vmatprep.subr.mxu0 0.0
      %1212 = vmatpush1.msra.mxu0 0.0
      %1213 = vmatprep.subr.mxu0 0.0
      %1214 = vmatpush1.msra.mxu0 0.0
      %1215 = vmatprep.subr.mxu0 0.0
      %1216 = vmatpush1.msra.mxu0 0.0
      %1217 = vmatprep.subr.mxu0 0.0
      %1218 = vmatpush1.msra.mxu0 0.0
      %1219 = vmatprep.subr.mxu0 0.0
      %1220 = vmatpush1.msra.mxu0 0.0
      %1221 = vmatprep.subr.mxu0 0.0
      %1222 = vmatpush1.msra.mxu0 0.0
      %1223 = vmatprep.subr.mxu0 0.0
      %1224 = vmatpush1.msra.mxu0 0.0
      %1225 = vmatprep.mubr.f32.mxu0 0.0
      %1226 = vmatmul.mubr.f32.gmra.mrb[0].mxu0 %v886
      %v1227 = vpop.f32.mrb[0].mxu0
      %v1228 = vadd.f32 %v864, %v1227
      %v1229 = vpop.f32.mrb[0].mxu0
      %v1230 = vadd.f32 %v864, %v1229
      %1231 = vmatprep.mubr.f32.mxu0 0.0
      %1232 = vmatmul.mubr.f32.gmra.mrb[0].mxu0 %v888
      %v1233 = vpop.f32.mrb[0].mxu0
      %v1234 = vadd.f32 %v868, %v1233
      %v1235 = vpop.f32.mrb[0].mxu0
      %v1236 = vadd.f32 %v868, %v1235
      %1237 = vmatprep.mubr.f32.mxu0 0.0
      %1238 = vmatmul.mubr.f32.gmra.mrb[0].mxu0 %v890
      %v1239 = vpop.f32.mrb[0].mxu0
      %v1240 = vadd.f32 %v872, %v1239
      %v1241 = vpop.f32.mrb[0].mxu0
      %v1242 = vadd.f32 %v872, %v1241
      %1243 = vmatprep.mubr.f32.mxu0 0.0
      %1244 = vmatmul.mubr.f32.gmra.mrb[0].mxu0 %v892
      %v1245 = vpop.f32.mrb[0].mxu0
      %v1246 = vadd.f32 %v876, %v1245
      %v1247 = vpop.f32.mrb[0].mxu0
      %v1248 = vadd.f32 %v876, %v1247
      %1249 = vdwg.mxu0
      %1250 = vmatprep.subr.mxu0 %v807
      %1251 = vmatpush1.msra.mxu0 %v806
      %1252 = vmatprep.subr.mxu0 %v823
      %1253 = vmatpush1.msra.mxu0 %v822
      %1254 = vmatprep.subr.mxu0 %v839
      %1255 = vmatpush1.msra.mxu0 %v838
      %1256 = vmatprep.subr.mxu0 %v855
      %1257 = vmatpush1.msra.mxu0 %v854
      %1258 = vmatprep.subr.mxu0 0.0
      %1259 = vmatpush1.msra.mxu0 0.0
      %1260 = vmatprep.subr.mxu0 0.0
      %1261 = vmatpush1.msra.mxu0 0.0
      %1262 = vmatprep.subr.mxu0 0.0
      %1263 = vmatpush1.msra.mxu0 0.0
      %1264 = vmatprep.subr.mxu0 0.0
      %1265 = vmatpush1.msra.mxu0 0.0
      %1266 = vmatprep.subr.mxu0 0.0
      %1267 = vmatpush1.msra.mxu0 0.0
      %1268 = vmatprep.subr.mxu0 0.0
      %1269 = vmatpush1.msra.mxu0 0.0
      %1270 = vmatprep.subr.mxu0 0.0
      %1271 = vmatpush1.msra.mxu0 0.0
      %1272 = vmatprep.subr.mxu0 0.0
      %1273 = vmatpush1.msra.mxu0 0.0
      %1274 = vmatprep.subr.mxu0 0.0
      %1275 = vmatpush1.msra.mxu0 0.0
      %1276 = vmatprep.subr.mxu0 0.0
      %1277 = vmatpush1.msra.mxu0 0.0
      %1278 = vmatprep.subr.mxu0 0.0
      %1279 = vmatpush1.msra.mxu0 0.0
      %1280 = vmatprep.subr.mxu0 0.0
      %1281 = vmatpush1.msra.mxu0 0.0
      %1282 = vmatprep.subr.mxu0 0.0
      %1283 = vmatpush1.msra.mxu0 0.0
      %1284 = vmatprep.subr.mxu0 0.0
      %1285 = vmatpush1.msra.mxu0 0.0
      %1286 = vmatprep.subr.mxu0 0.0
      %1287 = vmatpush1.msra.mxu0 0.0
      %1288 = vmatprep.subr.mxu0 0.0
      %1289 = vmatpush1.msra.mxu0 0.0
      %1290 = vmatprep.subr.mxu0 0.0
      %1291 = vmatpush1.msra.mxu0 0.0
      %1292 = vmatprep.subr.mxu0 0.0
      %1293 = vmatpush1.msra.mxu0 0.0
      %1294 = vmatprep.subr.mxu0 0.0
      %1295 = vmatpush1.msra.mxu0 0.0
      %1296 = vmatprep.subr.mxu0 0.0
      %1297 = vmatpush1.msra.mxu0 0.0
      %1298 = vmatprep.subr.mxu0 0.0
      %1299 = vmatpush1.msra.mxu0 0.0
      %1300 = vmatprep.subr.mxu0 0.0
      %1301 = vmatpush1.msra.mxu0 0.0
      %1302 = vmatprep.subr.mxu0 0.0
      %1303 = vmatpush1.msra.mxu0 0.0
      %1304 = vmatprep.subr.mxu0 0.0
      %1305 = vmatpush1.msra.mxu0 0.0
      %1306 = vmatprep.subr.mxu0 0.0
      %1307 = vmatpush1.msra.mxu0 0.0
      %1308 = vmatprep.subr.mxu0 0.0
      %1309 = vmatpush1.msra.mxu0 0.0
      %1310 = vmatprep.subr.mxu0 0.0
      %1311 = vmatpush1.msra.mxu0 0.0
      %1312 = vmatprep.subr.mxu0 0.0
      %1313 = vmatpush1.msra.mxu0 0.0
      %1314 = vmatprep.mubr.f32.mxu0 0.0
      %1315 = vmatmul.mubr.f32.gmra.mrb[0].mxu0 %v886
      %v1316 = vpop.f32.mrb[0].mxu0
      %v1317 = vadd.f32 %v864, %v1316
      %v1318 = vpop.f32.mrb[0].mxu0
      %v1319 = vadd.f32 %v864, %v1318
      %1320 = vmatprep.mubr.f32.mxu0 0.0
      %1321 = vmatmul.mubr.f32.gmra.mrb[0].mxu0 %v888
      %v1322 = vpop.f32.mrb[0].mxu0
      %v1323 = vadd.f32 %v868, %v1322
      %v1324 = vpop.f32.mrb[0].mxu0
      %v1325 = vadd.f32 %v868, %v1324
      %1326 = vmatprep.mubr.f32.mxu0 0.0
      %1327 = vmatmul.mubr.f32.gmra.mrb[0].mxu0 %v890
      %v1328 = vpop.f32.mrb[0].mxu0
      %v1329 = vadd.f32 %v872, %v1328
      %v1330 = vpop.f32.mrb[0].mxu0
      %v1331 = vadd.f32 %v872, %v1330
      %1332 = vmatprep.mubr.f32.mxu0 0.0
      %1333 = vmatmul.mubr.f32.gmra.mrb[0].mxu0 %v892
      %v1334 = vpop.f32.mrb[0].mxu0
      %v1335 = vadd.f32 %v876, %v1334
      %v1336 = vpop.f32.mrb[0].mxu0
      %v1337 = vadd.f32 %v876, %v1336
      %1338 = vdwg.mxu0
      %1339 = vmatprep.subr.mxu0 %v809
      %1340 = vmatpush1.msra.mxu0 %v808
      %1341 = vmatprep.subr.mxu0 %v825
      %1342 = vmatpush1.msra.mxu0 %v824
      %1343 = vmatprep.subr.mxu0 %v841
      %1344 = vmatpush1.msra.mxu0 %v840
      %1345 = vmatprep.subr.mxu0 %v857
      %1346 = vmatpush1.msra.mxu0 %v856
      %1347 = vmatprep.subr.mxu0 0.0
      %1348 = vmatpush1.msra.mxu0 0.0
      %1349 = vmatprep.subr.mxu0 0.0
      %1350 = vmatpush1.msra.mxu0 0.0
      %1351 = vmatprep.subr.mxu0 0.0
      %1352 = vmatpush1.msra.mxu0 0.0
      %1353 = vmatprep.subr.mxu0 0.0
      %1354 = vmatpush1.msra.mxu0 0.0
      %1355 = vmatprep.subr.mxu0 0.0
      %1356 = vmatpush1.msra.mxu0 0.0
      %1357 = vmatprep.subr.mxu0 0.0
      %1358 = vmatpush1.msra.mxu0 0.0
      %1359 = vmatprep.subr.mxu0 0.0
      %1360 = vmatpush1.msra.mxu0 0.0
      %1361 = vmatprep.subr.mxu0 0.0
      %1362 = vmatpush1.msra.mxu0 0.0
      %1363 = vmatprep.subr.mxu0 0.0
      %1364 = vmatpush1.msra.mxu0 0.0
      %1365 = vmatprep.subr.mxu0 0.0
      %1366 = vmatpush1.msra.mxu0 0.0
      %1367 = vmatprep.subr.mxu0 0.0
      %1368 = vmatpush1.msra.mxu0 0.0
      %1369 = vmatprep.subr.mxu0 0.0
      %1370 = vmatpush1.msra.mxu0 0.0
      %1371 = vmatprep.subr.mxu0 0.0
      %1372 = vmatpush1.msra.mxu0 0.0
      %1373 = vmatprep.subr.mxu0 0.0
      %1374 = vmatpush1.msra.mxu0 0.0
      %1375 = vmatprep.subr.mxu0 0.0
      %1376 = vmatpush1.msra.mxu0 0.0
      %1377 = vmatprep.subr.mxu0 0.0
      %1378 = vmatpush1.msra.mxu0 0.0
      %1379 = vmatprep.subr.mxu0 0.0
      %1380 = vmatpush1.msra.mxu0 0.0
      %1381 = vmatprep.subr.mxu0 0.0
      %1382 = vmatpush1.msra.mxu0 0.0
      %1383 = vmatprep.subr.mxu0 0.0
      %1384 = vmatpush1.msra.mxu0 0.0
      %1385 = vmatprep.subr.mxu0 0.0
      %1386 = vmatpush1.msra.mxu0 0.0
      %1387 = vmatprep.subr.mxu0 0.0
      %1388 = vmatpush1.msra.mxu0 0.0
      %1389 = vmatprep.subr.mxu0 0.0
      %1390 = vmatpush1.msra.mxu0 0.0
      %1391 = vmatprep.subr.mxu0 0.0
      %1392 = vmatpush1.msra.mxu0 0.0
      %1393 = vmatprep.subr.mxu0 0.0
      %1394 = vmatpush1.msra.mxu0 0.0
      %1395 = vmatprep.subr.mxu0 0.0
      %1396 = vmatpush1.msra.mxu0 0.0
      %1397 = vmatprep.subr.mxu0 0.0
      %1398 = vmatpush1.msra.mxu0 0.0
      %1399 = vmatprep.subr.mxu0 0.0
      %1400 = vmatpush1.msra.mxu0 0.0
      %1401 = vmatprep.subr.mxu0 0.0
      %1402 = vmatpush1.msra.mxu0 0.0
      %1403 = vmatprep.mubr.f32.mxu0 0.0
      %1404 = vmatmul.mubr.f32.gmra.mrb[0].mxu0 %v886
      %v1405 = vpop.f32.mrb[0].mxu0
      %v1406 = vadd.f32 %v864, %v1405
      %v1407 = vpop.f32.mrb[0].mxu0
      %v1408 = vadd.f32 %v864, %v1407
      %1409 = vmatprep.mubr.f32.mxu0 0.0
      %1410 = vmatmul.mubr.f32.gmra.mrb[0].mxu0 %v888
      %v1411 = vpop.f32.mrb[0].mxu0
      %v1412 = vadd.f32 %v868, %v1411
      %v1413 = vpop.f32.mrb[0].mxu0
      %v1414 = vadd.f32 %v868, %v1413
      %1415 = vmatprep.mubr.f32.mxu0 0.0
      %1416 = vmatmul.mubr.f32.gmra.mrb[0].mxu0 %v890
      %v1417 = vpop.f32.mrb[0].mxu0
      %v1418 = vadd.f32 %v872, %v1417
      %v1419 = vpop.f32.mrb[0].mxu0
      %v1420 = vadd.f32 %v872, %v1419
      %1421 = vmatprep.mubr.f32.mxu0 0.0
      %1422 = vmatmul.mubr.f32.gmra.mrb[0].mxu0 %v892
      %v1423 = vpop.f32.mrb[0].mxu0
      %v1424 = vadd.f32 %v876, %v1423
      %v1425 = vpop.f32.mrb[0].mxu0
      %v1426 = vadd.f32 %v876, %v1425
      %1427 = vdwg.mxu0
      %1428 = vmatprep.subr.mxu0 %v811
      %1429 = vmatpush1.msra.mxu0 %v810
      %1430 = vmatprep.subr.mxu0 %v827
      %1431 = vmatpush1.msra.mxu0 %v826
      %1432 = vmatprep.subr.mxu0 %v843
      %1433 = vmatpush1.msra.mxu0 %v842
      %1434 = vmatprep.subr.mxu0 %v859
      %1435 = vmatpush1.msra.mxu0 %v858
      %1436 = vmatprep.subr.mxu0 0.0
      %1437 = vmatpush1.msra.mxu0 0.0
      %1438 = vmatprep.subr.mxu0 0.0
      %1439 = vmatpush1.msra.mxu0 0.0
      %1440 = vmatprep.subr.mxu0 0.0
      %1441 = vmatpush1.msra.mxu0 0.0
      %1442 = vmatprep.subr.mxu0 0.0
      %1443 = vmatpush1.msra.mxu0 0.0
      %1444 = vmatprep.subr.mxu0 0.0
      %1445 = vmatpush1.msra.mxu0 0.0
      %1446 = vmatprep.subr.mxu0 0.0
      %1447 = vmatpush1.msra.mxu0 0.0
      %1448 = vmatprep.subr.mxu0 0.0
      %1449 = vmatpush1.msra.mxu0 0.0
      %1450 = vmatprep.subr.mxu0 0.0
      %1451 = vmatpush1.msra.mxu0 0.0
      %1452 = vmatprep.subr.mxu0 0.0
      %1453 = vmatpush1.msra.mxu0 0.0
      %1454 = vmatprep.subr.mxu0 0.0
      %1455 = vmatpush1.msra.mxu0 0.0
      %1456 = vmatprep.subr.mxu0 0.0
      %1457 = vmatpush1.msra.mxu0 0.0
      %1458 = vmatprep.subr.mxu0 0.0
      %1459 = vmatpush1.msra.mxu0 0.0
      %1460 = vmatprep.subr.mxu0 0.0
      %1461 = vmatpush1.msra.mxu0 0.0
      %1462 = vmatprep.subr.mxu0 0.0
      %1463 = vmatpush1.msra.mxu0 0.0
      %1464 = vmatprep.subr.mxu0 0.0
      %1465 = vmatpush1.msra.mxu0 0.0
      %1466 = vmatprep.subr.mxu0 0.0
      %1467 = vmatpush1.msra.mxu0 0.0
      %1468 = vmatprep.subr.mxu0 0.0
      %1469 = vmatpush1.msra.mxu0 0.0
      %1470 = vmatprep.subr.mxu0 0.0
      %1471 = vmatpush1.msra.mxu0 0.0
      %1472 = vmatprep.subr.mxu0 0.0
      %1473 = vmatpush1.msra.mxu0 0.0
      %1474 = vmatprep.subr.mxu0 0.0
      %1475 = vmatpush1.msra.mxu0 0.0
      %1476 = vmatprep.subr.mxu0 0.0
      %1477 = vmatpush1.msra.mxu0 0.0
      %1478 = vmatprep.subr.mxu0 0.0
      %1479 = vmatpush1.msra.mxu0 0.0
      %1480 = vmatprep.subr.mxu0 0.0
      %1481 = vmatpush1.msra.mxu0 0.0
      %1482 = vmatprep.subr.mxu0 0.0
      %1483 = vmatpush1.msra.mxu0 0.0
      %1484 = vmatprep.subr.mxu0 0.0
      %1485 = vmatpush1.msra.mxu0 0.0
      %1486 = vmatprep.subr.mxu0 0.0
      %1487 = vmatpush1.msra.mxu0 0.0
      %1488 = vmatprep.subr.mxu0 0.0
      %1489 = vmatpush1.msra.mxu0 0.0
      %1490 = vmatprep.subr.mxu0 0.0
      %1491 = vmatpush1.msra.mxu0 0.0
      %1492 = vmatprep.mubr.f32.mxu0 0.0
      %1493 = vmatmul.mubr.f32.gmra.mrb[0].mxu0 %v886
      %v1494 = vpop.f32.mrb[0].mxu0
      %v1495 = vadd.f32 %v864, %v1494
      %v1496 = vpop.f32.mrb[0].mxu0
      %v1497 = vadd.f32 %v864, %v1496
      %1498 = vmatprep.mubr.f32.mxu0 0.0
      %1499 = vmatmul.mubr.f32.gmra.mrb[0].mxu0 %v888
      %v1500 = vpop.f32.mrb[0].mxu0
      %v1501 = vadd.f32 %v868, %v1500
      %v1502 = vpop.f32.mrb[0].mxu0
      %v1503 = vadd.f32 %v868, %v1502
      %1504 = vmatprep.mubr.f32.mxu0 0.0
      %1505 = vmatmul.mubr.f32.gmra.mrb[0].mxu0 %v890
      %v1506 = vpop.f32.mrb[0].mxu0
      %v1507 = vadd.f32 %v872, %v1506
      %v1508 = vpop.f32.mrb[0].mxu0
      %v1509 = vadd.f32 %v872, %v1508
      %1510 = vmatprep.mubr.f32.mxu0 0.0
      %1511 = vmatmul.mubr.f32.gmra.mrb[0].mxu0 %v892
      %v1512 = vpop.f32.mrb[0].mxu0
      %v1513 = vadd.f32 %v876, %v1512
      %v1514 = vpop.f32.mrb[0].mxu0
      %v1515 = vadd.f32 %v876, %v1514
      %1516 = vdwg.mxu0
      %1517 = vmatprep.subr.mxu0 %v813
      %1518 = vmatpush1.msra.mxu0 %v812
      %1519 = vmatprep.subr.mxu0 %v829
      %1520 = vmatpush1.msra.mxu0 %v828
      %1521 = vmatprep.subr.mxu0 %v845
      %1522 = vmatpush1.msra.mxu0 %v844
      %1523 = vmatprep.subr.mxu0 %v861
      %1524 = vmatpush1.msra.mxu0 %v860
      %1525 = vmatprep.subr.mxu0 0.0
      %1526 = vmatpush1.msra.mxu0 0.0
      %1527 = vmatprep.subr.mxu0 0.0
      %1528 = vmatpush1.msra.mxu0 0.0
      %1529 = vmatprep.subr.mxu0 0.0
      %1530 = vmatpush1.msra.mxu0 0.0
      %1531 = vmatprep.subr.mxu0 0.0
      %1532 = vmatpush1.msra.mxu0 0.0
      %1533 = vmatprep.subr.mxu0 0.0
      %1534 = vmatpush1.msra.mxu0 0.0
      %1535 = vmatprep.subr.mxu0 0.0
      %1536 = vmatpush1.msra.mxu0 0.0
      %1537 = vmatprep.subr.mxu0 0.0
      %1538 = vmatpush1.msra.mxu0 0.0
      %1539 = vmatprep.subr.mxu0 0.0
      %1540 = vmatpush1.msra.mxu0 0.0
      %1541 = vmatprep.subr.mxu0 0.0
      %1542 = vmatpush1.msra.mxu0 0.0
      %1543 = vmatprep.subr.mxu0 0.0
      %1544 = vmatpush1.msra.mxu0 0.0
      %1545 = vmatprep.subr.mxu0 0.0
      %1546 = vmatpush1.msra.mxu0 0.0
      %1547 = vmatprep.subr.mxu0 0.0
      %1548 = vmatpush1.msra.mxu0 0.0
      %1549 = vmatprep.subr.mxu0 0.0
      %1550 = vmatpush1.msra.mxu0 0.0
      %1551 = vmatprep.subr.mxu0 0.0
      %1552 = vmatpush1.msra.mxu0 0.0
      %1553 = vmatprep.subr.mxu0 0.0
      %1554 = vmatpush1.msra.mxu0 0.0
      %1555 = vmatprep.subr.mxu0 0.0
      %1556 = vmatpush1.msra.mxu0 0.0
      %1557 = vmatprep.subr.mxu0 0.0
      %1558 = vmatpush1.msra.mxu0 0.0
      %1559 = vmatprep.subr.mxu0 0.0
      %1560 = vmatpush1.msra.mxu0 0.0
      %1561 = vmatprep.subr.mxu0 0.0
      %1562 = vmatpush1.msra.mxu0 0.0
      %1563 = vmatprep.subr.mxu0 0.0
      %1564 = vmatpush1.msra.mxu0 0.0
      %1565 = vmatprep.subr.mxu0 0.0
      %1566 = vmatpush1.msra.mxu0 0.0
      %1567 = vmatprep.subr.mxu0 0.0
      %1568 = vmatpush1.msra.mxu0 0.0
      %1569 = vmatprep.subr.mxu0 0.0
      %1570 = vmatpush1.msra.mxu0 0.0
      %1571 = vmatprep.subr.mxu0 0.0
      %1572 = vmatpush1.msra.mxu0 0.0
      %1573 = vmatprep.subr.mxu0 0.0
      %1574 = vmatpush1.msra.mxu0 0.0
      %1575 = vmatprep.subr.mxu0 0.0
      %1576 = vmatpush1.msra.mxu0 0.0
      %1577 = vmatprep.subr.mxu0 0.0
      %1578 = vmatpush1.msra.mxu0 0.0
      %1579 = vmatprep.subr.mxu0 0.0
      %1580 = vmatpush1.msra.mxu0 0.0
      %1581 = vmatprep.mubr.f32.mxu0 0.0
      %1582 = vmatmul.mubr.f32.gmra.mrb[0].mxu0 %v886
      %v1583 = vpop.f32.mrb[0].mxu0
      %v1584 = vadd.f32 %v864, %v1583
      %v1585 = vpop.f32.mrb[0].mxu0
      %v1586 = vadd.f32 %v864, %v1585
      %1587 = vmatprep.mubr.f32.mxu0 0.0
      %1588 = vmatmul.mubr.f32.gmra.mrb[0].mxu0 %v888
      %v1589 = vpop.f32.mrb[0].mxu0
      %v1590 = vadd.f32 %v868, %v1589
      %v1591 = vpop.f32.mrb[0].mxu0
      %v1592 = vadd.f32 %v868, %v1591
      %1593 = vmatprep.mubr.f32.mxu0 0.0
      %1594 = vmatmul.mubr.f32.gmra.mrb[0].mxu0 %v890
      %v1595 = vpop.f32.mrb[0].mxu0
      %v1596 = vadd.f32 %v872, %v1595
      %v1597 = vpop.f32.mrb[0].mxu0
      %v1598 = vadd.f32 %v872, %v1597
      %1599 = vmatprep.mubr.f32.mxu0 0.0
      %1600 = vmatmul.mubr.f32.gmra.mrb[0].mxu0 %v892
      %v1601 = vpop.f32.mrb[0].mxu0
      %v1602 = vadd.f32 %v876, %v1601
      %v1603 = vpop.f32.mrb[0].mxu0
      %v1604 = vadd.f32 %v876, %v1603
      %1605 = vdwg.mxu0
      %v1606 = vmax.f32 %v961, 0.0
      %v1607 = vmax.f32 %v963, 0.0
      %v1608 = vmax.f32 %v1050, 0.0
      %v1609 = vmax.f32 %v1052, 0.0
      %v1610 = vmax.f32 %v1139, 0.0
      %v1611 = vmax.f32 %v1141, 0.0
      %v1612 = vmax.f32 %v1228, 0.0
      %v1613 = vmax.f32 %v1230, 0.0
      %v1614 = vmax.f32 %v1317, 0.0
      %v1615 = vmax.f32 %v1319, 0.0
      %v1616 = vmax.f32 %v1406, 0.0
      %v1617 = vmax.f32 %v1408, 0.0
      %v1618 = vmax.f32 %v1495, 0.0
      %v1619 = vmax.f32 %v1497, 0.0
      %v1620 = vmax.f32 %v1584, 0.0
      %v1621 = vmax.f32 %v1586, 0.0
      %v1622 = vmax.f32 %v967, 0.0
      %v1623 = vmax.f32 %v969, 0.0
      %v1624 = vmax.f32 %v1056, 0.0
      %v1625 = vmax.f32 %v1058, 0.0
      %v1626 = vmax.f32 %v1145, 0.0
      %v1627 = vmax.f32 %v1147, 0.0
      %v1628 = vmax.f32 %v1234, 0.0
      %v1629 = vmax.f32 %v1236, 0.0
      %v1630 = vmax.f32 %v1323, 0.0
      %v1631 = vmax.f32 %v1325, 0.0
      %v1632 = vmax.f32 %v1412, 0.0
      %v1633 = vmax.f32 %v1414, 0.0
      %v1634 = vmax.f32 %v1501, 0.0
      %v1635 = vmax.f32 %v1503, 0.0
      %v1636 = vmax.f32 %v1590, 0.0
      %v1637 = vmax.f32 %v1592, 0.0
      %v1638 = vmax.f32 %v973, 0.0
      %v1639 = vmax.f32 %v975, 0.0
      %v1640 = vmax.f32 %v1062, 0.0
      %v1641 = vmax.f32 %v1064, 0.0
      %v1642 = vmax.f32 %v1151, 0.0
      %v1643 = vmax.f32 %v1153, 0.0
      %v1644 = vmax.f32 %v1240, 0.0
      %v1645 = vmax.f32 %v1242, 0.0
      %v1646 = vmax.f32 %v1329, 0.0
      %v1647 = vmax.f32 %v1331, 0.0
      %v1648 = vmax.f32 %v1418, 0.0
      %v1649 = vmax.f32 %v1420, 0.0
      %v1650 = vmax.f32 %v1507, 0.0
      %v1651 = vmax.f32 %v1509, 0.0
      %v1652 = vmax.f32 %v1596, 0.0
      %v1653 = vmax.f32 %v1598, 0.0
      %v1654 = vmax.f32 %v979, 0.0
      %v1655 = vmax.f32 %v981, 0.0
      %v1656 = vmax.f32 %v1068, 0.0
      %v1657 = vmax.f32 %v1070, 0.0
      %v1658 = vmax.f32 %v1157, 0.0
      %v1659 = vmax.f32 %v1159, 0.0
      %v1660 = vmax.f32 %v1246, 0.0
      %v1661 = vmax.f32 %v1248, 0.0
      %v1662 = vmax.f32 %v1335, 0.0
      %v1663 = vmax.f32 %v1337, 0.0
      %v1664 = vmax.f32 %v1424, 0.0
      %v1665 = vmax.f32 %v1426, 0.0
      %v1666 = vmax.f32 %v1513, 0.0
      %v1667 = vmax.f32 %v1515, 0.0
      %v1668 = vmax.f32 %v1602, 0.0
      %v1669 = vmax.f32 %v1604, 0.0
      %v1670 = vld [vmem:[%s2] sm:$0x7]
      %1672 = vset.pattern.permute.xlu0 32
      %1673 = vperm.xlu0 %1672, %v1670
      %v1674 = vpop.permute.xlu0 %1673
      %v1676 = vsel %vm396, %v1670, 0
      %1678 = vmatprep.subr.mxu0 %v1607
      %1679 = vmatpush1.msra.mxu0 %v1606
      %1680 = vmatprep.subr.mxu0 %v1623
      %1681 = vmatpush1.msra.mxu0 %v1622
      %1682 = vmatprep.subr.mxu0 %v1639
      %1683 = vmatpush1.msra.mxu0 %v1638
      %1684 = vmatprep.subr.mxu0 %v1655
      %1685 = vmatpush1.msra.mxu0 %v1654
      %1686 = vmatprep.subr.mxu0 0.0
      %1687 = vmatpush1.msra.mxu0 0.0
      %1688 = vmatprep.subr.mxu0 0.0
      %1689 = vmatpush1.msra.mxu0 0.0
      %1690 = vmatprep.subr.mxu0 0.0
      %1691 = vmatpush1.msra.mxu0 0.0
      %1692 = vmatprep.subr.mxu0 0.0
      %1693 = vmatpush1.msra.mxu0 0.0
      %1694 = vmatprep.subr.mxu0 0.0
      %1695 = vmatpush1.msra.mxu0 0.0
      %1696 = vmatprep.subr.mxu0 0.0
      %1697 = vmatpush1.msra.mxu0 0.0
      %1698 = vmatprep.subr.mxu0 0.0
      %1699 = vmatpush1.msra.mxu0 0.0
      %1700 = vmatprep.subr.mxu0 0.0
      %1701 = vmatpush1.msra.mxu0 0.0
      %1702 = vmatprep.subr.mxu0 0.0
      %1703 = vmatpush1.msra.mxu0 0.0
      %1704 = vmatprep.subr.mxu0 0.0
      %1705 = vmatpush1.msra.mxu0 0.0
      %1706 = vmatprep.subr.mxu0 0.0
      %1707 = vmatpush1.msra.mxu0 0.0
      %1708 = vmatprep.subr.mxu0 0.0
      %1709 = vmatpush1.msra.mxu0 0.0
      %1710 = vmatprep.subr.mxu0 0.0
      %1711 = vmatpush1.msra.mxu0 0.0
      %1712 = vmatprep.subr.mxu0 0.0
      %1713 = vmatpush1.msra.mxu0 0.0
      %1714 = vmatprep.subr.mxu0 0.0
      %1715 = vmatpush1.msra.mxu0 0.0
      %1716 = vmatprep.subr.mxu0 0.0
      %1717 = vmatpush1.msra.mxu0 0.0
      %1718 = vmatprep.subr.mxu0 0.0
      %1719 = vmatpush1.msra.mxu0 0.0
      %1720 = vmatprep.subr.mxu0 0.0
      %1721 = vmatpush1.msra.mxu0 0.0
      %1722 = vmatprep.subr.mxu0 0.0
      %1723 = vmatpush1.msra.mxu0 0.0
      %1724 = vmatprep.subr.mxu0 0.0
      %1725 = vmatpush1.msra.mxu0 0.0
      %1726 = vmatprep.subr.mxu0 0.0
      %1727 = vmatpush1.msra.mxu0 0.0
      %1728 = vmatprep.subr.mxu0 0.0
      %1729 = vmatpush1.msra.mxu0 0.0
      %1730 = vmatprep.subr.mxu0 0.0
      %1731 = vmatpush1.msra.mxu0 0.0
      %1732 = vmatprep.subr.mxu0 0.0
      %1733 = vmatpush1.msra.mxu0 0.0
      %1734 = vmatprep.subr.mxu0 0.0
      %1735 = vmatpush1.msra.mxu0 0.0
      %1736 = vmatprep.subr.mxu0 0.0
      %1737 = vmatpush1.msra.mxu0 0.0
      %1738 = vmatprep.subr.mxu0 0.0
      %1739 = vmatpush1.msra.mxu0 0.0
      %1740 = vmatprep.subr.mxu0 0.0
      %1741 = vmatpush1.msra.mxu0 0.0
      %1742 = vmatprep.mubr.f32.mxu0 0.0
      %1743 = vmatmul.mubr.f32.gmra.mrb[0].mxu0 %v1676
      %v1744 = vpop.f32.mrb[0].mxu0
      %v1745 = vadd.f32 %v1674, %v1744
      %v1746 = vpop.f32.mrb[0].mxu0
      %v1747 = vadd.f32 %v1674, %v1746
      %1748 = vdwg.mxu0
      %1749 = vmatprep.subr.mxu0 %v1609
      %1750 = vmatpush1.msra.mxu0 %v1608
      %1751 = vmatprep.subr.mxu0 %v1625
      %1752 = vmatpush1.msra.mxu0 %v1624
      %1753 = vmatprep.subr.mxu0 %v1641
      %1754 = vmatpush1.msra.mxu0 %v1640
      %1755 = vmatprep.subr.mxu0 %v1657
      %1756 = vmatpush1.msra.mxu0 %v1656
      %1757 = vmatprep.subr.mxu0 0.0
      %1758 = vmatpush1.msra.mxu0 0.0
      %1759 = vmatprep.subr.mxu0 0.0
      %1760 = vmatpush1.msra.mxu0 0.0
      %1761 = vmatprep.subr.mxu0 0.0
      %1762 = vmatpush1.msra.mxu0 0.0
      %1763 = vmatprep.subr.mxu0 0.0
      %1764 = vmatpush1.msra.mxu0 0.0
      %1765 = vmatprep.subr.mxu0 0.0
      %1766 = vmatpush1.msra.mxu0 0.0
      %1767 = vmatprep.subr.mxu0 0.0
      %1768 = vmatpush1.msra.mxu0 0.0
      %1769 = vmatprep.subr.mxu0 0.0
      %1770 = vmatpush1.msra.mxu0 0.0
      %1771 = vmatprep.subr.mxu0 0.0
      %1772 = vmatpush1.msra.mxu0 0.0
      %1773 = vmatprep.subr.mxu0 0.0
      %1774 = vmatpush1.msra.mxu0 0.0
      %1775 = vmatprep.subr.mxu0 0.0
      %1776 = vmatpush1.msra.mxu0 0.0
      %1777 = vmatprep.subr.mxu0 0.0
      %1778 = vmatpush1.msra.mxu0 0.0
      %1779 = vmatprep.subr.mxu0 0.0
      %1780 = vmatpush1.msra.mxu0 0.0
      %1781 = vmatprep.subr.mxu0 0.0
      %1782 = vmatpush1.msra.mxu0 0.0
      %1783 = vmatprep.subr.mxu0 0.0
      %1784 = vmatpush1.msra.mxu0 0.0
      %1785 = vmatprep.subr.mxu0 0.0
      %1786 = vmatpush1.msra.mxu0 0.0
      %1787 = vmatprep.subr.mxu0 0.0
      %1788 = vmatpush1.msra.mxu0 0.0
      %1789 = vmatprep.subr.mxu0 0.0
      %1790 = vmatpush1.msra.mxu0 0.0
      %1791 = vmatprep.subr.mxu0 0.0
      %1792 = vmatpush1.msra.mxu0 0.0
      %1793 = vmatprep.subr.mxu0 0.0
      %1794 = vmatpush1.msra.mxu0 0.0
      %1795 = vmatprep.subr.mxu0 0.0
      %1796 = vmatpush1.msra.mxu0 0.0
      %1797 = vmatprep.subr.mxu0 0.0
      %1798 = vmatpush1.msra.mxu0 0.0
      %1799 = vmatprep.subr.mxu0 0.0
      %1800 = vmatpush1.msra.mxu0 0.0
      %1801 = vmatprep.subr.mxu0 0.0
      %1802 = vmatpush1.msra.mxu0 0.0
      %1803 = vmatprep.subr.mxu0 0.0
      %1804 = vmatpush1.msra.mxu0 0.0
      %1805 = vmatprep.subr.mxu0 0.0
      %1806 = vmatpush1.msra.mxu0 0.0
      %1807 = vmatprep.subr.mxu0 0.0
      %1808 = vmatpush1.msra.mxu0 0.0
      %1809 = vmatprep.subr.mxu0 0.0
      %1810 = vmatpush1.msra.mxu0 0.0
      %1811 = vmatprep.subr.mxu0 0.0
      %1812 = vmatpush1.msra.mxu0 0.0
      %1813 = vmatprep.mubr.f32.mxu0 0.0
      %1814 = vmatmul.mubr.f32.gmra.mrb[0].mxu0 %v1676
      %v1815 = vpop.f32.mrb[0].mxu0
      %v1816 = vadd.f32 %v1674, %v1815
      %v1817 = vpop.f32.mrb[0].mxu0
      %v1818 = vadd.f32 %v1674, %v1817
      %1819 = vdwg.mxu0
      %1820 = vmatprep.subr.mxu0 %v1611
      %1821 = vmatpush1.msra.mxu0 %v1610
      %1822 = vmatprep.subr.mxu0 %v1627
      %1823 = vmatpush1.msra.mxu0 %v1626
      %1824 = vmatprep.subr.mxu0 %v1643
      %1825 = vmatpush1.msra.mxu0 %v1642
      %1826 = vmatprep.subr.mxu0 %v1659
      %1827 = vmatpush1.msra.mxu0 %v1658
      %1828 = vmatprep.subr.mxu0 0.0
      %1829 = vmatpush1.msra.mxu0 0.0
      %1830 = vmatprep.subr.mxu0 0.0
      %1831 = vmatpush1.msra.mxu0 0.0
      %1832 = vmatprep.subr.mxu0 0.0
      %1833 = vmatpush1.msra.mxu0 0.0
      %1834 = vmatprep.subr.mxu0 0.0
      %1835 = vmatpush1.msra.mxu0 0.0
      %1836 = vmatprep.subr.mxu0 0.0
      %1837 = vmatpush1.msra.mxu0 0.0
      %1838 = vmatprep.subr.mxu0 0.0
      %1839 = vmatpush1.msra.mxu0 0.0
      %1840 = vmatprep.subr.mxu0 0.0
      %1841 = vmatpush1.msra.mxu0 0.0
      %1842 = vmatprep.subr.mxu0 0.0
      %1843 = vmatpush1.msra.mxu0 0.0
      %1844 = vmatprep.subr.mxu0 0.0
      %1845 = vmatpush1.msra.mxu0 0.0
      %1846 = vmatprep.subr.mxu0 0.0
      %1847 = vmatpush1.msra.mxu0 0.0
      %1848 = vmatprep.subr.mxu0 0.0
      %1849 = vmatpush1.msra.mxu0 0.0
      %1850 = vmatprep.subr.mxu0 0.0
      %1851 = vmatpush1.msra.mxu0 0.0
      %1852 = vmatprep.subr.mxu0 0.0
      %1853 = vmatpush1.msra.mxu0 0.0
      %1854 = vmatprep.subr.mxu0 0.0
      %1855 = vmatpush1.msra.mxu0 0.0
      %1856 = vmatprep.subr.mxu0 0.0
      %1857 = vmatpush1.msra.mxu0 0.0
      %1858 = vmatprep.subr.mxu0 0.0
      %1859 = vmatpush1.msra.mxu0 0.0
      %1860 = vmatprep.subr.mxu0 0.0
      %1861 = vmatpush1.msra.mxu0 0.0
      %1862 = vmatprep.subr.mxu0 0.0
      %1863 = vmatpush1.msra.mxu0 0.0
      %1864 = vmatprep.subr.mxu0 0.0
      %1865 = vmatpush1.msra.mxu0 0.0
      %1866 = vmatprep.subr.mxu0 0.0
      %1867 = vmatpush1.msra.mxu0 0.0
      %1868 = vmatprep.subr.mxu0 0.0
      %1869 = vmatpush1.msra.mxu0 0.0
      %1870 = vmatprep.subr.mxu0 0.0
      %1871 = vmatpush1.msra.mxu0 0.0
      %1872 = vmatprep.subr.mxu0 0.0
      %1873 = vmatpush1.msra.mxu0 0.0
      %1874 = vmatprep.subr.mxu0 0.0
      %1875 = vmatpush1.msra.mxu0 0.0
      %1876 = vmatprep.subr.mxu0 0.0
      %1877 = vmatpush1.msra.mxu0 0.0
      %1878 = vmatprep.subr.mxu0 0.0
      %1879 = vmatpush1.msra.mxu0 0.0
      %1880 = vmatprep.subr.mxu0 0.0
      %1881 = vmatpush1.msra.mxu0 0.0
      %1882 = vmatprep.subr.mxu0 0.0
      %1883 = vmatpush1.msra.mxu0 0.0
      %1884 = vmatprep.mubr.f32.mxu0 0.0
      %1885 = vmatmul.mubr.f32.gmra.mrb[0].mxu0 %v1676
      %v1886 = vpop.f32.mrb[0].mxu0
      %v1887 = vadd.f32 %v1674, %v1886
      %v1888 = vpop.f32.mrb[0].mxu0
      %v1889 = vadd.f32 %v1674, %v1888
      %1890 = vdwg.mxu0
      %1891 = vmatprep.subr.mxu0 %v1613
      %1892 = vmatpush1.msra.mxu0 %v1612
      %1893 = vmatprep.subr.mxu0 %v1629
      %1894 = vmatpush1.msra.mxu0 %v1628
      %1895 = vmatprep.subr.mxu0 %v1645
      %1896 = vmatpush1.msra.mxu0 %v1644
      %1897 = vmatprep.subr.mxu0 %v1661
      %1898 = vmatpush1.msra.mxu0 %v1660
      %1899 = vmatprep.subr.mxu0 0.0
      %1900 = vmatpush1.msra.mxu0 0.0
      %1901 = vmatprep.subr.mxu0 0.0
      %1902 = vmatpush1.msra.mxu0 0.0
      %1903 = vmatprep.subr.mxu0 0.0
      %1904 = vmatpush1.msra.mxu0 0.0
      %1905 = vmatprep.subr.mxu0 0.0
      %1906 = vmatpush1.msra.mxu0 0.0
      %1907 = vmatprep.subr.mxu0 0.0
      %1908 = vmatpush1.msra.mxu0 0.0
      %1909 = vmatprep.subr.mxu0 0.0
      %1910 = vmatpush1.msra.mxu0 0.0
      %1911 = vmatprep.subr.mxu0 0.0
      %1912 = vmatpush1.msra.mxu0 0.0
      %1913 = vmatprep.subr.mxu0 0.0
      %1914 = vmatpush1.msra.mxu0 0.0
      %1915 = vmatprep.subr.mxu0 0.0
      %1916 = vmatpush1.msra.mxu0 0.0
      %1917 = vmatprep.subr.mxu0 0.0
      %1918 = vmatpush1.msra.mxu0 0.0
      %1919 = vmatprep.subr.mxu0 0.0
      %1920 = vmatpush1.msra.mxu0 0.0
      %1921 = vmatprep.subr.mxu0 0.0
      %1922 = vmatpush1.msra.mxu0 0.0
      %1923 = vmatprep.subr.mxu0 0.0
      %1924 = vmatpush1.msra.mxu0 0.0
      %1925 = vmatprep.subr.mxu0 0.0
      %1926 = vmatpush1.msra.mxu0 0.0
      %1927 = vmatprep.subr.mxu0 0.0
      %1928 = vmatpush1.msra.mxu0 0.0
      %1929 = vmatprep.subr.mxu0 0.0
      %1930 = vmatpush1.msra.mxu0 0.0
      %1931 = vmatprep.subr.mxu0 0.0
      %1932 = vmatpush1.msra.mxu0 0.0
      %1933 = vmatprep.subr.mxu0 0.0
      %1934 = vmatpush1.msra.mxu0 0.0
      %1935 = vmatprep.subr.mxu0 0.0
      %1936 = vmatpush1.msra.mxu0 0.0
      %1937 = vmatprep.subr.mxu0 0.0
      %1938 = vmatpush1.msra.mxu0 0.0
      %1939 = vmatprep.subr.mxu0 0.0
      %1940 = vmatpush1.msra.mxu0 0.0
      %1941 = vmatprep.subr.mxu0 0.0
      %1942 = vmatpush1.msra.mxu0 0.0
      %1943 = vmatprep.subr.mxu0 0.0
      %1944 = vmatpush1.msra.mxu0 0.0
      %1945 = vmatprep.subr.mxu0 0.0
      %1946 = vmatpush1.msra.mxu0 0.0
      %1947 = vmatprep.subr.mxu0 0.0
      %1948 = vmatpush1.msra.mxu0 0.0
      %1949 = vmatprep.subr.mxu0 0.0
      %1950 = vmatpush1.msra.mxu0 0.0
      %1951 = vmatprep.subr.mxu0 0.0
      %1952 = vmatpush1.msra.mxu0 0.0
      %1953 = vmatprep.subr.mxu0 0.0
      %1954 = vmatpush1.msra.mxu0 0.0
      %1955 = vmatprep.mubr.f32.mxu0 0.0
      %1956 = vmatmul.mubr.f32.gmra.mrb[0].mxu0 %v1676
      %v1957 = vpop.f32.mrb[0].mxu0
      %v1958 = vadd.f32 %v1674, %v1957
      %v1959 = vpop.f32.mrb[0].mxu0
      %v1960 = vadd.f32 %v1674, %v1959
      %1961 = vdwg.mxu0
      %1962 = vmatprep.subr.mxu0 %v1615
      %1963 = vmatpush1.msra.mxu0 %v1614
      %1964 = vmatprep.subr.mxu0 %v1631
      %1965 = vmatpush1.msra.mxu0 %v1630
      %1966 = vmatprep.subr.mxu0 %v1647
      %1967 = vmatpush1.msra.mxu0 %v1646
      %1968 = vmatprep.subr.mxu0 %v1663
      %1969 = vmatpush1.msra.mxu0 %v1662
      %1970 = vmatprep.subr.mxu0 0.0
      %1971 = vmatpush1.msra.mxu0 0.0
      %1972 = vmatprep.subr.mxu0 0.0
      %1973 = vmatpush1.msra.mxu0 0.0
      %1974 = vmatprep.subr.mxu0 0.0
      %1975 = vmatpush1.msra.mxu0 0.0
      %1976 = vmatprep.subr.mxu0 0.0
      %1977 = vmatpush1.msra.mxu0 0.0
      %1978 = vmatprep.subr.mxu0 0.0
      %1979 = vmatpush1.msra.mxu0 0.0
      %1980 = vmatprep.subr.mxu0 0.0
      %1981 = vmatpush1.msra.mxu0 0.0
      %1982 = vmatprep.subr.mxu0 0.0
      %1983 = vmatpush1.msra.mxu0 0.0
      %1984 = vmatprep.subr.mxu0 0.0
      %1985 = vmatpush1.msra.mxu0 0.0
      %1986 = vmatprep.subr.mxu0 0.0
      %1987 = vmatpush1.msra.mxu0 0.0
      %1988 = vmatprep.subr.mxu0 0.0
      %1989 = vmatpush1.msra.mxu0 0.0
      %1990 = vmatprep.subr.mxu0 0.0
      %1991 = vmatpush1.msra.mxu0 0.0
      %1992 = vmatprep.subr.mxu0 0.0
      %1993 = vmatpush1.msra.mxu0 0.0
      %1994 = vmatprep.subr.mxu0 0.0
      %1995 = vmatpush1.msra.mxu0 0.0
      %1996 = vmatprep.subr.mxu0 0.0
      %1997 = vmatpush1.msra.mxu0 0.0
      %1998 = vmatprep.subr.mxu0 0.0
      %1999 = vmatpush1.msra.mxu0 0.0
      %2000 = vmatprep.subr.mxu0 0.0
      %2001 = vmatpush1.msra.mxu0 0.0
      %2002 = vmatprep.subr.mxu0 0.0
      %2003 = vmatpush1.msra.mxu0 0.0
      %2004 = vmatprep.subr.mxu0 0.0
      %2005 = vmatpush1.msra.mxu0 0.0
      %2006 = vmatprep.subr.mxu0 0.0
      %2007 = vmatpush1.msra.mxu0 0.0
      %2008 = vmatprep.subr.mxu0 0.0
      %2009 = vmatpush1.msra.mxu0 0.0
      %2010 = vmatprep.subr.mxu0 0.0
      %2011 = vmatpush1.msra.mxu0 0.0
      %2012 = vmatprep.subr.mxu0 0.0
      %2013 = vmatpush1.msra.mxu0 0.0
      %2014 = vmatprep.subr.mxu0 0.0
      %2015 = vmatpush1.msra.mxu0 0.0
      %2016 = vmatprep.subr.mxu0 0.0
      %2017 = vmatpush1.msra.mxu0 0.0
      %2018 = vmatprep.subr.mxu0 0.0
      %2019 = vmatpush1.msra.mxu0 0.0
      %2020 = vmatprep.subr.mxu0 0.0
      %2021 = vmatpush1.msra.mxu0 0.0
      %2022 = vmatprep.subr.mxu0 0.0
      %2023 = vmatpush1.msra.mxu0 0.0
      %2024 = vmatprep.subr.mxu0 0.0
      %2025 = vmatpush1.msra.mxu0 0.0
      %2026 = vmatprep.mubr.f32.mxu0 0.0
      %2027 = vmatmul.mubr.f32.gmra.mrb[0].mxu0 %v1676
      %v2028 = vpop.f32.mrb[0].mxu0
      %v2029 = vadd.f32 %v1674, %v2028
      %v2030 = vpop.f32.mrb[0].mxu0
      %v2031 = vadd.f32 %v1674, %v2030
      %2032 = vdwg.mxu0
      %2033 = vmatprep.subr.mxu0 %v1617
      %2034 = vmatpush1.msra.mxu0 %v1616
      %2035 = vmatprep.subr.mxu0 %v1633
      %2036 = vmatpush1.msra.mxu0 %v1632
      %2037 = vmatprep.subr.mxu0 %v1649
      %2038 = vmatpush1.msra.mxu0 %v1648
      %2039 = vmatprep.subr.mxu0 %v1665
      %2040 = vmatpush1.msra.mxu0 %v1664
      %2041 = vmatprep.subr.mxu0 0.0
      %2042 = vmatpush1.msra.mxu0 0.0
      %2043 = vmatprep.subr.mxu0 0.0
      %2044 = vmatpush1.msra.mxu0 0.0
      %2045 = vmatprep.subr.mxu0 0.0
      %2046 = vmatpush1.msra.mxu0 0.0
      %2047 = vmatprep.subr.mxu0 0.0
      %2048 = vmatpush1.msra.mxu0 0.0
      %2049 = vmatprep.subr.mxu0 0.0
      %2050 = vmatpush1.msra.mxu0 0.0
      %2051 = vmatprep.subr.mxu0 0.0
      %2052 = vmatpush1.msra.mxu0 0.0
      %2053 = vmatprep.subr.mxu0 0.0
      %2054 = vmatpush1.msra.mxu0 0.0
      %2055 = vmatprep.subr.mxu0 0.0
      %2056 = vmatpush1.msra.mxu0 0.0
      %2057 = vmatprep.subr.mxu0 0.0
      %2058 = vmatpush1.msra.mxu0 0.0
      %2059 = vmatprep.subr.mxu0 0.0
      %2060 = vmatpush1.msra.mxu0 0.0
      %2061 = vmatprep.subr.mxu0 0.0
      %2062 = vmatpush1.msra.mxu0 0.0
      %2063 = vmatprep.subr.mxu0 0.0
      %2064 = vmatpush1.msra.mxu0 0.0
      %2065 = vmatprep.subr.mxu0 0.0
      %2066 = vmatpush1.msra.mxu0 0.0
      %2067 = vmatprep.subr.mxu0 0.0
      %2068 = vmatpush1.msra.mxu0 0.0
      %2069 = vmatprep.subr.mxu0 0.0
      %2070 = vmatpush1.msra.mxu0 0.0
      %2071 = vmatprep.subr.mxu0 0.0
      %2072 = vmatpush1.msra.mxu0 0.0
      %2073 = vmatprep.subr.mxu0 0.0
      %2074 = vmatpush1.msra.mxu0 0.0
      %2075 = vmatprep.subr.mxu0 0.0
      %2076 = vmatpush1.msra.mxu0 0.0
      %2077 = vmatprep.subr.mxu0 0.0
      %2078 = vmatpush1.msra.mxu0 0.0
      %2079 = vmatprep.subr.mxu0 0.0
      %2080 = vmatpush1.msra.mxu0 0.0
      %2081 = vmatprep.subr.mxu0 0.0
      %2082 = vmatpush1.msra.mxu0 0.0
      %2083 = vmatprep.subr.mxu0 0.0
      %2084 = vmatpush1.msra.mxu0 0.0
      %2085 = vmatprep.subr.mxu0 0.0
      %2086 = vmatpush1.msra.mxu0 0.0
      %2087 = vmatprep.subr.mxu0 0.0
      %2088 = vmatpush1.msra.mxu0 0.0
      %2089 = vmatprep.subr.mxu0 0.0
      %2090 = vmatpush1.msra.mxu0 0.0
      %2091 = vmatprep.subr.mxu0 0.0
      %2092 = vmatpush1.msra.mxu0 0.0
      %2093 = vmatprep.subr.mxu0 0.0
      %2094 = vmatpush1.msra.mxu0 0.0
      %2095 = vmatprep.subr.mxu0 0.0
      %2096 = vmatpush1.msra.mxu0 0.0
      %2097 = vmatprep.mubr.f32.mxu0 0.0
      %2098 = vmatmul.mubr.f32.gmra.mrb[0].mxu0 %v1676
      %v2099 = vpop.f32.mrb[0].mxu0
      %v2100 = vadd.f32 %v1674, %v2099
      %v2101 = vpop.f32.mrb[0].mxu0
      %v2102 = vadd.f32 %v1674, %v2101
      %2103 = vdwg.mxu0
      %2104 = vmatprep.subr.mxu0 %v1619
      %2105 = vmatpush1.msra.mxu0 %v1618
      %2106 = vmatprep.subr.mxu0 %v1635
      %2107 = vmatpush1.msra.mxu0 %v1634
      %2108 = vmatprep.subr.mxu0 %v1651
      %2109 = vmatpush1.msra.mxu0 %v1650
      %2110 = vmatprep.subr.mxu0 %v1667
      %2111 = vmatpush1.msra.mxu0 %v1666
      %2112 = vmatprep.subr.mxu0 0.0
      %2113 = vmatpush1.msra.mxu0 0.0
      %2114 = vmatprep.subr.mxu0 0.0
      %2115 = vmatpush1.msra.mxu0 0.0
      %2116 = vmatprep.subr.mxu0 0.0
      %2117 = vmatpush1.msra.mxu0 0.0
      %2118 = vmatprep.subr.mxu0 0.0
      %2119 = vmatpush1.msra.mxu0 0.0
      %2120 = vmatprep.subr.mxu0 0.0
      %2121 = vmatpush1.msra.mxu0 0.0
      %2122 = vmatprep.subr.mxu0 0.0
      %2123 = vmatpush1.msra.mxu0 0.0
      %2124 = vmatprep.subr.mxu0 0.0
      %2125 = vmatpush1.msra.mxu0 0.0
      %2126 = vmatprep.subr.mxu0 0.0
      %2127 = vmatpush1.msra.mxu0 0.0
      %2128 = vmatprep.subr.mxu0 0.0
      %2129 = vmatpush1.msra.mxu0 0.0
      %2130 = vmatprep.subr.mxu0 0.0
      %2131 = vmatpush1.msra.mxu0 0.0
      %2132 = vmatprep.subr.mxu0 0.0
      %2133 = vmatpush1.msra.mxu0 0.0
      %2134 = vmatprep.subr.mxu0 0.0
      %2135 = vmatpush1.msra.mxu0 0.0
      %2136 = vmatprep.subr.mxu0 0.0
      %2137 = vmatpush1.msra.mxu0 0.0
      %2138 = vmatprep.subr.mxu0 0.0
      %2139 = vmatpush1.msra.mxu0 0.0
      %2140 = vmatprep.subr.mxu0 0.0
      %2141 = vmatpush1.msra.mxu0 0.0
      %2142 = vmatprep.subr.mxu0 0.0
      %2143 = vmatpush1.msra.mxu0 0.0
      %2144 = vmatprep.subr.mxu0 0.0
      %2145 = vmatpush1.msra.mxu0 0.0
      %2146 = vmatprep.subr.mxu0 0.0
      %2147 = vmatpush1.msra.mxu0 0.0
      %2148 = vmatprep.subr.mxu0 0.0
      %2149 = vmatpush1.msra.mxu0 0.0
      %2150 = vmatprep.subr.mxu0 0.0
      %2151 = vmatpush1.msra.mxu0 0.0
      %2152 = vmatprep.subr.mxu0 0.0
      %2153 = vmatpush1.msra.mxu0 0.0
      %2154 = vmatprep.subr.mxu0 0.0
      %2155 = vmatpush1.msra.mxu0 0.0
      %2156 = vmatprep.subr.mxu0 0.0
      %2157 = vmatpush1.msra.mxu0 0.0
      %2158 = vmatprep.subr.mxu0 0.0
      %2159 = vmatpush1.msra.mxu0 0.0
      %2160 = vmatprep.subr.mxu0 0.0
      %2161 = vmatpush1.msra.mxu0 0.0
      %2162 = vmatprep.subr.mxu0 0.0
      %2163 = vmatpush1.msra.mxu0 0.0
      %2164 = vmatprep.subr.mxu0 0.0
      %2165 = vmatpush1.msra.mxu0 0.0
      %2166 = vmatprep.subr.mxu0 0.0
      %2167 = vmatpush1.msra.mxu0 0.0
      %2168 = vmatprep.mubr.f32.mxu0 0.0
      %2169 = vmatmul.mubr.f32.gmra.mrb[0].mxu0 %v1676
      %v2170 = vpop.f32.mrb[0].mxu0
      %v2171 = vadd.f32 %v1674, %v2170
      %v2172 = vpop.f32.mrb[0].mxu0
      %v2173 = vadd.f32 %v1674, %v2172
      %2174 = vdwg.mxu0
      %2175 = vmatprep.subr.mxu0 %v1621
      %2176 = vmatpush1.msra.mxu0 %v1620
      %2177 = vmatprep.subr.mxu0 %v1637
      %2178 = vmatpush1.msra.mxu0 %v1636
      %2179 = vmatprep.subr.mxu0 %v1653
      %2180 = vmatpush1.msra.mxu0 %v1652
      %2181 = vmatprep.subr.mxu0 %v1669
      %2182 = vmatpush1.msra.mxu0 %v1668
      %2183 = vmatprep.subr.mxu0 0.0
      %2184 = vmatpush1.msra.mxu0 0.0
      %2185 = vmatprep.subr.mxu0 0.0
      %2186 = vmatpush1.msra.mxu0 0.0
      %2187 = vmatprep.subr.mxu0 0.0
      %2188 = vmatpush1.msra.mxu0 0.0
      %2189 = vmatprep.subr.mxu0 0.0
      %2190 = vmatpush1.msra.mxu0 0.0
      %2191 = vmatprep.subr.mxu0 0.0
      %2192 = vmatpush1.msra.mxu0 0.0
      %2193 = vmatprep.subr.mxu0 0.0
      %2194 = vmatpush1.msra.mxu0 0.0
      %2195 = vmatprep.subr.mxu0 0.0
      %2196 = vmatpush1.msra.mxu0 0.0
      %2197 = vmatprep.subr.mxu0 0.0
      %2198 = vmatpush1.msra.mxu0 0.0
      %2199 = vmatprep.subr.mxu0 0.0
      %2200 = vmatpush1.msra.mxu0 0.0
      %2201 = vmatprep.subr.mxu0 0.0
      %2202 = vmatpush1.msra.mxu0 0.0
      %2203 = vmatprep.subr.mxu0 0.0
      %2204 = vmatpush1.msra.mxu0 0.0
      %2205 = vmatprep.subr.mxu0 0.0
      %2206 = vmatpush1.msra.mxu0 0.0
      %2207 = vmatprep.subr.mxu0 0.0
      %2208 = vmatpush1.msra.mxu0 0.0
      %2209 = vmatprep.subr.mxu0 0.0
      %2210 = vmatpush1.msra.mxu0 0.0
      %2211 = vmatprep.subr.mxu0 0.0
      %2212 = vmatpush1.msra.mxu0 0.0
      %2213 = vmatprep.subr.mxu0 0.0
      %2214 = vmatpush1.msra.mxu0 0.0
      %2215 = vmatprep.subr.mxu0 0.0
      %2216 = vmatpush1.msra.mxu0 0.0
      %2217 = vmatprep.subr.mxu0 0.0
      %2218 = vmatpush1.msra.mxu0 0.0
      %2219 = vmatprep.subr.mxu0 0.0
      %2220 = vmatpush1.msra.mxu0 0.0
      %2221 = vmatprep.subr.mxu0 0.0
      %2222 = vmatpush1.msra.mxu0 0.0
      %2223 = vmatprep.subr.mxu0 0.0
      %2224 = vmatpush1.msra.mxu0 0.0
      %2225 = vmatprep.subr.mxu0 0.0
      %2226 = vmatpush1.msra.mxu0 0.0
      %2227 = vmatprep.subr.mxu0 0.0
      %2228 = vmatpush1.msra.mxu0 0.0
      %2229 = vmatprep.subr.mxu0 0.0
      %2230 = vmatpush1.msra.mxu0 0.0
      %2231 = vmatprep.subr.mxu0 0.0
      %2232 = vmatpush1.msra.mxu0 0.0
      %2233 = vmatprep.subr.mxu0 0.0
      %2234 = vmatpush1.msra.mxu0 0.0
      %2235 = vmatprep.subr.mxu0 0.0
      %2236 = vmatpush1.msra.mxu0 0.0
      %2237 = vmatprep.subr.mxu0 0.0
      %2238 = vmatpush1.msra.mxu0 0.0
      %2239 = vmatprep.mubr.f32.mxu0 0.0
      %2240 = vmatmul.mubr.f32.gmra.mrb[0].mxu0 %v1676
      %v2241 = vpop.f32.mrb[0].mxu0
      %v2242 = vadd.f32 %v1674, %v2241
      %v2243 = vpop.f32.mrb[0].mxu0
      %v2244 = vadd.f32 %v1674, %v2243
      %2245 = vdwg.mxu0
      %v2262 = vcombine.low %v1745, %v1747
      %v2263 = vcombine.low %v1816, %v1818
      %v2264 = vcombine.low %v1887, %v1889
      %v2265 = vcombine.low %v1958, %v1960
      %v2266 = vcombine.low %v2029, %v2031
      %v2267 = vcombine.low %v2100, %v2102
      %v2268 = vcombine.low %v2171, %v2173
      %v2269 = vcombine.low %v2242, %v2244
      %2278 = vst [vmem:[%s210] sm:$0x77] %v2262
      %2279 = vst [vmem:[%s210 + $0x8] sm:$0x77] %v2263
      %2280 = vst [vmem:[%s210 + $0x10] sm:$0x77] %v2264
      %2281 = vst [vmem:[%s210 + $0x18] sm:$0x77] %v2265
      %2282 = vst [vmem:[%s210 + $0x20] sm:$0x77] %v2266
      %2283 = vst [vmem:[%s210 + $0x28] sm:$0x77] %v2267
      %2284 = vst [vmem:[%s210 + $0x30] sm:$0x77] %v2268
      %2285 = vst [vmem:[%s210 + $0x38] sm:$0x77] %v2269
      %v2286 = vld [vmem:[%s1] sm:$0xff]
      %v2287 = vld [vmem:[%s1 + $0x10] sm:$0xff]
      %v2288 = vld [vmem:[%s1 + $0x20] sm:$0xff]
      %v2289 = vld [vmem:[%s1 + $0x30] sm:$0xff]
      %2294 = vrot.lane.b32.xlu0 %v2286, 60
      %v2295 = vpop.permute.xlu0 %2294
      %2296 = vrot.lane.b32.xlu0 %v2287, 60
      %v2297 = vpop.permute.xlu0 %2296
      %2298 = vrot.lane.b32.xlu0 %v2288, 60
      %v2299 = vpop.permute.xlu0 %2298
      %2300 = vrot.lane.b32.xlu0 %v2289, 60
      %v2301 = vpop.permute.xlu0 %2300
      %2302 = vrot.lane.b32.xlu0 %v2286, 25
      %v2303 = vpop.permute.xlu0 %2302
      %2304 = vrot.lane.b32.xlu0 %v2287, 25
      %v2305 = vpop.permute.xlu0 %2304
      %2306 = vrot.lane.b32.xlu0 %v2288, 25
      %v2307 = vpop.permute.xlu0 %2306
      %2308 = vrot.lane.b32.xlu0 %v2289, 25
      %v2309 = vpop.permute.xlu0 %2308
      %v2314 = vsel %vm396, %v2295, 0
      %v2316 = vsel %vm396, %v2297, 0
      %v2318 = vsel %vm396, %v2299, 0
      %v2320 = vsel %vm396, %v2301, 0
      %2322 = vmatprep.subr.mxu0 0.0
      %2323 = vmatpush1.msra.mxu0 %v211
      %2324 = vmatprep.subr.mxu0 0.0
      %2325 = vmatpush1.msra.mxu0 %v212
      %2326 = vmatprep.subr.mxu0 0.0
      %2327 = vmatpush1.msra.mxu0 %v213
      %2328 = vmatprep.subr.mxu0 0.0
      %2329 = vmatpush1.msra.mxu0 %v214
      %2330 = vmatprep.subr.mxu0 0.0
      %2331 = vmatpush1.msra.mxu0 0.0
      %2332 = vmatprep.subr.mxu0 0.0
      %2333 = vmatpush1.msra.mxu0 0.0
      %2334 = vmatprep.subr.mxu0 0.0
      %2335 = vmatpush1.msra.mxu0 0.0
      %2336 = vmatprep.subr.mxu0 0.0
      %2337 = vmatpush1.msra.mxu0 0.0
      %2338 = vmatprep.subr.mxu0 0.0
      %2339 = vmatpush1.msra.mxu0 0.0
      %2340 = vmatprep.subr.mxu0 0.0
      %2341 = vmatpush1.msra.mxu0 0.0
      %2342 = vmatprep.subr.mxu0 0.0
      %2343 = vmatpush1.msra.mxu0 0.0
      %2344 = vmatprep.subr.mxu0 0.0
      %2345 = vmatpush1.msra.mxu0 0.0
      %2346 = vmatprep.subr.mxu0 0.0
      %2347 = vmatpush1.msra.mxu0 0.0
      %2348 = vmatprep.subr.mxu0 0.0
      %2349 = vmatpush1.msra.mxu0 0.0
      %2350 = vmatprep.subr.mxu0 0.0
      %2351 = vmatpush1.msra.mxu0 0.0
      %2352 = vmatprep.subr.mxu0 0.0
      %2353 = vmatpush1.msra.mxu0 0.0
      %2354 = vmatprep.subr.mxu0 0.0
      %2355 = vmatpush1.msra.mxu0 0.0
      %2356 = vmatprep.subr.mxu0 0.0
      %2357 = vmatpush1.msra.mxu0 0.0
      %2358 = vmatprep.subr.mxu0 0.0
      %2359 = vmatpush1.msra.mxu0 0.0
      %2360 = vmatprep.subr.mxu0 0.0
      %2361 = vmatpush1.msra.mxu0 0.0
      %2362 = vmatprep.subr.mxu0 0.0
      %2363 = vmatpush1.msra.mxu0 0.0
      %2364 = vmatprep.subr.mxu0 0.0
      %2365 = vmatpush1.msra.mxu0 0.0
      %2366 = vmatprep.subr.mxu0 0.0
      %2367 = vmatpush1.msra.mxu0 0.0
      %2368 = vmatprep.subr.mxu0 0.0
      %2369 = vmatpush1.msra.mxu0 0.0
      %2370 = vmatprep.subr.mxu0 0.0
      %2371 = vmatpush1.msra.mxu0 0.0
      %2372 = vmatprep.subr.mxu0 0.0
      %2373 = vmatpush1.msra.mxu0 0.0
      %2374 = vmatprep.subr.mxu0 0.0
      %2375 = vmatpush1.msra.mxu0 0.0
      %2376 = vmatprep.subr.mxu0 0.0
      %2377 = vmatpush1.msra.mxu0 0.0
      %2378 = vmatprep.subr.mxu0 0.0
      %2379 = vmatpush1.msra.mxu0 0.0
      %2380 = vmatprep.subr.mxu0 0.0
      %2381 = vmatpush1.msra.mxu0 0.0
      %2382 = vmatprep.subr.mxu0 0.0
      %2383 = vmatpush1.msra.mxu0 0.0
      %2384 = vmatprep.subr.mxu0 0.0
      %2385 = vmatpush1.msra.mxu0 0.0
      %2386 = vmatprep.mubr.f32.mxu0 0.0
      %2387 = vmatmul.mubr.f32.gmra.mrb[0].mxu0 %v2314
      %v2388 = vpop.f32.mrb[0].mxu0
      %v2389 = vadd.f32 %v2303, %v2388
      %v2390 = vpop.f32.mrb[0].mxu0
      %2391 = vmatprep.mubr.f32.mxu0 0.0
      %2392 = vmatmul.mubr.f32.gmra.mrb[0].mxu0 %v2316
      %v2393 = vpop.f32.mrb[0].mxu0
      %v2394 = vadd.f32 %v2305, %v2393
      %v2395 = vpop.f32.mrb[0].mxu0
      %2396 = vmatprep.mubr.f32.mxu0 0.0
      %2397 = vmatmul.mubr.f32.gmra.mrb[0].mxu0 %v2318
      %v2398 = vpop.f32.mrb[0].mxu0
      %v2399 = vadd.f32 %v2307, %v2398
      %v2400 = vpop.f32.mrb[0].mxu0
      %2401 = vmatprep.mubr.f32.mxu0 0.0
      %2402 = vmatmul.mubr.f32.gmra.mrb[0].mxu0 %v2320
      %v2403 = vpop.f32.mrb[0].mxu0
      %v2404 = vadd.f32 %v2309, %v2403
      %v2405 = vpop.f32.mrb[0].mxu0
      %2406 = vdwg.mxu0
      %2407 = vrot.lane.b32.xlu0 %v2286, 28
      %v2408 = vpop.permute.xlu0 %2407
      %2409 = vrot.lane.b32.xlu0 %v2287, 28
      %v2410 = vpop.permute.xlu0 %2409
      %2411 = vrot.lane.b32.xlu0 %v2288, 28
      %v2412 = vpop.permute.xlu0 %2411
      %2413 = vrot.lane.b32.xlu0 %v2289, 28
      %v2414 = vpop.permute.xlu0 %2413
      %vm2415 = vcmask 23552
      %v2416 = vsel %vm2415, %v2408, 0
      %v2418 = vsel %vm2415, %v2410, 0
      %v2420 = vsel %vm2415, %v2412, 0
      %v2422 = vsel %vm2415, %v2414, 0
      %vm2424 = vcmask 1042432
      %v2425 = vsel %vm2424, %v1745, 0
      %v2427 = vsel %vm2424, %v1747, 0
      %v2429 = vsel %vm2424, %v1816, 0
      %v2431 = vsel %vm2424, %v1818, 0
      %v2433 = vsel %vm2424, %v1887, 0
      %v2435 = vsel %vm2424, %v1889, 0
      %v2437 = vsel %vm2424, %v1958, 0
      %v2439 = vsel %vm2424, %v1960, 0
      %v2441 = vsel %vm2424, %v2029, 0
      %v2443 = vsel %vm2424, %v2031, 0
      %v2445 = vsel %vm2424, %v2100, 0
      %v2447 = vsel %vm2424, %v2102, 0
      %v2449 = vsel %vm2424, %v2171, 0
      %v2451 = vsel %vm2424, %v2173, 0
      %v2453 = vsel %vm2424, %v2242, 0
      %v2455 = vsel %vm2424, %v2244, 0
      %2457 = vmatprep.subr.mxu0 %v2427
      %2458 = vmatpush1.msra.mxu0 %v2425
      %2459 = vmatprep.subr.mxu0 0.0
      %2460 = vmatpush1.msra.mxu0 0.0
      %2461 = vmatprep.subr.mxu0 0.0
      %2462 = vmatpush1.msra.mxu0 0.0
      %2463 = vmatprep.subr.mxu0 0.0
      %2464 = vmatpush1.msra.mxu0 0.0
      %2465 = vmatprep.subr.mxu0 0.0
      %2466 = vmatpush1.msra.mxu0 0.0
      %2467 = vmatprep.subr.mxu0 0.0
      %2468 = vmatpush1.msra.mxu0 0.0
      %2469 = vmatprep.subr.mxu0 0.0
      %2470 = vmatpush1.msra.mxu0 0.0
      %2471 = vmatprep.subr.mxu0 0.0
      %2472 = vmatpush1.msra.mxu0 0.0
      %2473 = vmatprep.subr.mxu0 0.0
      %2474 = vmatpush1.msra.mxu0 0.0
      %2475 = vmatprep.subr.mxu0 0.0
      %2476 = vmatpush1.msra.mxu0 0.0
      %2477 = vmatprep.subr.mxu0 0.0
      %2478 = vmatpush1.msra.mxu0 0.0
      %2479 = vmatprep.subr.mxu0 0.0
      %2480 = vmatpush1.msra.mxu0 0.0
      %2481 = vmatprep.subr.mxu0 0.0
      %2482 = vmatpush1.msra.mxu0 0.0
      %2483 = vmatprep.subr.mxu0 0.0
      %2484 = vmatpush1.msra.mxu0 0.0
      %2485 = vmatprep.subr.mxu0 0.0
      %2486 = vmatpush1.msra.mxu0 0.0
      %2487 = vmatprep.subr.mxu0 0.0
      %2488 = vmatpush1.msra.mxu0 0.0
      %2489 = vmatprep.subr.mxu0 0.0
      %2490 = vmatpush1.msra.mxu0 0.0
      %2491 = vmatprep.subr.mxu0 0.0
      %2492 = vmatpush1.msra.mxu0 0.0
      %2493 = vmatprep.subr.mxu0 0.0
      %2494 = vmatpush1.msra.mxu0 0.0
      %2495 = vmatprep.subr.mxu0 0.0
      %2496 = vmatpush1.msra.mxu0 0.0
      %2497 = vmatprep.subr.mxu0 0.0
      %2498 = vmatpush1.msra.mxu0 0.0
      %2499 = vmatprep.subr.mxu0 0.0
      %2500 = vmatpush1.msra.mxu0 0.0
      %2501 = vmatprep.subr.mxu0 0.0
      %2502 = vmatpush1.msra.mxu0 0.0
      %2503 = vmatprep.subr.mxu0 0.0
      %2504 = vmatpush1.msra.mxu0 0.0
      %2505 = vmatprep.subr.mxu0 0.0
      %2506 = vmatpush1.msra.mxu0 0.0
      %2507 = vmatprep.subr.mxu0 0.0
      %2508 = vmatpush1.msra.mxu0 0.0
      %2509 = vmatprep.subr.mxu0 0.0
      %2510 = vmatpush1.msra.mxu0 0.0
      %2511 = vmatprep.subr.mxu0 0.0
      %2512 = vmatpush1.msra.mxu0 0.0
      %2513 = vmatprep.subr.mxu0 0.0
      %2514 = vmatpush1.msra.mxu0 0.0
      %2515 = vmatprep.subr.mxu0 0.0
      %2516 = vmatpush1.msra.mxu0 0.0
      %2517 = vmatprep.subr.mxu0 0.0
      %2518 = vmatpush1.msra.mxu0 0.0
      %2519 = vmatprep.subr.mxu0 0.0
      %2520 = vmatpush1.msra.mxu0 0.0
      %2521 = vmatprep.mubr.f32.mxu0 0.0
      %2522 = vmatmul.mubr.f32.gmra.mrb[0].mxu0 %v2416
      %v2523 = vpop.f32.mrb[0].mxu0
      %v2524 = vadd.f32 0.0, %v2523
      %v2525 = vpop.f32.mrb[0].mxu0
      %v2526 = vadd.f32 0.0, %v2525
      %2527 = vmatprep.mubr.f32.mxu0 0.0
      %2528 = vmatmul.mubr.f32.gmra.mrb[0].mxu0 %v2418
      %v2529 = vpop.f32.mrb[0].mxu0
      %v2530 = vadd.f32 0.0, %v2529
      %v2531 = vpop.f32.mrb[0].mxu0
      %v2532 = vadd.f32 0.0, %v2531
      %2533 = vmatprep.mubr.f32.mxu0 0.0
      %2534 = vmatmul.mubr.f32.gmra.mrb[0].mxu0 %v2420
      %v2535 = vpop.f32.mrb[0].mxu0
      %v2536 = vadd.f32 0.0, %v2535
      %v2537 = vpop.f32.mrb[0].mxu0
      %v2538 = vadd.f32 0.0, %v2537
      %2539 = vmatprep.mubr.f32.mxu0 0.0
      %2540 = vmatmul.mubr.f32.gmra.mrb[0].mxu0 %v2422
      %v2541 = vpop.f32.mrb[0].mxu0
      %v2542 = vadd.f32 0.0, %v2541
      %v2543 = vpop.f32.mrb[0].mxu0
      %v2544 = vadd.f32 0.0, %v2543
      %2545 = vdwg.mxu0
      %2546 = vmatprep.subr.mxu0 %v2431
      %2547 = vmatpush1.msra.mxu0 %v2429
      %2548 = vmatprep.subr.mxu0 0.0
      %2549 = vmatpush1.msra.mxu0 0.0
      %2550 = vmatprep.subr.mxu0 0.0
      %2551 = vmatpush1.msra.mxu0 0.0
      %2552 = vmatprep.subr.mxu0 0.0
      %2553 = vmatpush1.msra.mxu0 0.0
      %2554 = vmatprep.subr.mxu0 0.0
      %2555 = vmatpush1.msra.mxu0 0.0
      %2556 = vmatprep.subr.mxu0 0.0
      %2557 = vmatpush1.msra.mxu0 0.0
      %2558 = vmatprep.subr.mxu0 0.0
      %2559 = vmatpush1.msra.mxu0 0.0
      %2560 = vmatprep.subr.mxu0 0.0
      %2561 = vmatpush1.msra.mxu0 0.0
      %2562 = vmatprep.subr.mxu0 0.0
      %2563 = vmatpush1.msra.mxu0 0.0
      %2564 = vmatprep.subr.mxu0 0.0
      %2565 = vmatpush1.msra.mxu0 0.0
      %2566 = vmatprep.subr.mxu0 0.0
      %2567 = vmatpush1.msra.mxu0 0.0
      %2568 = vmatprep.subr.mxu0 0.0
      %2569 = vmatpush1.msra.mxu0 0.0
      %2570 = vmatprep.subr.mxu0 0.0
      %2571 = vmatpush1.msra.mxu0 0.0
      %2572 = vmatprep.subr.mxu0 0.0
      %2573 = vmatpush1.msra.mxu0 0.0
      %2574 = vmatprep.subr.mxu0 0.0
      %2575 = vmatpush1.msra.mxu0 0.0
      %2576 = vmatprep.subr.mxu0 0.0
      %2577 = vmatpush1.msra.mxu0 0.0
      %2578 = vmatprep.subr.mxu0 0.0
      %2579 = vmatpush1.msra.mxu0 0.0
      %2580 = vmatprep.subr.mxu0 0.0
      %2581 = vmatpush1.msra.mxu0 0.0
      %2582 = vmatprep.subr.mxu0 0.0
      %2583 = vmatpush1.msra.mxu0 0.0
      %2584 = vmatprep.subr.mxu0 0.0
      %2585 = vmatpush1.msra.mxu0 0.0
      %2586 = vmatprep.subr.mxu0 0.0
      %2587 = vmatpush1.msra.mxu0 0.0
      %2588 = vmatprep.subr.mxu0 0.0
      %2589 = vmatpush1.msra.mxu0 0.0
      %2590 = vmatprep.subr.mxu0 0.0
      %2591 = vmatpush1.msra.mxu0 0.0
      %2592 = vmatprep.subr.mxu0 0.0
      %2593 = vmatpush1.msra.mxu0 0.0
      %2594 = vmatprep.subr.mxu0 0.0
      %2595 = vmatpush1.msra.mxu0 0.0
      %2596 = vmatprep.subr.mxu0 0.0
      %2597 = vmatpush1.msra.mxu0 0.0
      %2598 = vmatprep.subr.mxu0 0.0
      %2599 = vmatpush1.msra.mxu0 0.0
      %2600 = vmatprep.subr.mxu0 0.0
      %2601 = vmatpush1.msra.mxu0 0.0
      %2602 = vmatprep.subr.mxu0 0.0
      %2603 = vmatpush1.msra.mxu0 0.0
      %2604 = vmatprep.subr.mxu0 0.0
      %2605 = vmatpush1.msra.mxu0 0.0
      %2606 = vmatprep.subr.mxu0 0.0
      %2607 = vmatpush1.msra.mxu0 0.0
      %2608 = vmatprep.subr.mxu0 0.0
      %2609 = vmatpush1.msra.mxu0 0.0
      %2610 = vmatprep.mubr.f32.mxu0 0.0
      %2611 = vmatmul.mubr.f32.gmra.mrb[0].mxu0 %v2416
      %v2612 = vpop.f32.mrb[0].mxu0
      %v2613 = vadd.f32 0.0, %v2612
      %v2614 = vpop.f32.mrb[0].mxu0
      %v2615 = vadd.f32 0.0, %v2614
      %2616 = vmatprep.mubr.f32.mxu0 0.0
      %2617 = vmatmul.mubr.f32.gmra.mrb[0].mxu0 %v2418
      %v2618 = vpop.f32.mrb[0].mxu0
      %v2619 = vadd.f32 0.0, %v2618
      %v2620 = vpop.f32.mrb[0].mxu0
      %v2621 = vadd.f32 0.0, %v2620
      %2622 = vmatprep.mubr.f32.mxu0 0.0
      %2623 = vmatmul.mubr.f32.gmra.mrb[0].mxu0 %v2420
      %v2624 = vpop.f32.mrb[0].mxu0
      %v2625 = vadd.f32 0.0, %v2624
      %v2626 = vpop.f32.mrb[0].mxu0
      %v2627 = vadd.f32 0.0, %v2626
      %2628 = vmatprep.mubr.f32.mxu0 0.0
      %2629 = vmatmul.mubr.f32.gmra.mrb[0].mxu0 %v2422
      %v2630 = vpop.f32.mrb[0].mxu0
      %v2631 = vadd.f32 0.0, %v2630
      %v2632 = vpop.f32.mrb[0].mxu0
      %v2633 = vadd.f32 0.0, %v2632
      %2634 = vdwg.mxu0
      %2635 = vmatprep.subr.mxu0 %v2435
      %2636 = vmatpush1.msra.mxu0 %v2433
      %2637 = vmatprep.subr.mxu0 0.0
      %2638 = vmatpush1.msra.mxu0 0.0
      %2639 = vmatprep.subr.mxu0 0.0
      %2640 = vmatpush1.msra.mxu0 0.0
      %2641 = vmatprep.subr.mxu0 0.0
      %2642 = vmatpush1.msra.mxu0 0.0
      %2643 = vmatprep.subr.mxu0 0.0
      %2644 = vmatpush1.msra.mxu0 0.0
      %2645 = vmatprep.subr.mxu0 0.0
      %2646 = vmatpush1.msra.mxu0 0.0
      %2647 = vmatprep.subr.mxu0 0.0
      %2648 = vmatpush1.msra.mxu0 0.0
      %2649 = vmatprep.subr.mxu0 0.0
      %2650 = vmatpush1.msra.mxu0 0.0
      %2651 = vmatprep.subr.mxu0 0.0
      %2652 = vmatpush1.msra.mxu0 0.0
      %2653 = vmatprep.subr.mxu0 0.0
      %2654 = vmatpush1.msra.mxu0 0.0
      %2655 = vmatprep.subr.mxu0 0.0
      %2656 = vmatpush1.msra.mxu0 0.0
      %2657 = vmatprep.subr.mxu0 0.0
      %2658 = vmatpush1.msra.mxu0 0.0
      %2659 = vmatprep.subr.mxu0 0.0
      %2660 = vmatpush1.msra.mxu0 0.0
      %2661 = vmatprep.subr.mxu0 0.0
      %2662 = vmatpush1.msra.mxu0 0.0
      %2663 = vmatprep.subr.mxu0 0.0
      %2664 = vmatpush1.msra.mxu0 0.0
      %2665 = vmatprep.subr.mxu0 0.0
      %2666 = vmatpush1.msra.mxu0 0.0
      %2667 = vmatprep.subr.mxu0 0.0
      %2668 = vmatpush1.msra.mxu0 0.0
      %2669 = vmatprep.subr.mxu0 0.0
      %2670 = vmatpush1.msra.mxu0 0.0
      %2671 = vmatprep.subr.mxu0 0.0
      %2672 = vmatpush1.msra.mxu0 0.0
      %2673 = vmatprep.subr.mxu0 0.0
      %2674 = vmatpush1.msra.mxu0 0.0
      %2675 = vmatprep.subr.mxu0 0.0
      %2676 = vmatpush1.msra.mxu0 0.0
      %2677 = vmatprep.subr.mxu0 0.0
      %2678 = vmatpush1.msra.mxu0 0.0
      %2679 = vmatprep.subr.mxu0 0.0
      %2680 = vmatpush1.msra.mxu0 0.0
      %2681 = vmatprep.subr.mxu0 0.0
      %2682 = vmatpush1.msra.mxu0 0.0
      %2683 = vmatprep.subr.mxu0 0.0
      %2684 = vmatpush1.msra.mxu0 0.0
      %2685 = vmatprep.subr.mxu0 0.0
      %2686 = vmatpush1.msra.mxu0 0.0
      %2687 = vmatprep.subr.mxu0 0.0
      %2688 = vmatpush1.msra.mxu0 0.0
      %2689 = vmatprep.subr.mxu0 0.0
      %2690 = vmatpush1.msra.mxu0 0.0
      %2691 = vmatprep.subr.mxu0 0.0
      %2692 = vmatpush1.msra.mxu0 0.0
      %2693 = vmatprep.subr.mxu0 0.0
      %2694 = vmatpush1.msra.mxu0 0.0
      %2695 = vmatprep.subr.mxu0 0.0
      %2696 = vmatpush1.msra.mxu0 0.0
      %2697 = vmatprep.subr.mxu0 0.0
      %2698 = vmatpush1.msra.mxu0 0.0
      %2699 = vmatprep.mubr.f32.mxu0 0.0
      %2700 = vmatmul.mubr.f32.gmra.mrb[0].mxu0 %v2416
      %v2701 = vpop.f32.mrb[0].mxu0
      %v2702 = vadd.f32 0.0, %v2701
      %v2703 = vpop.f32.mrb[0].mxu0
      %v2704 = vadd.f32 0.0, %v2703
      %2705 = vmatprep.mubr.f32.mxu0 0.0
      %2706 = vmatmul.mubr.f32.gmra.mrb[0].mxu0 %v2418
      %v2707 = vpop.f32.mrb[0].mxu0
      %v2708 = vadd.f32 0.0, %v2707
      %v2709 = vpop.f32.mrb[0].mxu0
      %v2710 = vadd.f32 0.0, %v2709
      %2711 = vmatprep.mubr.f32.mxu0 0.0
      %2712 = vmatmul.mubr.f32.gmra.mrb[0].mxu0 %v2420
      %v2713 = vpop.f32.mrb[0].mxu0
      %v2714 = vadd.f32 0.0, %v2713
      %v2715 = vpop.f32.mrb[0].mxu0
      %v2716 = vadd.f32 0.0, %v2715
      %2717 = vmatprep.mubr.f32.mxu0 0.0
      %2718 = vmatmul.mubr.f32.gmra.mrb[0].mxu0 %v2422
      %v2719 = vpop.f32.mrb[0].mxu0
      %v2720 = vadd.f32 0.0, %v2719
      %v2721 = vpop.f32.mrb[0].mxu0
      %v2722 = vadd.f32 0.0, %v2721
      %2723 = vdwg.mxu0
      %2724 = vmatprep.subr.mxu0 %v2439
      %2725 = vmatpush1.msra.mxu0 %v2437
      %2726 = vmatprep.subr.mxu0 0.0
      %2727 = vmatpush1.msra.mxu0 0.0
      %2728 = vmatprep.subr.mxu0 0.0
      %2729 = vmatpush1.msra.mxu0 0.0
      %2730 = vmatprep.subr.mxu0 0.0
      %2731 = vmatpush1.msra.mxu0 0.0
      %2732 = vmatprep.subr.mxu0 0.0
      %2733 = vmatpush1.msra.mxu0 0.0
      %2734 = vmatprep.subr.mxu0 0.0
      %2735 = vmatpush1.msra.mxu0 0.0
      %2736 = vmatprep.subr.mxu0 0.0
      %2737 = vmatpush1.msra.mxu0 0.0
      %2738 = vmatprep.subr.mxu0 0.0
      %2739 = vmatpush1.msra.mxu0 0.0
      %2740 = vmatprep.subr.mxu0 0.0
      %2741 = vmatpush1.msra.mxu0 0.0
      %2742 = vmatprep.subr.mxu0 0.0
      %2743 = vmatpush1.msra.mxu0 0.0
      %2744 = vmatprep.subr.mxu0 0.0
      %2745 = vmatpush1.msra.mxu0 0.0
      %2746 = vmatprep.subr.mxu0 0.0
      %2747 = vmatpush1.msra.mxu0 0.0
      %2748 = vmatprep.subr.mxu0 0.0
      %2749 = vmatpush1.msra.mxu0 0.0
      %2750 = vmatprep.subr.mxu0 0.0
      %2751 = vmatpush1.msra.mxu0 0.0
      %2752 = vmatprep.subr.mxu0 0.0
      %2753 = vmatpush1.msra.mxu0 0.0
      %2754 = vmatprep.subr.mxu0 0.0
      %2755 = vmatpush1.msra.mxu0 0.0
      %2756 = vmatprep.subr.mxu0 0.0
      %2757 = vmatpush1.msra.mxu0 0.0
      %2758 = vmatprep.subr.mxu0 0.0
      %2759 = vmatpush1.msra.mxu0 0.0
      %2760 = vmatprep.subr.mxu0 0.0
      %2761 = vmatpush1.msra.mxu0 0.0
      %2762 = vmatprep.subr.mxu0 0.0
      %2763 = vmatpush1.msra.mxu0 0.0
      %2764 = vmatprep.subr.mxu0 0.0
      %2765 = vmatpush1.msra.mxu0 0.0
      %2766 = vmatprep.subr.mxu0 0.0
      %2767 = vmatpush1.msra.mxu0 0.0
      %2768 = vmatprep.subr.mxu0 0.0
      %2769 = vmatpush1.msra.mxu0 0.0
      %2770 = vmatprep.subr.mxu0 0.0
      %2771 = vmatpush1.msra.mxu0 0.0
      %2772 = vmatprep.subr.mxu0 0.0
      %2773 = vmatpush1.msra.mxu0 0.0
      %2774 = vmatprep.subr.mxu0 0.0
      %2775 = vmatpush1.msra.mxu0 0.0
      %2776 = vmatprep.subr.mxu0 0.0
      %2777 = vmatpush1.msra.mxu0 0.0
      %2778 = vmatprep.subr.mxu0 0.0
      %2779 = vmatpush1.msra.mxu0 0.0
      %2780 = vmatprep.subr.mxu0 0.0
      %2781 = vmatpush1.msra.mxu0 0.0
      %2782 = vmatprep.subr.mxu0 0.0
      %2783 = vmatpush1.msra.mxu0 0.0
      %2784 = vmatprep.subr.mxu0 0.0
      %2785 = vmatpush1.msra.mxu0 0.0
      %2786 = vmatprep.subr.mxu0 0.0
      %2787 = vmatpush1.msra.mxu0 0.0
      %2788 = vmatprep.mubr.f32.mxu0 0.0
      %2789 = vmatmul.mubr.f32.gmra.mrb[0].mxu0 %v2416
      %v2790 = vpop.f32.mrb[0].mxu0
      %v2791 = vadd.f32 0.0, %v2790
      %v2792 = vpop.f32.mrb[0].mxu0
      %v2793 = vadd.f32 0.0, %v2792
      %2794 = vmatprep.mubr.f32.mxu0 0.0
      %2795 = vmatmul.mubr.f32.gmra.mrb[0].mxu0 %v2418
      %v2796 = vpop.f32.mrb[0].mxu0
      %v2797 = vadd.f32 0.0, %v2796
      %v2798 = vpop.f32.mrb[0].mxu0
      %v2799 = vadd.f32 0.0, %v2798
      %2800 = vmatprep.mubr.f32.mxu0 0.0
      %2801 = vmatmul.mubr.f32.gmra.mrb[0].mxu0 %v2420
      %v2802 = vpop.f32.mrb[0].mxu0
      %v2803 = vadd.f32 0.0, %v2802
      %v2804 = vpop.f32.mrb[0].mxu0
      %v2805 = vadd.f32 0.0, %v2804
      %2806 = vmatprep.mubr.f32.mxu0 0.0
      %2807 = vmatmul.mubr.f32.gmra.mrb[0].mxu0 %v2422
      %v2808 = vpop.f32.mrb[0].mxu0
      %v2809 = vadd.f32 0.0, %v2808
      %v2810 = vpop.f32.mrb[0].mxu0
      %v2811 = vadd.f32 0.0, %v2810
      %2812 = vdwg.mxu0
      %2813 = vmatprep.subr.mxu0 %v2443
      %2814 = vmatpush1.msra.mxu0 %v2441
      %2815 = vmatprep.subr.mxu0 0.0
      %2816 = vmatpush1.msra.mxu0 0.0
      %2817 = vmatprep.subr.mxu0 0.0
      %2818 = vmatpush1.msra.mxu0 0.0
      %2819 = vmatprep.subr.mxu0 0.0
      %2820 = vmatpush1.msra.mxu0 0.0
      %2821 = vmatprep.subr.mxu0 0.0
      %2822 = vmatpush1.msra.mxu0 0.0
      %2823 = vmatprep.subr.mxu0 0.0
      %2824 = vmatpush1.msra.mxu0 0.0
      %2825 = vmatprep.subr.mxu0 0.0
      %2826 = vmatpush1.msra.mxu0 0.0
      %2827 = vmatprep.subr.mxu0 0.0
      %2828 = vmatpush1.msra.mxu0 0.0
      %2829 = vmatprep.subr.mxu0 0.0
      %2830 = vmatpush1.msra.mxu0 0.0
      %2831 = vmatprep.subr.mxu0 0.0
      %2832 = vmatpush1.msra.mxu0 0.0
      %2833 = vmatprep.subr.mxu0 0.0
      %2834 = vmatpush1.msra.mxu0 0.0
      %2835 = vmatprep.subr.mxu0 0.0
      %2836 = vmatpush1.msra.mxu0 0.0
      %2837 = vmatprep.subr.mxu0 0.0
      %2838 = vmatpush1.msra.mxu0 0.0
      %2839 = vmatprep.subr.mxu0 0.0
      %2840 = vmatpush1.msra.mxu0 0.0
      %2841 = vmatprep.subr.mxu0 0.0
      %2842 = vmatpush1.msra.mxu0 0.0
      %2843 = vmatprep.subr.mxu0 0.0
      %2844 = vmatpush1.msra.mxu0 0.0
      %2845 = vmatprep.subr.mxu0 0.0
      %2846 = vmatpush1.msra.mxu0 0.0
      %2847 = vmatprep.subr.mxu0 0.0
      %2848 = vmatpush1.msra.mxu0 0.0
      %2849 = vmatprep.subr.mxu0 0.0
      %2850 = vmatpush1.msra.mxu0 0.0
      %2851 = vmatprep.subr.mxu0 0.0
      %2852 = vmatpush1.msra.mxu0 0.0
      %2853 = vmatprep.subr.mxu0 0.0
      %2854 = vmatpush1.msra.mxu0 0.0
      %2855 = vmatprep.subr.mxu0 0.0
      %2856 = vmatpush1.msra.mxu0 0.0
      %2857 = vmatprep.subr.mxu0 0.0
      %2858 = vmatpush1.msra.mxu0 0.0
      %2859 = vmatprep.subr.mxu0 0.0
      %2860 = vmatpush1.msra.mxu0 0.0
      %2861 = vmatprep.subr.mxu0 0.0
      %2862 = vmatpush1.msra.mxu0 0.0
      %2863 = vmatprep.subr.mxu0 0.0
      %2864 = vmatpush1.msra.mxu0 0.0
      %2865 = vmatprep.subr.mxu0 0.0
      %2866 = vmatpush1.msra.mxu0 0.0
      %2867 = vmatprep.subr.mxu0 0.0
      %2868 = vmatpush1.msra.mxu0 0.0
      %2869 = vmatprep.subr.mxu0 0.0
      %2870 = vmatpush1.msra.mxu0 0.0
      %2871 = vmatprep.subr.mxu0 0.0
      %2872 = vmatpush1.msra.mxu0 0.0
      %2873 = vmatprep.subr.mxu0 0.0
      %2874 = vmatpush1.msra.mxu0 0.0
      %2875 = vmatprep.subr.mxu0 0.0
      %2876 = vmatpush1.msra.mxu0 0.0
      %2877 = vmatprep.mubr.f32.mxu0 0.0
      %2878 = vmatmul.mubr.f32.gmra.mrb[0].mxu0 %v2416
      %v2879 = vpop.f32.mrb[0].mxu0
      %v2880 = vadd.f32 0.0, %v2879
      %v2881 = vpop.f32.mrb[0].mxu0
      %v2882 = vadd.f32 0.0, %v2881
      %2883 = vmatprep.mubr.f32.mxu0 0.0
      %2884 = vmatmul.mubr.f32.gmra.mrb[0].mxu0 %v2418
      %v2885 = vpop.f32.mrb[0].mxu0
      %v2886 = vadd.f32 0.0, %v2885
      %v2887 = vpop.f32.mrb[0].mxu0
      %v2888 = vadd.f32 0.0, %v2887
      %2889 = vmatprep.mubr.f32.mxu0 0.0
      %2890 = vmatmul.mubr.f32.gmra.mrb[0].mxu0 %v2420
      %v2891 = vpop.f32.mrb[0].mxu0
      %v2892 = vadd.f32 0.0, %v2891
      %v2893 = vpop.f32.mrb[0].mxu0
      %v2894 = vadd.f32 0.0, %v2893
      %2895 = vmatprep.mubr.f32.mxu0 0.0
      %2896 = vmatmul.mubr.f32.gmra.mrb[0].mxu0 %v2422
      %v2897 = vpop.f32.mrb[0].mxu0
      %v2898 = vadd.f32 0.0, %v2897
      %v2899 = vpop.f32.mrb[0].mxu0
      %v2900 = vadd.f32 0.0, %v2899
      %2901 = vdwg.mxu0
      %2902 = vmatprep.subr.mxu0 %v2447
      %2903 = vmatpush1.msra.mxu0 %v2445
      %2904 = vmatprep.subr.mxu0 0.0
      %2905 = vmatpush1.msra.mxu0 0.0
      %2906 = vmatprep.subr.mxu0 0.0
      %2907 = vmatpush1.msra.mxu0 0.0
      %2908 = vmatprep.subr.mxu0 0.0
      %2909 = vmatpush1.msra.mxu0 0.0
      %2910 = vmatprep.subr.mxu0 0.0
      %2911 = vmatpush1.msra.mxu0 0.0
      %2912 = vmatprep.subr.mxu0 0.0
      %2913 = vmatpush1.msra.mxu0 0.0
      %2914 = vmatprep.subr.mxu0 0.0
      %2915 = vmatpush1.msra.mxu0 0.0
      %2916 = vmatprep.subr.mxu0 0.0
      %2917 = vmatpush1.msra.mxu0 0.0
      %2918 = vmatprep.subr.mxu0 0.0
      %2919 = vmatpush1.msra.mxu0 0.0
      %2920 = vmatprep.subr.mxu0 0.0
      %2921 = vmatpush1.msra.mxu0 0.0
      %2922 = vmatprep.subr.mxu0 0.0
      %2923 = vmatpush1.msra.mxu0 0.0
      %2924 = vmatprep.subr.mxu0 0.0
      %2925 = vmatpush1.msra.mxu0 0.0
      %2926 = vmatprep.subr.mxu0 0.0
      %2927 = vmatpush1.msra.mxu0 0.0
      %2928 = vmatprep.subr.mxu0 0.0
      %2929 = vmatpush1.msra.mxu0 0.0
      %2930 = vmatprep.subr.mxu0 0.0
      %2931 = vmatpush1.msra.mxu0 0.0
      %2932 = vmatprep.subr.mxu0 0.0
      %2933 = vmatpush1.msra.mxu0 0.0
      %2934 = vmatprep.subr.mxu0 0.0
      %2935 = vmatpush1.msra.mxu0 0.0
      %2936 = vmatprep.subr.mxu0 0.0
      %2937 = vmatpush1.msra.mxu0 0.0
      %2938 = vmatprep.subr.mxu0 0.0
      %2939 = vmatpush1.msra.mxu0 0.0
      %2940 = vmatprep.subr.mxu0 0.0
      %2941 = vmatpush1.msra.mxu0 0.0
      %2942 = vmatprep.subr.mxu0 0.0
      %2943 = vmatpush1.msra.mxu0 0.0
      %2944 = vmatprep.subr.mxu0 0.0
      %2945 = vmatpush1.msra.mxu0 0.0
      %2946 = vmatprep.subr.mxu0 0.0
      %2947 = vmatpush1.msra.mxu0 0.0
      %2948 = vmatprep.subr.mxu0 0.0
      %2949 = vmatpush1.msra.mxu0 0.0
      %2950 = vmatprep.subr.mxu0 0.0
      %2951 = vmatpush1.msra.mxu0 0.0
      %2952 = vmatprep.subr.mxu0 0.0
      %2953 = vmatpush1.msra.mxu0 0.0
      %2954 = vmatprep.subr.mxu0 0.0
      %2955 = vmatpush1.msra.mxu0 0.0
      %2956 = vmatprep.subr.mxu0 0.0
      %2957 = vmatpush1.msra.mxu0 0.0
      %2958 = vmatprep.subr.mxu0 0.0
      %2959 = vmatpush1.msra.mxu0 0.0
      %2960 = vmatprep.subr.mxu0 0.0
      %2961 = vmatpush1.msra.mxu0 0.0
      %2962 = vmatprep.subr.mxu0 0.0
      %2963 = vmatpush1.msra.mxu0 0.0
      %2964 = vmatprep.subr.mxu0 0.0
      %2965 = vmatpush1.msra.mxu0 0.0
      %2966 = vmatprep.mubr.f32.mxu0 0.0
      %2967 = vmatmul.mubr.f32.gmra.mrb[0].mxu0 %v2416
      %v2968 = vpop.f32.mrb[0].mxu0
      %v2969 = vadd.f32 0.0, %v2968
      %v2970 = vpop.f32.mrb[0].mxu0
      %v2971 = vadd.f32 0.0, %v2970
      %2972 = vmatprep.mubr.f32.mxu0 0.0
      %2973 = vmatmul.mubr.f32.gmra.mrb[0].mxu0 %v2418
      %v2974 = vpop.f32.mrb[0].mxu0
      %v2975 = vadd.f32 0.0, %v2974
      %v2976 = vpop.f32.mrb[0].mxu0
      %v2977 = vadd.f32 0.0, %v2976
      %2978 = vmatprep.mubr.f32.mxu0 0.0
      %2979 = vmatmul.mubr.f32.gmra.mrb[0].mxu0 %v2420
      %v2980 = vpop.f32.mrb[0].mxu0
      %v2981 = vadd.f32 0.0, %v2980
      %v2982 = vpop.f32.mrb[0].mxu0
      %v2983 = vadd.f32 0.0, %v2982
      %2984 = vmatprep.mubr.f32.mxu0 0.0
      %2985 = vmatmul.mubr.f32.gmra.mrb[0].mxu0 %v2422
      %v2986 = vpop.f32.mrb[0].mxu0
      %v2987 = vadd.f32 0.0, %v2986
      %v2988 = vpop.f32.mrb[0].mxu0
      %v2989 = vadd.f32 0.0, %v2988
      %2990 = vdwg.mxu0
      %2991 = vmatprep.subr.mxu0 %v2451
      %2992 = vmatpush1.msra.mxu0 %v2449
      %2993 = vmatprep.subr.mxu0 0.0
      %2994 = vmatpush1.msra.mxu0 0.0
      %2995 = vmatprep.subr.mxu0 0.0
      %2996 = vmatpush1.msra.mxu0 0.0
      %2997 = vmatprep.subr.mxu0 0.0
      %2998 = vmatpush1.msra.mxu0 0.0
      %2999 = vmatprep.subr.mxu0 0.0
      %3000 = vmatpush1.msra.mxu0 0.0
      %3001 = vmatprep.subr.mxu0 0.0
      %3002 = vmatpush1.msra.mxu0 0.0
      %3003 = vmatprep.subr.mxu0 0.0
      %3004 = vmatpush1.msra.mxu0 0.0
      %3005 = vmatprep.subr.mxu0 0.0
      %3006 = vmatpush1.msra.mxu0 0.0
      %3007 = vmatprep.subr.mxu0 0.0
      %3008 = vmatpush1.msra.mxu0 0.0
      %3009 = vmatprep.subr.mxu0 0.0
      %3010 = vmatpush1.msra.mxu0 0.0
      %3011 = vmatprep.subr.mxu0 0.0
      %3012 = vmatpush1.msra.mxu0 0.0
      %3013 = vmatprep.subr.mxu0 0.0
      %3014 = vmatpush1.msra.mxu0 0.0
      %3015 = vmatprep.subr.mxu0 0.0
      %3016 = vmatpush1.msra.mxu0 0.0
      %3017 = vmatprep.subr.mxu0 0.0
      %3018 = vmatpush1.msra.mxu0 0.0
      %3019 = vmatprep.subr.mxu0 0.0
      %3020 = vmatpush1.msra.mxu0 0.0
      %3021 = vmatprep.subr.mxu0 0.0
      %3022 = vmatpush1.msra.mxu0 0.0
      %3023 = vmatprep.subr.mxu0 0.0
      %3024 = vmatpush1.msra.mxu0 0.0
      %3025 = vmatprep.subr.mxu0 0.0
      %3026 = vmatpush1.msra.mxu0 0.0
      %3027 = vmatprep.subr.mxu0 0.0
      %3028 = vmatpush1.msra.mxu0 0.0
      %3029 = vmatprep.subr.mxu0 0.0
      %3030 = vmatpush1.msra.mxu0 0.0
      %3031 = vmatprep.subr.mxu0 0.0
      %3032 = vmatpush1.msra.mxu0 0.0
      %3033 = vmatprep.subr.mxu0 0.0
      %3034 = vmatpush1.msra.mxu0 0.0
      %3035 = vmatprep.subr.mxu0 0.0
      %3036 = vmatpush1.msra.mxu0 0.0
      %3037 = vmatprep.subr.mxu0 0.0
      %3038 = vmatpush1.msra.mxu0 0.0
      %3039 = vmatprep.subr.mxu0 0.0
      %3040 = vmatpush1.msra.mxu0 0.0
      %3041 = vmatprep.subr.mxu0 0.0
      %3042 = vmatpush1.msra.mxu0 0.0
      %3043 = vmatprep.subr.mxu0 0.0
      %3044 = vmatpush1.msra.mxu0 0.0
      %3045 = vmatprep.subr.mxu0 0.0
      %3046 = vmatpush1.msra.mxu0 0.0
      %3047 = vmatprep.subr.mxu0 0.0
      %3048 = vmatpush1.msra.mxu0 0.0
      %3049 = vmatprep.subr.mxu0 0.0
      %3050 = vmatpush1.msra.mxu0 0.0
      %3051 = vmatprep.subr.mxu0 0.0
      %3052 = vmatpush1.msra.mxu0 0.0
      %3053 = vmatprep.subr.mxu0 0.0
      %3054 = vmatpush1.msra.mxu0 0.0
      %3055 = vmatprep.mubr.f32.mxu0 0.0
      %3056 = vmatmul.mubr.f32.gmra.mrb[0].mxu0 %v2416
      %v3057 = vpop.f32.mrb[0].mxu0
      %v3058 = vadd.f32 0.0, %v3057
      %v3059 = vpop.f32.mrb[0].mxu0
      %v3060 = vadd.f32 0.0, %v3059
      %3061 = vmatprep.mubr.f32.mxu0 0.0
      %3062 = vmatmul.mubr.f32.gmra.mrb[0].mxu0 %v2418
      %v3063 = vpop.f32.mrb[0].mxu0
      %v3064 = vadd.f32 0.0, %v3063
      %v3065 = vpop.f32.mrb[0].mxu0
      %v3066 = vadd.f32 0.0, %v3065
      %3067 = vmatprep.mubr.f32.mxu0 0.0
      %3068 = vmatmul.mubr.f32.gmra.mrb[0].mxu0 %v2420
      %v3069 = vpop.f32.mrb[0].mxu0
      %v3070 = vadd.f32 0.0, %v3069
      %v3071 = vpop.f32.mrb[0].mxu0
      %v3072 = vadd.f32 0.0, %v3071
      %3073 = vmatprep.mubr.f32.mxu0 0.0
      %3074 = vmatmul.mubr.f32.gmra.mrb[0].mxu0 %v2422
      %v3075 = vpop.f32.mrb[0].mxu0
      %v3076 = vadd.f32 0.0, %v3075
      %v3077 = vpop.f32.mrb[0].mxu0
      %v3078 = vadd.f32 0.0, %v3077
      %3079 = vdwg.mxu0
      %3080 = vmatprep.subr.mxu0 %v2455
      %3081 = vmatpush1.msra.mxu0 %v2453
      %3082 = vmatprep.subr.mxu0 0.0
      %3083 = vmatpush1.msra.mxu0 0.0
      %3084 = vmatprep.subr.mxu0 0.0
      %3085 = vmatpush1.msra.mxu0 0.0
      %3086 = vmatprep.subr.mxu0 0.0
      %3087 = vmatpush1.msra.mxu0 0.0
      %3088 = vmatprep.subr.mxu0 0.0
      %3089 = vmatpush1.msra.mxu0 0.0
      %3090 = vmatprep.subr.mxu0 0.0
      %3091 = vmatpush1.msra.mxu0 0.0
      %3092 = vmatprep.subr.mxu0 0.0
      %3093 = vmatpush1.msra.mxu0 0.0
      %3094 = vmatprep.subr.mxu0 0.0
      %3095 = vmatpush1.msra.mxu0 0.0
      %3096 = vmatprep.subr.mxu0 0.0
      %3097 = vmatpush1.msra.mxu0 0.0
      %3098 = vmatprep.subr.mxu0 0.0
      %3099 = vmatpush1.msra.mxu0 0.0
      %3100 = vmatprep.subr.mxu0 0.0
      %3101 = vmatpush1.msra.mxu0 0.0
      %3102 = vmatprep.subr.mxu0 0.0
      %3103 = vmatpush1.msra.mxu0 0.0
      %3104 = vmatprep.subr.mxu0 0.0
      %3105 = vmatpush1.msra.mxu0 0.0
      %3106 = vmatprep.subr.mxu0 0.0
      %3107 = vmatpush1.msra.mxu0 0.0
      %3108 = vmatprep.subr.mxu0 0.0
      %3109 = vmatpush1.msra.mxu0 0.0
      %3110 = vmatprep.subr.mxu0 0.0
      %3111 = vmatpush1.msra.mxu0 0.0
      %3112 = vmatprep.subr.mxu0 0.0
      %3113 = vmatpush1.msra.mxu0 0.0
      %3114 = vmatprep.subr.mxu0 0.0
      %3115 = vmatpush1.msra.mxu0 0.0
      %3116 = vmatprep.subr.mxu0 0.0
      %3117 = vmatpush1.msra.mxu0 0.0
      %3118 = vmatprep.subr.mxu0 0.0
      %3119 = vmatpush1.msra.mxu0 0.0
      %3120 = vmatprep.subr.mxu0 0.0
      %3121 = vmatpush1.msra.mxu0 0.0
      %3122 = vmatprep.subr.mxu0 0.0
      %3123 = vmatpush1.msra.mxu0 0.0
      %3124 = vmatprep.subr.mxu0 0.0
      %3125 = vmatpush1.msra.mxu0 0.0
      %3126 = vmatprep.subr.mxu0 0.0
      %3127 = vmatpush1.msra.mxu0 0.0
      %3128 = vmatprep.subr.mxu0 0.0
      %3129 = vmatpush1.msra.mxu0 0.0
      %3130 = vmatprep.subr.mxu0 0.0
      %3131 = vmatpush1.msra.mxu0 0.0
      %3132 = vmatprep.subr.mxu0 0.0
      %3133 = vmatpush1.msra.mxu0 0.0
      %3134 = vmatprep.subr.mxu0 0.0
      %3135 = vmatpush1.msra.mxu0 0.0
      %3136 = vmatprep.subr.mxu0 0.0
      %3137 = vmatpush1.msra.mxu0 0.0
      %3138 = vmatprep.subr.mxu0 0.0
      %3139 = vmatpush1.msra.mxu0 0.0
      %3140 = vmatprep.subr.mxu0 0.0
      %3141 = vmatpush1.msra.mxu0 0.0
      %3142 = vmatprep.subr.mxu0 0.0
      %3143 = vmatpush1.msra.mxu0 0.0
      %3144 = vmatprep.mubr.f32.mxu0 0.0
      %3145 = vmatmul.mubr.f32.gmra.mrb[0].mxu0 %v2416
      %v3146 = vpop.f32.mrb[0].mxu0
      %v3147 = vadd.f32 0.0, %v3146
      %v3148 = vpop.f32.mrb[0].mxu0
      %v3149 = vadd.f32 0.0, %v3148
      %3150 = vmatprep.mubr.f32.mxu0 0.0
      %3151 = vmatmul.mubr.f32.gmra.mrb[0].mxu0 %v2418
      %v3152 = vpop.f32.mrb[0].mxu0
      %v3153 = vadd.f32 0.0, %v3152
      %v3154 = vpop.f32.mrb[0].mxu0
      %v3155 = vadd.f32 0.0, %v3154
      %3156 = vmatprep.mubr.f32.mxu0 0.0
      %3157 = vmatmul.mubr.f32.gmra.mrb[0].mxu0 %v2420
      %v3158 = vpop.f32.mrb[0].mxu0
      %v3159 = vadd.f32 0.0, %v3158
      %v3160 = vpop.f32.mrb[0].mxu0
      %v3161 = vadd.f32 0.0, %v3160
      %3162 = vmatprep.mubr.f32.mxu0 0.0
      %3163 = vmatmul.mubr.f32.gmra.mrb[0].mxu0 %v2422
      %v3164 = vpop.f32.mrb[0].mxu0
      %v3165 = vadd.f32 0.0, %v3164
      %v3166 = vpop.f32.mrb[0].mxu0
      %v3167 = vadd.f32 0.0, %v3166
      %3168 = vdwg.mxu0
      %3170 = vset.pattern.permute.xlu0 0
      %3171 = vperm.xlu0 %3170, %v2389
      %v3172 = vpop.permute.xlu0 %3171
      %3175 = vset.pattern.permute.xlu0 0
      %3176 = vperm.xlu0 %3175, %v2394
      %v3177 = vpop.permute.xlu0 %3176
      %3180 = vset.pattern.permute.xlu0 0
      %3181 = vperm.xlu0 %3180, %v2399
      %v3182 = vpop.permute.xlu0 %3181
      %3185 = vset.pattern.permute.xlu0 0
      %3186 = vperm.xlu0 %3185, %v2404
      %v3187 = vpop.permute.xlu0 %3186
      %v3189 = vadd.f32 %v3172, %v2524
      %v3190 = vadd.f32 %v3172, %v2526
      %v3191 = vadd.f32 %v3172, %v2613
      %v3192 = vadd.f32 %v3172, %v2615
      %v3193 = vadd.f32 %v3172, %v2702
      %v3194 = vadd.f32 %v3172, %v2704
      %v3195 = vadd.f32 %v3172, %v2791
      %v3196 = vadd.f32 %v3172, %v2793
      %v3197 = vadd.f32 %v3172, %v2880
      %v3198 = vadd.f32 %v3172, %v2882
      %v3199 = vadd.f32 %v3172, %v2969
      %v3200 = vadd.f32 %v3172, %v2971
      %v3201 = vadd.f32 %v3172, %v3058
      %v3202 = vadd.f32 %v3172, %v3060
      %v3203 = vadd.f32 %v3172, %v3147
      %v3204 = vadd.f32 %v3172, %v3149
      %v3205 = vadd.f32 %v3177, %v2530
      %v3206 = vadd.f32 %v3177, %v2532
      %v3207 = vadd.f32 %v3177, %v2619
      %v3208 = vadd.f32 %v3177, %v2621
      %v3209 = vadd.f32 %v3177, %v2708
      %v3210 = vadd.f32 %v3177, %v2710
      %v3211 = vadd.f32 %v3177, %v2797
      %v3212 = vadd.f32 %v3177, %v2799
      %v3213 = vadd.f32 %v3177, %v2886
      %v3214 = vadd.f32 %v3177, %v2888
      %v3215 = vadd.f32 %v3177, %v2975
      %v3216 = vadd.f32 %v3177, %v2977
      %v3217 = vadd.f32 %v3177, %v3064
      %v3218 = vadd.f32 %v3177, %v3066
      %v3219 = vadd.f32 %v3177, %v3153
      %v3220 = vadd.f32 %v3177, %v3155
      %v3221 = vadd.f32 %v3182, %v2536
      %v3222 = vadd.f32 %v3182, %v2538
      %v3223 = vadd.f32 %v3182, %v2625
      %v3224 = vadd.f32 %v3182, %v2627
      %v3225 = vadd.f32 %v3182, %v2714
      %v3226 = vadd.f32 %v3182, %v2716
      %v3227 = vadd.f32 %v3182, %v2803
      %v3228 = vadd.f32 %v3182, %v2805
      %v3229 = vadd.f32 %v3182, %v2892
      %v3230 = vadd.f32 %v3182, %v2894
      %v3231 = vadd.f32 %v3182, %v2981
      %v3232 = vadd.f32 %v3182, %v2983
      %v3233 = vadd.f32 %v3182, %v3070
      %v3234 = vadd.f32 %v3182, %v3072
      %v3235 = vadd.f32 %v3182, %v3159
      %v3236 = vadd.f32 %v3182, %v3161
      %v3237 = vadd.f32 %v3187, %v2542
      %v3238 = vadd.f32 %v3187, %v2544
      %v3239 = vadd.f32 %v3187, %v2631
      %v3240 = vadd.f32 %v3187, %v2633
      %v3241 = vadd.f32 %v3187, %v2720
      %v3242 = vadd.f32 %v3187, %v2722
      %v3243 = vadd.f32 %v3187, %v2809
      %v3244 = vadd.f32 %v3187, %v2811
      %v3245 = vadd.f32 %v3187, %v2898
      %v3246 = vadd.f32 %v3187, %v2900
      %v3247 = vadd.f32 %v3187, %v2987
      %v3248 = vadd.f32 %v3187, %v2989
      %v3249 = vadd.f32 %v3187, %v3076
      %v3250 = vadd.f32 %v3187, %v3078
      %v3251 = vadd.f32 %v3187, %v3165
      %v3252 = vadd.f32 %v3187, %v3167
      %v3253 = vmax.f32 %v3189, 0.0
      %v3254 = vmax.f32 %v3190, 0.0
      %v3255 = vmax.f32 %v3191, 0.0
      %v3256 = vmax.f32 %v3192, 0.0
      %v3257 = vmax.f32 %v3193, 0.0
      %v3258 = vmax.f32 %v3194, 0.0
      %v3259 = vmax.f32 %v3195, 0.0
      %v3260 = vmax.f32 %v3196, 0.0
      %v3261 = vmax.f32 %v3197, 0.0
      %v3262 = vmax.f32 %v3198, 0.0
      %v3263 = vmax.f32 %v3199, 0.0
      %v3264 = vmax.f32 %v3200, 0.0
      %v3265 = vmax.f32 %v3201, 0.0
      %v3266 = vmax.f32 %v3202, 0.0
      %v3267 = vmax.f32 %v3203, 0.0
      %v3268 = vmax.f32 %v3204, 0.0
      %v3269 = vmax.f32 %v3205, 0.0
      %v3270 = vmax.f32 %v3206, 0.0
      %v3271 = vmax.f32 %v3207, 0.0
      %v3272 = vmax.f32 %v3208, 0.0
      %v3273 = vmax.f32 %v3209, 0.0
      %v3274 = vmax.f32 %v3210, 0.0
      %v3275 = vmax.f32 %v3211, 0.0
      %v3276 = vmax.f32 %v3212, 0.0
      %v3277 = vmax.f32 %v3213, 0.0
      %v3278 = vmax.f32 %v3214, 0.0
      %v3279 = vmax.f32 %v3215, 0.0
      %v3280 = vmax.f32 %v3216, 0.0
      %v3281 = vmax.f32 %v3217, 0.0
      %v3282 = vmax.f32 %v3218, 0.0
      %v3283 = vmax.f32 %v3219, 0.0
      %v3284 = vmax.f32 %v3220, 0.0
      %v3285 = vmax.f32 %v3221, 0.0
      %v3286 = vmax.f32 %v3222, 0.0
      %v3287 = vmax.f32 %v3223, 0.0
      %v3288 = vmax.f32 %v3224, 0.0
      %v3289 = vmax.f32 %v3225, 0.0
      %v3290 = vmax.f32 %v3226, 0.0
      %v3291 = vmax.f32 %v3227, 0.0
      %v3292 = vmax.f32 %v3228, 0.0
      %v3293 = vmax.f32 %v3229, 0.0
      %v3294 = vmax.f32 %v3230, 0.0
      %v3295 = vmax.f32 %v3231, 0.0
      %v3296 = vmax.f32 %v3232, 0.0
      %v3297 = vmax.f32 %v3233, 0.0
      %v3298 = vmax.f32 %v3234, 0.0
      %v3299 = vmax.f32 %v3235, 0.0
      %v3300 = vmax.f32 %v3236, 0.0
      %v3301 = vmax.f32 %v3237, 0.0
      %v3302 = vmax.f32 %v3238, 0.0
      %v3303 = vmax.f32 %v3239, 0.0
      %v3304 = vmax.f32 %v3240, 0.0
      %v3305 = vmax.f32 %v3241, 0.0
      %v3306 = vmax.f32 %v3242, 0.0
      %v3307 = vmax.f32 %v3243, 0.0
      %v3308 = vmax.f32 %v3244, 0.0
      %v3309 = vmax.f32 %v3245, 0.0
      %v3310 = vmax.f32 %v3246, 0.0
      %v3311 = vmax.f32 %v3247, 0.0
      %v3312 = vmax.f32 %v3248, 0.0
      %v3313 = vmax.f32 %v3249, 0.0
      %v3314 = vmax.f32 %v3250, 0.0
      %v3315 = vmax.f32 %v3251, 0.0
      %v3316 = vmax.f32 %v3252, 0.0
      %v3317 = vld [vmem:[%s1] sm:$0xff]
      %v3318 = vld [vmem:[%s1 + $0x8] sm:$0xff]
      %v3319 = vld [vmem:[%s1 + $0x10] sm:$0xff]
      %v3320 = vld [vmem:[%s1 + $0x18] sm:$0xff]
      %v3321 = vld [vmem:[%s1 + $0x20] sm:$0xff]
      %v3322 = vld [vmem:[%s1 + $0x28] sm:$0xff]
      %v3323 = vld [vmem:[%s1 + $0x30] sm:$0xff]
      %v3324 = vld [vmem:[%s1 + $0x38] sm:$0xff]
      %3326 = vset.pattern.permute.xlu0 8
      %3327 = vperm.xlu0 %3326, %v3318
      %v3328 = vpop.permute.xlu0 %3327
      %3331 = vset.pattern.permute.xlu0 8
      %3332 = vperm.xlu0 %3331, %v3320
      %v3333 = vpop.permute.xlu0 %3332
      %3336 = vset.pattern.permute.xlu0 8
      %3337 = vperm.xlu0 %3336, %v3322
      %v3338 = vpop.permute.xlu0 %3337
      %3341 = vset.pattern.permute.xlu0 8
      %3342 = vperm.xlu0 %3341, %v3324
      %v3343 = vpop.permute.xlu0 %3342
      %3349 = vrot.lane.b32.xlu0 %v3317, 24
      %v3350 = vpop.permute.xlu0 %3349
      %3351 = vrot.lane.b32.xlu0 %v3318, 24
      %v3352 = vpop.permute.xlu0 %3351
      %3353 = vrot.lane.b32.xlu0 %v3319, 24
      %v3354 = vpop.permute.xlu0 %3353
      %3355 = vrot.lane.b32.xlu0 %v3320, 24
      %v3356 = vpop.permute.xlu0 %3355
      %3357 = vrot.lane.b32.xlu0 %v3321, 24
      %v3358 = vpop.permute.xlu0 %3357
      %3359 = vrot.lane.b32.xlu0 %v3322, 24
      %v3360 = vpop.permute.xlu0 %3359
      %3361 = vrot.lane.b32.xlu0 %v3323, 24
      %v3362 = vpop.permute.xlu0 %3361
      %3363 = vrot.lane.b32.xlu0 %v3324, 24
      %v3364 = vpop.permute.xlu0 %3363
      %vm3365 = vcmask 195584
      %v3366 = vsel %vm3365, %v3350, %v3352
      %v3367 = vsel %vm3365, %v3354, %v3356
      %v3368 = vsel %vm3365, %v3358, %v3360
      %v3369 = vsel %vm3365, %v3362, %v3364
      %v3370 = vsel %vm396, %v3366, 0
      %v3372 = vsel %vm396, %v3367, 0
      %v3374 = vsel %vm396, %v3368, 0
      %v3376 = vsel %vm396, %v3369, 0
      %3378 = vmatprep.subr.mxu0 %v3254
      %3379 = vmatpush1.msra.mxu0 %v3253
      %3380 = vmatprep.subr.mxu0 %v3270
      %3381 = vmatpush1.msra.mxu0 %v3269
      %3382 = vmatprep.subr.mxu0 %v3286
      %3383 = vmatpush1.msra.mxu0 %v3285
      %3384 = vmatprep.subr.mxu0 %v3302
      %3385 = vmatpush1.msra.mxu0 %v3301
      %3386 = vmatprep.subr.mxu0 0.0
      %3387 = vmatpush1.msra.mxu0 0.0
      %3388 = vmatprep.subr.mxu0 0.0
      %3389 = vmatpush1.msra.mxu0 0.0
      %3390 = vmatprep.subr.mxu0 0.0
      %3391 = vmatpush1.msra.mxu0 0.0
      %3392 = vmatprep.subr.mxu0 0.0
      %3393 = vmatpush1.msra.mxu0 0.0
      %3394 = vmatprep.subr.mxu0 0.0
      %3395 = vmatpush1.msra.mxu0 0.0
      %3396 = vmatprep.subr.mxu0 0.0
      %3397 = vmatpush1.msra.mxu0 0.0
      %3398 = vmatprep.subr.mxu0 0.0
      %3399 = vmatpush1.msra.mxu0 0.0
      %3400 = vmatprep.subr.mxu0 0.0
      %3401 = vmatpush1.msra.mxu0 0.0
      %3402 = vmatprep.subr.mxu0 0.0
      %3403 = vmatpush1.msra.mxu0 0.0
      %3404 = vmatprep.subr.mxu0 0.0
      %3405 = vmatpush1.msra.mxu0 0.0
      %3406 = vmatprep.subr.mxu0 0.0
      %3407 = vmatpush1.msra.mxu0 0.0
      %3408 = vmatprep.subr.mxu0 0.0
      %3409 = vmatpush1.msra.mxu0 0.0
      %3410 = vmatprep.subr.mxu0 0.0
      %3411 = vmatpush1.msra.mxu0 0.0
      %3412 = vmatprep.subr.mxu0 0.0
      %3413 = vmatpush1.msra.mxu0 0.0
      %3414 = vmatprep.subr.mxu0 0.0
      %3415 = vmatpush1.msra.mxu0 0.0
      %3416 = vmatprep.subr.mxu0 0.0
      %3417 = vmatpush1.msra.mxu0 0.0
      %3418 = vmatprep.subr.mxu0 0.0
      %3419 = vmatpush1.msra.mxu0 0.0
      %3420 = vmatprep.subr.mxu0 0.0
      %3421 = vmatpush1.msra.mxu0 0.0
      %3422 = vmatprep.subr.mxu0 0.0
      %3423 = vmatpush1.msra.mxu0 0.0
      %3424 = vmatprep.subr.mxu0 0.0
      %3425 = vmatpush1.msra.mxu0 0.0
      %3426 = vmatprep.subr.mxu0 0.0
      %3427 = vmatpush1.msra.mxu0 0.0
      %3428 = vmatprep.subr.mxu0 0.0
      %3429 = vmatpush1.msra.mxu0 0.0
      %3430 = vmatprep.subr.mxu0 0.0
      %3431 = vmatpush1.msra.mxu0 0.0
      %3432 = vmatprep.subr.mxu0 0.0
      %3433 = vmatpush1.msra.mxu0 0.0
      %3434 = vmatprep.subr.mxu0 0.0
      %3435 = vmatpush1.msra.mxu0 0.0
      %3436 = vmatprep.subr.mxu0 0.0
      %3437 = vmatpush1.msra.mxu0 0.0
      %3438 = vmatprep.subr.mxu0 0.0
      %3439 = vmatpush1.msra.mxu0 0.0
      %3440 = vmatprep.subr.mxu0 0.0
      %3441 = vmatpush1.msra.mxu0 0.0
      %3442 = vmatprep.mubr.f32.mxu0 0.0
      %3443 = vmatmul.mubr.f32.gmra.mrb[0].mxu0 %v3370
      %v3444 = vpop.f32.mrb[0].mxu0
      %v3445 = vadd.f32 %v3328, %v3444
      %v3446 = vpop.f32.mrb[0].mxu0
      %v3447 = vadd.f32 %v3328, %v3446
      %3448 = vmatprep.mubr.f32.mxu0 0.0
      %3449 = vmatmul.mubr.f32.gmra.mrb[0].mxu0 %v3372
      %v3450 = vpop.f32.mrb[0].mxu0
      %v3451 = vadd.f32 %v3333, %v3450
      %v3452 = vpop.f32.mrb[0].mxu0
      %v3453 = vadd.f32 %v3333, %v3452
      %3454 = vmatprep.mubr.f32.mxu0 0.0
      %3455 = vmatmul.mubr.f32.gmra.mrb[0].mxu0 %v3374
      %v3456 = vpop.f32.mrb[0].mxu0
      %v3457 = vadd.f32 %v3338, %v3456
      %v3458 = vpop.f32.mrb[0].mxu0
      %v3459 = vadd.f32 %v3338, %v3458
      %3460 = vmatprep.mubr.f32.mxu0 0.0
      %3461 = vmatmul.mubr.f32.gmra.mrb[0].mxu0 %v3376
      %v3462 = vpop.f32.mrb[0].mxu0
      %v3463 = vadd.f32 %v3343, %v3462
      %v3464 = vpop.f32.mrb[0].mxu0
      %v3465 = vadd.f32 %v3343, %v3464
      %3466 = vdwg.mxu0
      %3467 = vmatprep.subr.mxu0 %v3256
      %3468 = vmatpush1.msra.mxu0 %v3255
      %3469 = vmatprep.subr.mxu0 %v3272
      %3470 = vmatpush1.msra.mxu0 %v3271
      %3471 = vmatprep.subr.mxu0 %v3288
      %3472 = vmatpush1.msra.mxu0 %v3287
      %3473 = vmatprep.subr.mxu0 %v3304
      %3474 = vmatpush1.msra.mxu0 %v3303
      %3475 = vmatprep.subr.mxu0 0.0
      %3476 = vmatpush1.msra.mxu0 0.0
      %3477 = vmatprep.subr.mxu0 0.0
      %3478 = vmatpush1.msra.mxu0 0.0
      %3479 = vmatprep.subr.mxu0 0.0
      %3480 = vmatpush1.msra.mxu0 0.0
      %3481 = vmatprep.subr.mxu0 0.0
      %3482 = vmatpush1.msra.mxu0 0.0
      %3483 = vmatprep.subr.mxu0 0.0
      %3484 = vmatpush1.msra.mxu0 0.0
      %3485 = vmatprep.subr.mxu0 0.0
      %3486 = vmatpush1.msra.mxu0 0.0
      %3487 = vmatprep.subr.mxu0 0.0
      %3488 = vmatpush1.msra.mxu0 0.0
      %3489 = vmatprep.subr.mxu0 0.0
      %3490 = vmatpush1.msra.mxu0 0.0
      %3491 = vmatprep.subr.mxu0 0.0
      %3492 = vmatpush1.msra.mxu0 0.0
      %3493 = vmatprep.subr.mxu0 0.0
      %3494 = vmatpush1.msra.mxu0 0.0
      %3495 = vmatprep.subr.mxu0 0.0
      %3496 = vmatpush1.msra.mxu0 0.0
      %3497 = vmatprep.subr.mxu0 0.0
      %3498 = vmatpush1.msra.mxu0 0.0
      %3499 = vmatprep.subr.mxu0 0.0
      %3500 = vmatpush1.msra.mxu0 0.0
      %3501 = vmatprep.subr.mxu0 0.0
      %3502 = vmatpush1.msra.mxu0 0.0
      %3503 = vmatprep.subr.mxu0 0.0
      %3504 = vmatpush1.msra.mxu0 0.0
      %3505 = vmatprep.subr.mxu0 0.0
      %3506 = vmatpush1.msra.mxu0 0.0
      %3507 = vmatprep.subr.mxu0 0.0
      %3508 = vmatpush1.msra.mxu0 0.0
      %3509 = vmatprep.subr.mxu0 0.0
      %3510 = vmatpush1.msra.mxu0 0.0
      %3511 = vmatprep.subr.mxu0 0.0
      %3512 = vmatpush1.msra.mxu0 0.0
      %3513 = vmatprep.subr.mxu0 0.0
      %3514 = vmatpush1.msra.mxu0 0.0
      %3515 = vmatprep.subr.mxu0 0.0
      %3516 = vmatpush1.msra.mxu0 0.0
      %3517 = vmatprep.subr.mxu0 0.0
      %3518 = vmatpush1.msra.mxu0 0.0
      %3519 = vmatprep.subr.mxu0 0.0
      %3520 = vmatpush1.msra.mxu0 0.0
      %3521 = vmatprep.subr.mxu0 0.0
      %3522 = vmatpush1.msra.mxu0 0.0
      %3523 = vmatprep.subr.mxu0 0.0
      %3524 = vmatpush1.msra.mxu0 0.0
      %3525 = vmatprep.subr.mxu0 0.0
      %3526 = vmatpush1.msra.mxu0 0.0
      %3527 = vmatprep.subr.mxu0 0.0
      %3528 = vmatpush1.msra.mxu0 0.0
      %3529 = vmatprep.subr.mxu0 0.0
      %3530 = vmatpush1.msra.mxu0 0.0
      %3531 = vmatprep.mubr.f32.mxu0 0.0
      %3532 = vmatmul.mubr.f32.gmra.mrb[0].mxu0 %v3370
      %v3533 = vpop.f32.mrb[0].mxu0
      %v3534 = vadd.f32 %v3328, %v3533
      %v3535 = vpop.f32.mrb[0].mxu0
      %v3536 = vadd.f32 %v3328, %v3535
      %3537 = vmatprep.mubr.f32.mxu0 0.0
      %3538 = vmatmul.mubr.f32.gmra.mrb[0].mxu0 %v3372
      %v3539 = vpop.f32.mrb[0].mxu0
      %v3540 = vadd.f32 %v3333, %v3539
      %v3541 = vpop.f32.mrb[0].mxu0
      %v3542 = vadd.f32 %v3333, %v3541
      %3543 = vmatprep.mubr.f32.mxu0 0.0
      %3544 = vmatmul.mubr.f32.gmra.mrb[0].mxu0 %v3374
      %v3545 = vpop.f32.mrb[0].mxu0
      %v3546 = vadd.f32 %v3338, %v3545
      %v3547 = vpop.f32.mrb[0].mxu0
      %v3548 = vadd.f32 %v3338, %v3547
      %3549 = vmatprep.mubr.f32.mxu0 0.0
      %3550 = vmatmul.mubr.f32.gmra.mrb[0].mxu0 %v3376
      %v3551 = vpop.f32.mrb[0].mxu0
      %v3552 = vadd.f32 %v3343, %v3551
      %v3553 = vpop.f32.mrb[0].mxu0
      %v3554 = vadd.f32 %v3343, %v3553
      %3555 = vdwg.mxu0
      %3556 = vmatprep.subr.mxu0 %v3258
      %3557 = vmatpush1.msra.mxu0 %v3257
      %3558 = vmatprep.subr.mxu0 %v3274
      %3559 = vmatpush1.msra.mxu0 %v3273
      %3560 = vmatprep.subr.mxu0 %v3290
      %3561 = vmatpush1.msra.mxu0 %v3289
      %3562 = vmatprep.subr.mxu0 %v3306
      %3563 = vmatpush1.msra.mxu0 %v3305
      %3564 = vmatprep.subr.mxu0 0.0
      %3565 = vmatpush1.msra.mxu0 0.0
      %3566 = vmatprep.subr.mxu0 0.0
      %3567 = vmatpush1.msra.mxu0 0.0
      %3568 = vmatprep.subr.mxu0 0.0
      %3569 = vmatpush1.msra.mxu0 0.0
      %3570 = vmatprep.subr.mxu0 0.0
      %3571 = vmatpush1.msra.mxu0 0.0
      %3572 = vmatprep.subr.mxu0 0.0
      %3573 = vmatpush1.msra.mxu0 0.0
      %3574 = vmatprep.subr.mxu0 0.0
      %3575 = vmatpush1.msra.mxu0 0.0
      %3576 = vmatprep.subr.mxu0 0.0
      %3577 = vmatpush1.msra.mxu0 0.0
      %3578 = vmatprep.subr.mxu0 0.0
      %3579 = vmatpush1.msra.mxu0 0.0
      %3580 = vmatprep.subr.mxu0 0.0
      %3581 = vmatpush1.msra.mxu0 0.0
      %3582 = vmatprep.subr.mxu0 0.0
      %3583 = vmatpush1.msra.mxu0 0.0
      %3584 = vmatprep.subr.mxu0 0.0
      %3585 = vmatpush1.msra.mxu0 0.0
      %3586 = vmatprep.subr.mxu0 0.0
      %3587 = vmatpush1.msra.mxu0 0.0
      %3588 = vmatprep.subr.mxu0 0.0
      %3589 = vmatpush1.msra.mxu0 0.0
      %3590 = vmatprep.subr.mxu0 0.0
      %3591 = vmatpush1.msra.mxu0 0.0
      %3592 = vmatprep.subr.mxu0 0.0
      %3593 = vmatpush1.msra.mxu0 0.0
      %3594 = vmatprep.subr.mxu0 0.0
      %3595 = vmatpush1.msra.mxu0 0.0
      %3596 = vmatprep.subr.mxu0 0.0
      %3597 = vmatpush1.msra.mxu0 0.0
      %3598 = vmatprep.subr.mxu0 0.0
      %3599 = vmatpush1.msra.mxu0 0.0
      %3600 = vmatprep.subr.mxu0 0.0
      %3601 = vmatpush1.msra.mxu0 0.0
      %3602 = vmatprep.subr.mxu0 0.0
      %3603 = vmatpush1.msra.mxu0 0.0
      %3604 = vmatprep.subr.mxu0 0.0
      %3605 = vmatpush1.msra.mxu0 0.0
      %3606 = vmatprep.subr.mxu0 0.0
      %3607 = vmatpush1.msra.mxu0 0.0
      %3608 = vmatprep.subr.mxu0 0.0
      %3609 = vmatpush1.msra.mxu0 0.0
      %3610 = vmatprep.subr.mxu0 0.0
      %3611 = vmatpush1.msra.mxu0 0.0
      %3612 = vmatprep.subr.mxu0 0.0
      %3613 = vmatpush1.msra.mxu0 0.0
      %3614 = vmatprep.subr.mxu0 0.0
      %3615 = vmatpush1.msra.mxu0 0.0
      %3616 = vmatprep.subr.mxu0 0.0
      %3617 = vmatpush1.msra.mxu0 0.0
      %3618 = vmatprep.subr.mxu0 0.0
      %3619 = vmatpush1.msra.mxu0 0.0
      %3620 = vmatprep.mubr.f32.mxu0 0.0
      %3621 = vmatmul.mubr.f32.gmra.mrb[0].mxu0 %v3370
      %v3622 = vpop.f32.mrb[0].mxu0
      %v3623 = vadd.f32 %v3328, %v3622
      %v3624 = vpop.f32.mrb[0].mxu0
      %v3625 = vadd.f32 %v3328, %v3624
      %3626 = vmatprep.mubr.f32.mxu0 0.0
      %3627 = vmatmul.mubr.f32.gmra.mrb[0].mxu0 %v3372
      %v3628 = vpop.f32.mrb[0].mxu0
      %v3629 = vadd.f32 %v3333, %v3628
      %v3630 = vpop.f32.mrb[0].mxu0
      %v3631 = vadd.f32 %v3333, %v3630
      %3632 = vmatprep.mubr.f32.mxu0 0.0
      %3633 = vmatmul.mubr.f32.gmra.mrb[0].mxu0 %v3374
      %v3634 = vpop.f32.mrb[0].mxu0
      %v3635 = vadd.f32 %v3338, %v3634
      %v3636 = vpop.f32.mrb[0].mxu0
      %v3637 = vadd.f32 %v3338, %v3636
      %3638 = vmatprep.mubr.f32.mxu0 0.0
      %3639 = vmatmul.mubr.f32.gmra.mrb[0].mxu0 %v3376
      %v3640 = vpop.f32.mrb[0].mxu0
      %v3641 = vadd.f32 %v3343, %v3640
      %v3642 = vpop.f32.mrb[0].mxu0
      %v3643 = vadd.f32 %v3343, %v3642
      %3644 = vdwg.mxu0
      %3645 = vmatprep.subr.mxu0 %v3260
      %3646 = vmatpush1.msra.mxu0 %v3259
      %3647 = vmatprep.subr.mxu0 %v3276
      %3648 = vmatpush1.msra.mxu0 %v3275
      %3649 = vmatprep.subr.mxu0 %v3292
      %3650 = vmatpush1.msra.mxu0 %v3291
      %3651 = vmatprep.subr.mxu0 %v3308
      %3652 = vmatpush1.msra.mxu0 %v3307
      %3653 = vmatprep.subr.mxu0 0.0
      %3654 = vmatpush1.msra.mxu0 0.0
      %3655 = vmatprep.subr.mxu0 0.0
      %3656 = vmatpush1.msra.mxu0 0.0
      %3657 = vmatprep.subr.mxu0 0.0
      %3658 = vmatpush1.msra.mxu0 0.0
      %3659 = vmatprep.subr.mxu0 0.0
      %3660 = vmatpush1.msra.mxu0 0.0
      %3661 = vmatprep.subr.mxu0 0.0
      %3662 = vmatpush1.msra.mxu0 0.0
      %3663 = vmatprep.subr.mxu0 0.0
      %3664 = vmatpush1.msra.mxu0 0.0
      %3665 = vmatprep.subr.mxu0 0.0
      %3666 = vmatpush1.msra.mxu0 0.0
      %3667 = vmatprep.subr.mxu0 0.0
      %3668 = vmatpush1.msra.mxu0 0.0
      %3669 = vmatprep.subr.mxu0 0.0
      %3670 = vmatpush1.msra.mxu0 0.0
      %3671 = vmatprep.subr.mxu0 0.0
      %3672 = vmatpush1.msra.mxu0 0.0
      %3673 = vmatprep.subr.mxu0 0.0
      %3674 = vmatpush1.msra.mxu0 0.0
      %3675 = vmatprep.subr.mxu0 0.0
      %3676 = vmatpush1.msra.mxu0 0.0
      %3677 = vmatprep.subr.mxu0 0.0
      %3678 = vmatpush1.msra.mxu0 0.0
      %3679 = vmatprep.subr.mxu0 0.0
      %3680 = vmatpush1.msra.mxu0 0.0
      %3681 = vmatprep.subr.mxu0 0.0
      %3682 = vmatpush1.msra.mxu0 0.0
      %3683 = vmatprep.subr.mxu0 0.0
      %3684 = vmatpush1.msra.mxu0 0.0
      %3685 = vmatprep.subr.mxu0 0.0
      %3686 = vmatpush1.msra.mxu0 0.0
      %3687 = vmatprep.subr.mxu0 0.0
      %3688 = vmatpush1.msra.mxu0 0.0
      %3689 = vmatprep.subr.mxu0 0.0
      %3690 = vmatpush1.msra.mxu0 0.0
      %3691 = vmatprep.subr.mxu0 0.0
      %3692 = vmatpush1.msra.mxu0 0.0
      %3693 = vmatprep.subr.mxu0 0.0
      %3694 = vmatpush1.msra.mxu0 0.0
      %3695 = vmatprep.subr.mxu0 0.0
      %3696 = vmatpush1.msra.mxu0 0.0
      %3697 = vmatprep.subr.mxu0 0.0
      %3698 = vmatpush1.msra.mxu0 0.0
      %3699 = vmatprep.subr.mxu0 0.0
      %3700 = vmatpush1.msra.mxu0 0.0
      %3701 = vmatprep.subr.mxu0 0.0
      %3702 = vmatpush1.msra.mxu0 0.0
      %3703 = vmatprep.subr.mxu0 0.0
      %3704 = vmatpush1.msra.mxu0 0.0
      %3705 = vmatprep.subr.mxu0 0.0
      %3706 = vmatpush1.msra.mxu0 0.0
      %3707 = vmatprep.subr.mxu0 0.0
      %3708 = vmatpush1.msra.mxu0 0.0
      %3709 = vmatprep.mubr.f32.mxu0 0.0
      %3710 = vmatmul.mubr.f32.gmra.mrb[0].mxu0 %v3370
      %v3711 = vpop.f32.mrb[0].mxu0
      %v3712 = vadd.f32 %v3328, %v3711
      %v3713 = vpop.f32.mrb[0].mxu0
      %v3714 = vadd.f32 %v3328, %v3713
      %3715 = vmatprep.mubr.f32.mxu0 0.0
      %3716 = vmatmul.mubr.f32.gmra.mrb[0].mxu0 %v3372
      %v3717 = vpop.f32.mrb[0].mxu0
      %v3718 = vadd.f32 %v3333, %v3717
      %v3719 = vpop.f32.mrb[0].mxu0
      %v3720 = vadd.f32 %v3333, %v3719
      %3721 = vmatprep.mubr.f32.mxu0 0.0
      %3722 = vmatmul.mubr.f32.gmra.mrb[0].mxu0 %v3374
      %v3723 = vpop.f32.mrb[0].mxu0
      %v3724 = vadd.f32 %v3338, %v3723
      %v3725 = vpop.f32.mrb[0].mxu0
      %v3726 = vadd.f32 %v3338, %v3725
      %3727 = vmatprep.mubr.f32.mxu0 0.0
      %3728 = vmatmul.mubr.f32.gmra.mrb[0].mxu0 %v3376
      %v3729 = vpop.f32.mrb[0].mxu0
      %v3730 = vadd.f32 %v3343, %v3729
      %v3731 = vpop.f32.mrb[0].mxu0
      %v3732 = vadd.f32 %v3343, %v3731
      %3733 = vdwg.mxu0
      %3734 = vmatprep.subr.mxu0 %v3262
      %3735 = vmatpush1.msra.mxu0 %v3261
      %3736 = vmatprep.subr.mxu0 %v3278
      %3737 = vmatpush1.msra.mxu0 %v3277
      %3738 = vmatprep.subr.mxu0 %v3294
      %3739 = vmatpush1.msra.mxu0 %v3293
      %3740 = vmatprep.subr.mxu0 %v3310
      %3741 = vmatpush1.msra.mxu0 %v3309
      %3742 = vmatprep.subr.mxu0 0.0
      %3743 = vmatpush1.msra.mxu0 0.0
      %3744 = vmatprep.subr.mxu0 0.0
      %3745 = vmatpush1.msra.mxu0 0.0
      %3746 = vmatprep.subr.mxu0 0.0
      %3747 = vmatpush1.msra.mxu0 0.0
      %3748 = vmatprep.subr.mxu0 0.0
      %3749 = vmatpush1.msra.mxu0 0.0
      %3750 = vmatprep.subr.mxu0 0.0
      %3751 = vmatpush1.msra.mxu0 0.0
      %3752 = vmatprep.subr.mxu0 0.0
      %3753 = vmatpush1.msra.mxu0 0.0
      %3754 = vmatprep.subr.mxu0 0.0
      %3755 = vmatpush1.msra.mxu0 0.0
      %3756 = vmatprep.subr.mxu0 0.0
      %3757 = vmatpush1.msra.mxu0 0.0
      %3758 = vmatprep.subr.mxu0 0.0
      %3759 = vmatpush1.msra.mxu0 0.0
      %3760 = vmatprep.subr.mxu0 0.0
      %3761 = vmatpush1.msra.mxu0 0.0
      %3762 = vmatprep.subr.mxu0 0.0
      %3763 = vmatpush1.msra.mxu0 0.0
      %3764 = vmatprep.subr.mxu0 0.0
      %3765 = vmatpush1.msra.mxu0 0.0
      %3766 = vmatprep.subr.mxu0 0.0
      %3767 = vmatpush1.msra.mxu0 0.0
      %3768 = vmatprep.subr.mxu0 0.0
      %3769 = vmatpush1.msra.mxu0 0.0
      %3770 = vmatprep.subr.mxu0 0.0
      %3771 = vmatpush1.msra.mxu0 0.0
      %3772 = vmatprep.subr.mxu0 0.0
      %3773 = vmatpush1.msra.mxu0 0.0
      %3774 = vmatprep.subr.mxu0 0.0
      %3775 = vmatpush1.msra.mxu0 0.0
      %3776 = vmatprep.subr.mxu0 0.0
      %3777 = vmatpush1.msra.mxu0 0.0
      %3778 = vmatprep.subr.mxu0 0.0
      %3779 = vmatpush1.msra.mxu0 0.0
      %3780 = vmatprep.subr.mxu0 0.0
      %3781 = vmatpush1.msra.mxu0 0.0
      %3782 = vmatprep.subr.mxu0 0.0
      %3783 = vmatpush1.msra.mxu0 0.0
      %3784 = vmatprep.subr.mxu0 0.0
      %3785 = vmatpush1.msra.mxu0 0.0
      %3786 = vmatprep.subr.mxu0 0.0
      %3787 = vmatpush1.msra.mxu0 0.0
      %3788 = vmatprep.subr.mxu0 0.0
      %3789 = vmatpush1.msra.mxu0 0.0
      %3790 = vmatprep.subr.mxu0 0.0
      %3791 = vmatpush1.msra.mxu0 0.0
      %3792 = vmatprep.subr.mxu0 0.0
      %3793 = vmatpush1.msra.mxu0 0.0
      %3794 = vmatprep.subr.mxu0 0.0
      %3795 = vmatpush1.msra.mxu0 0.0
      %3796 = vmatprep.subr.mxu0 0.0
      %3797 = vmatpush1.msra.mxu0 0.0
      %3798 = vmatprep.mubr.f32.mxu0 0.0
      %3799 = vmatmul.mubr.f32.gmra.mrb[0].mxu0 %v3370
      %v3800 = vpop.f32.mrb[0].mxu0
      %v3801 = vadd.f32 %v3328, %v3800
      %v3802 = vpop.f32.mrb[0].mxu0
      %v3803 = vadd.f32 %v3328, %v3802
      %3804 = vmatprep.mubr.f32.mxu0 0.0
      %3805 = vmatmul.mubr.f32.gmra.mrb[0].mxu0 %v3372
      %v3806 = vpop.f32.mrb[0].mxu0
      %v3807 = vadd.f32 %v3333, %v3806
      %v3808 = vpop.f32.mrb[0].mxu0
      %v3809 = vadd.f32 %v3333, %v3808
      %3810 = vmatprep.mubr.f32.mxu0 0.0
      %3811 = vmatmul.mubr.f32.gmra.mrb[0].mxu0 %v3374
      %v3812 = vpop.f32.mrb[0].mxu0
      %v3813 = vadd.f32 %v3338, %v3812
      %v3814 = vpop.f32.mrb[0].mxu0
      %v3815 = vadd.f32 %v3338, %v3814
      %3816 = vmatprep.mubr.f32.mxu0 0.0
      %3817 = vmatmul.mubr.f32.gmra.mrb[0].mxu0 %v3376
      %v3818 = vpop.f32.mrb[0].mxu0
      %v3819 = vadd.f32 %v3343, %v3818
      %v3820 = vpop.f32.mrb[0].mxu0
      %v3821 = vadd.f32 %v3343, %v3820
      %3822 = vdwg.mxu0
      %3823 = vmatprep.subr.mxu0 %v3264
      %3824 = vmatpush1.msra.mxu0 %v3263
      %3825 = vmatprep.subr.mxu0 %v3280
      %3826 = vmatpush1.msra.mxu0 %v3279
      %3827 = vmatprep.subr.mxu0 %v3296
      %3828 = vmatpush1.msra.mxu0 %v3295
      %3829 = vmatprep.subr.mxu0 %v3312
      %3830 = vmatpush1.msra.mxu0 %v3311
      %3831 = vmatprep.subr.mxu0 0.0
      %3832 = vmatpush1.msra.mxu0 0.0
      %3833 = vmatprep.subr.mxu0 0.0
      %3834 = vmatpush1.msra.mxu0 0.0
      %3835 = vmatprep.subr.mxu0 0.0
      %3836 = vmatpush1.msra.mxu0 0.0
      %3837 = vmatprep.subr.mxu0 0.0
      %3838 = vmatpush1.msra.mxu0 0.0
      %3839 = vmatprep.subr.mxu0 0.0
      %3840 = vmatpush1.msra.mxu0 0.0
      %3841 = vmatprep.subr.mxu0 0.0
      %3842 = vmatpush1.msra.mxu0 0.0
      %3843 = vmatprep.subr.mxu0 0.0
      %3844 = vmatpush1.msra.mxu0 0.0
      %3845 = vmatprep.subr.mxu0 0.0
      %3846 = vmatpush1.msra.mxu0 0.0
      %3847 = vmatprep.subr.mxu0 0.0
      %3848 = vmatpush1.msra.mxu0 0.0
      %3849 = vmatprep.subr.mxu0 0.0
      %3850 = vmatpush1.msra.mxu0 0.0
      %3851 = vmatprep.subr.mxu0 0.0
      %3852 = vmatpush1.msra.mxu0 0.0
      %3853 = vmatprep.subr.mxu0 0.0
      %3854 = vmatpush1.msra.mxu0 0.0
      %3855 = vmatprep.subr.mxu0 0.0
      %3856 = vmatpush1.msra.mxu0 0.0
      %3857 = vmatprep.subr.mxu0 0.0
      %3858 = vmatpush1.msra.mxu0 0.0
      %3859 = vmatprep.subr.mxu0 0.0
      %3860 = vmatpush1.msra.mxu0 0.0
      %3861 = vmatprep.subr.mxu0 0.0
      %3862 = vmatpush1.msra.mxu0 0.0
      %3863 = vmatprep.subr.mxu0 0.0
      %3864 = vmatpush1.msra.mxu0 0.0
      %3865 = vmatprep.subr.mxu0 0.0
      %3866 = vmatpush1.msra.mxu0 0.0
      %3867 = vmatprep.subr.mxu0 0.0
      %3868 = vmatpush1.msra.mxu0 0.0
      %3869 = vmatprep.subr.mxu0 0.0
      %3870 = vmatpush1.msra.mxu0 0.0
      %3871 = vmatprep.subr.mxu0 0.0
      %3872 = vmatpush1.msra.mxu0 0.0
      %3873 = vmatprep.subr.mxu0 0.0
      %3874 = vmatpush1.msra.mxu0 0.0
      %3875 = vmatprep.subr.mxu0 0.0
      %3876 = vmatpush1.msra.mxu0 0.0
      %3877 = vmatprep.subr.mxu0 0.0
      %3878 = vmatpush1.msra.mxu0 0.0
      %3879 = vmatprep.subr.mxu0 0.0
      %3880 = vmatpush1.msra.mxu0 0.0
      %3881 = vmatprep.subr.mxu0 0.0
      %3882 = vmatpush1.msra.mxu0 0.0
      %3883 = vmatprep.subr.mxu0 0.0
      %3884 = vmatpush1.msra.mxu0 0.0
      %3885 = vmatprep.subr.mxu0 0.0
      %3886 = vmatpush1.msra.mxu0 0.0
      %3887 = vmatprep.mubr.f32.mxu0 0.0
      %3888 = vmatmul.mubr.f32.gmra.mrb[0].mxu0 %v3370
      %v3889 = vpop.f32.mrb[0].mxu0
      %v3890 = vadd.f32 %v3328, %v3889
      %v3891 = vpop.f32.mrb[0].mxu0
      %v3892 = vadd.f32 %v3328, %v3891
      %3893 = vmatprep.mubr.f32.mxu0 0.0
      %3894 = vmatmul.mubr.f32.gmra.mrb[0].mxu0 %v3372
      %v3895 = vpop.f32.mrb[0].mxu0
      %v3896 = vadd.f32 %v3333, %v3895
      %v3897 = vpop.f32.mrb[0].mxu0
      %v3898 = vadd.f32 %v3333, %v3897
      %3899 = vmatprep.mubr.f32.mxu0 0.0
      %3900 = vmatmul.mubr.f32.gmra.mrb[0].mxu0 %v3374
      %v3901 = vpop.f32.mrb[0].mxu0
      %v3902 = vadd.f32 %v3338, %v3901
      %v3903 = vpop.f32.mrb[0].mxu0
      %v3904 = vadd.f32 %v3338, %v3903
      %3905 = vmatprep.mubr.f32.mxu0 0.0
      %3906 = vmatmul.mubr.f32.gmra.mrb[0].mxu0 %v3376
      %v3907 = vpop.f32.mrb[0].mxu0
      %v3908 = vadd.f32 %v3343, %v3907
      %v3909 = vpop.f32.mrb[0].mxu0
      %v3910 = vadd.f32 %v3343, %v3909
      %3911 = vdwg.mxu0
      %3912 = vmatprep.subr.mxu0 %v3266
      %3913 = vmatpush1.msra.mxu0 %v3265
      %3914 = vmatprep.subr.mxu0 %v3282
      %3915 = vmatpush1.msra.mxu0 %v3281
      %3916 = vmatprep.subr.mxu0 %v3298
      %3917 = vmatpush1.msra.mxu0 %v3297
      %3918 = vmatprep.subr.mxu0 %v3314
      %3919 = vmatpush1.msra.mxu0 %v3313
      %3920 = vmatprep.subr.mxu0 0.0
      %3921 = vmatpush1.msra.mxu0 0.0
      %3922 = vmatprep.subr.mxu0 0.0
      %3923 = vmatpush1.msra.mxu0 0.0
      %3924 = vmatprep.subr.mxu0 0.0
      %3925 = vmatpush1.msra.mxu0 0.0
      %3926 = vmatprep.subr.mxu0 0.0
      %3927 = vmatpush1.msra.mxu0 0.0
      %3928 = vmatprep.subr.mxu0 0.0
      %3929 = vmatpush1.msra.mxu0 0.0
      %3930 = vmatprep.subr.mxu0 0.0
      %3931 = vmatpush1.msra.mxu0 0.0
      %3932 = vmatprep.subr.mxu0 0.0
      %3933 = vmatpush1.msra.mxu0 0.0
      %3934 = vmatprep.subr.mxu0 0.0
      %3935 = vmatpush1.msra.mxu0 0.0
      %3936 = vmatprep.subr.mxu0 0.0
      %3937 = vmatpush1.msra.mxu0 0.0
      %3938 = vmatprep.subr.mxu0 0.0
      %3939 = vmatpush1.msra.mxu0 0.0
      %3940 = vmatprep.subr.mxu0 0.0
      %3941 = vmatpush1.msra.mxu0 0.0
      %3942 = vmatprep.subr.mxu0 0.0
      %3943 = vmatpush1.msra.mxu0 0.0
      %3944 = vmatprep.subr.mxu0 0.0
      %3945 = vmatpush1.msra.mxu0 0.0
      %3946 = vmatprep.subr.mxu0 0.0
      %3947 = vmatpush1.msra.mxu0 0.0
      %3948 = vmatprep.subr.mxu0 0.0
      %3949 = vmatpush1.msra.mxu0 0.0
      %3950 = vmatprep.subr.mxu0 0.0
      %3951 = vmatpush1.msra.mxu0 0.0
      %3952 = vmatprep.subr.mxu0 0.0
      %3953 = vmatpush1.msra.mxu0 0.0
      %3954 = vmatprep.subr.mxu0 0.0
      %3955 = vmatpush1.msra.mxu0 0.0
      %3956 = vmatprep.subr.mxu0 0.0
      %3957 = vmatpush1.msra.mxu0 0.0
      %3958 = vmatprep.subr.mxu0 0.0
      %3959 = vmatpush1.msra.mxu0 0.0
      %3960 = vmatprep.subr.mxu0 0.0
      %3961 = vmatpush1.msra.mxu0 0.0
      %3962 = vmatprep.subr.mxu0 0.0
      %3963 = vmatpush1.msra.mxu0 0.0
      %3964 = vmatprep.subr.mxu0 0.0
      %3965 = vmatpush1.msra.mxu0 0.0
      %3966 = vmatprep.subr.mxu0 0.0
      %3967 = vmatpush1.msra.mxu0 0.0
      %3968 = vmatprep.subr.mxu0 0.0
      %3969 = vmatpush1.msra.mxu0 0.0
      %3970 = vmatprep.subr.mxu0 0.0
      %3971 = vmatpush1.msra.mxu0 0.0
      %3972 = vmatprep.subr.mxu0 0.0
      %3973 = vmatpush1.msra.mxu0 0.0
      %3974 = vmatprep.subr.mxu0 0.0
      %3975 = vmatpush1.msra.mxu0 0.0
      %3976 = vmatprep.mubr.f32.mxu0 0.0
      %3977 = vmatmul.mubr.f32.gmra.mrb[0].mxu0 %v3370
      %v3978 = vpop.f32.mrb[0].mxu0
      %v3979 = vadd.f32 %v3328, %v3978
      %v3980 = vpop.f32.mrb[0].mxu0
      %v3981 = vadd.f32 %v3328, %v3980
      %3982 = vmatprep.mubr.f32.mxu0 0.0
      %3983 = vmatmul.mubr.f32.gmra.mrb[0].mxu0 %v3372
      %v3984 = vpop.f32.mrb[0].mxu0
      %v3985 = vadd.f32 %v3333, %v3984
      %v3986 = vpop.f32.mrb[0].mxu0
      %v3987 = vadd.f32 %v3333, %v3986
      %3988 = vmatprep.mubr.f32.mxu0 0.0
      %3989 = vmatmul.mubr.f32.gmra.mrb[0].mxu0 %v3374
      %v3990 = vpop.f32.mrb[0].mxu0
      %v3991 = vadd.f32 %v3338, %v3990
      %v3992 = vpop.f32.mrb[0].mxu0
      %v3993 = vadd.f32 %v3338, %v3992
      %3994 = vmatprep.mubr.f32.mxu0 0.0
      %3995 = vmatmul.mubr.f32.gmra.mrb[0].mxu0 %v3376
      %v3996 = vpop.f32.mrb[0].mxu0
      %v3997 = vadd.f32 %v3343, %v3996
      %v3998 = vpop.f32.mrb[0].mxu0
      %v3999 = vadd.f32 %v3343, %v3998
      %4000 = vdwg.mxu0
      %4001 = vmatprep.subr.mxu0 %v3268
      %4002 = vmatpush1.msra.mxu0 %v3267
      %4003 = vmatprep.subr.mxu0 %v3284
      %4004 = vmatpush1.msra.mxu0 %v3283
      %4005 = vmatprep.subr.mxu0 %v3300
      %4006 = vmatpush1.msra.mxu0 %v3299
      %4007 = vmatprep.subr.mxu0 %v3316
      %4008 = vmatpush1.msra.mxu0 %v3315
      %4009 = vmatprep.subr.mxu0 0.0
      %4010 = vmatpush1.msra.mxu0 0.0
      %4011 = vmatprep.subr.mxu0 0.0
      %4012 = vmatpush1.msra.mxu0 0.0
      %4013 = vmatprep.subr.mxu0 0.0
      %4014 = vmatpush1.msra.mxu0 0.0
      %4015 = vmatprep.subr.mxu0 0.0
      %4016 = vmatpush1.msra.mxu0 0.0
      %4017 = vmatprep.subr.mxu0 0.0
      %4018 = vmatpush1.msra.mxu0 0.0
      %4019 = vmatprep.subr.mxu0 0.0
      %4020 = vmatpush1.msra.mxu0 0.0
      %4021 = vmatprep.subr.mxu0 0.0
      %4022 = vmatpush1.msra.mxu0 0.0
      %4023 = vmatprep.subr.mxu0 0.0
      %4024 = vmatpush1.msra.mxu0 0.0
      %4025 = vmatprep.subr.mxu0 0.0
      %4026 = vmatpush1.msra.mxu0 0.0
      %4027 = vmatprep.subr.mxu0 0.0
      %4028 = vmatpush1.msra.mxu0 0.0
      %4029 = vmatprep.subr.mxu0 0.0
      %4030 = vmatpush1.msra.mxu0 0.0
      %4031 = vmatprep.subr.mxu0 0.0
      %4032 = vmatpush1.msra.mxu0 0.0
      %4033 = vmatprep.subr.mxu0 0.0
      %4034 = vmatpush1.msra.mxu0 0.0
      %4035 = vmatprep.subr.mxu0 0.0
      %4036 = vmatpush1.msra.mxu0 0.0
      %4037 = vmatprep.subr.mxu0 0.0
      %4038 = vmatpush1.msra.mxu0 0.0
      %4039 = vmatprep.subr.mxu0 0.0
      %4040 = vmatpush1.msra.mxu0 0.0
      %4041 = vmatprep.subr.mxu0 0.0
      %4042 = vmatpush1.msra.mxu0 0.0
      %4043 = vmatprep.subr.mxu0 0.0
      %4044 = vmatpush1.msra.mxu0 0.0
      %4045 = vmatprep.subr.mxu0 0.0
      %4046 = vmatpush1.msra.mxu0 0.0
      %4047 = vmatprep.subr.mxu0 0.0
      %4048 = vmatpush1.msra.mxu0 0.0
      %4049 = vmatprep.subr.mxu0 0.0
      %4050 = vmatpush1.msra.mxu0 0.0
      %4051 = vmatprep.subr.mxu0 0.0
      %4052 = vmatpush1.msra.mxu0 0.0
      %4053 = vmatprep.subr.mxu0 0.0
      %4054 = vmatpush1.msra.mxu0 0.0
      %4055 = vmatprep.subr.mxu0 0.0
      %4056 = vmatpush1.msra.mxu0 0.0
      %4057 = vmatprep.subr.mxu0 0.0
      %4058 = vmatpush1.msra.mxu0 0.0
      %4059 = vmatprep.subr.mxu0 0.0
      %4060 = vmatpush1.msra.mxu0 0.0
      %4061 = vmatprep.subr.mxu0 0.0
      %4062 = vmatpush1.msra.mxu0 0.0
      %4063 = vmatprep.subr.mxu0 0.0
      %4064 = vmatpush1.msra.mxu0 0.0
      %4065 = vmatprep.mubr.f32.mxu0 0.0
      %4066 = vmatmul.mubr.f32.gmra.mrb[0].mxu0 %v3370
      %v4067 = vpop.f32.mrb[0].mxu0
      %v4068 = vadd.f32 %v3328, %v4067
      %v4069 = vpop.f32.mrb[0].mxu0
      %v4070 = vadd.f32 %v3328, %v4069
      %4071 = vmatprep.mubr.f32.mxu0 0.0
      %4072 = vmatmul.mubr.f32.gmra.mrb[0].mxu0 %v3372
      %v4073 = vpop.f32.mrb[0].mxu0
      %v4074 = vadd.f32 %v3333, %v4073
      %v4075 = vpop.f32.mrb[0].mxu0
      %v4076 = vadd.f32 %v3333, %v4075
      %4077 = vmatprep.mubr.f32.mxu0 0.0
      %4078 = vmatmul.mubr.f32.gmra.mrb[0].mxu0 %v3374
      %v4079 = vpop.f32.mrb[0].mxu0
      %v4080 = vadd.f32 %v3338, %v4079
      %v4081 = vpop.f32.mrb[0].mxu0
      %v4082 = vadd.f32 %v3338, %v4081
      %4083 = vmatprep.mubr.f32.mxu0 0.0
      %4084 = vmatmul.mubr.f32.gmra.mrb[0].mxu0 %v3376
      %v4085 = vpop.f32.mrb[0].mxu0
      %v4086 = vadd.f32 %v3343, %v4085
      %v4087 = vpop.f32.mrb[0].mxu0
      %v4088 = vadd.f32 %v3343, %v4087
      %4089 = vdwg.mxu0
      %v4090 = vmax.f32 %v3445, 0.0
      %v4091 = vmax.f32 %v3447, 0.0
      %v4092 = vmax.f32 %v3534, 0.0
      %v4093 = vmax.f32 %v3536, 0.0
      %v4094 = vmax.f32 %v3623, 0.0
      %v4095 = vmax.f32 %v3625, 0.0
      %v4096 = vmax.f32 %v3712, 0.0
      %v4097 = vmax.f32 %v3714, 0.0
      %v4098 = vmax.f32 %v3801, 0.0
      %v4099 = vmax.f32 %v3803, 0.0
      %v4100 = vmax.f32 %v3890, 0.0
      %v4101 = vmax.f32 %v3892, 0.0
      %v4102 = vmax.f32 %v3979, 0.0
      %v4103 = vmax.f32 %v3981, 0.0
      %v4104 = vmax.f32 %v4068, 0.0
      %v4105 = vmax.f32 %v4070, 0.0
      %v4106 = vmax.f32 %v3451, 0.0
      %v4107 = vmax.f32 %v3453, 0.0
      %v4108 = vmax.f32 %v3540, 0.0
      %v4109 = vmax.f32 %v3542, 0.0
      %v4110 = vmax.f32 %v3629, 0.0
      %v4111 = vmax.f32 %v3631, 0.0
      %v4112 = vmax.f32 %v3718, 0.0
      %v4113 = vmax.f32 %v3720, 0.0
      %v4114 = vmax.f32 %v3807, 0.0
      %v4115 = vmax.f32 %v3809, 0.0
      %v4116 = vmax.f32 %v3896, 0.0
      %v4117 = vmax.f32 %v3898, 0.0
      %v4118 = vmax.f32 %v3985, 0.0
      %v4119 = vmax.f32 %v3987, 0.0
      %v4120 = vmax.f32 %v4074, 0.0
      %v4121 = vmax.f32 %v4076, 0.0
      %v4122 = vmax.f32 %v3457, 0.0
      %v4123 = vmax.f32 %v3459, 0.0
      %v4124 = vmax.f32 %v3546, 0.0
      %v4125 = vmax.f32 %v3548, 0.0
      %v4126 = vmax.f32 %v3635, 0.0
      %v4127 = vmax.f32 %v3637, 0.0
      %v4128 = vmax.f32 %v3724, 0.0
      %v4129 = vmax.f32 %v3726, 0.0
      %v4130 = vmax.f32 %v3813, 0.0
      %v4131 = vmax.f32 %v3815, 0.0
      %v4132 = vmax.f32 %v3902, 0.0
      %v4133 = vmax.f32 %v3904, 0.0
      %v4134 = vmax.f32 %v3991, 0.0
      %v4135 = vmax.f32 %v3993, 0.0
      %v4136 = vmax.f32 %v4080, 0.0
      %v4137 = vmax.f32 %v4082, 0.0
      %v4138 = vmax.f32 %v3463, 0.0
      %v4139 = vmax.f32 %v3465, 0.0
      %v4140 = vmax.f32 %v3552, 0.0
      %v4141 = vmax.f32 %v3554, 0.0
      %v4142 = vmax.f32 %v3641, 0.0
      %v4143 = vmax.f32 %v3643, 0.0
      %v4144 = vmax.f32 %v3730, 0.0
      %v4145 = vmax.f32 %v3732, 0.0
      %v4146 = vmax.f32 %v3819, 0.0
      %v4147 = vmax.f32 %v3821, 0.0
      %v4148 = vmax.f32 %v3908, 0.0
      %v4149 = vmax.f32 %v3910, 0.0
      %v4150 = vmax.f32 %v3997, 0.0
      %v4151 = vmax.f32 %v3999, 0.0
      %v4152 = vmax.f32 %v4086, 0.0
      %v4153 = vmax.f32 %v4088, 0.0
      %v4154 = vld [vmem:[%s2] sm:$0x7]
      %4156 = vset.pattern.permute.xlu0 65
      %4157 = vperm.xlu0 %4156, %v4154
      %v4158 = vpop.permute.xlu0 %4157
      %4160 = vrot.lane.b32.xlu0 %v4154, 95
      %v4161 = vpop.permute.xlu0 %4160
      %v4162 = vsel %vm396, %v4161, 0
      %4164 = vmatprep.subr.mxu0 %v4091
      %4165 = vmatpush1.msra.mxu0 %v4090
      %4166 = vmatprep.subr.mxu0 %v4107
      %4167 = vmatpush1.msra.mxu0 %v4106
      %4168 = vmatprep.subr.mxu0 %v4123
      %4169 = vmatpush1.msra.mxu0 %v4122
      %4170 = vmatprep.subr.mxu0 %v4139
      %4171 = vmatpush1.msra.mxu0 %v4138
      %4172 = vmatprep.subr.mxu0 0.0
      %4173 = vmatpush1.msra.mxu0 0.0
      %4174 = vmatprep.subr.mxu0 0.0
      %4175 = vmatpush1.msra.mxu0 0.0
      %4176 = vmatprep.subr.mxu0 0.0
      %4177 = vmatpush1.msra.mxu0 0.0
      %4178 = vmatprep.subr.mxu0 0.0
      %4179 = vmatpush1.msra.mxu0 0.0
      %4180 = vmatprep.subr.mxu0 0.0
      %4181 = vmatpush1.msra.mxu0 0.0
      %4182 = vmatprep.subr.mxu0 0.0
      %4183 = vmatpush1.msra.mxu0 0.0
      %4184 = vmatprep.subr.mxu0 0.0
      %4185 = vmatpush1.msra.mxu0 0.0
      %4186 = vmatprep.subr.mxu0 0.0
      %4187 = vmatpush1.msra.mxu0 0.0
      %4188 = vmatprep.subr.mxu0 0.0
      %4189 = vmatpush1.msra.mxu0 0.0
      %4190 = vmatprep.subr.mxu0 0.0
      %4191 = vmatpush1.msra.mxu0 0.0
      %4192 = vmatprep.subr.mxu0 0.0
      %4193 = vmatpush1.msra.mxu0 0.0
      %4194 = vmatprep.subr.mxu0 0.0
      %4195 = vmatpush1.msra.mxu0 0.0
      %4196 = vmatprep.subr.mxu0 0.0
      %4197 = vmatpush1.msra.mxu0 0.0
      %4198 = vmatprep.subr.mxu0 0.0
      %4199 = vmatpush1.msra.mxu0 0.0
      %4200 = vmatprep.subr.mxu0 0.0
      %4201 = vmatpush1.msra.mxu0 0.0
      %4202 = vmatprep.subr.mxu0 0.0
      %4203 = vmatpush1.msra.mxu0 0.0
      %4204 = vmatprep.subr.mxu0 0.0
      %4205 = vmatpush1.msra.mxu0 0.0
      %4206 = vmatprep.subr.mxu0 0.0
      %4207 = vmatpush1.msra.mxu0 0.0
      %4208 = vmatprep.subr.mxu0 0.0
      %4209 = vmatpush1.msra.mxu0 0.0
      %4210 = vmatprep.subr.mxu0 0.0
      %4211 = vmatpush1.msra.mxu0 0.0
      %4212 = vmatprep.subr.mxu0 0.0
      %4213 = vmatpush1.msra.mxu0 0.0
      %4214 = vmatprep.subr.mxu0 0.0
      %4215 = vmatpush1.msra.mxu0 0.0
      %4216 = vmatprep.subr.mxu0 0.0
      %4217 = vmatpush1.msra.mxu0 0.0
      %4218 = vmatprep.subr.mxu0 0.0
      %4219 = vmatpush1.msra.mxu0 0.0
      %4220 = vmatprep.subr.mxu0 0.0
      %4221 = vmatpush1.msra.mxu0 0.0
      %4222 = vmatprep.subr.mxu0 0.0
      %4223 = vmatpush1.msra.mxu0 0.0
      %4224 = vmatprep.subr.mxu0 0.0
      %4225 = vmatpush1.msra.mxu0 0.0
      %4226 = vmatprep.subr.mxu0 0.0
      %4227 = vmatpush1.msra.mxu0 0.0
      %4228 = vmatprep.mubr.f32.mxu0 0.0
      %4229 = vmatmul.mubr.f32.gmra.mrb[0].mxu0 %v4162
      %v4230 = vpop.f32.mrb[0].mxu0
      %v4231 = vadd.f32 %v4158, %v4230
      %v4232 = vpop.f32.mrb[0].mxu0
      %v4233 = vadd.f32 %v4158, %v4232
      %4234 = vdwg.mxu0
      %4235 = vmatprep.subr.mxu0 %v4093
      %4236 = vmatpush1.msra.mxu0 %v4092
      %4237 = vmatprep.subr.mxu0 %v4109
      %4238 = vmatpush1.msra.mxu0 %v4108
      %4239 = vmatprep.subr.mxu0 %v4125
      %4240 = vmatpush1.msra.mxu0 %v4124
      %4241 = vmatprep.subr.mxu0 %v4141
      %4242 = vmatpush1.msra.mxu0 %v4140
      %4243 = vmatprep.subr.mxu0 0.0
      %4244 = vmatpush1.msra.mxu0 0.0
      %4245 = vmatprep.subr.mxu0 0.0
      %4246 = vmatpush1.msra.mxu0 0.0
      %4247 = vmatprep.subr.mxu0 0.0
      %4248 = vmatpush1.msra.mxu0 0.0
      %4249 = vmatprep.subr.mxu0 0.0
      %4250 = vmatpush1.msra.mxu0 0.0
      %4251 = vmatprep.subr.mxu0 0.0
      %4252 = vmatpush1.msra.mxu0 0.0
      %4253 = vmatprep.subr.mxu0 0.0
      %4254 = vmatpush1.msra.mxu0 0.0
      %4255 = vmatprep.subr.mxu0 0.0
      %4256 = vmatpush1.msra.mxu0 0.0
      %4257 = vmatprep.subr.mxu0 0.0
      %4258 = vmatpush1.msra.mxu0 0.0
      %4259 = vmatprep.subr.mxu0 0.0
      %4260 = vmatpush1.msra.mxu0 0.0
      %4261 = vmatprep.subr.mxu0 0.0
      %4262 = vmatpush1.msra.mxu0 0.0
      %4263 = vmatprep.subr.mxu0 0.0
      %4264 = vmatpush1.msra.mxu0 0.0
      %4265 = vmatprep.subr.mxu0 0.0
      %4266 = vmatpush1.msra.mxu0 0.0
      %4267 = vmatprep.subr.mxu0 0.0
      %4268 = vmatpush1.msra.mxu0 0.0
      %4269 = vmatprep.subr.mxu0 0.0
      %4270 = vmatpush1.msra.mxu0 0.0
      %4271 = vmatprep.subr.mxu0 0.0
      %4272 = vmatpush1.msra.mxu0 0.0
      %4273 = vmatprep.subr.mxu0 0.0
      %4274 = vmatpush1.msra.mxu0 0.0
      %4275 = vmatprep.subr.mxu0 0.0
      %4276 = vmatpush1.msra.mxu0 0.0
      %4277 = vmatprep.subr.mxu0 0.0
      %4278 = vmatpush1.msra.mxu0 0.0
      %4279 = vmatprep.subr.mxu0 0.0
      %4280 = vmatpush1.msra.mxu0 0.0
      %4281 = vmatprep.subr.mxu0 0.0
      %4282 = vmatpush1.msra.mxu0 0.0
      %4283 = vmatprep.subr.mxu0 0.0
      %4284 = vmatpush1.msra.mxu0 0.0
      %4285 = vmatprep.subr.mxu0 0.0
      %4286 = vmatpush1.msra.mxu0 0.0
      %4287 = vmatprep.subr.mxu0 0.0
      %4288 = vmatpush1.msra.mxu0 0.0
      %4289 = vmatprep.subr.mxu0 0.0
      %4290 = vmatpush1.msra.mxu0 0.0
      %4291 = vmatprep.subr.mxu0 0.0
      %4292 = vmatpush1.msra.mxu0 0.0
      %4293 = vmatprep.subr.mxu0 0.0
      %4294 = vmatpush1.msra.mxu0 0.0
      %4295 = vmatprep.subr.mxu0 0.0
      %4296 = vmatpush1.msra.mxu0 0.0
      %4297 = vmatprep.subr.mxu0 0.0
      %4298 = vmatpush1.msra.mxu0 0.0
      %4299 = vmatprep.mubr.f32.mxu0 0.0
      %4300 = vmatmul.mubr.f32.gmra.mrb[0].mxu0 %v4162
      %v4301 = vpop.f32.mrb[0].mxu0
      %v4302 = vadd.f32 %v4158, %v4301
      %v4303 = vpop.f32.mrb[0].mxu0
      %v4304 = vadd.f32 %v4158, %v4303
      %4305 = vdwg.mxu0
      %4306 = vmatprep.subr.mxu0 %v4095
      %4307 = vmatpush1.msra.mxu0 %v4094
      %4308 = vmatprep.subr.mxu0 %v4111
      %4309 = vmatpush1.msra.mxu0 %v4110
      %4310 = vmatprep.subr.mxu0 %v4127
      %4311 = vmatpush1.msra.mxu0 %v4126
      %4312 = vmatprep.subr.mxu0 %v4143
      %4313 = vmatpush1.msra.mxu0 %v4142
      %4314 = vmatprep.subr.mxu0 0.0
      %4315 = vmatpush1.msra.mxu0 0.0
      %4316 = vmatprep.subr.mxu0 0.0
      %4317 = vmatpush1.msra.mxu0 0.0
      %4318 = vmatprep.subr.mxu0 0.0
      %4319 = vmatpush1.msra.mxu0 0.0
      %4320 = vmatprep.subr.mxu0 0.0
      %4321 = vmatpush1.msra.mxu0 0.0
      %4322 = vmatprep.subr.mxu0 0.0
      %4323 = vmatpush1.msra.mxu0 0.0
      %4324 = vmatprep.subr.mxu0 0.0
      %4325 = vmatpush1.msra.mxu0 0.0
      %4326 = vmatprep.subr.mxu0 0.0
      %4327 = vmatpush1.msra.mxu0 0.0
      %4328 = vmatprep.subr.mxu0 0.0
      %4329 = vmatpush1.msra.mxu0 0.0
      %4330 = vmatprep.subr.mxu0 0.0
      %4331 = vmatpush1.msra.mxu0 0.0
      %4332 = vmatprep.subr.mxu0 0.0
      %4333 = vmatpush1.msra.mxu0 0.0
      %4334 = vmatprep.subr.mxu0 0.0
      %4335 = vmatpush1.msra.mxu0 0.0
      %4336 = vmatprep.subr.mxu0 0.0
      %4337 = vmatpush1.msra.mxu0 0.0
      %4338 = vmatprep.subr.mxu0 0.0
      %4339 = vmatpush1.msra.mxu0 0.0
      %4340 = vmatprep.subr.mxu0 0.0
      %4341 = vmatpush1.msra.mxu0 0.0
      %4342 = vmatprep.subr.mxu0 0.0
      %4343 = vmatpush1.msra.mxu0 0.0
      %4344 = vmatprep.subr.mxu0 0.0
      %4345 = vmatpush1.msra.mxu0 0.0
      %4346 = vmatprep.subr.mxu0 0.0
      %4347 = vmatpush1.msra.mxu0 0.0
      %4348 = vmatprep.subr.mxu0 0.0
      %4349 = vmatpush1.msra.mxu0 0.0
      %4350 = vmatprep.subr.mxu0 0.0
      %4351 = vmatpush1.msra.mxu0 0.0
      %4352 = vmatprep.subr.mxu0 0.0
      %4353 = vmatpush1.msra.mxu0 0.0
      %4354 = vmatprep.subr.mxu0 0.0
      %4355 = vmatpush1.msra.mxu0 0.0
      %4356 = vmatprep.subr.mxu0 0.0
      %4357 = vmatpush1.msra.mxu0 0.0
      %4358 = vmatprep.subr.mxu0 0.0
      %4359 = vmatpush1.msra.mxu0 0.0
      %4360 = vmatprep.subr.mxu0 0.0
      %4361 = vmatpush1.msra.mxu0 0.0
      %4362 = vmatprep.subr.mxu0 0.0
      %4363 = vmatpush1.msra.mxu0 0.0
      %4364 = vmatprep.subr.mxu0 0.0
      %4365 = vmatpush1.msra.mxu0 0.0
      %4366 = vmatprep.subr.mxu0 0.0
      %4367 = vmatpush1.msra.mxu0 0.0
      %4368 = vmatprep.subr.mxu0 0.0
      %4369 = vmatpush1.msra.mxu0 0.0
      %4370 = vmatprep.mubr.f32.mxu0 0.0
      %4371 = vmatmul.mubr.f32.gmra.mrb[0].mxu0 %v4162
      %v4372 = vpop.f32.mrb[0].mxu0
      %v4373 = vadd.f32 %v4158, %v4372
      %v4374 = vpop.f32.mrb[0].mxu0
      %v4375 = vadd.f32 %v4158, %v4374
      %4376 = vdwg.mxu0
      %4377 = vmatprep.subr.mxu0 %v4097
      %4378 = vmatpush1.msra.mxu0 %v4096
      %4379 = vmatprep.subr.mxu0 %v4113
      %4380 = vmatpush1.msra.mxu0 %v4112
      %4381 = vmatprep.subr.mxu0 %v4129
      %4382 = vmatpush1.msra.mxu0 %v4128
      %4383 = vmatprep.subr.mxu0 %v4145
      %4384 = vmatpush1.msra.mxu0 %v4144
      %4385 = vmatprep.subr.mxu0 0.0
      %4386 = vmatpush1.msra.mxu0 0.0
      %4387 = vmatprep.subr.mxu0 0.0
      %4388 = vmatpush1.msra.mxu0 0.0
      %4389 = vmatprep.subr.mxu0 0.0
      %4390 = vmatpush1.msra.mxu0 0.0
      %4391 = vmatprep.subr.mxu0 0.0
      %4392 = vmatpush1.msra.mxu0 0.0
      %4393 = vmatprep.subr.mxu0 0.0
      %4394 = vmatpush1.msra.mxu0 0.0
      %4395 = vmatprep.subr.mxu0 0.0
      %4396 = vmatpush1.msra.mxu0 0.0
      %4397 = vmatprep.subr.mxu0 0.0
      %4398 = vmatpush1.msra.mxu0 0.0
      %4399 = vmatprep.subr.mxu0 0.0
      %4400 = vmatpush1.msra.mxu0 0.0
      %4401 = vmatprep.subr.mxu0 0.0
      %4402 = vmatpush1.msra.mxu0 0.0
      %4403 = vmatprep.subr.mxu0 0.0
      %4404 = vmatpush1.msra.mxu0 0.0
      %4405 = vmatprep.subr.mxu0 0.0
      %4406 = vmatpush1.msra.mxu0 0.0
      %4407 = vmatprep.subr.mxu0 0.0
      %4408 = vmatpush1.msra.mxu0 0.0
      %4409 = vmatprep.subr.mxu0 0.0
      %4410 = vmatpush1.msra.mxu0 0.0
      %4411 = vmatprep.subr.mxu0 0.0
      %4412 = vmatpush1.msra.mxu0 0.0
      %4413 = vmatprep.subr.mxu0 0.0
      %4414 = vmatpush1.msra.mxu0 0.0
      %4415 = vmatprep.subr.mxu0 0.0
      %4416 = vmatpush1.msra.mxu0 0.0
      %4417 = vmatprep.subr.mxu0 0.0
      %4418 = vmatpush1.msra.mxu0 0.0
      %4419 = vmatprep.subr.mxu0 0.0
      %4420 = vmatpush1.msra.mxu0 0.0
      %4421 = vmatprep.subr.mxu0 0.0
      %4422 = vmatpush1.msra.mxu0 0.0
      %4423 = vmatprep.subr.mxu0 0.0
      %4424 = vmatpush1.msra.mxu0 0.0
      %4425 = vmatprep.subr.mxu0 0.0
      %4426 = vmatpush1.msra.mxu0 0.0
      %4427 = vmatprep.subr.mxu0 0.0
      %4428 = vmatpush1.msra.mxu0 0.0
      %4429 = vmatprep.subr.mxu0 0.0
      %4430 = vmatpush1.msra.mxu0 0.0
      %4431 = vmatprep.subr.mxu0 0.0
      %4432 = vmatpush1.msra.mxu0 0.0
      %4433 = vmatprep.subr.mxu0 0.0
      %4434 = vmatpush1.msra.mxu0 0.0
      %4435 = vmatprep.subr.mxu0 0.0
      %4436 = vmatpush1.msra.mxu0 0.0
      %4437 = vmatprep.subr.mxu0 0.0
      %4438 = vmatpush1.msra.mxu0 0.0
      %4439 = vmatprep.subr.mxu0 0.0
      %4440 = vmatpush1.msra.mxu0 0.0
      %4441 = vmatprep.mubr.f32.mxu0 0.0
      %4442 = vmatmul.mubr.f32.gmra.mrb[0].mxu0 %v4162
      %v4443 = vpop.f32.mrb[0].mxu0
      %v4444 = vadd.f32 %v4158, %v4443
      %v4445 = vpop.f32.mrb[0].mxu0
      %v4446 = vadd.f32 %v4158, %v4445
      %4447 = vdwg.mxu0
      %4448 = vmatprep.subr.mxu0 %v4099
      %4449 = vmatpush1.msra.mxu0 %v4098
      %4450 = vmatprep.subr.mxu0 %v4115
      %4451 = vmatpush1.msra.mxu0 %v4114
      %4452 = vmatprep.subr.mxu0 %v4131
      %4453 = vmatpush1.msra.mxu0 %v4130
      %4454 = vmatprep.subr.mxu0 %v4147
      %4455 = vmatpush1.msra.mxu0 %v4146
      %4456 = vmatprep.subr.mxu0 0.0
      %4457 = vmatpush1.msra.mxu0 0.0
      %4458 = vmatprep.subr.mxu0 0.0
      %4459 = vmatpush1.msra.mxu0 0.0
      %4460 = vmatprep.subr.mxu0 0.0
      %4461 = vmatpush1.msra.mxu0 0.0
      %4462 = vmatprep.subr.mxu0 0.0
      %4463 = vmatpush1.msra.mxu0 0.0
      %4464 = vmatprep.subr.mxu0 0.0
      %4465 = vmatpush1.msra.mxu0 0.0
      %4466 = vmatprep.subr.mxu0 0.0
      %4467 = vmatpush1.msra.mxu0 0.0
      %4468 = vmatprep.subr.mxu0 0.0
      %4469 = vmatpush1.msra.mxu0 0.0
      %4470 = vmatprep.subr.mxu0 0.0
      %4471 = vmatpush1.msra.mxu0 0.0
      %4472 = vmatprep.subr.mxu0 0.0
      %4473 = vmatpush1.msra.mxu0 0.0
      %4474 = vmatprep.subr.mxu0 0.0
      %4475 = vmatpush1.msra.mxu0 0.0
      %4476 = vmatprep.subr.mxu0 0.0
      %4477 = vmatpush1.msra.mxu0 0.0
      %4478 = vmatprep.subr.mxu0 0.0
      %4479 = vmatpush1.msra.mxu0 0.0
      %4480 = vmatprep.subr.mxu0 0.0
      %4481 = vmatpush1.msra.mxu0 0.0
      %4482 = vmatprep.subr.mxu0 0.0
      %4483 = vmatpush1.msra.mxu0 0.0
      %4484 = vmatprep.subr.mxu0 0.0
      %4485 = vmatpush1.msra.mxu0 0.0
      %4486 = vmatprep.subr.mxu0 0.0
      %4487 = vmatpush1.msra.mxu0 0.0
      %4488 = vmatprep.subr.mxu0 0.0
      %4489 = vmatpush1.msra.mxu0 0.0
      %4490 = vmatprep.subr.mxu0 0.0
      %4491 = vmatpush1.msra.mxu0 0.0
      %4492 = vmatprep.subr.mxu0 0.0
      %4493 = vmatpush1.msra.mxu0 0.0
      %4494 = vmatprep.subr.mxu0 0.0
      %4495 = vmatpush1.msra.mxu0 0.0
      %4496 = vmatprep.subr.mxu0 0.0
      %4497 = vmatpush1.msra.mxu0 0.0
      %4498 = vmatprep.subr.mxu0 0.0
      %4499 = vmatpush1.msra.mxu0 0.0
      %4500 = vmatprep.subr.mxu0 0.0
      %4501 = vmatpush1.msra.mxu0 0.0
      %4502 = vmatprep.subr.mxu0 0.0
      %4503 = vmatpush1.msra.mxu0 0.0
      %4504 = vmatprep.subr.mxu0 0.0
      %4505 = vmatpush1.msra.mxu0 0.0
      %4506 = vmatprep.subr.mxu0 0.0
      %4507 = vmatpush1.msra.mxu0 0.0
      %4508 = vmatprep.subr.mxu0 0.0
      %4509 = vmatpush1.msra.mxu0 0.0
      %4510 = vmatprep.subr.mxu0 0.0
      %4511 = vmatpush1.msra.mxu0 0.0
      %4512 = vmatprep.mubr.f32.mxu0 0.0
      %4513 = vmatmul.mubr.f32.gmra.mrb[0].mxu0 %v4162
      %v4514 = vpop.f32.mrb[0].mxu0
      %v4515 = vadd.f32 %v4158, %v4514
      %v4516 = vpop.f32.mrb[0].mxu0
      %v4517 = vadd.f32 %v4158, %v4516
      %4518 = vdwg.mxu0
      %4519 = vmatprep.subr.mxu0 %v4101
      %4520 = vmatpush1.msra.mxu0 %v4100
      %4521 = vmatprep.subr.mxu0 %v4117
      %4522 = vmatpush1.msra.mxu0 %v4116
      %4523 = vmatprep.subr.mxu0 %v4133
      %4524 = vmatpush1.msra.mxu0 %v4132
      %4525 = vmatprep.subr.mxu0 %v4149
      %4526 = vmatpush1.msra.mxu0 %v4148
      %4527 = vmatprep.subr.mxu0 0.0
      %4528 = vmatpush1.msra.mxu0 0.0
      %4529 = vmatprep.subr.mxu0 0.0
      %4530 = vmatpush1.msra.mxu0 0.0
      %4531 = vmatprep.subr.mxu0 0.0
      %4532 = vmatpush1.msra.mxu0 0.0
      %4533 = vmatprep.subr.mxu0 0.0
      %4534 = vmatpush1.msra.mxu0 0.0
      %4535 = vmatprep.subr.mxu0 0.0
      %4536 = vmatpush1.msra.mxu0 0.0
      %4537 = vmatprep.subr.mxu0 0.0
      %4538 = vmatpush1.msra.mxu0 0.0
      %4539 = vmatprep.subr.mxu0 0.0
      %4540 = vmatpush1.msra.mxu0 0.0
      %4541 = vmatprep.subr.mxu0 0.0
      %4542 = vmatpush1.msra.mxu0 0.0
      %4543 = vmatprep.subr.mxu0 0.0
      %4544 = vmatpush1.msra.mxu0 0.0
      %4545 = vmatprep.subr.mxu0 0.0
      %4546 = vmatpush1.msra.mxu0 0.0
      %4547 = vmatprep.subr.mxu0 0.0
      %4548 = vmatpush1.msra.mxu0 0.0
      %4549 = vmatprep.subr.mxu0 0.0
      %4550 = vmatpush1.msra.mxu0 0.0
      %4551 = vmatprep.subr.mxu0 0.0
      %4552 = vmatpush1.msra.mxu0 0.0
      %4553 = vmatprep.subr.mxu0 0.0
      %4554 = vmatpush1.msra.mxu0 0.0
      %4555 = vmatprep.subr.mxu0 0.0
      %4556 = vmatpush1.msra.mxu0 0.0
      %4557 = vmatprep.subr.mxu0 0.0
      %4558 = vmatpush1.msra.mxu0 0.0
      %4559 = vmatprep.subr.mxu0 0.0
      %4560 = vmatpush1.msra.mxu0 0.0
      %4561 = vmatprep.subr.mxu0 0.0
      %4562 = vmatpush1.msra.mxu0 0.0
      %4563 = vmatprep.subr.mxu0 0.0
      %4564 = vmatpush1.msra.mxu0 0.0
      %4565 = vmatprep.subr.mxu0 0.0
      %4566 = vmatpush1.msra.mxu0 0.0
      %4567 = vmatprep.subr.mxu0 0.0
      %4568 = vmatpush1.msra.mxu0 0.0
      %4569 = vmatprep.subr.mxu0 0.0
      %4570 = vmatpush1.msra.mxu0 0.0
      %4571 = vmatprep.subr.mxu0 0.0
      %4572 = vmatpush1.msra.mxu0 0.0
      %4573 = vmatprep.subr.mxu0 0.0
      %4574 = vmatpush1.msra.mxu0 0.0
      %4575 = vmatprep.subr.mxu0 0.0
      %4576 = vmatpush1.msra.mxu0 0.0
      %4577 = vmatprep.subr.mxu0 0.0
      %4578 = vmatpush1.msra.mxu0 0.0
      %4579 = vmatprep.subr.mxu0 0.0
      %4580 = vmatpush1.msra.mxu0 0.0
      %4581 = vmatprep.subr.mxu0 0.0
      %4582 = vmatpush1.msra.mxu0 0.0
      %4583 = vmatprep.mubr.f32.mxu0 0.0
      %4584 = vmatmul.mubr.f32.gmra.mrb[0].mxu0 %v4162
      %v4585 = vpop.f32.mrb[0].mxu0
      %v4586 = vadd.f32 %v4158, %v4585
      %v4587 = vpop.f32.mrb[0].mxu0
      %v4588 = vadd.f32 %v4158, %v4587
      %4589 = vdwg.mxu0
      %4590 = vmatprep.subr.mxu0 %v4103
      %4591 = vmatpush1.msra.mxu0 %v4102
      %4592 = vmatprep.subr.mxu0 %v4119
      %4593 = vmatpush1.msra.mxu0 %v4118
      %4594 = vmatprep.subr.mxu0 %v4135
      %4595 = vmatpush1.msra.mxu0 %v4134
      %4596 = vmatprep.subr.mxu0 %v4151
      %4597 = vmatpush1.msra.mxu0 %v4150
      %4598 = vmatprep.subr.mxu0 0.0
      %4599 = vmatpush1.msra.mxu0 0.0
      %4600 = vmatprep.subr.mxu0 0.0
      %4601 = vmatpush1.msra.mxu0 0.0
      %4602 = vmatprep.subr.mxu0 0.0
      %4603 = vmatpush1.msra.mxu0 0.0
      %4604 = vmatprep.subr.mxu0 0.0
      %4605 = vmatpush1.msra.mxu0 0.0
      %4606 = vmatprep.subr.mxu0 0.0
      %4607 = vmatpush1.msra.mxu0 0.0
      %4608 = vmatprep.subr.mxu0 0.0
      %4609 = vmatpush1.msra.mxu0 0.0
      %4610 = vmatprep.subr.mxu0 0.0
      %4611 = vmatpush1.msra.mxu0 0.0
      %4612 = vmatprep.subr.mxu0 0.0
      %4613 = vmatpush1.msra.mxu0 0.0
      %4614 = vmatprep.subr.mxu0 0.0
      %4615 = vmatpush1.msra.mxu0 0.0
      %4616 = vmatprep.subr.mxu0 0.0
      %4617 = vmatpush1.msra.mxu0 0.0
      %4618 = vmatprep.subr.mxu0 0.0
      %4619 = vmatpush1.msra.mxu0 0.0
      %4620 = vmatprep.subr.mxu0 0.0
      %4621 = vmatpush1.msra.mxu0 0.0
      %4622 = vmatprep.subr.mxu0 0.0
      %4623 = vmatpush1.msra.mxu0 0.0
      %4624 = vmatprep.subr.mxu0 0.0
      %4625 = vmatpush1.msra.mxu0 0.0
      %4626 = vmatprep.subr.mxu0 0.0
      %4627 = vmatpush1.msra.mxu0 0.0
      %4628 = vmatprep.subr.mxu0 0.0
      %4629 = vmatpush1.msra.mxu0 0.0
      %4630 = vmatprep.subr.mxu0 0.0
      %4631 = vmatpush1.msra.mxu0 0.0
      %4632 = vmatprep.subr.mxu0 0.0
      %4633 = vmatpush1.msra.mxu0 0.0
      %4634 = vmatprep.subr.mxu0 0.0
      %4635 = vmatpush1.msra.mxu0 0.0
      %4636 = vmatprep.subr.mxu0 0.0
      %4637 = vmatpush1.msra.mxu0 0.0
      %4638 = vmatprep.subr.mxu0 0.0
      %4639 = vmatpush1.msra.mxu0 0.0
      %4640 = vmatprep.subr.mxu0 0.0
      %4641 = vmatpush1.msra.mxu0 0.0
      %4642 = vmatprep.subr.mxu0 0.0
      %4643 = vmatpush1.msra.mxu0 0.0
      %4644 = vmatprep.subr.mxu0 0.0
      %4645 = vmatpush1.msra.mxu0 0.0
      %4646 = vmatprep.subr.mxu0 0.0
      %4647 = vmatpush1.msra.mxu0 0.0
      %4648 = vmatprep.subr.mxu0 0.0
      %4649 = vmatpush1.msra.mxu0 0.0
      %4650 = vmatprep.subr.mxu0 0.0
      %4651 = vmatpush1.msra.mxu0 0.0
      %4652 = vmatprep.subr.mxu0 0.0
      %4653 = vmatpush1.msra.mxu0 0.0
      %4654 = vmatprep.mubr.f32.mxu0 0.0
      %4655 = vmatmul.mubr.f32.gmra.mrb[0].mxu0 %v4162
      %v4656 = vpop.f32.mrb[0].mxu0
      %v4657 = vadd.f32 %v4158, %v4656
      %v4658 = vpop.f32.mrb[0].mxu0
      %v4659 = vadd.f32 %v4158, %v4658
      %4660 = vdwg.mxu0
      %4661 = vmatprep.subr.mxu0 %v4105
      %4662 = vmatpush1.msra.mxu0 %v4104
      %4663 = vmatprep.subr.mxu0 %v4121
      %4664 = vmatpush1.msra.mxu0 %v4120
      %4665 = vmatprep.subr.mxu0 %v4137
      %4666 = vmatpush1.msra.mxu0 %v4136
      %4667 = vmatprep.subr.mxu0 %v4153
      %4668 = vmatpush1.msra.mxu0 %v4152
      %4669 = vmatprep.subr.mxu0 0.0
      %4670 = vmatpush1.msra.mxu0 0.0
      %4671 = vmatprep.subr.mxu0 0.0
      %4672 = vmatpush1.msra.mxu0 0.0
      %4673 = vmatprep.subr.mxu0 0.0
      %4674 = vmatpush1.msra.mxu0 0.0
      %4675 = vmatprep.subr.mxu0 0.0
      %4676 = vmatpush1.msra.mxu0 0.0
      %4677 = vmatprep.subr.mxu0 0.0
      %4678 = vmatpush1.msra.mxu0 0.0
      %4679 = vmatprep.subr.mxu0 0.0
      %4680 = vmatpush1.msra.mxu0 0.0
      %4681 = vmatprep.subr.mxu0 0.0
      %4682 = vmatpush1.msra.mxu0 0.0
      %4683 = vmatprep.subr.mxu0 0.0
      %4684 = vmatpush1.msra.mxu0 0.0
      %4685 = vmatprep.subr.mxu0 0.0
      %4686 = vmatpush1.msra.mxu0 0.0
      %4687 = vmatprep.subr.mxu0 0.0
      %4688 = vmatpush1.msra.mxu0 0.0
      %4689 = vmatprep.subr.mxu0 0.0
      %4690 = vmatpush1.msra.mxu0 0.0
      %4691 = vmatprep.subr.mxu0 0.0
      %4692 = vmatpush1.msra.mxu0 0.0
      %4693 = vmatprep.subr.mxu0 0.0
      %4694 = vmatpush1.msra.mxu0 0.0
      %4695 = vmatprep.subr.mxu0 0.0
      %4696 = vmatpush1.msra.mxu0 0.0
      %4697 = vmatprep.subr.mxu0 0.0
      %4698 = vmatpush1.msra.mxu0 0.0
      %4699 = vmatprep.subr.mxu0 0.0
      %4700 = vmatpush1.msra.mxu0 0.0
      %4701 = vmatprep.subr.mxu0 0.0
      %4702 = vmatpush1.msra.mxu0 0.0
      %4703 = vmatprep.subr.mxu0 0.0
      %4704 = vmatpush1.msra.mxu0 0.0
      %4705 = vmatprep.subr.mxu0 0.0
      %4706 = vmatpush1.msra.mxu0 0.0
      %4707 = vmatprep.subr.mxu0 0.0
      %4708 = vmatpush1.msra.mxu0 0.0
      %4709 = vmatprep.subr.mxu0 0.0
      %4710 = vmatpush1.msra.mxu0 0.0
      %4711 = vmatprep.subr.mxu0 0.0
      %4712 = vmatpush1.msra.mxu0 0.0
      %4713 = vmatprep.subr.mxu0 0.0
      %4714 = vmatpush1.msra.mxu0 0.0
      %4715 = vmatprep.subr.mxu0 0.0
      %4716 = vmatpush1.msra.mxu0 0.0
      %4717 = vmatprep.subr.mxu0 0.0
      %4718 = vmatpush1.msra.mxu0 0.0
      %4719 = vmatprep.subr.mxu0 0.0
      %4720 = vmatpush1.msra.mxu0 0.0
      %4721 = vmatprep.subr.mxu0 0.0
      %4722 = vmatpush1.msra.mxu0 0.0
      %4723 = vmatprep.subr.mxu0 0.0
      %4724 = vmatpush1.msra.mxu0 0.0
      %4725 = vmatprep.mubr.f32.mxu0 0.0
      %4726 = vmatmul.mubr.f32.gmra.mrb[0].mxu0 %v4162
      %v4727 = vpop.f32.mrb[0].mxu0
      %v4728 = vadd.f32 %v4158, %v4727
      %v4729 = vpop.f32.mrb[0].mxu0
      %v4730 = vadd.f32 %v4158, %v4729
      %4731 = vdwg.mxu0
      %v4748 = vcombine.low %v4231, %v4233
      %v4749 = vcombine.low %v4302, %v4304
      %v4750 = vcombine.low %v4373, %v4375
      %v4751 = vcombine.low %v4444, %v4446
      %v4752 = vcombine.low %v4515, %v4517
      %v4753 = vcombine.low %v4586, %v4588
      %v4754 = vcombine.low %v4657, %v4659
      %v4755 = vcombine.low %v4728, %v4730
      %4764 = vst [vmem:[%s205] sm:$0x77] %v4748
      %4765 = vst [vmem:[%s205 + $0x8] sm:$0x77] %v4749
      %4766 = vst [vmem:[%s205 + $0x10] sm:$0x77] %v4750
      %4767 = vst [vmem:[%s205 + $0x18] sm:$0x77] %v4751
      %4768 = vst [vmem:[%s205 + $0x20] sm:$0x77] %v4752
      %4769 = vst [vmem:[%s205 + $0x28] sm:$0x77] %v4753
      %4770 = vst [vmem:[%s205 + $0x30] sm:$0x77] %v4754
      %4771 = vst [vmem:[%s205 + $0x38] sm:$0x77] %v4755
      %p4772 = scmp.lt.s32.totalorder %s16, 1
      %s4773 = scalar_select %p4772, %s16, 1
      %s4774 = smul.addr %s4773, 16
      %s4775 = smul.addr %s4774, 4
      %s4776 = scalar_lea.vmem %s3, %s4775
      %p4777 = scmp.lt.s32.totalorder %s16, 1
      %s4778 = scalar_select %p4777, %s16, 1
      %s4779 = smul.addr %s4778, 16
      %s4780 = smul.addr %s4779, 4
      %s4781 = scalar_lea.vmem %s4, %s4780
      // Predicated region
      $region33: #{skip_foldingnet_forward.3} parent=31 // pred_check
        %p4782 = pneg %p102
      $region34: #{skip_foldingnet_forward.3} parent=31 // pred_check_branch
        %4784 = sbr.rel (%p4782) target = $region36
      $region35: #{skip_foldingnet_forward.3} parent=31 // pred_region
        _
      $region36: #{skip_foldingnet_forward.3} parent=31 // pred_fallthru
        _
      // Predicated region
      $region37: #{skip_foldingnet_forward.3} parent=31 // pred_check
        %p4785 = pneg %p128
      $region38: #{skip_foldingnet_forward.3} parent=31 // pred_check_branch
        %4787 = sbr.rel (%p4785) target = $region40
      $region39: #{skip_foldingnet_forward.3} parent=31 // pred_region
        _
      $region40: #{skip_foldingnet_forward.3} parent=31 // pred_fallthru
        _
    $region32: #{skip_foldingnet_forward.3} parent=5 // pred_fallthru
      _
    %p4788 = scmp.le.s32.totalorder 2, %s11
    // Predicated region
    $region41: #{skip_foldingnet_forward.3} parent=5 // pred_check
      %p4789 = pneg %p4788
    $region42: #{skip_foldingnet_forward.3} parent=5 // pred_check_branch
      %4791 = sbr.rel (%p4789) target = $region44
    $region43: #{skip_foldingnet_forward.3} parent=5 // pred_region
      %s4792 = ssub.s32 %s11, 2
      // Predicated region
      $region45: #{skip_foldingnet_forward.3} parent=43 // pred_check
        %p4793 = pneg %p108
      $region46: #{skip_foldingnet_forward.3} parent=43 // pred_check_branch
        %4795 = sbr.rel (%p4793) target = $region48
      $region47: #{skip_foldingnet_forward.3} parent=43 // pred_region
        %p4796 = scmp.lt.s32.totalorder %s17, 1
        %s4797 = scalar_select %p4796, %s17, 1
        %s4798 = smul.addr %s4797, 16
        %s4799 = smul.addr %s4798, 4
        %s4800 = scalar_lea.vmem %s3, %s4799
      $region48: #{skip_foldingnet_forward.3} parent=43 // pred_fallthru
        _
      // Predicated region
      $region49: #{skip_foldingnet_forward.3} parent=43 // pred_check
        %p4801 = pneg %p134
      $region50: #{skip_foldingnet_forward.3} parent=43 // pred_check_branch
        %4803 = sbr.rel (%p4801) target = $region52
      $region51: #{skip_foldingnet_forward.3} parent=43 // pred_region
        %p4804 = scmp.lt.s32.totalorder %s17, 1
        %s4805 = scalar_select %p4804, %s17, 1
        %s4806 = smul.addr %s4805, 16
        %s4807 = smul.addr %s4806, 4
        %s4808 = scalar_lea.vmem %s4, %s4807
      $region52: #{skip_foldingnet_forward.3} parent=43 // pred_fallthru
        _
    $region44: #{skip_foldingnet_forward.3} parent=5 // pred_fallthru
      _
  $region6: #{skip_foldingnet_forward.3} parent=0 // loop_footer
    %s15 = sadd.s32 1, %s11
  $region7: #{skip_foldingnet_forward.3} parent=0 // loop_footer_branch
    %10 = sbr.rel target = $region3
  $region8: #{skip_foldingnet_forward.3} parent=0 // loop_exit
    _

// kernel: skip_foldingnet_forward.2
$region0: #{skip_foldingnet_forward.2}
  #allocation0 [shape = 'u32[]', space=smem, size = 0x4, offset = 0x4, fixed_abs, tag = 'smem constant byte address 0x4 - core index']
  #allocation1 [shape = 'u32[144,128]{1,0:T(1,128)}', space=vmem, size = 0x12000, scoped, tag = 'internal scratch']
  %s0 = inlined_call_operand.vmem [shape: f32[2,64,3], index: 0, kind: input, shape index: {}]
  %s1 = inlined_call_operand.vmem [shape: s32[2,64,16], index: 1, kind: input, shape index: {}]
  %s2 = inlined_call_operand.vmem [shape: f32[208,64], index: 2, kind: input, shape index: {}]
  %s3 = inlined_call_operand.vmem [shape: f32[194,128], index: 3, kind: input, shape index: {}]
  %s4 = inlined_call_operand.vmem [shape: bf16[129,1024], index: 4, kind: input, shape index: {}]
  %s5 = inlined_call_operand.vmem [shape: f32[1122,32], index: 5, kind: input, shape index: {}]
  %s6 = inlined_call_operand.vmem [shape: f32[2,1,32], index: 6, kind: output, shape index: {}]
  %s7 = sld [smem:[#allocation0]]
  $region57: #{skip_foldingnet_forward.2} parent=0
    _
  %s9 = ssub.s32 1, %s7
  %s10 = scalar_select 0, %s9, %s7
  loop: start=0, step=1, limit=4
  $region2: #{skip_foldingnet_forward.2} parent=0 // loop_pre_header
    _
  $region3: #{skip_foldingnet_forward.2} parent=0 // loop_header
    %s12 = sphi 0, %s16
    %p13 = scmp.ge.s32.totalorder %s12, 4
    %s22 = sphi 0, %s24
    %s25 = sphi 0, %s22
    %s26 = sphi 0, %s25
    %s42 = sphi 0, %s26
    %s48 = sphi 0, %s50
    %s51 = sphi 0, %s48
    %s52 = sphi 0, %s51
    %s68 = sphi 0, %s52
    %s72 = sphi 0, %s72
    %s74 = sphi 0, %s72
    %s75 = sphi 0, %s74
    %s89 = sphi 0, %s75
    %s93 = sphi 0, %s93
    %s95 = sphi 0, %s93
    %s96 = sphi 0, %s95
    %s110 = sphi 0, %s96
    %s114 = sphi 0, %s114
    %s116 = sphi 0, %s114
    %s117 = sphi 0, %s116
    %s131 = sphi 0, %s117
    %s135 = sphi 0, %s135
    %s137 = sphi 0, %s135
    %s138 = sphi 0, %s137
    %s152 = sphi 0, %s138
    %s158 = sphi 0, %s160
    %s161 = sphi 0, %s158
    %s162 = sphi 0, %s161
    %s178 = sphi 0, %s162
  $region4: #{skip_foldingnet_forward.2} parent=0 // loop_header_branch
    %15 = sbr.rel (%p13) target = $region8
  $region5: #{skip_foldingnet_forward.2} parent=0 // loop_body
    %s17 = ssub.s32 %s12, 1
    %s18 = ssub.s32 %s12, 2
    %s19 = sadd.s32 %s12, 1
    %s20 = ssub.s32 %s12, %s19
    %p21 = scmp.eq.s32.totalorder %s20, 0
    %s23 = sadd.s32 %s22, 1
    %s24 = scalar_select %p21, %s22, %s23
    %p27 = pneg %p21
    %p28 = scmp.eq.s32.totalorder %s12, 1
    %p29 = por %p27, %p28
    %p30 = scmp.ne.s32.totalorder %s22, %s25
    %p31 = scmp.eq.s32.totalorder %s12, 0
    %p32 = por %p30, %p31
    %p33 = scmp.ne.s32.totalorder %s22, %s25
    %p34 = scmp.eq.s32.totalorder %s17, 1
    %p35 = por %p33, %p34
    %p36 = scmp.ne.s32.totalorder %s25, %s26
    %p37 = scmp.eq.s32.totalorder %s17, 0
    %p38 = por %p36, %p37
    %p39 = scmp.ne.s32.totalorder %s25, %s26
    %p40 = scmp.eq.s32.totalorder %s18, 1
    %p41 = por %p39, %p40
    %p43 = scmp.ne.s32.totalorder %s26, %s42
    %p44 = scmp.eq.s32.totalorder %s18, 0
    %p45 = por %p43, %p44
    %s46 = ssub.s32 %s12, %s19
    %p47 = scmp.eq.s32.totalorder %s46, 0
    %s49 = sadd.s32 %s48, 1
    %s50 = scalar_select %p47, %s48, %s49
    %p53 = pneg %p47
    %p54 = scmp.eq.s32.totalorder %s12, 1
    %p55 = por %p53, %p54
    %p56 = scmp.ne.s32.totalorder %s48, %s51
    %p57 = scmp.eq.s32.totalorder %s12, 0
    %p58 = por %p56, %p57
    %p59 = scmp.ne.s32.totalorder %s48, %s51
    %p60 = scmp.eq.s32.totalorder %s17, 1
    %p61 = por %p59, %p60
    %p62 = scmp.ne.s32.totalorder %s51, %s52
    %p63 = scmp.eq.s32.totalorder %s17, 0
    %p64 = por %p62, %p63
    %p65 = scmp.ne.s32.totalorder %s51, %s52
    %p66 = scmp.eq.s32.totalorder %s18, 1
    %p67 = por %p65, %p66
    %p69 = scmp.ne.s32.totalorder %s52, %s68
    %p70 = scmp.eq.s32.totalorder %s18, 0
    %p71 = por %p69, %p70
    %s73 = sadd.s32 %s72, 1
    %p76 = scmp.eq.s32.totalorder %s12, 1
    %p77 = scmp.ne.s32.totalorder %s72, %s74
    %p78 = scmp.eq.s32.totalorder %s12, 0
    %p79 = por %p77, %p78
    %p80 = scmp.ne.s32.totalorder %s72, %s74
    %p81 = scmp.eq.s32.totalorder %s17, 1
    %p82 = por %p80, %p81
    %p83 = scmp.ne.s32.totalorder %s74, %s75
    %p84 = scmp.eq.s32.totalorder %s17, 0
    %p85 = por %p83, %p84
    %p86 = scmp.ne.s32.totalorder %s74, %s75
    %p87 = scmp.eq.s32.totalorder %s18, 1
    %p88 = por %p86, %p87
    %p90 = scmp.ne.s32.totalorder %s75, %s89
    %p91 = scmp.eq.s32.totalorder %s18, 0
    %p92 = por %p90, %p91
    %s94 = sadd.s32 %s93, 1
    %p97 = scmp.eq.s32.totalorder %s12, 1
    %p98 = scmp.ne.s32.totalorder %s93, %s95
    %p99 = scmp.eq.s32.totalorder %s12, 0
    %p100 = por %p98, %p99
    %p101 = scmp.ne.s32.totalorder %s93, %s95
    %p102 = scmp.eq.s32.totalorder %s17, 1
    %p103 = por %p101, %p102
    %p104 = scmp.ne.s32.totalorder %s95, %s96
    %p105 = scmp.eq.s32.totalorder %s17, 0
    %p106 = por %p104, %p105
    %p107 = scmp.ne.s32.totalorder %s95, %s96
    %p108 = scmp.eq.s32.totalorder %s18, 1
    %p109 = por %p107, %p108
    %p111 = scmp.ne.s32.totalorder %s96, %s110
    %p112 = scmp.eq.s32.totalorder %s18, 0
    %p113 = por %p111, %p112
    %s115 = sadd.s32 %s114, 1
    %p118 = scmp.eq.s32.totalorder %s12, 1
    %p119 = scmp.ne.s32.totalorder %s114, %s116
    %p120 = scmp.eq.s32.totalorder %s12, 0
    %p121 = por %p119, %p120
    %p122 = scmp.ne.s32.totalorder %s114, %s116
    %p123 = scmp.eq.s32.totalorder %s17, 1
    %p124 = por %p122, %p123
    %p125 = scmp.ne.s32.totalorder %s116, %s117
    %p126 = scmp.eq.s32.totalorder %s17, 0
    %p127 = por %p125, %p126
    %p128 = scmp.ne.s32.totalorder %s116, %s117
    %p129 = scmp.eq.s32.totalorder %s18, 1
    %p130 = por %p128, %p129
    %p132 = scmp.ne.s32.totalorder %s117, %s131
    %p133 = scmp.eq.s32.totalorder %s18, 0
    %p134 = por %p132, %p133
    %s136 = sadd.s32 %s135, 1
    %p139 = scmp.eq.s32.totalorder %s12, 1
    %p140 = scmp.ne.s32.totalorder %s135, %s137
    %p141 = scmp.eq.s32.totalorder %s12, 0
    %p142 = por %p140, %p141
    %p143 = scmp.ne.s32.totalorder %s135, %s137
    %p144 = scmp.eq.s32.totalorder %s17, 1
    %p145 = por %p143, %p144
    %p146 = scmp.ne.s32.totalorder %s137, %s138
    %p147 = scmp.eq.s32.totalorder %s17, 0
    %p148 = por %p146, %p147
    %p149 = scmp.ne.s32.totalorder %s137, %s138
    %p150 = scmp.eq.s32.totalorder %s18, 1
    %p151 = por %p149, %p150
    %p153 = scmp.ne.s32.totalorder %s138, %s152
    %p154 = scmp.eq.s32.totalorder %s18, 0
    %p155 = por %p153, %p154
    %s156 = ssub.s32 %s12, %s19
    %p157 = scmp.eq.s32.totalorder %s156, 0
    %s159 = sadd.s32 %s158, 1
    %s160 = scalar_select %p157, %s158, %s159
    %p163 = pneg %p157
    %p164 = scmp.eq.s32.totalorder %s12, 1
    %p165 = por %p163, %p164
    %p166 = scmp.ne.s32.totalorder %s158, %s161
    %p167 = scmp.eq.s32.totalorder %s12, 0
    %p168 = por %p166, %p167
    %p169 = scmp.ne.s32.totalorder %s158, %s161
    %p170 = scmp.eq.s32.totalorder %s17, 1
    %p171 = por %p169, %p170
    %p172 = scmp.ne.s32.totalorder %s161, %s162
    %p173 = scmp.eq.s32.totalorder %s17, 0
    %p174 = por %p172, %p173
    %p175 = scmp.ne.s32.totalorder %s161, %s162
    %p176 = scmp.eq.s32.totalorder %s18, 1
    %p177 = por %p175, %p176
    %p179 = scmp.ne.s32.totalorder %s162, %s178
    %p180 = scmp.eq.s32.totalorder %s18, 0
    %p181 = por %p179, %p180
    %p182 = scmp.le.s32.totalorder 1, %s12
    %p183 = scmp.lt.s32.totalorder %s12, 3
    %p184 = pnand %p182, %p183
    %p185 = pneg %p184
    // Predicated region
    $region9: #{skip_foldingnet_forward.2} parent=5 // pred_check
      _
    $region10: #{skip_foldingnet_forward.2} parent=5 // pred_check_branch
      %187 = sbr.rel (%p184) target = $region12
    $region11: #{skip_foldingnet_forward.2} parent=5 // pred_region
      %s188 = ssub.s32 %s12, 1
      // Predicated region
      $region13: #{skip_foldingnet_forward.2} parent=11 // pred_check
        %p189 = pneg %p85
      $region14: #{skip_foldingnet_forward.2} parent=11 // pred_check_branch
        %191 = sbr.rel (%p189) target = $region16
      $region15: #{skip_foldingnet_forward.2} parent=11 // pred_region
        _
      $region16: #{skip_foldingnet_forward.2} parent=11 // pred_fallthru
        _
      // Predicated region
      $region17: #{skip_foldingnet_forward.2} parent=11 // pred_check
        %p192 = pneg %p106
      $region18: #{skip_foldingnet_forward.2} parent=11 // pred_check_branch
        %194 = sbr.rel (%p192) target = $region20
      $region19: #{skip_foldingnet_forward.2} parent=11 // pred_region
        _
      $region20: #{skip_foldingnet_forward.2} parent=11 // pred_fallthru
        _
      // Predicated region
      $region21: #{skip_foldingnet_forward.2} parent=11 // pred_check
        %p195 = pneg %p127
      $region22: #{skip_foldingnet_forward.2} parent=11 // pred_check_branch
        %197 = sbr.rel (%p195) target = $region24
      $region23: #{skip_foldingnet_forward.2} parent=11 // pred_region
        _
      $region24: #{skip_foldingnet_forward.2} parent=11 // pred_fallthru
        _
      // Predicated region
      $region25: #{skip_foldingnet_forward.2} parent=11 // pred_check
        %p198 = pneg %p148
      $region26: #{skip_foldingnet_forward.2} parent=11 // pred_check_branch
        %200 = sbr.rel (%p198) target = $region28
      $region27: #{skip_foldingnet_forward.2} parent=11 // pred_region
        _
      $region28: #{skip_foldingnet_forward.2} parent=11 // pred_fallthru
        _
    $region12: #{skip_foldingnet_forward.2} parent=5 // pred_fallthru
      _
    %p201 = scmp.lt.s32.totalorder %s12, 2
    // Predicated region
    $region29: #{skip_foldingnet_forward.2} parent=5 // pred_check
      %p202 = pneg %p201
    $region30: #{skip_foldingnet_forward.2} parent=5 // pred_check_branch
      %204 = sbr.rel (%p202) target = $region32
    $region31: #{skip_foldingnet_forward.2} parent=5 // pred_region
      // Predicated region
      $region33: #{skip_foldingnet_forward.2} parent=31 // pred_check
        %p205 = pneg %p32
      $region34: #{skip_foldingnet_forward.2} parent=31 // pred_check_branch
        %207 = sbr.rel (%p205) target = $region36
      $region35: #{skip_foldingnet_forward.2} parent=31 // pred_region
        %p208 = scmp.lt.s32.totalorder %s12, 1
        %s209 = scalar_select %p208, %s12, 1
        %s210 = smul.addr %s209, 8
        %s211 = smul.addr %s210, 8
        %s212 = scalar_lea.vmem %s0, %s211
      $region36: #{skip_foldingnet_forward.2} parent=31 // pred_fallthru
        _
      // Predicated region
      $region37: #{skip_foldingnet_forward.2} parent=31 // pred_check
        %p213 = pneg %p58
      $region38: #{skip_foldingnet_forward.2} parent=31 // pred_check_branch
        %215 = sbr.rel (%p213) target = $region40
      $region39: #{skip_foldingnet_forward.2} parent=31 // pred_region
        %p216 = scmp.lt.s32.totalorder %s12, 1
        %s217 = scalar_select %p216, %s12, 1
        %s218 = smul.addr %s217, 8
        %s219 = smul.addr %s218, 8
        %s220 = scalar_lea.vmem %s1, %s219
      $region40: #{skip_foldingnet_forward.2} parent=31 // pred_fallthru
        _
    $region32: #{skip_foldingnet_forward.2} parent=5 // pred_fallthru
      _
    %p221 = scmp.le.s32.totalorder 1, %s12
    %p222 = scmp.lt.s32.totalorder %s12, 3
    %p223 = pnand %p221, %p222
    %p224 = pneg %p223
    // Predicated region
    $region41: #{skip_foldingnet_forward.2} parent=5 // pred_check
      _
    $region42: #{skip_foldingnet_forward.2} parent=5 // pred_check_branch
      %226 = sbr.rel (%p223) target = $region44
    $region43: #{skip_foldingnet_forward.2} parent=5 // pred_region
      %s227 = ssub.s32 %s12, 1
      %p228 = scmp.lt.s32.totalorder %s17, 1
      %s229 = scalar_select %p228, %s17, 1
      %s230 = smul.addr %s229, 8
      %s231 = smul.addr %s230, 8
      %s232 = scalar_lea.vmem %s0, %s231
      %p233 = pneg %p38
      %p234 = pneg %p35
      %p235 = scmp.lt.s32.totalorder %s17, 1
      %s236 = scalar_select %p235, %s17, 1
      %s237 = smul.addr %s236, 8
      %s238 = smul.addr %s237, 8
      %s239 = scalar_lea.vmem %s1, %s238
      %p240 = pneg %p64
      %p241 = pneg %p61
      %p242 = pneg %p85
      %p243 = pneg %p82
      %p244 = pneg %p106
      %p245 = pneg %p103
      %p246 = pneg %p127
      %p247 = pneg %p124
      %p248 = pneg %p148
      %p249 = pneg %p145
      %p250 = pneg %p174
      %p251 = pneg %p171
      %p252 = scmp.lt.s32.totalorder %s17, 1
      %s253 = scalar_select %p252, %s17, 1
      %s254 = scalar_lea.vmem %s6, %s253
      %p255 = scmp.lt.s32.totalorder %s17, 1
      %s256 = scalar_select %p255, %s17, 1
      %s257 = smul.addr %s256, 8
      %s258 = smul.addr %s257, 8
      %s259 = scalar_lea.vmem %s0, %s258
      %p260 = scmp.lt.s32.totalorder %s17, 1
      %s261 = scalar_select %p260, %s17, 1
      %s262 = smul.addr %s261, 8
      %s263 = smul.addr %s262, 8
      %s264 = scalar_lea.vmem %s1, %s263
      %p265 = scmp.lt.s32.totalorder %s17, 1
      %s266 = scalar_select %p265, %s17, 1
      %s267 = scalar_lea.vmem %s6, %s266
      %v269 = vld [vmem:[%s259] sm:$0xff]
      %v270 = vld [vmem:[%s259 + $0x8] sm:$0xff]
      %v271 = vld [vmem:[%s259 + $0x10] sm:$0xff]
      %v272 = vld [vmem:[%s259 + $0x18] sm:$0xff]
      %v273 = vld [vmem:[%s259 + $0x20] sm:$0xff]
      %v274 = vld [vmem:[%s259 + $0x28] sm:$0xff]
      %v275 = vld [vmem:[%s259 + $0x30] sm:$0xff]
      %v276 = vld [vmem:[%s259 + $0x38] sm:$0xff]
      %v277 = vld [vmem:[%s264] sm:$0xff]
      %v278 = vld [vmem:[%s264 + $0x8] sm:$0xff]
      %v279 = vld [vmem:[%s264 + $0x10] sm:$0xff]
      %v280 = vld [vmem:[%s264 + $0x18] sm:$0xff]
      %v281 = vld [vmem:[%s264 + $0x20] sm:$0xff]
      %v282 = vld [vmem:[%s264 + $0x28] sm:$0xff]
      %v283 = vld [vmem:[%s264 + $0x30] sm:$0xff]
      %v284 = vld [vmem:[%s264 + $0x38] sm:$0xff]
      %v285 = vlaneseq
      %v286 = vand.u32 %v285, 127
      %287 = vset.pattern.permute.xlu0 0
      %288 = vperm.xlu0 %287, %v277
      %v289 = vpop.permute.xlu0 %288
      %290 = vset.pattern.permute.xlu0 0
      %291 = vperm.xlu0 %290, %v278
      %v292 = vpop.permute.xlu0 %291
      %293 = vset.pattern.permute.xlu0 0
      %294 = vperm.xlu0 %293, %v279
      %v295 = vpop.permute.xlu0 %294
      %296 = vset.pattern.permute.xlu0 0
      %297 = vperm.xlu0 %296, %v280
      %v298 = vpop.permute.xlu0 %297
      %299 = vset.pattern.permute.xlu0 0
      %300 = vperm.xlu0 %299, %v281
      %v301 = vpop.permute.xlu0 %300
      %302 = vset.pattern.permute.xlu0 0
      %303 = vperm.xlu0 %302, %v282
      %v304 = vpop.permute.xlu0 %303
      %305 = vset.pattern.permute.xlu0 0
      %306 = vperm.xlu0 %305, %v283
      %v307 = vpop.permute.xlu0 %306
      %308 = vset.pattern.permute.xlu0 0
      %309 = vperm.xlu0 %308, %v284
      %v310 = vpop.permute.xlu0 %309
      %vm311 = vcmp.eq.s32.totalorder %v289, %v286
      %vm312 = vcmp.eq.s32.totalorder %v292, %v286
      %vm313 = vcmp.eq.s32.totalorder %v295, %v286
      %vm314 = vcmp.eq.s32.totalorder %v298, %v286
      %vm315 = vcmp.eq.s32.totalorder %v301, %v286
      %vm316 = vcmp.eq.s32.totalorder %v304, %v286
      %vm317 = vcmp.eq.s32.totalorder %v307, %v286
      %vm318 = vcmp.eq.s32.totalorder %v310, %v286
      %v319 = vsel %vm311, 1, 0
      %v320 = vsel %vm312, 1, 0
      %v321 = vsel %vm313, 1, 0
      %v322 = vsel %vm314, 1, 0
      %v323 = vsel %vm315, 1, 0
      %v324 = vsel %vm316, 1, 0
      %v325 = vsel %vm317, 1, 0
      %v326 = vsel %vm318, 1, 0
      %v327 = vcvt.s32.f32 %v319
      %v328 = vcvt.s32.f32 %v320
      %v329 = vcvt.s32.f32 %v321
      %v330 = vcvt.s32.f32 %v322
      %v331 = vcvt.s32.f32 %v323
      %v332 = vcvt.s32.f32 %v324
      %v333 = vcvt.s32.f32 %v325
      %v334 = vcvt.s32.f32 %v326
      %335 = vset.pattern.permute.xlu0 1
      %336 = vperm.xlu0 %335, %v277
      %v337 = vpop.permute.xlu0 %336
      %338 = vset.pattern.permute.xlu0 1
      %339 = vperm.xlu0 %338, %v278
      %v340 = vpop.permute.xlu0 %339
      %341 = vset.pattern.permute.xlu0 1
      %342 = vperm.xlu0 %341, %v279
      %v343 = vpop.permute.xlu0 %342
      %344 = vset.pattern.permute.xlu0 1
      %345 = vperm.xlu0 %344, %v280
      %v346 = vpop.permute.xlu0 %345
      %347 = vset.pattern.permute.xlu0 1
      %348 = vperm.xlu0 %347, %v281
      %v349 = vpop.permute.xlu0 %348
      %350 = vset.pattern.permute.xlu0 1
      %351 = vperm.xlu0 %350, %v282
      %v352 = vpop.permute.xlu0 %351
      %353 = vset.pattern.permute.xlu0 1
      %354 = vperm.xlu0 %353, %v283
      %v355 = vpop.permute.xlu0 %354
      %356 = vset.pattern.permute.xlu0 1
      %357 = vperm.xlu0 %356, %v284
      %v358 = vpop.permute.xlu0 %357
      %vm359 = vcmp.eq.s32.totalorder %v337, %v286
      %vm360 = vcmp.eq.s32.totalorder %v340, %v286
      %vm361 = vcmp.eq.s32.totalorder %v343, %v286
      %vm362 = vcmp.eq.s32.totalorder %v346, %v286
      %vm363 = vcmp.eq.s32.totalorder %v349, %v286
      %vm364 = vcmp.eq.s32.totalorder %v352, %v286
      %vm365 = vcmp.eq.s32.totalorder %v355, %v286
      %vm366 = vcmp.eq.s32.totalorder %v358, %v286
      %v367 = vsel %vm359, 1, 0
      %v368 = vsel %vm360, 1, 0
      %v369 = vsel %vm361, 1, 0
      %v370 = vsel %vm362, 1, 0
      %v371 = vsel %vm363, 1, 0
      %v372 = vsel %vm364, 1, 0
      %v373 = vsel %vm365, 1, 0
      %v374 = vsel %vm366, 1, 0
      %v375 = vcvt.s32.f32 %v367
      %v376 = vcvt.s32.f32 %v368
      %v377 = vcvt.s32.f32 %v369
      %v378 = vcvt.s32.f32 %v370
      %v379 = vcvt.s32.f32 %v371
      %v380 = vcvt.s32.f32 %v372
      %v381 = vcvt.s32.f32 %v373
      %v382 = vcvt.s32.f32 %v374
      %383 = vset.pattern.permute.xlu0 2
      %384 = vperm.xlu0 %383, %v277
      %v385 = vpop.permute.xlu0 %384
      %386 = vset.pattern.permute.xlu0 2
      %387 = vperm.xlu0 %386, %v278
      %v388 = vpop.permute.xlu0 %387
      %389 = vset.pattern.permute.xlu0 2
      %390 = vperm.xlu0 %389, %v279
      %v391 = vpop.permute.xlu0 %390
      %392 = vset.pattern.permute.xlu0 2
      %393 = vperm.xlu0 %392, %v280
      %v394 = vpop.permute.xlu0 %393
      %395 = vset.pattern.permute.xlu0 2
      %396 = vperm.xlu0 %395, %v281
      %v397 = vpop.permute.xlu0 %396
      %398 = vset.pattern.permute.xlu0 2
      %399 = vperm.xlu0 %398, %v282
      %v400 = vpop.permute.xlu0 %399
      %401 = vset.pattern.permute.xlu0 2
      %402 = vperm.xlu0 %401, %v283
      %v403 = vpop.permute.xlu0 %402
      %404 = vset.pattern.permute.xlu0 2
      %405 = vperm.xlu0 %404, %v284
      %v406 = vpop.permute.xlu0 %405
      %vm407 = vcmp.eq.s32.totalorder %v385, %v286
      %vm408 = vcmp.eq.s32.totalorder %v388, %v286
      %vm409 = vcmp.eq.s32.totalorder %v391, %v286
      %vm410 = vcmp.eq.s32.totalorder %v394, %v286
      %vm411 = vcmp.eq.s32.totalorder %v397, %v286
      %vm412 = vcmp.eq.s32.totalorder %v400, %v286
      %vm413 = vcmp.eq.s32.totalorder %v403, %v286
      %vm414 = vcmp.eq.s32.totalorder %v406, %v286
      %v415 = vsel %vm407, 1, 0
      %v416 = vsel %vm408, 1, 0
      %v417 = vsel %vm409, 1, 0
      %v418 = vsel %vm410, 1, 0
      %v419 = vsel %vm411, 1, 0
      %v420 = vsel %vm412, 1, 0
      %v421 = vsel %vm413, 1, 0
      %v422 = vsel %vm414, 1, 0
      %v423 = vcvt.s32.f32 %v415
      %v424 = vcvt.s32.f32 %v416
      %v425 = vcvt.s32.f32 %v417
      %v426 = vcvt.s32.f32 %v418
      %v427 = vcvt.s32.f32 %v419
      %v428 = vcvt.s32.f32 %v420
      %v429 = vcvt.s32.f32 %v421
      %v430 = vcvt.s32.f32 %v422
      %431 = vset.pattern.permute.xlu0 3
      %432 = vperm.xlu0 %431, %v277
      %v433 = vpop.permute.xlu0 %432
      %434 = vset.pattern.permute.xlu0 3
      %435 = vperm.xlu0 %434, %v278
      %v436 = vpop.permute.xlu0 %435
      %437 = vset.pattern.permute.xlu0 3
      %438 = vperm.xlu0 %437, %v279
      %v439 = vpop.permute.xlu0 %438
      %440 = vset.pattern.permute.xlu0 3
      %441 = vperm.xlu0 %440, %v280
      %v442 = vpop.permute.xlu0 %441
      %443 = vset.pattern.permute.xlu0 3
      %444 = vperm.xlu0 %443, %v281
      %v445 = vpop.permute.xlu0 %444
      %446 = vset.pattern.permute.xlu0 3
      %447 = vperm.xlu0 %446, %v282
      %v448 = vpop.permute.xlu0 %447
      %449 = vset.pattern.permute.xlu0 3
      %450 = vperm.xlu0 %449, %v283
      %v451 = vpop.permute.xlu0 %450
      %452 = vset.pattern.permute.xlu0 3
      %453 = vperm.xlu0 %452, %v284
      %v454 = vpop.permute.xlu0 %453
      %vm455 = vcmp.eq.s32.totalorder %v433, %v286
      %vm456 = vcmp.eq.s32.totalorder %v436, %v286
      %vm457 = vcmp.eq.s32.totalorder %v439, %v286
      %vm458 = vcmp.eq.s32.totalorder %v442, %v286
      %vm459 = vcmp.eq.s32.totalorder %v445, %v286
      %vm460 = vcmp.eq.s32.totalorder %v448, %v286
      %vm461 = vcmp.eq.s32.totalorder %v451, %v286
      %vm462 = vcmp.eq.s32.totalorder %v454, %v286
      %v463 = vsel %vm455, 1, 0
      %v464 = vsel %vm456, 1, 0
      %v465 = vsel %vm457, 1, 0
      %v466 = vsel %vm458, 1, 0
      %v467 = vsel %vm459, 1, 0
      %v468 = vsel %vm460, 1, 0
      %v469 = vsel %vm461, 1, 0
      %v470 = vsel %vm462, 1, 0
      %v471 = vcvt.s32.f32 %v463
      %v472 = vcvt.s32.f32 %v464
      %v473 = vcvt.s32.f32 %v465
      %v474 = vcvt.s32.f32 %v466
      %v475 = vcvt.s32.f32 %v467
      %v476 = vcvt.s32.f32 %v468
      %v477 = vcvt.s32.f32 %v469
      %v478 = vcvt.s32.f32 %v470
      %479 = vset.pattern.permute.xlu0 4
      %480 = vperm.xlu0 %479, %v277
      %v481 = vpop.permute.xlu0 %480
      %482 = vset.pattern.permute.xlu0 4
      %483 = vperm.xlu0 %482, %v278
      %v484 = vpop.permute.xlu0 %483
      %485 = vset.pattern.permute.xlu0 4
      %486 = vperm.xlu0 %485, %v279
      %v487 = vpop.permute.xlu0 %486
      %488 = vset.pattern.permute.xlu0 4
      %489 = vperm.xlu0 %488, %v280
      %v490 = vpop.permute.xlu0 %489
      %491 = vset.pattern.permute.xlu0 4
      %492 = vperm.xlu0 %491, %v281
      %v493 = vpop.permute.xlu0 %492
      %494 = vset.pattern.permute.xlu0 4
      %495 = vperm.xlu0 %494, %v282
      %v496 = vpop.permute.xlu0 %495
      %497 = vset.pattern.permute.xlu0 4
      %498 = vperm.xlu0 %497, %v283
      %v499 = vpop.permute.xlu0 %498
      %500 = vset.pattern.permute.xlu0 4
      %501 = vperm.xlu0 %500, %v284
      %v502 = vpop.permute.xlu0 %501
      %vm503 = vcmp.eq.s32.totalorder %v481, %v286
      %vm504 = vcmp.eq.s32.totalorder %v484, %v286
      %vm505 = vcmp.eq.s32.totalorder %v487, %v286
      %vm506 = vcmp.eq.s32.totalorder %v490, %v286
      %vm507 = vcmp.eq.s32.totalorder %v493, %v286
      %vm508 = vcmp.eq.s32.totalorder %v496, %v286
      %vm509 = vcmp.eq.s32.totalorder %v499, %v286
      %vm510 = vcmp.eq.s32.totalorder %v502, %v286
      %v511 = vsel %vm503, 1, 0
      %v512 = vsel %vm504, 1, 0
      %v513 = vsel %vm505, 1, 0
      %v514 = vsel %vm506, 1, 0
      %v515 = vsel %vm507, 1, 0
      %v516 = vsel %vm508, 1, 0
      %v517 = vsel %vm509, 1, 0
      %v518 = vsel %vm510, 1, 0
      %v519 = vcvt.s32.f32 %v511
      %v520 = vcvt.s32.f32 %v512
      %v521 = vcvt.s32.f32 %v513
      %v522 = vcvt.s32.f32 %v514
      %v523 = vcvt.s32.f32 %v515
      %v524 = vcvt.s32.f32 %v516
      %v525 = vcvt.s32.f32 %v517
      %v526 = vcvt.s32.f32 %v518
      %527 = vset.pattern.permute.xlu0 5
      %528 = vperm.xlu0 %527, %v277
      %v529 = vpop.permute.xlu0 %528
      %530 = vset.pattern.permute.xlu0 5
      %531 = vperm.xlu0 %530, %v278
      %v532 = vpop.permute.xlu0 %531
      %533 = vset.pattern.permute.xlu0 5
      %534 = vperm.xlu0 %533, %v279
      %v535 = vpop.permute.xlu0 %534
      %536 = vset.pattern.permute.xlu0 5
      %537 = vperm.xlu0 %536, %v280
      %v538 = vpop.permute.xlu0 %537
      %539 = vset.pattern.permute.xlu0 5
      %540 = vperm.xlu0 %539, %v281
      %v541 = vpop.permute.xlu0 %540
      %542 = vset.pattern.permute.xlu0 5
      %543 = vperm.xlu0 %542, %v282
      %v544 = vpop.permute.xlu0 %543
      %545 = vset.pattern.permute.xlu0 5
      %546 = vperm.xlu0 %545, %v283
      %v547 = vpop.permute.xlu0 %546
      %548 = vset.pattern.permute.xlu0 5
      %549 = vperm.xlu0 %548, %v284
      %v550 = vpop.permute.xlu0 %549
      %vm551 = vcmp.eq.s32.totalorder %v529, %v286
      %vm552 = vcmp.eq.s32.totalorder %v532, %v286
      %vm553 = vcmp.eq.s32.totalorder %v535, %v286
      %vm554 = vcmp.eq.s32.totalorder %v538, %v286
      %vm555 = vcmp.eq.s32.totalorder %v541, %v286
      %vm556 = vcmp.eq.s32.totalorder %v544, %v286
      %vm557 = vcmp.eq.s32.totalorder %v547, %v286
      %vm558 = vcmp.eq.s32.totalorder %v550, %v286
      %v559 = vsel %vm551, 1, 0
      %v560 = vsel %vm552, 1, 0
      %v561 = vsel %vm553, 1, 0
      %v562 = vsel %vm554, 1, 0
      %v563 = vsel %vm555, 1, 0
      %v564 = vsel %vm556, 1, 0
      %v565 = vsel %vm557, 1, 0
      %v566 = vsel %vm558, 1, 0
      %v567 = vcvt.s32.f32 %v559
      %v568 = vcvt.s32.f32 %v560
      %v569 = vcvt.s32.f32 %v561
      %v570 = vcvt.s32.f32 %v562
      %v571 = vcvt.s32.f32 %v563
      %v572 = vcvt.s32.f32 %v564
      %v573 = vcvt.s32.f32 %v565
      %v574 = vcvt.s32.f32 %v566
      %575 = vset.pattern.permute.xlu0 6
      %576 = vperm.xlu0 %575, %v277
      %v577 = vpop.permute.xlu0 %576
      %578 = vset.pattern.permute.xlu0 6
      %579 = vperm.xlu0 %578, %v278
      %v580 = vpop.permute.xlu0 %579
      %581 = vset.pattern.permute.xlu0 6
      %582 = vperm.xlu0 %581, %v279
      %v583 = vpop.permute.xlu0 %582
      %584 = vset.pattern.permute.xlu0 6
      %585 = vperm.xlu0 %584, %v280
      %v586 = vpop.permute.xlu0 %585
      %587 = vset.pattern.permute.xlu0 6
      %588 = vperm.xlu0 %587, %v281
      %v589 = vpop.permute.xlu0 %588
      %590 = vset.pattern.permute.xlu0 6
      %591 = vperm.xlu0 %590, %v282
      %v592 = vpop.permute.xlu0 %591
      %593 = vset.pattern.permute.xlu0 6
      %594 = vperm.xlu0 %593, %v283
      %v595 = vpop.permute.xlu0 %594
      %596 = vset.pattern.permute.xlu0 6
      %597 = vperm.xlu0 %596, %v284
      %v598 = vpop.permute.xlu0 %597
      %vm599 = vcmp.eq.s32.totalorder %v577, %v286
      %vm600 = vcmp.eq.s32.totalorder %v580, %v286
      %vm601 = vcmp.eq.s32.totalorder %v583, %v286
      %vm602 = vcmp.eq.s32.totalorder %v586, %v286
      %vm603 = vcmp.eq.s32.totalorder %v589, %v286
      %vm604 = vcmp.eq.s32.totalorder %v592, %v286
      %vm605 = vcmp.eq.s32.totalorder %v595, %v286
      %vm606 = vcmp.eq.s32.totalorder %v598, %v286
      %v607 = vsel %vm599, 1, 0
      %v608 = vsel %vm600, 1, 0
      %v609 = vsel %vm601, 1, 0
      %v610 = vsel %vm602, 1, 0
      %v611 = vsel %vm603, 1, 0
      %v612 = vsel %vm604, 1, 0
      %v613 = vsel %vm605, 1, 0
      %v614 = vsel %vm606, 1, 0
      %v615 = vcvt.s32.f32 %v607
      %v616 = vcvt.s32.f32 %v608
      %v617 = vcvt.s32.f32 %v609
      %v618 = vcvt.s32.f32 %v610
      %v619 = vcvt.s32.f32 %v611
      %v620 = vcvt.s32.f32 %v612
      %v621 = vcvt.s32.f32 %v613
      %v622 = vcvt.s32.f32 %v614
      %623 = vset.pattern.permute.xlu0 7
      %624 = vperm.xlu0 %623, %v277
      %v625 = vpop.permute.xlu0 %624
      %626 = vset.pattern.permute.xlu0 7
      %627 = vperm.xlu0 %626, %v278
      %v628 = vpop.permute.xlu0 %627
      %629 = vset.pattern.permute.xlu0 7
      %630 = vperm.xlu0 %629, %v279
      %v631 = vpop.permute.xlu0 %630
      %632 = vset.pattern.permute.xlu0 7
      %633 = vperm.xlu0 %632, %v280
      %v634 = vpop.permute.xlu0 %633
      %635 = vset.pattern.permute.xlu0 7
      %636 = vperm.xlu0 %635, %v281
      %v637 = vpop.permute.xlu0 %636
      %638 = vset.pattern.permute.xlu0 7
      %639 = vperm.xlu0 %638, %v282
      %v640 = vpop.permute.xlu0 %639
      %641 = vset.pattern.permute.xlu0 7
      %642 = vperm.xlu0 %641, %v283
      %v643 = vpop.permute.xlu0 %642
      %644 = vset.pattern.permute.xlu0 7
      %645 = vperm.xlu0 %644, %v284
      %v646 = vpop.permute.xlu0 %645
      %vm647 = vcmp.eq.s32.totalorder %v625, %v286
      %vm648 = vcmp.eq.s32.totalorder %v628, %v286
      %vm649 = vcmp.eq.s32.totalorder %v631, %v286
      %vm650 = vcmp.eq.s32.totalorder %v634, %v286
      %vm651 = vcmp.eq.s32.totalorder %v637, %v286
      %vm652 = vcmp.eq.s32.totalorder %v640, %v286
      %vm653 = vcmp.eq.s32.totalorder %v643, %v286
      %vm654 = vcmp.eq.s32.totalorder %v646, %v286
      %v655 = vsel %vm647, 1, 0
      %v656 = vsel %vm648, 1, 0
      %v657 = vsel %vm649, 1, 0
      %v658 = vsel %vm650, 1, 0
      %v659 = vsel %vm651, 1, 0
      %v660 = vsel %vm652, 1, 0
      %v661 = vsel %vm653, 1, 0
      %v662 = vsel %vm654, 1, 0
      %v663 = vcvt.s32.f32 %v655
      %v664 = vcvt.s32.f32 %v656
      %v665 = vcvt.s32.f32 %v657
      %v666 = vcvt.s32.f32 %v658
      %v667 = vcvt.s32.f32 %v659
      %v668 = vcvt.s32.f32 %v660
      %v669 = vcvt.s32.f32 %v661
      %v670 = vcvt.s32.f32 %v662
      %671 = vset.pattern.permute.xlu0 8
      %672 = vperm.xlu0 %671, %v277
      %v673 = vpop.permute.xlu0 %672
      %674 = vset.pattern.permute.xlu0 8
      %675 = vperm.xlu0 %674, %v278
      %v676 = vpop.permute.xlu0 %675
      %677 = vset.pattern.permute.xlu0 8
      %678 = vperm.xlu0 %677, %v279
      %v679 = vpop.permute.xlu0 %678
      %680 = vset.pattern.permute.xlu0 8
      %681 = vperm.xlu0 %680, %v280
      %v682 = vpop.permute.xlu0 %681
      %683 = vset.pattern.permute.xlu0 8
      %684 = vperm.xlu0 %683, %v281
      %v685 = vpop.permute.xlu0 %684
      %686 = vset.pattern.permute.xlu0 8
      %687 = vperm.xlu0 %686, %v282
      %v688 = vpop.permute.xlu0 %687
      %689 = vset.pattern.permute.xlu0 8
      %690 = vperm.xlu0 %689, %v283
      %v691 = vpop.permute.xlu0 %690
      %692 = vset.pattern.permute.xlu0 8
      %693 = vperm.xlu0 %692, %v284
      %v694 = vpop.permute.xlu0 %693
      %vm695 = vcmp.eq.s32.totalorder %v673, %v286
      %vm696 = vcmp.eq.s32.totalorder %v676, %v286
      %vm697 = vcmp.eq.s32.totalorder %v679, %v286
      %vm698 = vcmp.eq.s32.totalorder %v682, %v286
      %vm699 = vcmp.eq.s32.totalorder %v685, %v286
      %vm700 = vcmp.eq.s32.totalorder %v688, %v286
      %vm701 = vcmp.eq.s32.totalorder %v691, %v286
      %vm702 = vcmp.eq.s32.totalorder %v694, %v286
      %v703 = vsel %vm695, 1, 0
      %v704 = vsel %vm696, 1, 0
      %v705 = vsel %vm697, 1, 0
      %v706 = vsel %vm698, 1, 0
      %v707 = vsel %vm699, 1, 0
      %v708 = vsel %vm700, 1, 0
      %v709 = vsel %vm701, 1, 0
      %v710 = vsel %vm702, 1, 0
      %v711 = vcvt.s32.f32 %v703
      %v712 = vcvt.s32.f32 %v704
      %v713 = vcvt.s32.f32 %v705
      %v714 = vcvt.s32.f32 %v706
      %v715 = vcvt.s32.f32 %v707
      %v716 = vcvt.s32.f32 %v708
      %v717 = vcvt.s32.f32 %v709
      %v718 = vcvt.s32.f32 %v710
      %719 = vset.pattern.permute.xlu0 9
      %720 = vperm.xlu0 %719, %v277
      %v721 = vpop.permute.xlu0 %720
      %722 = vset.pattern.permute.xlu0 9
      %723 = vperm.xlu0 %722, %v278
      %v724 = vpop.permute.xlu0 %723
      %725 = vset.pattern.permute.xlu0 9
      %726 = vperm.xlu0 %725, %v279
      %v727 = vpop.permute.xlu0 %726
      %728 = vset.pattern.permute.xlu0 9
      %729 = vperm.xlu0 %728, %v280
      %v730 = vpop.permute.xlu0 %729
      %731 = vset.pattern.permute.xlu0 9
      %732 = vperm.xlu0 %731, %v281
      %v733 = vpop.permute.xlu0 %732
      %734 = vset.pattern.permute.xlu0 9
      %735 = vperm.xlu0 %734, %v282
      %v736 = vpop.permute.xlu0 %735
      %737 = vset.pattern.permute.xlu0 9
      %738 = vperm.xlu0 %737, %v283
      %v739 = vpop.permute.xlu0 %738
      %740 = vset.pattern.permute.xlu0 9
      %741 = vperm.xlu0 %740, %v284
      %v742 = vpop.permute.xlu0 %741
      %vm743 = vcmp.eq.s32.totalorder %v721, %v286
      %vm744 = vcmp.eq.s32.totalorder %v724, %v286
      %vm745 = vcmp.eq.s32.totalorder %v727, %v286
      %vm746 = vcmp.eq.s32.totalorder %v730, %v286
      %vm747 = vcmp.eq.s32.totalorder %v733, %v286
      %vm748 = vcmp.eq.s32.totalorder %v736, %v286
      %vm749 = vcmp.eq.s32.totalorder %v739, %v286
      %vm750 = vcmp.eq.s32.totalorder %v742, %v286
      %v751 = vsel %vm743, 1, 0
      %v752 = vsel %vm744, 1, 0
      %v753 = vsel %vm745, 1, 0
      %v754 = vsel %vm746, 1, 0
      %v755 = vsel %vm747, 1, 0
      %v756 = vsel %vm748, 1, 0
      %v757 = vsel %vm749, 1, 0
      %v758 = vsel %vm750, 1, 0
      %v759 = vcvt.s32.f32 %v751
      %v760 = vcvt.s32.f32 %v752
      %v761 = vcvt.s32.f32 %v753
      %v762 = vcvt.s32.f32 %v754
      %v763 = vcvt.s32.f32 %v755
      %v764 = vcvt.s32.f32 %v756
      %v765 = vcvt.s32.f32 %v757
      %v766 = vcvt.s32.f32 %v758
      %767 = vset.pattern.permute.xlu0 10
      %768 = vperm.xlu0 %767, %v277
      %v769 = vpop.permute.xlu0 %768
      %770 = vset.pattern.permute.xlu0 10
      %771 = vperm.xlu0 %770, %v278
      %v772 = vpop.permute.xlu0 %771
      %773 = vset.pattern.permute.xlu0 10
      %774 = vperm.xlu0 %773, %v279
      %v775 = vpop.permute.xlu0 %774
      %776 = vset.pattern.permute.xlu0 10
      %777 = vperm.xlu0 %776, %v280
      %v778 = vpop.permute.xlu0 %777
      %779 = vset.pattern.permute.xlu0 10
      %780 = vperm.xlu0 %779, %v281
      %v781 = vpop.permute.xlu0 %780
      %782 = vset.pattern.permute.xlu0 10
      %783 = vperm.xlu0 %782, %v282
      %v784 = vpop.permute.xlu0 %783
      %785 = vset.pattern.permute.xlu0 10
      %786 = vperm.xlu0 %785, %v283
      %v787 = vpop.permute.xlu0 %786
      %788 = vset.pattern.permute.xlu0 10
      %789 = vperm.xlu0 %788, %v284
      %v790 = vpop.permute.xlu0 %789
      %vm791 = vcmp.eq.s32.totalorder %v769, %v286
      %vm792 = vcmp.eq.s32.totalorder %v772, %v286
      %vm793 = vcmp.eq.s32.totalorder %v775, %v286
      %vm794 = vcmp.eq.s32.totalorder %v778, %v286
      %vm795 = vcmp.eq.s32.totalorder %v781, %v286
      %vm796 = vcmp.eq.s32.totalorder %v784, %v286
      %vm797 = vcmp.eq.s32.totalorder %v787, %v286
      %vm798 = vcmp.eq.s32.totalorder %v790, %v286
      %v799 = vsel %vm791, 1, 0
      %v800 = vsel %vm792, 1, 0
      %v801 = vsel %vm793, 1, 0
      %v802 = vsel %vm794, 1, 0
      %v803 = vsel %vm795, 1, 0
      %v804 = vsel %vm796, 1, 0
      %v805 = vsel %vm797, 1, 0
      %v806 = vsel %vm798, 1, 0
      %v807 = vcvt.s32.f32 %v799
      %v808 = vcvt.s32.f32 %v800
      %v809 = vcvt.s32.f32 %v801
      %v810 = vcvt.s32.f32 %v802
      %v811 = vcvt.s32.f32 %v803
      %v812 = vcvt.s32.f32 %v804
      %v813 = vcvt.s32.f32 %v805
      %v814 = vcvt.s32.f32 %v806
      %815 = vset.pattern.permute.xlu0 11
      %816 = vperm.xlu0 %815, %v277
      %v817 = vpop.permute.xlu0 %816
      %818 = vset.pattern.permute.xlu0 11
      %819 = vperm.xlu0 %818, %v278
      %v820 = vpop.permute.xlu0 %819
      %821 = vset.pattern.permute.xlu0 11
      %822 = vperm.xlu0 %821, %v279
      %v823 = vpop.permute.xlu0 %822
      %824 = vset.pattern.permute.xlu0 11
      %825 = vperm.xlu0 %824, %v280
      %v826 = vpop.permute.xlu0 %825
      %827 = vset.pattern.permute.xlu0 11
      %828 = vperm.xlu0 %827, %v281
      %v829 = vpop.permute.xlu0 %828
      %830 = vset.pattern.permute.xlu0 11
      %831 = vperm.xlu0 %830, %v282
      %v832 = vpop.permute.xlu0 %831
      %833 = vset.pattern.permute.xlu0 11
      %834 = vperm.xlu0 %833, %v283
      %v835 = vpop.permute.xlu0 %834
      %836 = vset.pattern.permute.xlu0 11
      %837 = vperm.xlu0 %836, %v284
      %v838 = vpop.permute.xlu0 %837
      %vm839 = vcmp.eq.s32.totalorder %v817, %v286
      %vm840 = vcmp.eq.s32.totalorder %v820, %v286
      %vm841 = vcmp.eq.s32.totalorder %v823, %v286
      %vm842 = vcmp.eq.s32.totalorder %v826, %v286
      %vm843 = vcmp.eq.s32.totalorder %v829, %v286
      %vm844 = vcmp.eq.s32.totalorder %v832, %v286
      %vm845 = vcmp.eq.s32.totalorder %v835, %v286
      %vm846 = vcmp.eq.s32.totalorder %v838, %v286
      %v847 = vsel %vm839, 1, 0
      %v848 = vsel %vm840, 1, 0
      %v849 = vsel %vm841, 1, 0
      %v850 = vsel %vm842, 1, 0
      %v851 = vsel %vm843, 1, 0
      %v852 = vsel %vm844, 1, 0
      %v853 = vsel %vm845, 1, 0
      %v854 = vsel %vm846, 1, 0
      %v855 = vcvt.s32.f32 %v847
      %v856 = vcvt.s32.f32 %v848
      %v857 = vcvt.s32.f32 %v849
      %v858 = vcvt.s32.f32 %v850
      %v859 = vcvt.s32.f32 %v851
      %v860 = vcvt.s32.f32 %v852
      %v861 = vcvt.s32.f32 %v853
      %v862 = vcvt.s32.f32 %v854
      %863 = vset.pattern.permute.xlu0 12
      %864 = vperm.xlu0 %863, %v277
      %v865 = vpop.permute.xlu0 %864
      %866 = vset.pattern.permute.xlu0 12
      %867 = vperm.xlu0 %866, %v278
      %v868 = vpop.permute.xlu0 %867
      %869 = vset.pattern.permute.xlu0 12
      %870 = vperm.xlu0 %869, %v279
      %v871 = vpop.permute.xlu0 %870
      %872 = vset.pattern.permute.xlu0 12
      %873 = vperm.xlu0 %872, %v280
      %v874 = vpop.permute.xlu0 %873
      %875 = vset.pattern.permute.xlu0 12
      %876 = vperm.xlu0 %875, %v281
      %v877 = vpop.permute.xlu0 %876
      %878 = vset.pattern.permute.xlu0 12
      %879 = vperm.xlu0 %878, %v282
      %v880 = vpop.permute.xlu0 %879
      %881 = vset.pattern.permute.xlu0 12
      %882 = vperm.xlu0 %881, %v283
      %v883 = vpop.permute.xlu0 %882
      %884 = vset.pattern.permute.xlu0 12
      %885 = vperm.xlu0 %884, %v284
      %v886 = vpop.permute.xlu0 %885
      %vm887 = vcmp.eq.s32.totalorder %v865, %v286
      %vm888 = vcmp.eq.s32.totalorder %v868, %v286
      %vm889 = vcmp.eq.s32.totalorder %v871, %v286
      %vm890 = vcmp.eq.s32.totalorder %v874, %v286
      %vm891 = vcmp.eq.s32.totalorder %v877, %v286
      %vm892 = vcmp.eq.s32.totalorder %v880, %v286
      %vm893 = vcmp.eq.s32.totalorder %v883, %v286
      %vm894 = vcmp.eq.s32.totalorder %v886, %v286
      %v895 = vsel %vm887, 1, 0
      %v896 = vsel %vm888, 1, 0
      %v897 = vsel %vm889, 1, 0
      %v898 = vsel %vm890, 1, 0
      %v899 = vsel %vm891, 1, 0
      %v900 = vsel %vm892, 1, 0
      %v901 = vsel %vm893, 1, 0
      %v902 = vsel %vm894, 1, 0
      %v903 = vcvt.s32.f32 %v895
      %v904 = vcvt.s32.f32 %v896
      %v905 = vcvt.s32.f32 %v897
      %v906 = vcvt.s32.f32 %v898
      %v907 = vcvt.s32.f32 %v899
      %v908 = vcvt.s32.f32 %v900
      %v909 = vcvt.s32.f32 %v901
      %v910 = vcvt.s32.f32 %v902
      %911 = vset.pattern.permute.xlu0 13
      %912 = vperm.xlu0 %911, %v277
      %v913 = vpop.permute.xlu0 %912
      %914 = vset.pattern.permute.xlu0 13
      %915 = vperm.xlu0 %914, %v278
      %v916 = vpop.permute.xlu0 %915
      %917 = vset.pattern.permute.xlu0 13
      %918 = vperm.xlu0 %917, %v279
      %v919 = vpop.permute.xlu0 %918
      %920 = vset.pattern.permute.xlu0 13
      %921 = vperm.xlu0 %920, %v280
      %v922 = vpop.permute.xlu0 %921
      %923 = vset.pattern.permute.xlu0 13
      %924 = vperm.xlu0 %923, %v281
      %v925 = vpop.permute.xlu0 %924
      %926 = vset.pattern.permute.xlu0 13
      %927 = vperm.xlu0 %926, %v282
      %v928 = vpop.permute.xlu0 %927
      %929 = vset.pattern.permute.xlu0 13
      %930 = vperm.xlu0 %929, %v283
      %v931 = vpop.permute.xlu0 %930
      %932 = vset.pattern.permute.xlu0 13
      %933 = vperm.xlu0 %932, %v284
      %v934 = vpop.permute.xlu0 %933
      %vm935 = vcmp.eq.s32.totalorder %v913, %v286
      %vm936 = vcmp.eq.s32.totalorder %v916, %v286
      %vm937 = vcmp.eq.s32.totalorder %v919, %v286
      %vm938 = vcmp.eq.s32.totalorder %v922, %v286
      %vm939 = vcmp.eq.s32.totalorder %v925, %v286
      %vm940 = vcmp.eq.s32.totalorder %v928, %v286
      %vm941 = vcmp.eq.s32.totalorder %v931, %v286
      %vm942 = vcmp.eq.s32.totalorder %v934, %v286
      %v943 = vsel %vm935, 1, 0
      %v944 = vsel %vm936, 1, 0
      %v945 = vsel %vm937, 1, 0
      %v946 = vsel %vm938, 1, 0
      %v947 = vsel %vm939, 1, 0
      %v948 = vsel %vm940, 1, 0
      %v949 = vsel %vm941, 1, 0
      %v950 = vsel %vm942, 1, 0
      %v951 = vcvt.s32.f32 %v943
      %v952 = vcvt.s32.f32 %v944
      %v953 = vcvt.s32.f32 %v945
      %v954 = vcvt.s32.f32 %v946
      %v955 = vcvt.s32.f32 %v947
      %v956 = vcvt.s32.f32 %v948
      %v957 = vcvt.s32.f32 %v949
      %v958 = vcvt.s32.f32 %v950
      %959 = vset.pattern.permute.xlu0 14
      %960 = vperm.xlu0 %959, %v277
      %v961 = vpop.permute.xlu0 %960
      %962 = vset.pattern.permute.xlu0 14
      %963 = vperm.xlu0 %962, %v278
      %v964 = vpop.permute.xlu0 %963
      %965 = vset.pattern.permute.xlu0 14
      %966 = vperm.xlu0 %965, %v279
      %v967 = vpop.permute.xlu0 %966
      %968 = vset.pattern.permute.xlu0 14
      %969 = vperm.xlu0 %968, %v280
      %v970 = vpop.permute.xlu0 %969
      %971 = vset.pattern.permute.xlu0 14
      %972 = vperm.xlu0 %971, %v281
      %v973 = vpop.permute.xlu0 %972
      %974 = vset.pattern.permute.xlu0 14
      %975 = vperm.xlu0 %974, %v282
      %v976 = vpop.permute.xlu0 %975
      %977 = vset.pattern.permute.xlu0 14
      %978 = vperm.xlu0 %977, %v283
      %v979 = vpop.permute.xlu0 %978
      %980 = vset.pattern.permute.xlu0 14
      %981 = vperm.xlu0 %980, %v284
      %v982 = vpop.permute.xlu0 %981
      %vm983 = vcmp.eq.s32.totalorder %v961, %v286
      %vm984 = vcmp.eq.s32.totalorder %v964, %v286
      %vm985 = vcmp.eq.s32.totalorder %v967, %v286
      %vm986 = vcmp.eq.s32.totalorder %v970, %v286
      %vm987 = vcmp.eq.s32.totalorder %v973, %v286
      %vm988 = vcmp.eq.s32.totalorder %v976, %v286
      %vm989 = vcmp.eq.s32.totalorder %v979, %v286
      %vm990 = vcmp.eq.s32.totalorder %v982, %v286
      %v991 = vsel %vm983, 1, 0
      %v992 = vsel %vm984, 1, 0
      %v993 = vsel %vm985, 1, 0
      %v994 = vsel %vm986, 1, 0
      %v995 = vsel %vm987, 1, 0
      %v996 = vsel %vm988, 1, 0
      %v997 = vsel %vm989, 1, 0
      %v998 = vsel %vm990, 1, 0
      %v999 = vcvt.s32.f32 %v991
      %v1000 = vcvt.s32.f32 %v992
      %v1001 = vcvt.s32.f32 %v993
      %v1002 = vcvt.s32.f32 %v994
      %v1003 = vcvt.s32.f32 %v995
      %v1004 = vcvt.s32.f32 %v996
      %v1005 = vcvt.s32.f32 %v997
      %v1006 = vcvt.s32.f32 %v998
      %1007 = vset.pattern.permute.xlu0 15
      %1008 = vperm.xlu0 %1007, %v277
      %v1009 = vpop.permute.xlu0 %1008
      %1010 = vset.pattern.permute.xlu0 15
      %1011 = vperm.xlu0 %1010, %v278
      %v1012 = vpop.permute.xlu0 %1011
      %1013 = vset.pattern.permute.xlu0 15
      %1014 = vperm.xlu0 %1013, %v279
      %v1015 = vpop.permute.xlu0 %1014
      %1016 = vset.pattern.permute.xlu0 15
      %1017 = vperm.xlu0 %1016, %v280
      %v1018 = vpop.permute.xlu0 %1017
      %1019 = vset.pattern.permute.xlu0 15
      %1020 = vperm.xlu0 %1019, %v281
      %v1021 = vpop.permute.xlu0 %1020
      %1022 = vset.pattern.permute.xlu0 15
      %1023 = vperm.xlu0 %1022, %v282
      %v1024 = vpop.permute.xlu0 %1023
      %1025 = vset.pattern.permute.xlu0 15
      %1026 = vperm.xlu0 %1025, %v283
      %v1027 = vpop.permute.xlu0 %1026
      %1028 = vset.pattern.permute.xlu0 15
      %1029 = vperm.xlu0 %1028, %v284
      %v1030 = vpop.permute.xlu0 %1029
      %vm1031 = vcmp.eq.s32.totalorder %v1009, %v286
      %vm1032 = vcmp.eq.s32.totalorder %v1012, %v286
      %vm1033 = vcmp.eq.s32.totalorder %v1015, %v286
      %vm1034 = vcmp.eq.s32.totalorder %v1018, %v286
      %vm1035 = vcmp.eq.s32.totalorder %v1021, %v286
      %vm1036 = vcmp.eq.s32.totalorder %v1024, %v286
      %vm1037 = vcmp.eq.s32.totalorder %v1027, %v286
      %vm1038 = vcmp.eq.s32.totalorder %v1030, %v286
      %v1039 = vsel %vm1031, 1, 0
      %v1040 = vsel %vm1032, 1, 0
      %v1041 = vsel %vm1033, 1, 0
      %v1042 = vsel %vm1034, 1, 0
      %v1043 = vsel %vm1035, 1, 0
      %v1044 = vsel %vm1036, 1, 0
      %v1045 = vsel %vm1037, 1, 0
      %v1046 = vsel %vm1038, 1, 0
      %v1047 = vcvt.s32.f32 %v1039
      %v1048 = vcvt.s32.f32 %v1040
      %v1049 = vcvt.s32.f32 %v1041
      %v1050 = vcvt.s32.f32 %v1042
      %v1051 = vcvt.s32.f32 %v1043
      %v1052 = vcvt.s32.f32 %v1044
      %v1053 = vcvt.s32.f32 %v1045
      %v1054 = vcvt.s32.f32 %v1046
      %vm1055 = vcmask 523264
      %v1057 = vsel %vm1055, %v327, 0
      %v1060 = vsel %vm1055, %v328, 0
      %v1063 = vsel %vm1055, %v329, 0
      %v1066 = vsel %vm1055, %v330, 0
      %v1069 = vsel %vm1055, %v331, 0
      %v1072 = vsel %vm1055, %v332, 0
      %v1075 = vsel %vm1055, %v333, 0
      %v1078 = vsel %vm1055, %v334, 0
      %v1081 = vsel %vm1055, %v375, 0
      %v1084 = vsel %vm1055, %v376, 0
      %v1087 = vsel %vm1055, %v377, 0
      %v1090 = vsel %vm1055, %v378, 0
      %v1093 = vsel %vm1055, %v379, 0
      %v1096 = vsel %vm1055, %v380, 0
      %v1099 = vsel %vm1055, %v381, 0
      %v1102 = vsel %vm1055, %v382, 0
      %1104 = vmatprep.subr.mxu0 0.0
      %1105 = vmatpush1.msra.mxu0 %v269
      %1106 = vmatprep.subr.mxu0 0.0
      %1107 = vmatpush1.msra.mxu0 %v270
      %1108 = vmatprep.subr.mxu0 0.0
      %1109 = vmatpush1.msra.mxu0 %v271
      %1110 = vmatprep.subr.mxu0 0.0
      %1111 = vmatpush1.msra.mxu0 %v272
      %1112 = vmatprep.subr.mxu0 0.0
      %1113 = vmatpush1.msra.mxu0 %v273
      %1114 = vmatprep.subr.mxu0 0.0
      %1115 = vmatpush1.msra.mxu0 %v274
      %1116 = vmatprep.subr.mxu0 0.0
      %1117 = vmatpush1.msra.mxu0 %v275
      %1118 = vmatprep.subr.mxu0 0.0
      %1119 = vmatpush1.msra.mxu0 %v276
      %1120 = vmatprep.subr.mxu0 0.0
      %1121 = vmatpush1.msra.mxu0 0.0
      %1122 = vmatprep.subr.mxu0 0.0
      %1123 = vmatpush1.msra.mxu0 0.0
      %1124 = vmatprep.subr.mxu0 0.0
      %1125 = vmatpush1.msra.mxu0 0.0
      %1126 = vmatprep.subr.mxu0 0.0
      %1127 = vmatpush1.msra.mxu0 0.0
      %1128 = vmatprep.subr.mxu0 0.0
      %1129 = vmatpush1.msra.mxu0 0.0
      %1130 = vmatprep.subr.mxu0 0.0
      %1131 = vmatpush1.msra.mxu0 0.0
      %1132 = vmatprep.subr.mxu0 0.0
      %1133 = vmatpush1.msra.mxu0 0.0
      %1134 = vmatprep.subr.mxu0 0.0
      %1135 = vmatpush1.msra.mxu0 0.0
      %1136 = vmatprep.subr.mxu0 0.0
      %1137 = vmatpush1.msra.mxu0 0.0
      %1138 = vmatprep.subr.mxu0 0.0
      %1139 = vmatpush1.msra.mxu0 0.0
      %1140 = vmatprep.subr.mxu0 0.0
      %1141 = vmatpush1.msra.mxu0 0.0
      %1142 = vmatprep.subr.mxu0 0.0
      %1143 = vmatpush1.msra.mxu0 0.0
      %1144 = vmatprep.subr.mxu0 0.0
      %1145 = vmatpush1.msra.mxu0 0.0
      %1146 = vmatprep.subr.mxu0 0.0
      %1147 = vmatpush1.msra.mxu0 0.0
      %1148 = vmatprep.subr.mxu0 0.0
      %1149 = vmatpush1.msra.mxu0 0.0
      %1150 = vmatprep.subr.mxu0 0.0
      %1151 = vmatpush1.msra.mxu0 0.0
      %1152 = vmatprep.subr.mxu0 0.0
      %1153 = vmatpush1.msra.mxu0 0.0
      %1154 = vmatprep.subr.mxu0 0.0
      %1155 = vmatpush1.msra.mxu0 0.0
      %1156 = vmatprep.subr.mxu0 0.0
      %1157 = vmatpush1.msra.mxu0 0.0
      %1158 = vmatprep.subr.mxu0 0.0
      %1159 = vmatpush1.msra.mxu0 0.0
      %1160 = vmatprep.subr.mxu0 0.0
      %1161 = vmatpush1.msra.mxu0 0.0
      %1162 = vmatprep.subr.mxu0 0.0
      %1163 = vmatpush1.msra.mxu0 0.0
      %1164 = vmatprep.subr.mxu0 0.0
      %1165 = vmatpush1.msra.mxu0 0.0
      %1166 = vmatprep.subr.mxu0 0.0
      %1167 = vmatpush1.msra.mxu0 0.0
      %1168 = vmatprep.mubr.f32.mxu0 0.0
      %1169 = vmatmul.mubr.f32.gmra.mrb[0].mxu0 %v1057
      %v1170 = vpop.f32.mrb[0].mxu0
      %v1171 = vadd.f32 0.0, %v1170
      %v1172 = vpop.f32.mrb[0].mxu0
      %1173 = vmatprep.mubr.f32.mxu0 0.0
      %1174 = vmatmul.mubr.f32.gmra.mrb[0].mxu0 %v1060
      %v1175 = vpop.f32.mrb[0].mxu0
      %v1176 = vadd.f32 0.0, %v1175
      %v1177 = vpop.f32.mrb[0].mxu0
      %1178 = vmatprep.mubr.f32.mxu0 0.0
      %1179 = vmatmul.mubr.f32.gmra.mrb[0].mxu0 %v1063
      %v1180 = vpop.f32.mrb[0].mxu0
      %v1181 = vadd.f32 0.0, %v1180
      %v1182 = vpop.f32.mrb[0].mxu0
      %1183 = vmatprep.mubr.f32.mxu0 0.0
      %1184 = vmatmul.mubr.f32.gmra.mrb[0].mxu0 %v1066
      %v1185 = vpop.f32.mrb[0].mxu0
      %v1186 = vadd.f32 0.0, %v1185
      %v1187 = vpop.f32.mrb[0].mxu0
      %1188 = vmatprep.mubr.f32.mxu0 0.0
      %1189 = vmatmul.mubr.f32.gmra.mrb[0].mxu0 %v1069
      %v1190 = vpop.f32.mrb[0].mxu0
      %v1191 = vadd.f32 0.0, %v1190
      %v1192 = vpop.f32.mrb[0].mxu0
      %1193 = vmatprep.mubr.f32.mxu0 0.0
      %1194 = vmatmul.mubr.f32.gmra.mrb[0].mxu0 %v1072
      %v1195 = vpop.f32.mrb[0].mxu0
      %v1196 = vadd.f32 0.0, %v1195
      %v1197 = vpop.f32.mrb[0].mxu0
      %1198 = vmatprep.mubr.f32.mxu0 0.0
      %1199 = vmatmul.mubr.f32.gmra.mrb[0].mxu0 %v1075
      %v1200 = vpop.f32.mrb[0].mxu0
      %v1201 = vadd.f32 0.0, %v1200
      %v1202 = vpop.f32.mrb[0].mxu0
      %1203 = vmatprep.mubr.f32.mxu0 0.0
      %1204 = vmatmul.mubr.f32.gmra.mrb[0].mxu0 %v1078
      %v1205 = vpop.f32.mrb[0].mxu0
      %v1206 = vadd.f32 0.0, %v1205
      %v1207 = vpop.f32.mrb[0].mxu0
      %1208 = vmatprep.mubr.f32.mxu0 0.0
      %1209 = vmatmul.mubr.f32.gmra.mrb[0].mxu0 %v1081
      %v1210 = vpop.f32.mrb[0].mxu0
      %v1211 = vadd.f32 0.0, %v1210
      %v1212 = vpop.f32.mrb[0].mxu0
      %1213 = vmatprep.mubr.f32.mxu0 0.0
      %1214 = vmatmul.mubr.f32.gmra.mrb[0].mxu0 %v1084
      %v1215 = vpop.f32.mrb[0].mxu0
      %v1216 = vadd.f32 0.0, %v1215
      %v1217 = vpop.f32.mrb[0].mxu0
      %1218 = vmatprep.mubr.f32.mxu0 0.0
      %1219 = vmatmul.mubr.f32.gmra.mrb[0].mxu0 %v1087
      %v1220 = vpop.f32.mrb[0].mxu0
      %v1221 = vadd.f32 0.0, %v1220
      %v1222 = vpop.f32.mrb[0].mxu0
      %1223 = vmatprep.mubr.f32.mxu0 0.0
      %1224 = vmatmul.mubr.f32.gmra.mrb[0].mxu0 %v1090
      %v1225 = vpop.f32.mrb[0].mxu0
      %v1226 = vadd.f32 0.0, %v1225
      %v1227 = vpop.f32.mrb[0].mxu0
      %1228 = vmatprep.mubr.f32.mxu0 0.0
      %1229 = vmatmul.mubr.f32.gmra.mrb[0].mxu0 %v1093
      %v1230 = vpop.f32.mrb[0].mxu0
      %v1231 = vadd.f32 0.0, %v1230
      %v1232 = vpop.f32.mrb[0].mxu0
      %1233 = vmatprep.mubr.f32.mxu0 0.0
      %1234 = vmatmul.mubr.f32.gmra.mrb[0].mxu0 %v1096
      %v1235 = vpop.f32.mrb[0].mxu0
      %v1236 = vadd.f32 0.0, %v1235
      %v1237 = vpop.f32.mrb[0].mxu0
      %1238 = vmatprep.mubr.f32.mxu0 0.0
      %1239 = vmatmul.mubr.f32.gmra.mrb[0].mxu0 %v1099
      %v1240 = vpop.f32.mrb[0].mxu0
      %v1241 = vadd.f32 0.0, %v1240
      %v1242 = vpop.f32.mrb[0].mxu0
      %1243 = vmatprep.mubr.f32.mxu0 0.0
      %1244 = vmatmul.mubr.f32.gmra.mrb[0].mxu0 %v1102
      %v1245 = vpop.f32.mrb[0].mxu0
      %v1246 = vadd.f32 0.0, %v1245
      %v1247 = vpop.f32.mrb[0].mxu0
      %1248 = vdwg.mxu0
      %v1249 = vld [vmem:[%s2] sm:$0x7]
      %v1250 = vld [vmem:[%s2 + $0xcc] sm:$0x1]
      %v1251 = vlaneseq
      %v1252 = vshrl.u32 %v1251, 7
      %v1253 = vsub.s32 0, %v1252
      %v1254 = vrot.slane %v1250, %v1253
      %vm1255 = vcmask 23552
      %v1257 = vsel %vm1255, %v269, 0
      %v1260 = vsel %vm1255, %v270, 0
      %v1263 = vsel %vm1255, %v271, 0
      %v1266 = vsel %vm1255, %v272, 0
      %v1269 = vsel %vm1255, %v273, 0
      %v1272 = vsel %vm1255, %v274, 0
      %v1275 = vsel %vm1255, %v275, 0
      %v1278 = vsel %vm1255, %v276, 0
      %vm1280 = vcmask 1042432
      %v1282 = vsel %vm1280, %v1249, 0
      %1284 = vmatprep.subr.mxu0 0.0
      %1285 = vmatpush1.msra.mxu0 %v1282
      %1286 = vmatprep.subr.mxu0 0.0
      %1287 = vmatpush1.msra.mxu0 0.0
      %1288 = vmatprep.subr.mxu0 0.0
      %1289 = vmatpush1.msra.mxu0 0.0
      %1290 = vmatprep.subr.mxu0 0.0
      %1291 = vmatpush1.msra.mxu0 0.0
      %1292 = vmatprep.subr.mxu0 0.0
      %1293 = vmatpush1.msra.mxu0 0.0
      %1294 = vmatprep.subr.mxu0 0.0
      %1295 = vmatpush1.msra.mxu0 0.0
      %1296 = vmatprep.subr.mxu0 0.0
      %1297 = vmatpush1.msra.mxu0 0.0
      %1298 = vmatprep.subr.mxu0 0.0
      %1299 = vmatpush1.msra.mxu0 0.0
      %1300 = vmatprep.subr.mxu0 0.0
      %1301 = vmatpush1.msra.mxu0 0.0
      %1302 = vmatprep.subr.mxu0 0.0
      %1303 = vmatpush1.msra.mxu0 0.0
      %1304 = vmatprep.subr.mxu0 0.0
      %1305 = vmatpush1.msra.mxu0 0.0
      %1306 = vmatprep.subr.mxu0 0.0
      %1307 = vmatpush1.msra.mxu0 0.0
      %1308 = vmatprep.subr.mxu0 0.0
      %1309 = vmatpush1.msra.mxu0 0.0
      %1310 = vmatprep.subr.mxu0 0.0
      %1311 = vmatpush1.msra.mxu0 0.0
      %1312 = vmatprep.subr.mxu0 0.0
      %1313 = vmatpush1.msra.mxu0 0.0
      %1314 = vmatprep.subr.mxu0 0.0
      %1315 = vmatpush1.msra.mxu0 0.0
      %1316 = vmatprep.subr.mxu0 0.0
      %1317 = vmatpush1.msra.mxu0 0.0
      %1318 = vmatprep.subr.mxu0 0.0
      %1319 = vmatpush1.msra.mxu0 0.0
      %1320 = vmatprep.subr.mxu0 0.0
      %1321 = vmatpush1.msra.mxu0 0.0
      %1322 = vmatprep.subr.mxu0 0.0
      %1323 = vmatpush1.msra.mxu0 0.0
      %1324 = vmatprep.subr.mxu0 0.0
      %1325 = vmatpush1.msra.mxu0 0.0
      %1326 = vmatprep.subr.mxu0 0.0
      %1327 = vmatpush1.msra.mxu0 0.0
      %1328 = vmatprep.subr.mxu0 0.0
      %1329 = vmatpush1.msra.mxu0 0.0
      %1330 = vmatprep.subr.mxu0 0.0
      %1331 = vmatpush1.msra.mxu0 0.0
      %1332 = vmatprep.subr.mxu0 0.0
      %1333 = vmatpush1.msra.mxu0 0.0
      %1334 = vmatprep.subr.mxu0 0.0
      %1335 = vmatpush1.msra.mxu0 0.0
      %1336 = vmatprep.subr.mxu0 0.0
      %1337 = vmatpush1.msra.mxu0 0.0
      %1338 = vmatprep.subr.mxu0 0.0
      %1339 = vmatpush1.msra.mxu0 0.0
      %1340 = vmatprep.subr.mxu0 0.0
      %1341 = vmatpush1.msra.mxu0 0.0
      %1342 = vmatprep.subr.mxu0 0.0
      %1343 = vmatpush1.msra.mxu0 0.0
      %1344 = vmatprep.subr.mxu0 0.0
      %1345 = vmatpush1.msra.mxu0 0.0
      %1346 = vmatprep.subr.mxu0 0.0
      %1347 = vmatpush1.msra.mxu0 0.0
      %1348 = vmatprep.mubr.f32.mxu0 0.0
      %1349 = vmatmul.mubr.f32.gmra.mrb[0].mxu0 %v1257
      %v1350 = vpop.f32.mrb[0].mxu0
      %v1351 = vadd.f32 %v1254, %v1350
      %v1352 = vpop.f32.mrb[0].mxu0
      %1353 = vmatprep.mubr.f32.mxu0 0.0
      %1354 = vmatmul.mubr.f32.gmra.mrb[0].mxu0 %v1260
      %v1355 = vpop.f32.mrb[0].mxu0
      %v1356 = vadd.f32 %v1254, %v1355
      %v1357 = vpop.f32.mrb[0].mxu0
      %1358 = vmatprep.mubr.f32.mxu0 0.0
      %1359 = vmatmul.mubr.f32.gmra.mrb[0].mxu0 %v1263
      %v1360 = vpop.f32.mrb[0].mxu0
      %v1361 = vadd.f32 %v1254, %v1360
      %v1362 = vpop.f32.mrb[0].mxu0
      %1363 = vmatprep.mubr.f32.mxu0 0.0
      %1364 = vmatmul.mubr.f32.gmra.mrb[0].mxu0 %v1266
      %v1365 = vpop.f32.mrb[0].mxu0
      %v1366 = vadd.f32 %v1254, %v1365
      %v1367 = vpop.f32.mrb[0].mxu0
      %1368 = vmatprep.mubr.f32.mxu0 0.0
      %1369 = vmatmul.mubr.f32.gmra.mrb[0].mxu0 %v1269
      %v1370 = vpop.f32.mrb[0].mxu0
      %v1371 = vadd.f32 %v1254, %v1370
      %v1372 = vpop.f32.mrb[0].mxu0
      %1373 = vmatprep.mubr.f32.mxu0 0.0
      %1374 = vmatmul.mubr.f32.gmra.mrb[0].mxu0 %v1272
      %v1375 = vpop.f32.mrb[0].mxu0
      %v1376 = vadd.f32 %v1254, %v1375
      %v1377 = vpop.f32.mrb[0].mxu0
      %1378 = vmatprep.mubr.f32.mxu0 0.0
      %1379 = vmatmul.mubr.f32.gmra.mrb[0].mxu0 %v1275
      %v1380 = vpop.f32.mrb[0].mxu0
      %v1381 = vadd.f32 %v1254, %v1380
      %v1382 = vpop.f32.mrb[0].mxu0
      %1383 = vmatprep.mubr.f32.mxu0 0.0
      %1384 = vmatmul.mubr.f32.gmra.mrb[0].mxu0 %v1278
      %v1385 = vpop.f32.mrb[0].mxu0
      %v1386 = vadd.f32 %v1254, %v1385
      %v1387 = vpop.f32.mrb[0].mxu0
      %1388 = vdwg.mxu0
      %v1389 = vld [vmem:[%s2 + $0x3] sm:$0x7]
      %v1391 = vsel %vm1255, %v1211, 0
      %v1394 = vsel %vm1255, %v1216, 0
      %v1397 = vsel %vm1255, %v1221, 0
      %v1400 = vsel %vm1255, %v1226, 0
      %v1403 = vsel %vm1255, %v1231, 0
      %v1406 = vsel %vm1255, %v1236, 0
      %v1409 = vsel %vm1255, %v1241, 0
      %v1412 = vsel %vm1255, %v1246, 0
      %v1415 = vsel %vm1280, %v1389, 0
      %1417 = vmatprep.subr.mxu0 0.0
      %1418 = vmatpush1.msra.mxu0 %v1415
      %1419 = vmatprep.subr.mxu0 0.0
      %1420 = vmatpush1.msra.mxu0 0.0
      %1421 = vmatprep.subr.mxu0 0.0
      %1422 = vmatpush1.msra.mxu0 0.0
      %1423 = vmatprep.subr.mxu0 0.0
      %1424 = vmatpush1.msra.mxu0 0.0
      %1425 = vmatprep.subr.mxu0 0.0
      %1426 = vmatpush1.msra.mxu0 0.0
      %1427 = vmatprep.subr.mxu0 0.0
      %1428 = vmatpush1.msra.mxu0 0.0
      %1429 = vmatprep.subr.mxu0 0.0
      %1430 = vmatpush1.msra.mxu0 0.0
      %1431 = vmatprep.subr.mxu0 0.0
      %1432 = vmatpush1.msra.mxu0 0.0
      %1433 = vmatprep.subr.mxu0 0.0
      %1434 = vmatpush1.msra.mxu0 0.0
      %1435 = vmatprep.subr.mxu0 0.0
      %1436 = vmatpush1.msra.mxu0 0.0
      %1437 = vmatprep.subr.mxu0 0.0
      %1438 = vmatpush1.msra.mxu0 0.0
      %1439 = vmatprep.subr.mxu0 0.0
      %1440 = vmatpush1.msra.mxu0 0.0
      %1441 = vmatprep.subr.mxu0 0.0
      %1442 = vmatpush1.msra.mxu0 0.0
      %1443 = vmatprep.subr.mxu0 0.0
      %1444 = vmatpush1.msra.mxu0 0.0
      %1445 = vmatprep.subr.mxu0 0.0
      %1446 = vmatpush1.msra.mxu0 0.0
      %1447 = vmatprep.subr.mxu0 0.0
      %1448 = vmatpush1.msra.mxu0 0.0
      %1449 = vmatprep.subr.mxu0 0.0
      %1450 = vmatpush1.msra.mxu0 0.0
      %1451 = vmatprep.subr.mxu0 0.0
      %1452 = vmatpush1.msra.mxu0 0.0
      %1453 = vmatprep.subr.mxu0 0.0
      %1454 = vmatpush1.msra.mxu0 0.0
      %1455 = vmatprep.subr.mxu0 0.0
      %1456 = vmatpush1.msra.mxu0 0.0
      %1457 = vmatprep.subr.mxu0 0.0
      %1458 = vmatpush1.msra.mxu0 0.0
      %1459 = vmatprep.subr.mxu0 0.0
      %1460 = vmatpush1.msra.mxu0 0.0
      %1461 = vmatprep.subr.mxu0 0.0
      %1462 = vmatpush1.msra.mxu0 0.0
      %1463 = vmatprep.subr.mxu0 0.0
      %1464 = vmatpush1.msra.mxu0 0.0
      %1465 = vmatprep.subr.mxu0 0.0
      %1466 = vmatpush1.msra.mxu0 0.0
      %1467 = vmatprep.subr.mxu0 0.0
      %1468 = vmatpush1.msra.mxu0 0.0
      %1469 = vmatprep.subr.mxu0 0.0
      %1470 = vmatpush1.msra.mxu0 0.0
      %1471 = vmatprep.subr.mxu0 0.0
      %1472 = vmatpush1.msra.mxu0 0.0
      %1473 = vmatprep.subr.mxu0 0.0
      %1474 = vmatpush1.msra.mxu0 0.0
      %1475 = vmatprep.subr.mxu0 0.0
      %1476 = vmatpush1.msra.mxu0 0.0
      %1477 = vmatprep.subr.mxu0 0.0
      %1478 = vmatpush1.msra.mxu0 0.0
      %1479 = vmatprep.subr.mxu0 0.0
      %1480 = vmatpush1.msra.mxu0 0.0
      %1481 = vmatprep.mubr.f32.mxu0 0.0
      %1482 = vmatmul.mubr.f32.gmra.mrb[0].mxu0 %v1391
      %v1483 = vpop.f32.mrb[0].mxu0
      %v1484 = vadd.f32 0.0, %v1483
      %v1485 = vpop.f32.mrb[0].mxu0
      %1486 = vmatprep.mubr.f32.mxu0 0.0
      %1487 = vmatmul.mubr.f32.gmra.mrb[0].mxu0 %v1394
      %v1488 = vpop.f32.mrb[0].mxu0
      %v1489 = vadd.f32 0.0, %v1488
      %v1490 = vpop.f32.mrb[0].mxu0
      %1491 = vmatprep.mubr.f32.mxu0 0.0
      %1492 = vmatmul.mubr.f32.gmra.mrb[0].mxu0 %v1397
      %v1493 = vpop.f32.mrb[0].mxu0
      %v1494 = vadd.f32 0.0, %v1493
      %v1495 = vpop.f32.mrb[0].mxu0
      %1496 = vmatprep.mubr.f32.mxu0 0.0
      %1497 = vmatmul.mubr.f32.gmra.mrb[0].mxu0 %v1400
      %v1498 = vpop.f32.mrb[0].mxu0
      %v1499 = vadd.f32 0.0, %v1498
      %v1500 = vpop.f32.mrb[0].mxu0
      %1501 = vmatprep.mubr.f32.mxu0 0.0
      %1502 = vmatmul.mubr.f32.gmra.mrb[0].mxu0 %v1403
      %v1503 = vpop.f32.mrb[0].mxu0
      %v1504 = vadd.f32 0.0, %v1503
      %v1505 = vpop.f32.mrb[0].mxu0
      %1506 = vmatprep.mubr.f32.mxu0 0.0
      %1507 = vmatmul.mubr.f32.gmra.mrb[0].mxu0 %v1406
      %v1508 = vpop.f32.mrb[0].mxu0
      %v1509 = vadd.f32 0.0, %v1508
      %v1510 = vpop.f32.mrb[0].mxu0
      %1511 = vmatprep.mubr.f32.mxu0 0.0
      %1512 = vmatmul.mubr.f32.gmra.mrb[0].mxu0 %v1409
      %v1513 = vpop.f32.mrb[0].mxu0
      %v1514 = vadd.f32 0.0, %v1513
      %v1515 = vpop.f32.mrb[0].mxu0
      %1516 = vmatprep.mubr.f32.mxu0 0.0
      %1517 = vmatmul.mubr.f32.gmra.mrb[0].mxu0 %v1412
      %v1518 = vpop.f32.mrb[0].mxu0
      %v1519 = vadd.f32 0.0, %v1518
      %v1520 = vpop.f32.mrb[0].mxu0
      %1521 = vdwg.mxu0
      %1523 = vset.pattern.permute.xlu0 0
      %1524 = vperm.xlu0 %1523, %v1171
      %v1525 = vpop.permute.xlu0 %1524
      %1528 = vset.pattern.permute.xlu0 0
      %1529 = vperm.xlu0 %1528, %v1176
      %v1530 = vpop.permute.xlu0 %1529
      %1533 = vset.pattern.permute.xlu0 0
      %1534 = vperm.xlu0 %1533, %v1181
      %v1535 = vpop.permute.xlu0 %1534
      %1538 = vset.pattern.permute.xlu0 0
      %1539 = vperm.xlu0 %1538, %v1186
      %v1540 = vpop.permute.xlu0 %1539
      %1543 = vset.pattern.permute.xlu0 0
      %1544 = vperm.xlu0 %1543, %v1191
      %v1545 = vpop.permute.xlu0 %1544
      %1548 = vset.pattern.permute.xlu0 0
      %1549 = vperm.xlu0 %1548, %v1196
      %v1550 = vpop.permute.xlu0 %1549
      %1553 = vset.pattern.permute.xlu0 0
      %1554 = vperm.xlu0 %1553, %v1201
      %v1555 = vpop.permute.xlu0 %1554
      %1558 = vset.pattern.permute.xlu0 0
      %1559 = vperm.xlu0 %1558, %v1206
      %v1560 = vpop.permute.xlu0 %1559
      %v1562 = vmul.f32 %v1525, %v1484
      %v1563 = vmul.f32 %v1530, %v1489
      %v1564 = vmul.f32 %v1535, %v1494
      %v1565 = vmul.f32 %v1540, %v1499
      %v1566 = vmul.f32 %v1545, %v1504
      %v1567 = vmul.f32 %v1550, %v1509
      %v1568 = vmul.f32 %v1555, %v1514
      %v1569 = vmul.f32 %v1560, %v1519
      %v1570 = vadd.f32 %v1351, %v1562
      %v1571 = vadd.f32 %v1356, %v1563
      %v1572 = vadd.f32 %v1361, %v1564
      %v1573 = vadd.f32 %v1366, %v1565
      %v1574 = vadd.f32 %v1371, %v1566
      %v1575 = vadd.f32 %v1376, %v1567
      %v1576 = vadd.f32 %v1381, %v1568
      %v1577 = vadd.f32 %v1386, %v1569
      %v1578 = vld [vmem:[%s2 + $0x6] sm:$0x7]
      %v1580 = vsel %vm1280, %v1578, 0
      %1582 = vmatprep.subr.mxu0 0.0
      %1583 = vmatpush1.msra.mxu0 %v1580
      %1584 = vmatprep.subr.mxu0 0.0
      %1585 = vmatpush1.msra.mxu0 0.0
      %1586 = vmatprep.subr.mxu0 0.0
      %1587 = vmatpush1.msra.mxu0 0.0
      %1588 = vmatprep.subr.mxu0 0.0
      %1589 = vmatpush1.msra.mxu0 0.0
      %1590 = vmatprep.subr.mxu0 0.0
      %1591 = vmatpush1.msra.mxu0 0.0
      %1592 = vmatprep.subr.mxu0 0.0
      %1593 = vmatpush1.msra.mxu0 0.0
      %1594 = vmatprep.subr.mxu0 0.0
      %1595 = vmatpush1.msra.mxu0 0.0
      %1596 = vmatprep.subr.mxu0 0.0
      %1597 = vmatpush1.msra.mxu0 0.0
      %1598 = vmatprep.subr.mxu0 0.0
      %1599 = vmatpush1.msra.mxu0 0.0
      %1600 = vmatprep.subr.mxu0 0.0
      %1601 = vmatpush1.msra.mxu0 0.0
      %1602 = vmatprep.subr.mxu0 0.0
      %1603 = vmatpush1.msra.mxu0 0.0
      %1604 = vmatprep.subr.mxu0 0.0
      %1605 = vmatpush1.msra.mxu0 0.0
      %1606 = vmatprep.subr.mxu0 0.0
      %1607 = vmatpush1.msra.mxu0 0.0
      %1608 = vmatprep.subr.mxu0 0.0
      %1609 = vmatpush1.msra.mxu0 0.0
      %1610 = vmatprep.subr.mxu0 0.0
      %1611 = vmatpush1.msra.mxu0 0.0
      %1612 = vmatprep.subr.mxu0 0.0
      %1613 = vmatpush1.msra.mxu0 0.0
      %1614 = vmatprep.subr.mxu0 0.0
      %1615 = vmatpush1.msra.mxu0 0.0
      %1616 = vmatprep.subr.mxu0 0.0
      %1617 = vmatpush1.msra.mxu0 0.0
      %1618 = vmatprep.subr.mxu0 0.0
      %1619 = vmatpush1.msra.mxu0 0.0
      %1620 = vmatprep.subr.mxu0 0.0
      %1621 = vmatpush1.msra.mxu0 0.0
      %1622 = vmatprep.subr.mxu0 0.0
      %1623 = vmatpush1.msra.mxu0 0.0
      %1624 = vmatprep.subr.mxu0 0.0
      %1625 = vmatpush1.msra.mxu0 0.0
      %1626 = vmatprep.subr.mxu0 0.0
      %1627 = vmatpush1.msra.mxu0 0.0
      %1628 = vmatprep.subr.mxu0 0.0
      %1629 = vmatpush1.msra.mxu0 0.0
      %1630 = vmatprep.subr.mxu0 0.0
      %1631 = vmatpush1.msra.mxu0 0.0
      %1632 = vmatprep.subr.mxu0 0.0
      %1633 = vmatpush1.msra.mxu0 0.0
      %1634 = vmatprep.subr.mxu0 0.0
      %1635 = vmatpush1.msra.mxu0 0.0
      %1636 = vmatprep.subr.mxu0 0.0
      %1637 = vmatpush1.msra.mxu0 0.0
      %1638 = vmatprep.subr.mxu0 0.0
      %1639 = vmatpush1.msra.mxu0 0.0
      %1640 = vmatprep.subr.mxu0 0.0
      %1641 = vmatpush1.msra.mxu0 0.0
      %1642 = vmatprep.subr.mxu0 0.0
      %1643 = vmatpush1.msra.mxu0 0.0
      %1644 = vmatprep.subr.mxu0 0.0
      %1645 = vmatpush1.msra.mxu0 0.0
      %1646 = vmatprep.mubr.f32.mxu0 0.0
      %1647 = vmatmul.mubr.f32.gmra.mrb[0].mxu0 %v1391
      %v1648 = vpop.f32.mrb[0].mxu0
      %v1649 = vadd.f32 0.0, %v1648
      %v1650 = vpop.f32.mrb[0].mxu0
      %1651 = vmatprep.mubr.f32.mxu0 0.0
      %1652 = vmatmul.mubr.f32.gmra.mrb[0].mxu0 %v1394
      %v1653 = vpop.f32.mrb[0].mxu0
      %v1654 = vadd.f32 0.0, %v1653
      %v1655 = vpop.f32.mrb[0].mxu0
      %1656 = vmatprep.mubr.f32.mxu0 0.0
      %1657 = vmatmul.mubr.f32.gmra.mrb[0].mxu0 %v1397
      %v1658 = vpop.f32.mrb[0].mxu0
      %v1659 = vadd.f32 0.0, %v1658
      %v1660 = vpop.f32.mrb[0].mxu0
      %1661 = vmatprep.mubr.f32.mxu0 0.0
      %1662 = vmatmul.mubr.f32.gmra.mrb[0].mxu0 %v1400
      %v1663 = vpop.f32.mrb[0].mxu0
      %v1664 = vadd.f32 0.0, %v1663
      %v1665 = vpop.f32.mrb[0].mxu0
      %1666 = vmatprep.mubr.f32.mxu0 0.0
      %1667 = vmatmul.mubr.f32.gmra.mrb[0].mxu0 %v1403
      %v1668 = vpop.f32.mrb[0].mxu0
      %v1669 = vadd.f32 0.0, %v1668
      %v1670 = vpop.f32.mrb[0].mxu0
      %1671 = vmatprep.mubr.f32.mxu0 0.0
      %1672 = vmatmul.mubr.f32.gmra.mrb[0].mxu0 %v1406
      %v1673 = vpop.f32.mrb[0].mxu0
      %v1674 = vadd.f32 0.0, %v1673
      %v1675 = vpop.f32.mrb[0].mxu0
      %1676 = vmatprep.mubr.f32.mxu0 0.0
      %1677 = vmatmul.mubr.f32.gmra.mrb[0].mxu0 %v1409
      %v1678 = vpop.f32.mrb[0].mxu0
      %v1679 = vadd.f32 0.0, %v1678
      %v1680 = vpop.f32.mrb[0].mxu0
      %1681 = vmatprep.mubr.f32.mxu0 0.0
      %1682 = vmatmul.mubr.f32.gmra.mrb[0].mxu0 %v1412
      %v1683 = vpop.f32.mrb[0].mxu0
      %v1684 = vadd.f32 0.0, %v1683
      %v1685 = vpop.f32.mrb[0].mxu0
      %1686 = vdwg.mxu0
      %1687 = vset.pattern.permute.xlu0 1
      %1688 = vperm.xlu0 %1687, %v1171
      %v1689 = vpop.permute.xlu0 %1688
      %1691 = vset.pattern.permute.xlu0 1
      %1692 = vperm.xlu0 %1691, %v1176
      %v1693 = vpop.permute.xlu0 %1692
      %1695 = vset.pattern.permute.xlu0 1
      %1696 = vperm.xlu0 %1695, %v1181
      %v1697 = vpop.permute.xlu0 %1696
      %1699 = vset.pattern.permute.xlu0 1
      %1700 = vperm.xlu0 %1699, %v1186
      %v1701 = vpop.permute.xlu0 %1700
      %1703 = vset.pattern.permute.xlu0 1
      %1704 = vperm.xlu0 %1703, %v1191
      %v1705 = vpop.permute.xlu0 %1704
      %1707 = vset.pattern.permute.xlu0 1
      %1708 = vperm.xlu0 %1707, %v1196
      %v1709 = vpop.permute.xlu0 %1708
      %1711 = vset.pattern.permute.xlu0 1
      %1712 = vperm.xlu0 %1711, %v1201
      %v1713 = vpop.permute.xlu0 %1712
      %1715 = vset.pattern.permute.xlu0 1
      %1716 = vperm.xlu0 %1715, %v1206
      %v1717 = vpop.permute.xlu0 %1716
      %v1719 = vmul.f32 %v1689, %v1649
      %v1720 = vmul.f32 %v1693, %v1654
      %v1721 = vmul.f32 %v1697, %v1659
      %v1722 = vmul.f32 %v1701, %v1664
      %v1723 = vmul.f32 %v1705, %v1669
      %v1724 = vmul.f32 %v1709, %v1674
      %v1725 = vmul.f32 %v1713, %v1679
      %v1726 = vmul.f32 %v1717, %v1684
      %v1727 = vadd.f32 %v1570, %v1719
      %v1728 = vadd.f32 %v1571, %v1720
      %v1729 = vadd.f32 %v1572, %v1721
      %v1730 = vadd.f32 %v1573, %v1722
      %v1731 = vadd.f32 %v1574, %v1723
      %v1732 = vadd.f32 %v1575, %v1724
      %v1733 = vadd.f32 %v1576, %v1725
      %v1734 = vadd.f32 %v1577, %v1726
      %v1735 = vld [vmem:[%s2 + $0x9] sm:$0x7]
      %v1737 = vsel %vm1280, %v1735, 0
      %1739 = vmatprep.subr.mxu0 0.0
      %1740 = vmatpush1.msra.mxu0 %v1737
      %1741 = vmatprep.subr.mxu0 0.0
      %1742 = vmatpush1.msra.mxu0 0.0
      %1743 = vmatprep.subr.mxu0 0.0
      %1744 = vmatpush1.msra.mxu0 0.0
      %1745 = vmatprep.subr.mxu0 0.0
      %1746 = vmatpush1.msra.mxu0 0.0
      %1747 = vmatprep.subr.mxu0 0.0
      %1748 = vmatpush1.msra.mxu0 0.0
      %1749 = vmatprep.subr.mxu0 0.0
      %1750 = vmatpush1.msra.mxu0 0.0
      %1751 = vmatprep.subr.mxu0 0.0
      %1752 = vmatpush1.msra.mxu0 0.0
      %1753 = vmatprep.subr.mxu0 0.0
      %1754 = vmatpush1.msra.mxu0 0.0
      %1755 = vmatprep.subr.mxu0 0.0
      %1756 = vmatpush1.msra.mxu0 0.0
      %1757 = vmatprep.subr.mxu0 0.0
      %1758 = vmatpush1.msra.mxu0 0.0
      %1759 = vmatprep.subr.mxu0 0.0
      %1760 = vmatpush1.msra.mxu0 0.0
      %1761 = vmatprep.subr.mxu0 0.0
      %1762 = vmatpush1.msra.mxu0 0.0
      %1763 = vmatprep.subr.mxu0 0.0
      %1764 = vmatpush1.msra.mxu0 0.0
      %1765 = vmatprep.subr.mxu0 0.0
      %1766 = vmatpush1.msra.mxu0 0.0
      %1767 = vmatprep.subr.mxu0 0.0
      %1768 = vmatpush1.msra.mxu0 0.0
      %1769 = vmatprep.subr.mxu0 0.0
      %1770 = vmatpush1.msra.mxu0 0.0
      %1771 = vmatprep.subr.mxu0 0.0
      %1772 = vmatpush1.msra.mxu0 0.0
      %1773 = vmatprep.subr.mxu0 0.0
      %1774 = vmatpush1.msra.mxu0 0.0
      %1775 = vmatprep.subr.mxu0 0.0
      %1776 = vmatpush1.msra.mxu0 0.0
      %1777 = vmatprep.subr.mxu0 0.0
      %1778 = vmatpush1.msra.mxu0 0.0
      %1779 = vmatprep.subr.mxu0 0.0
      %1780 = vmatpush1.msra.mxu0 0.0
      %1781 = vmatprep.subr.mxu0 0.0
      %1782 = vmatpush1.msra.mxu0 0.0
      %1783 = vmatprep.subr.mxu0 0.0
      %1784 = vmatpush1.msra.mxu0 0.0
      %1785 = vmatprep.subr.mxu0 0.0
      %1786 = vmatpush1.msra.mxu0 0.0
      %1787 = vmatprep.subr.mxu0 0.0
      %1788 = vmatpush1.msra.mxu0 0.0
      %1789 = vmatprep.subr.mxu0 0.0
      %1790 = vmatpush1.msra.mxu0 0.0
      %1791 = vmatprep.subr.mxu0 0.0
      %1792 = vmatpush1.msra.mxu0 0.0
      %1793 = vmatprep.subr.mxu0 0.0
      %1794 = vmatpush1.msra.mxu0 0.0
      %1795 = vmatprep.subr.mxu0 0.0
      %1796 = vmatpush1.msra.mxu0 0.0
      %1797 = vmatprep.subr.mxu0 0.0
      %1798 = vmatpush1.msra.mxu0 0.0
      %1799 = vmatprep.subr.mxu0 0.0
      %1800 = vmatpush1.msra.mxu0 0.0
      %1801 = vmatprep.subr.mxu0 0.0
      %1802 = vmatpush1.msra.mxu0 0.0
      %1803 = vmatprep.mubr.f32.mxu0 0.0
      %1804 = vmatmul.mubr.f32.gmra.mrb[0].mxu0 %v1391
      %v1805 = vpop.f32.mrb[0].mxu0
      %v1806 = vadd.f32 0.0, %v1805
      %v1807 = vpop.f32.mrb[0].mxu0
      %1808 = vmatprep.mubr.f32.mxu0 0.0
      %1809 = vmatmul.mubr.f32.gmra.mrb[0].mxu0 %v1394
      %v1810 = vpop.f32.mrb[0].mxu0
      %v1811 = vadd.f32 0.0, %v1810
      %v1812 = vpop.f32.mrb[0].mxu0
      %1813 = vmatprep.mubr.f32.mxu0 0.0
      %1814 = vmatmul.mubr.f32.gmra.mrb[0].mxu0 %v1397
      %v1815 = vpop.f32.mrb[0].mxu0
      %v1816 = vadd.f32 0.0, %v1815
      %v1817 = vpop.f32.mrb[0].mxu0
      %1818 = vmatprep.mubr.f32.mxu0 0.0
      %1819 = vmatmul.mubr.f32.gmra.mrb[0].mxu0 %v1400
      %v1820 = vpop.f32.mrb[0].mxu0
      %v1821 = vadd.f32 0.0, %v1820
      %v1822 = vpop.f32.mrb[0].mxu0
      %1823 = vmatprep.mubr.f32.mxu0 0.0
      %1824 = vmatmul.mubr.f32.gmra.mrb[0].mxu0 %v1403
      %v1825 = vpop.f32.mrb[0].mxu0
      %v1826 = vadd.f32 0.0, %v1825
      %v1827 = vpop.f32.mrb[0].mxu0
      %1828 = vmatprep.mubr.f32.mxu0 0.0
      %1829 = vmatmul.mubr.f32.gmra.mrb[0].mxu0 %v1406
      %v1830 = vpop.f32.mrb[0].mxu0
      %v1831 = vadd.f32 0.0, %v1830
      %v1832 = vpop.f32.mrb[0].mxu0
      %1833 = vmatprep.mubr.f32.mxu0 0.0
      %1834 = vmatmul.mubr.f32.gmra.mrb[0].mxu0 %v1409
      %v1835 = vpop.f32.mrb[0].mxu0
      %v1836 = vadd.f32 0.0, %v1835
      %v1837 = vpop.f32.mrb[0].mxu0
      %1838 = vmatprep.mubr.f32.mxu0 0.0
      %1839 = vmatmul.mubr.f32.gmra.mrb[0].mxu0 %v1412
      %v1840 = vpop.f32.mrb[0].mxu0
      %v1841 = vadd.f32 0.0, %v1840
      %v1842 = vpop.f32.mrb[0].mxu0
      %1843 = vdwg.mxu0
      %1844 = vset.pattern.permute.xlu0 2
      %1845 = vperm.xlu0 %1844, %v1171
      %v1846 = vpop.permute.xlu0 %1845
      %1848 = vset.pattern.permute.xlu0 2
      %1849 = vperm.xlu0 %1848, %v1176
      %v1850 = vpop.permute.xlu0 %1849
      %1852 = vset.pattern.permute.xlu0 2
      %1853 = vperm.xlu0 %1852, %v1181
      %v1854 = vpop.permute.xlu0 %1853
      %1856 = vset.pattern.permute.xlu0 2
      %1857 = vperm.xlu0 %1856, %v1186
      %v1858 = vpop.permute.xlu0 %1857
      %1860 = vset.pattern.permute.xlu0 2
      %1861 = vperm.xlu0 %1860, %v1191
      %v1862 = vpop.permute.xlu0 %1861
      %1864 = vset.pattern.permute.xlu0 2
      %1865 = vperm.xlu0 %1864, %v1196
      %v1866 = vpop.permute.xlu0 %1865
      %1868 = vset.pattern.permute.xlu0 2
      %1869 = vperm.xlu0 %1868, %v1201
      %v1870 = vpop.permute.xlu0 %1869
      %1872 = vset.pattern.permute.xlu0 2
      %1873 = vperm.xlu0 %1872, %v1206
      %v1874 = vpop.permute.xlu0 %1873
      %v1876 = vmul.f32 %v1846, %v1806
      %v1877 = vmul.f32 %v1850, %v1811
      %v1878 = vmul.f32 %v1854, %v1816
      %v1879 = vmul.f32 %v1858, %v1821
      %v1880 = vmul.f32 %v1862, %v1826
      %v1881 = vmul.f32 %v1866, %v1831
      %v1882 = vmul.f32 %v1870, %v1836
      %v1883 = vmul.f32 %v1874, %v1841
      %v1884 = vadd.f32 %v1727, %v1876
      %v1885 = vadd.f32 %v1728, %v1877
      %v1886 = vadd.f32 %v1729, %v1878
      %v1887 = vadd.f32 %v1730, %v1879
      %v1888 = vadd.f32 %v1731, %v1880
      %v1889 = vadd.f32 %v1732, %v1881
      %v1890 = vadd.f32 %v1733, %v1882
      %v1891 = vadd.f32 %v1734, %v1883
      %v1892 = vmax.f32 %v1884, 0.0
      %v1893 = vmax.f32 %v1885, 0.0
      %v1894 = vmax.f32 %v1886, 0.0
      %v1895 = vmax.f32 %v1887, 0.0
      %v1896 = vmax.f32 %v1888, 0.0
      %v1897 = vmax.f32 %v1889, 0.0
      %v1898 = vmax.f32 %v1890, 0.0
      %v1899 = vmax.f32 %v1891, 0.0
      %v1900 = vld [vmem:[%s2 + $0xc] sm:$0xff]
      %v1901 = vld [vmem:[%s2 + $0x14] sm:$0xff]
      %v1902 = vld [vmem:[%s2 + $0x1c] sm:$0xff]
      %v1903 = vld [vmem:[%s2 + $0x24] sm:$0xff]
      %v1904 = vld [vmem:[%s2 + $0x2c] sm:$0xff]
      %v1905 = vld [vmem:[%s2 + $0x34] sm:$0xff]
      %v1906 = vld [vmem:[%s2 + $0x3c] sm:$0xff]
      %v1907 = vld [vmem:[%s2 + $0x44] sm:$0xff]
      %v1908 = vld [vmem:[%s2 + $0xcd] sm:$0x1]
      %v1909 = vlaneseq
      %v1910 = vshrl.u32 %v1909, 7
      %v1911 = vsub.s32 0, %v1910
      %v1912 = vrot.slane %v1908, %v1911
      %v1914 = vsel %vm1055, %v1892, 0
      %v1917 = vsel %vm1055, %v1893, 0
      %v1920 = vsel %vm1055, %v1894, 0
      %v1923 = vsel %vm1055, %v1895, 0
      %v1926 = vsel %vm1055, %v1896, 0
      %v1929 = vsel %vm1055, %v1897, 0
      %v1932 = vsel %vm1055, %v1898, 0
      %v1935 = vsel %vm1055, %v1899, 0
      %1937 = vmatprep.subr.mxu0 0.0
      %1938 = vmatpush1.msra.mxu0 %v1900
      %1939 = vmatprep.subr.mxu0 0.0
      %1940 = vmatpush1.msra.mxu0 %v1901
      %1941 = vmatprep.subr.mxu0 0.0
      %1942 = vmatpush1.msra.mxu0 %v1902
      %1943 = vmatprep.subr.mxu0 0.0
      %1944 = vmatpush1.msra.mxu0 %v1903
      %1945 = vmatprep.subr.mxu0 0.0
      %1946 = vmatpush1.msra.mxu0 %v1904
      %1947 = vmatprep.subr.mxu0 0.0
      %1948 = vmatpush1.msra.mxu0 %v1905
      %1949 = vmatprep.subr.mxu0 0.0
      %1950 = vmatpush1.msra.mxu0 %v1906
      %1951 = vmatprep.subr.mxu0 0.0
      %1952 = vmatpush1.msra.mxu0 %v1907
      %1953 = vmatprep.subr.mxu0 0.0
      %1954 = vmatpush1.msra.mxu0 0.0
      %1955 = vmatprep.subr.mxu0 0.0
      %1956 = vmatpush1.msra.mxu0 0.0
      %1957 = vmatprep.subr.mxu0 0.0
      %1958 = vmatpush1.msra.mxu0 0.0
      %1959 = vmatprep.subr.mxu0 0.0
      %1960 = vmatpush1.msra.mxu0 0.0
      %1961 = vmatprep.subr.mxu0 0.0
      %1962 = vmatpush1.msra.mxu0 0.0
      %1963 = vmatprep.subr.mxu0 0.0
      %1964 = vmatpush1.msra.mxu0 0.0
      %1965 = vmatprep.subr.mxu0 0.0
      %1966 = vmatpush1.msra.mxu0 0.0
      %1967 = vmatprep.subr.mxu0 0.0
      %1968 = vmatpush1.msra.mxu0 0.0
      %1969 = vmatprep.subr.mxu0 0.0
      %1970 = vmatpush1.msra.mxu0 0.0
      %1971 = vmatprep.subr.mxu0 0.0
      %1972 = vmatpush1.msra.mxu0 0.0
      %1973 = vmatprep.subr.mxu0 0.0
      %1974 = vmatpush1.msra.mxu0 0.0
      %1975 = vmatprep.subr.mxu0 0.0
      %1976 = vmatpush1.msra.mxu0 0.0
      %1977 = vmatprep.subr.mxu0 0.0
      %1978 = vmatpush1.msra.mxu0 0.0
      %1979 = vmatprep.subr.mxu0 0.0
      %1980 = vmatpush1.msra.mxu0 0.0
      %1981 = vmatprep.subr.mxu0 0.0
      %1982 = vmatpush1.msra.mxu0 0.0
      %1983 = vmatprep.subr.mxu0 0.0
      %1984 = vmatpush1.msra.mxu0 0.0
      %1985 = vmatprep.subr.mxu0 0.0
      %1986 = vmatpush1.msra.mxu0 0.0
      %1987 = vmatprep.subr.mxu0 0.0
      %1988 = vmatpush1.msra.mxu0 0.0
      %1989 = vmatprep.subr.mxu0 0.0
      %1990 = vmatpush1.msra.mxu0 0.0
      %1991 = vmatprep.subr.mxu0 0.0
      %1992 = vmatpush1.msra.mxu0 0.0
      %1993 = vmatprep.subr.mxu0 0.0
      %1994 = vmatpush1.msra.mxu0 0.0
      %1995 = vmatprep.subr.mxu0 0.0
      %1996 = vmatpush1.msra.mxu0 0.0
      %1997 = vmatprep.subr.mxu0 0.0
      %1998 = vmatpush1.msra.mxu0 0.0
      %1999 = vmatprep.subr.mxu0 0.0
      %2000 = vmatpush1.msra.mxu0 0.0
      %2001 = vmatprep.mubr.f32.mxu0 0.0
      %2002 = vmatmul.mubr.f32.gmra.mrb[0].mxu0 %v1914
      %v2003 = vpop.f32.mrb[0].mxu0
      %v2004 = vadd.f32 %v1912, %v2003
      %v2005 = vpop.f32.mrb[0].mxu0
      %2006 = vmatprep.mubr.f32.mxu0 0.0
      %2007 = vmatmul.mubr.f32.gmra.mrb[0].mxu0 %v1917
      %v2008 = vpop.f32.mrb[0].mxu0
      %v2009 = vadd.f32 %v1912, %v2008
      %v2010 = vpop.f32.mrb[0].mxu0
      %2011 = vmatprep.mubr.f32.mxu0 0.0
      %2012 = vmatmul.mubr.f32.gmra.mrb[0].mxu0 %v1920
      %v2013 = vpop.f32.mrb[0].mxu0
      %v2014 = vadd.f32 %v1912, %v2013
      %v2015 = vpop.f32.mrb[0].mxu0
      %2016 = vmatprep.mubr.f32.mxu0 0.0
      %2017 = vmatmul.mubr.f32.gmra.mrb[0].mxu0 %v1923
      %v2018 = vpop.f32.mrb[0].mxu0
      %v2019 = vadd.f32 %v1912, %v2018
      %v2020 = vpop.f32.mrb[0].mxu0
      %2021 = vmatprep.mubr.f32.mxu0 0.0
      %2022 = vmatmul.mubr.f32.gmra.mrb[0].mxu0 %v1926
      %v2023 = vpop.f32.mrb[0].mxu0
      %v2024 = vadd.f32 %v1912, %v2023
      %v2025 = vpop.f32.mrb[0].mxu0
      %2026 = vmatprep.mubr.f32.mxu0 0.0
      %2027 = vmatmul.mubr.f32.gmra.mrb[0].mxu0 %v1929
      %v2028 = vpop.f32.mrb[0].mxu0
      %v2029 = vadd.f32 %v1912, %v2028
      %v2030 = vpop.f32.mrb[0].mxu0
      %2031 = vmatprep.mubr.f32.mxu0 0.0
      %2032 = vmatmul.mubr.f32.gmra.mrb[0].mxu0 %v1932
      %v2033 = vpop.f32.mrb[0].mxu0
      %v2034 = vadd.f32 %v1912, %v2033
      %v2035 = vpop.f32.mrb[0].mxu0
      %2036 = vmatprep.mubr.f32.mxu0 0.0
      %2037 = vmatmul.mubr.f32.gmra.mrb[0].mxu0 %v1935
      %v2038 = vpop.f32.mrb[0].mxu0
      %v2039 = vadd.f32 %v1912, %v2038
      %v2040 = vpop.f32.mrb[0].mxu0
      %2041 = vdwg.mxu0
      %v2042 = vmax.f32 %v2004, 0.0
      %v2043 = vmax.f32 %v2009, 0.0
      %v2044 = vmax.f32 %v2014, 0.0
      %v2045 = vmax.f32 %v2019, 0.0
      %v2046 = vmax.f32 %v2024, 0.0
      %v2047 = vmax.f32 %v2029, 0.0
      %v2048 = vmax.f32 %v2034, 0.0
      %v2049 = vmax.f32 %v2039, 0.0
      %v2050 = vld [vmem:[%s2 + $0x4c] sm:$0xff]
      %v2051 = vld [vmem:[%s2 + $0x54] sm:$0xff]
      %v2052 = vld [vmem:[%s2 + $0x5c] sm:$0xff]
      %v2053 = vld [vmem:[%s2 + $0x64] sm:$0xff]
      %v2054 = vld [vmem:[%s2 + $0x6c] sm:$0xff]
      %v2055 = vld [vmem:[%s2 + $0x74] sm:$0xff]
      %v2056 = vld [vmem:[%s2 + $0x7c] sm:$0xff]
      %v2057 = vld [vmem:[%s2 + $0x84] sm:$0xff]
      %v2058 = vld [vmem:[%s2 + $0xce] sm:$0x1]
      %v2059 = vlaneseq
      %v2060 = vshrl.u32 %v2059, 7
      %v2061 = vsub.s32 0, %v2060
      %v2062 = vrot.slane %v2058, %v2061
      %v2064 = vsel %vm1055, %v2042, 0
      %v2067 = vsel %vm1055, %v2043, 0
      %v2070 = vsel %vm1055, %v2044, 0
      %v2073 = vsel %vm1055, %v2045, 0
      %v2076 = vsel %vm1055, %v2046, 0
      %v2079 = vsel %vm1055, %v2047, 0
      %v2082 = vsel %vm1055, %v2048, 0
      %v2085 = vsel %vm1055, %v2049, 0
      %2087 = vmatprep.subr.mxu0 0.0
      %2088 = vmatpush1.msra.mxu0 %v2050
      %2089 = vmatprep.subr.mxu0 0.0
      %2090 = vmatpush1.msra.mxu0 %v2051
      %2091 = vmatprep.subr.mxu0 0.0
      %2092 = vmatpush1.msra.mxu0 %v2052
      %2093 = vmatprep.subr.mxu0 0.0
      %2094 = vmatpush1.msra.mxu0 %v2053
      %2095 = vmatprep.subr.mxu0 0.0
      %2096 = vmatpush1.msra.mxu0 %v2054
      %2097 = vmatprep.subr.mxu0 0.0
      %2098 = vmatpush1.msra.mxu0 %v2055
      %2099 = vmatprep.subr.mxu0 0.0
      %2100 = vmatpush1.msra.mxu0 %v2056
      %2101 = vmatprep.subr.mxu0 0.0
      %2102 = vmatpush1.msra.mxu0 %v2057
      %2103 = vmatprep.subr.mxu0 0.0
      %2104 = vmatpush1.msra.mxu0 0.0
      %2105 = vmatprep.subr.mxu0 0.0
      %2106 = vmatpush1.msra.mxu0 0.0
      %2107 = vmatprep.subr.mxu0 0.0
      %2108 = vmatpush1.msra.mxu0 0.0
      %2109 = vmatprep.subr.mxu0 0.0
      %2110 = vmatpush1.msra.mxu0 0.0
      %2111 = vmatprep.subr.mxu0 0.0
      %2112 = vmatpush1.msra.mxu0 0.0
      %2113 = vmatprep.subr.mxu0 0.0
      %2114 = vmatpush1.msra.mxu0 0.0
      %2115 = vmatprep.subr.mxu0 0.0
      %2116 = vmatpush1.msra.mxu0 0.0
      %2117 = vmatprep.subr.mxu0 0.0
      %2118 = vmatpush1.msra.mxu0 0.0
      %2119 = vmatprep.subr.mxu0 0.0
      %2120 = vmatpush1.msra.mxu0 0.0
      %2121 = vmatprep.subr.mxu0 0.0
      %2122 = vmatpush1.msra.mxu0 0.0
      %2123 = vmatprep.subr.mxu0 0.0
      %2124 = vmatpush1.msra.mxu0 0.0
      %2125 = vmatprep.subr.mxu0 0.0
      %2126 = vmatpush1.msra.mxu0 0.0
      %2127 = vmatprep.subr.mxu0 0.0
      %2128 = vmatpush1.msra.mxu0 0.0
      %2129 = vmatprep.subr.mxu0 0.0
      %2130 = vmatpush1.msra.mxu0 0.0
      %2131 = vmatprep.subr.mxu0 0.0
      %2132 = vmatpush1.msra.mxu0 0.0
      %2133 = vmatprep.subr.mxu0 0.0
      %2134 = vmatpush1.msra.mxu0 0.0
      %2135 = vmatprep.subr.mxu0 0.0
      %2136 = vmatpush1.msra.mxu0 0.0
      %2137 = vmatprep.subr.mxu0 0.0
      %2138 = vmatpush1.msra.mxu0 0.0
      %2139 = vmatprep.subr.mxu0 0.0
      %2140 = vmatpush1.msra.mxu0 0.0
      %2141 = vmatprep.subr.mxu0 0.0
      %2142 = vmatpush1.msra.mxu0 0.0
      %2143 = vmatprep.subr.mxu0 0.0
      %2144 = vmatpush1.msra.mxu0 0.0
      %2145 = vmatprep.subr.mxu0 0.0
      %2146 = vmatpush1.msra.mxu0 0.0
      %2147 = vmatprep.subr.mxu0 0.0
      %2148 = vmatpush1.msra.mxu0 0.0
      %2149 = vmatprep.subr.mxu0 0.0
      %2150 = vmatpush1.msra.mxu0 0.0
      %2151 = vmatprep.mubr.f32.mxu0 0.0
      %2152 = vmatmul.mubr.f32.gmra.mrb[0].mxu0 %v2064
      %v2153 = vpop.f32.mrb[0].mxu0
      %v2154 = vadd.f32 %v2062, %v2153
      %v2155 = vpop.f32.mrb[0].mxu0
      %2156 = vmatprep.mubr.f32.mxu0 0.0
      %2157 = vmatmul.mubr.f32.gmra.mrb[0].mxu0 %v2067
      %v2158 = vpop.f32.mrb[0].mxu0
      %v2159 = vadd.f32 %v2062, %v2158
      %v2160 = vpop.f32.mrb[0].mxu0
      %2161 = vmatprep.mubr.f32.mxu0 0.0
      %2162 = vmatmul.mubr.f32.gmra.mrb[0].mxu0 %v2070
      %v2163 = vpop.f32.mrb[0].mxu0
      %v2164 = vadd.f32 %v2062, %v2163
      %v2165 = vpop.f32.mrb[0].mxu0
      %2166 = vmatprep.mubr.f32.mxu0 0.0
      %2167 = vmatmul.mubr.f32.gmra.mrb[0].mxu0 %v2073
      %v2168 = vpop.f32.mrb[0].mxu0
      %v2169 = vadd.f32 %v2062, %v2168
      %v2170 = vpop.f32.mrb[0].mxu0
      %2171 = vmatprep.mubr.f32.mxu0 0.0
      %2172 = vmatmul.mubr.f32.gmra.mrb[0].mxu0 %v2076
      %v2173 = vpop.f32.mrb[0].mxu0
      %v2174 = vadd.f32 %v2062, %v2173
      %v2175 = vpop.f32.mrb[0].mxu0
      %2176 = vmatprep.mubr.f32.mxu0 0.0
      %2177 = vmatmul.mubr.f32.gmra.mrb[0].mxu0 %v2079
      %v2178 = vpop.f32.mrb[0].mxu0
      %v2179 = vadd.f32 %v2062, %v2178
      %v2180 = vpop.f32.mrb[0].mxu0
      %2181 = vmatprep.mubr.f32.mxu0 0.0
      %2182 = vmatmul.mubr.f32.gmra.mrb[0].mxu0 %v2082
      %v2183 = vpop.f32.mrb[0].mxu0
      %v2184 = vadd.f32 %v2062, %v2183
      %v2185 = vpop.f32.mrb[0].mxu0
      %2186 = vmatprep.mubr.f32.mxu0 0.0
      %2187 = vmatmul.mubr.f32.gmra.mrb[0].mxu0 %v2085
      %v2188 = vpop.f32.mrb[0].mxu0
      %v2189 = vadd.f32 %v2062, %v2188
      %v2190 = vpop.f32.mrb[0].mxu0
      %2191 = vdwg.mxu0
      %v2192 = vmax.f32 %v2154, 0.0
      %v2193 = vmax.f32 %v2159, 0.0
      %v2194 = vmax.f32 %v2164, 0.0
      %v2195 = vmax.f32 %v2169, 0.0
      %v2196 = vmax.f32 %v2174, 0.0
      %v2197 = vmax.f32 %v2179, 0.0
      %v2198 = vmax.f32 %v2184, 0.0
      %v2199 = vmax.f32 %v2189, 0.0
      %v2201 = vsel %vm1055, %v423, 0
      %v2204 = vsel %vm1055, %v424, 0
      %v2207 = vsel %vm1055, %v425, 0
      %v2210 = vsel %vm1055, %v426, 0
      %v2213 = vsel %vm1055, %v427, 0
      %v2216 = vsel %vm1055, %v428, 0
      %v2219 = vsel %vm1055, %v429, 0
      %v2222 = vsel %vm1055, %v430, 0
      %v2225 = vsel %vm1055, %v471, 0
      %v2228 = vsel %vm1055, %v472, 0
      %v2231 = vsel %vm1055, %v473, 0
      %v2234 = vsel %vm1055, %v474, 0
      %v2237 = vsel %vm1055, %v475, 0
      %v2240 = vsel %vm1055, %v476, 0
      %v2243 = vsel %vm1055, %v477, 0
      %v2246 = vsel %vm1055, %v478, 0
      %v2249 = vsel %vm1055, %v519, 0
      %v2252 = vsel %vm1055, %v520, 0
      %v2255 = vsel %vm1055, %v521, 0
      %v2258 = vsel %vm1055, %v522, 0
      %v2261 = vsel %vm1055, %v523, 0
      %v2264 = vsel %vm1055, %v524, 0
      %v2267 = vsel %vm1055, %v525, 0
      %v2270 = vsel %vm1055, %v526, 0
      %v2273 = vsel %vm1055, %v567, 0
      %v2276 = vsel %vm1055, %v568, 0
      %v2279 = vsel %vm1055, %v569, 0
      %v2282 = vsel %vm1055, %v570, 0
      %v2285 = vsel %vm1055, %v571, 0
      %v2288 = vsel %vm1055, %v572, 0
      %v2291 = vsel %vm1055, %v573, 0
      %v2294 = vsel %vm1055, %v574, 0
      %v2297 = vsel %vm1055, %v615, 0
      %v2300 = vsel %vm1055, %v616, 0
      %v2303 = vsel %vm1055, %v617, 0
      %v2306 = vsel %vm1055, %v618, 0
      %v2309 = vsel %vm1055, %v619, 0
      %v2312 = vsel %vm1055, %v620, 0
      %v2315 = vsel %vm1055, %v621, 0
      %v2318 = vsel %vm1055, %v622, 0
      %v2321 = vsel %vm1055, %v663, 0
      %v2324 = vsel %vm1055, %v664, 0
      %v2327 = vsel %vm1055, %v665, 0
      %v2330 = vsel %vm1055, %v666, 0
      %v2333 = vsel %vm1055, %v667, 0
      %v2336 = vsel %vm1055, %v668, 0
      %v2339 = vsel %vm1055, %v669, 0
      %v2342 = vsel %vm1055, %v670, 0
      %v2345 = vsel %vm1055, %v711, 0
      %v2348 = vsel %vm1055, %v712, 0
      %v2351 = vsel %vm1055, %v713, 0
      %v2354 = vsel %vm1055, %v714, 0
      %v2357 = vsel %vm1055, %v715, 0
      %v2360 = vsel %vm1055, %v716, 0
      %v2363 = vsel %vm1055, %v717, 0
      %v2366 = vsel %vm1055, %v718, 0
      %v2369 = vsel %vm1055, %v759, 0
      %v2372 = vsel %vm1055, %v760, 0
      %v2375 = vsel %vm1055, %v761, 0
      %v2378 = vsel %vm1055, %v762, 0
      %v2381 = vsel %vm1055, %v763, 0
      %v2384 = vsel %vm1055, %v764, 0
      %v2387 = vsel %vm1055, %v765, 0
      %v2390 = vsel %vm1055, %v766, 0
      %v2393 = vsel %vm1055, %v807, 0
      %v2396 = vsel %vm1055, %v808, 0
      %v2399 = vsel %vm1055, %v809, 0
      %v2402 = vsel %vm1055, %v810, 0
      %v2405 = vsel %vm1055, %v811, 0
      %v2408 = vsel %vm1055, %v812, 0
      %v2411 = vsel %vm1055, %v813, 0
      %v2414 = vsel %vm1055, %v814, 0
      %v2417 = vsel %vm1055, %v855, 0
      %v2420 = vsel %vm1055, %v856, 0
      %v2423 = vsel %vm1055, %v857, 0
      %v2426 = vsel %vm1055, %v858, 0
      %v2429 = vsel %vm1055, %v859, 0
      %v2432 = vsel %vm1055, %v860, 0
      %v2435 = vsel %vm1055, %v861, 0
      %v2438 = vsel %vm1055, %v862, 0
      %v2441 = vsel %vm1055, %v903, 0
      %v2444 = vsel %vm1055, %v904, 0
      %v2447 = vsel %vm1055, %v905, 0
      %v2450 = vsel %vm1055, %v906, 0
      %v2453 = vsel %vm1055, %v907, 0
      %v2456 = vsel %vm1055, %v908, 0
      %v2459 = vsel %vm1055, %v909, 0
      %v2462 = vsel %vm1055, %v910, 0
      %v2465 = vsel %vm1055, %v951, 0
      %v2468 = vsel %vm1055, %v952, 0
      %v2471 = vsel %vm1055, %v953, 0
      %v2474 = vsel %vm1055, %v954, 0
      %v2477 = vsel %vm1055, %v955, 0
      %v2480 = vsel %vm1055, %v956, 0
      %v2483 = vsel %vm1055, %v957, 0
      %v2486 = vsel %vm1055, %v958, 0
      %v2489 = vsel %vm1055, %v999, 0
      %v2492 = vsel %vm1055, %v1000, 0
      %v2495 = vsel %vm1055, %v1001, 0
      %v2498 = vsel %vm1055, %v1002, 0
      %v2501 = vsel %vm1055, %v1003, 0
      %v2504 = vsel %vm1055, %v1004, 0
      %v2507 = vsel %vm1055, %v1005, 0
      %v2510 = vsel %vm1055, %v1006, 0
      %v2513 = vsel %vm1055, %v1047, 0
      %v2516 = vsel %vm1055, %v1048, 0
      %v2519 = vsel %vm1055, %v1049, 0
      %v2522 = vsel %vm1055, %v1050, 0
      %v2525 = vsel %vm1055, %v1051, 0
      %v2528 = vsel %vm1055, %v1052, 0
      %v2531 = vsel %vm1055, %v1053, 0
      %v2534 = vsel %vm1055, %v1054, 0
      %2536 = vmatprep.subr.mxu0 0.0
      %2537 = vmatpush1.msra.mxu0 %v2192
      %2538 = vmatprep.subr.mxu0 0.0
      %2539 = vmatpush1.msra.mxu0 %v2193
      %2540 = vmatprep.subr.mxu0 0.0
      %2541 = vmatpush1.msra.mxu0 %v2194
      %2542 = vmatprep.subr.mxu0 0.0
      %2543 = vmatpush1.msra.mxu0 %v2195
      %2544 = vmatprep.subr.mxu0 0.0
      %2545 = vmatpush1.msra.mxu0 %v2196
      %2546 = vmatprep.subr.mxu0 0.0
      %2547 = vmatpush1.msra.mxu0 %v2197
      %2548 = vmatprep.subr.mxu0 0.0
      %2549 = vmatpush1.msra.mxu0 %v2198
      %2550 = vmatprep.subr.mxu0 0.0
      %2551 = vmatpush1.msra.mxu0 %v2199
      %2552 = vmatprep.subr.mxu0 0.0
      %2553 = vmatpush1.msra.mxu0 0.0
      %2554 = vmatprep.subr.mxu0 0.0
      %2555 = vmatpush1.msra.mxu0 0.0
      %2556 = vmatprep.subr.mxu0 0.0
      %2557 = vmatpush1.msra.mxu0 0.0
      %2558 = vmatprep.subr.mxu0 0.0
      %2559 = vmatpush1.msra.mxu0 0.0
      %2560 = vmatprep.subr.mxu0 0.0
      %2561 = vmatpush1.msra.mxu0 0.0
      %2562 = vmatprep.subr.mxu0 0.0
      %2563 = vmatpush1.msra.mxu0 0.0
      %2564 = vmatprep.subr.mxu0 0.0
      %2565 = vmatpush1.msra.mxu0 0.0
      %2566 = vmatprep.subr.mxu0 0.0
      %2567 = vmatpush1.msra.mxu0 0.0
      %2568 = vmatprep.subr.mxu0 0.0
      %2569 = vmatpush1.msra.mxu0 0.0
      %2570 = vmatprep.subr.mxu0 0.0
      %2571 = vmatpush1.msra.mxu0 0.0
      %2572 = vmatprep.subr.mxu0 0.0
      %2573 = vmatpush1.msra.mxu0 0.0
      %2574 = vmatprep.subr.mxu0 0.0
      %2575 = vmatpush1.msra.mxu0 0.0
      %2576 = vmatprep.subr.mxu0 0.0
      %2577 = vmatpush1.msra.mxu0 0.0
      %2578 = vmatprep.subr.mxu0 0.0
      %2579 = vmatpush1.msra.mxu0 0.0
      %2580 = vmatprep.subr.mxu0 0.0
      %2581 = vmatpush1.msra.mxu0 0.0
      %2582 = vmatprep.subr.mxu0 0.0
      %2583 = vmatpush1.msra.mxu0 0.0
      %2584 = vmatprep.subr.mxu0 0.0
      %2585 = vmatpush1.msra.mxu0 0.0
      %2586 = vmatprep.subr.mxu0 0.0
      %2587 = vmatpush1.msra.mxu0 0.0
      %2588 = vmatprep.subr.mxu0 0.0
      %2589 = vmatpush1.msra.mxu0 0.0
      %2590 = vmatprep.subr.mxu0 0.0
      %2591 = vmatpush1.msra.mxu0 0.0
      %2592 = vmatprep.subr.mxu0 0.0
      %2593 = vmatpush1.msra.mxu0 0.0
      %2594 = vmatprep.subr.mxu0 0.0
      %2595 = vmatpush1.msra.mxu0 0.0
      %2596 = vmatprep.subr.mxu0 0.0
      %2597 = vmatpush1.msra.mxu0 0.0
      %2598 = vmatprep.subr.mxu0 0.0
      %2599 = vmatpush1.msra.mxu0 0.0
      %2600 = vmatprep.mubr.f32.mxu0 0.0
      %2601 = vmatmul.mubr.f32.gmra.mrb[0].mxu0 %v1057
      %v2602 = vpop.f32.mrb[0].mxu0
      %v2603 = vadd.f32 0.0, %v2602
      %v2604 = vpop.f32.mrb[0].mxu0
      %2605 = vmatprep.mubr.f32.mxu0 0.0
      %2606 = vmatmul.mubr.f32.gmra.mrb[0].mxu0 %v1060
      %v2607 = vpop.f32.mrb[0].mxu0
      %v2608 = vadd.f32 0.0, %v2607
      %v2609 = vpop.f32.mrb[0].mxu0
      %2610 = vmatprep.mubr.f32.mxu0 0.0
      %2611 = vmatmul.mubr.f32.gmra.mrb[0].mxu0 %v1063
      %v2612 = vpop.f32.mrb[0].mxu0
      %v2613 = vadd.f32 0.0, %v2612
      %v2614 = vpop.f32.mrb[0].mxu0
      %2615 = vmatprep.mubr.f32.mxu0 0.0
      %2616 = vmatmul.mubr.f32.gmra.mrb[0].mxu0 %v1066
      %v2617 = vpop.f32.mrb[0].mxu0
      %v2618 = vadd.f32 0.0, %v2617
      %v2619 = vpop.f32.mrb[0].mxu0
      %2620 = vmatprep.mubr.f32.mxu0 0.0
      %2621 = vmatmul.mubr.f32.gmra.mrb[0].mxu0 %v1069
      %v2622 = vpop.f32.mrb[0].mxu0
      %v2623 = vadd.f32 0.0, %v2622
      %v2624 = vpop.f32.mrb[0].mxu0
      %2625 = vmatprep.mubr.f32.mxu0 0.0
      %2626 = vmatmul.mubr.f32.gmra.mrb[0].mxu0 %v1072
      %v2627 = vpop.f32.mrb[0].mxu0
      %v2628 = vadd.f32 0.0, %v2627
      %v2629 = vpop.f32.mrb[0].mxu0
      %2630 = vmatprep.mubr.f32.mxu0 0.0
      %2631 = vmatmul.mubr.f32.gmra.mrb[0].mxu0 %v1075
      %v2632 = vpop.f32.mrb[0].mxu0
      %v2633 = vadd.f32 0.0, %v2632
      %v2634 = vpop.f32.mrb[0].mxu0
      %2635 = vmatprep.mubr.f32.mxu0 0.0
      %2636 = vmatmul.mubr.f32.gmra.mrb[0].mxu0 %v1078
      %v2637 = vpop.f32.mrb[0].mxu0
      %v2638 = vadd.f32 0.0, %v2637
      %v2639 = vpop.f32.mrb[0].mxu0
      %2640 = vmatprep.mubr.f32.mxu0 0.0
      %2641 = vmatmul.mubr.f32.gmra.mrb[0].mxu0 %v1081
      %v2642 = vpop.f32.mrb[0].mxu0
      %v2643 = vadd.f32 0.0, %v2642
      %v2644 = vpop.f32.mrb[0].mxu0
      %2645 = vmatprep.mubr.f32.mxu0 0.0
      %2646 = vmatmul.mubr.f32.gmra.mrb[0].mxu0 %v1084
      %v2647 = vpop.f32.mrb[0].mxu0
      %v2648 = vadd.f32 0.0, %v2647
      %v2649 = vpop.f32.mrb[0].mxu0
      %2650 = vmatprep.mubr.f32.mxu0 0.0
      %2651 = vmatmul.mubr.f32.gmra.mrb[0].mxu0 %v1087
      %v2652 = vpop.f32.mrb[0].mxu0
      %v2653 = vadd.f32 0.0, %v2652
      %v2654 = vpop.f32.mrb[0].mxu0
      %2655 = vmatprep.mubr.f32.mxu0 0.0
      %2656 = vmatmul.mubr.f32.gmra.mrb[0].mxu0 %v1090
      %v2657 = vpop.f32.mrb[0].mxu0
      %v2658 = vadd.f32 0.0, %v2657
      %v2659 = vpop.f32.mrb[0].mxu0
      %2660 = vmatprep.mubr.f32.mxu0 0.0
      %2661 = vmatmul.mubr.f32.gmra.mrb[0].mxu0 %v1093
      %v2662 = vpop.f32.mrb[0].mxu0
      %v2663 = vadd.f32 0.0, %v2662
      %v2664 = vpop.f32.mrb[0].mxu0
      %2665 = vmatprep.mubr.f32.mxu0 0.0
      %2666 = vmatmul.mubr.f32.gmra.mrb[0].mxu0 %v1096
      %v2667 = vpop.f32.mrb[0].mxu0
      %v2668 = vadd.f32 0.0, %v2667
      %v2669 = vpop.f32.mrb[0].mxu0
      %2670 = vmatprep.mubr.f32.mxu0 0.0
      %2671 = vmatmul.mubr.f32.gmra.mrb[0].mxu0 %v1099
      %v2672 = vpop.f32.mrb[0].mxu0
      %v2673 = vadd.f32 0.0, %v2672
      %v2674 = vpop.f32.mrb[0].mxu0
      %2675 = vmatprep.mubr.f32.mxu0 0.0
      %2676 = vmatmul.mubr.f32.gmra.mrb[0].mxu0 %v1102
      %v2677 = vpop.f32.mrb[0].mxu0
      %v2678 = vadd.f32 0.0, %v2677
      %v2679 = vpop.f32.mrb[0].mxu0
      %2680 = vmatprep.mubr.f32.mxu0 0.0
      %2681 = vmatmul.mubr.f32.gmra.mrb[0].mxu0 %v2201
      %v2682 = vpop.f32.mrb[0].mxu0
      %v2683 = vadd.f32 0.0, %v2682
      %v2684 = vpop.f32.mrb[0].mxu0
      %2685 = vmatprep.mubr.f32.mxu0 0.0
      %2686 = vmatmul.mubr.f32.gmra.mrb[0].mxu0 %v2204
      %v2687 = vpop.f32.mrb[0].mxu0
      %v2688 = vadd.f32 0.0, %v2687
      %v2689 = vpop.f32.mrb[0].mxu0
      %2690 = vmatprep.mubr.f32.mxu0 0.0
      %2691 = vmatmul.mubr.f32.gmra.mrb[0].mxu0 %v2207
      %v2692 = vpop.f32.mrb[0].mxu0
      %v2693 = vadd.f32 0.0, %v2692
      %v2694 = vpop.f32.mrb[0].mxu0
      %2695 = vmatprep.mubr.f32.mxu0 0.0
      %2696 = vmatmul.mubr.f32.gmra.mrb[0].mxu0 %v2210
      %v2697 = vpop.f32.mrb[0].mxu0
      %v2698 = vadd.f32 0.0, %v2697
      %v2699 = vpop.f32.mrb[0].mxu0
      %2700 = vmatprep.mubr.f32.mxu0 0.0
      %2701 = vmatmul.mubr.f32.gmra.mrb[0].mxu0 %v2213
      %v2702 = vpop.f32.mrb[0].mxu0
      %v2703 = vadd.f32 0.0, %v2702
      %v2704 = vpop.f32.mrb[0].mxu0
      %2705 = vmatprep.mubr.f32.mxu0 0.0
      %2706 = vmatmul.mubr.f32.gmra.mrb[0].mxu0 %v2216
      %v2707 = vpop.f32.mrb[0].mxu0
      %v2708 = vadd.f32 0.0, %v2707
      %v2709 = vpop.f32.mrb[0].mxu0
      %2710 = vmatprep.mubr.f32.mxu0 0.0
      %2711 = vmatmul.mubr.f32.gmra.mrb[0].mxu0 %v2219
      %v2712 = vpop.f32.mrb[0].mxu0
      %v2713 = vadd.f32 0.0, %v2712
      %v2714 = vpop.f32.mrb[0].mxu0
      %2715 = vmatprep.mubr.f32.mxu0 0.0
      %2716 = vmatmul.mubr.f32.gmra.mrb[0].mxu0 %v2222
      %v2717 = vpop.f32.mrb[0].mxu0
      %v2718 = vadd.f32 0.0, %v2717
      %v2719 = vpop.f32.mrb[0].mxu0
      %2720 = vmatprep.mubr.f32.mxu0 0.0
      %2721 = vmatmul.mubr.f32.gmra.mrb[0].mxu0 %v2225
      %v2722 = vpop.f32.mrb[0].mxu0
      %v2723 = vadd.f32 0.0, %v2722
      %v2724 = vpop.f32.mrb[0].mxu0
      %2725 = vmatprep.mubr.f32.mxu0 0.0
      %2726 = vmatmul.mubr.f32.gmra.mrb[0].mxu0 %v2228
      %v2727 = vpop.f32.mrb[0].mxu0
      %v2728 = vadd.f32 0.0, %v2727
      %v2729 = vpop.f32.mrb[0].mxu0
      %2730 = vmatprep.mubr.f32.mxu0 0.0
      %2731 = vmatmul.mubr.f32.gmra.mrb[0].mxu0 %v2231
      %v2732 = vpop.f32.mrb[0].mxu0
      %v2733 = vadd.f32 0.0, %v2732
      %v2734 = vpop.f32.mrb[0].mxu0
      %2735 = vmatprep.mubr.f32.mxu0 0.0
      %2736 = vmatmul.mubr.f32.gmra.mrb[0].mxu0 %v2234
      %v2737 = vpop.f32.mrb[0].mxu0
      %v2738 = vadd.f32 0.0, %v2737
      %v2739 = vpop.f32.mrb[0].mxu0
      %2740 = vmatprep.mubr.f32.mxu0 0.0
      %2741 = vmatmul.mubr.f32.gmra.mrb[0].mxu0 %v2237
      %v2742 = vpop.f32.mrb[0].mxu0
      %v2743 = vadd.f32 0.0, %v2742
      %v2744 = vpop.f32.mrb[0].mxu0
      %2745 = vmatprep.mubr.f32.mxu0 0.0
      %2746 = vmatmul.mubr.f32.gmra.mrb[0].mxu0 %v2240
      %v2747 = vpop.f32.mrb[0].mxu0
      %v2748 = vadd.f32 0.0, %v2747
      %v2749 = vpop.f32.mrb[0].mxu0
      %2750 = vmatprep.mubr.f32.mxu0 0.0
      %2751 = vmatmul.mubr.f32.gmra.mrb[0].mxu0 %v2243
      %v2752 = vpop.f32.mrb[0].mxu0
      %v2753 = vadd.f32 0.0, %v2752
      %v2754 = vpop.f32.mrb[0].mxu0
      %2755 = vmatprep.mubr.f32.mxu0 0.0
      %2756 = vmatmul.mubr.f32.gmra.mrb[0].mxu0 %v2246
      %v2757 = vpop.f32.mrb[0].mxu0
      %v2758 = vadd.f32 0.0, %v2757
      %v2759 = vpop.f32.mrb[0].mxu0
      %2760 = vmatprep.mubr.f32.mxu0 0.0
      %2761 = vmatmul.mubr.f32.gmra.mrb[0].mxu0 %v2249
      %v2762 = vpop.f32.mrb[0].mxu0
      %v2763 = vadd.f32 0.0, %v2762
      %v2764 = vpop.f32.mrb[0].mxu0
      %2765 = vmatprep.mubr.f32.mxu0 0.0
      %2766 = vmatmul.mubr.f32.gmra.mrb[0].mxu0 %v2252
      %v2767 = vpop.f32.mrb[0].mxu0
      %v2768 = vadd.f32 0.0, %v2767
      %v2769 = vpop.f32.mrb[0].mxu0
      %2770 = vmatprep.mubr.f32.mxu0 0.0
      %2771 = vmatmul.mubr.f32.gmra.mrb[0].mxu0 %v2255
      %v2772 = vpop.f32.mrb[0].mxu0
      %v2773 = vadd.f32 0.0, %v2772
      %v2774 = vpop.f32.mrb[0].mxu0
      %2775 = vmatprep.mubr.f32.mxu0 0.0
      %2776 = vmatmul.mubr.f32.gmra.mrb[0].mxu0 %v2258
      %v2777 = vpop.f32.mrb[0].mxu0
      %v2778 = vadd.f32 0.0, %v2777
      %v2779 = vpop.f32.mrb[0].mxu0
      %2780 = vmatprep.mubr.f32.mxu0 0.0
      %2781 = vmatmul.mubr.f32.gmra.mrb[0].mxu0 %v2261
      %v2782 = vpop.f32.mrb[0].mxu0
      %v2783 = vadd.f32 0.0, %v2782
      %v2784 = vpop.f32.mrb[0].mxu0
      %2785 = vmatprep.mubr.f32.mxu0 0.0
      %2786 = vmatmul.mubr.f32.gmra.mrb[0].mxu0 %v2264
      %v2787 = vpop.f32.mrb[0].mxu0
      %v2788 = vadd.f32 0.0, %v2787
      %v2789 = vpop.f32.mrb[0].mxu0
      %2790 = vmatprep.mubr.f32.mxu0 0.0
      %2791 = vmatmul.mubr.f32.gmra.mrb[0].mxu0 %v2267
      %v2792 = vpop.f32.mrb[0].mxu0
      %v2793 = vadd.f32 0.0, %v2792
      %v2794 = vpop.f32.mrb[0].mxu0
      %2795 = vmatprep.mubr.f32.mxu0 0.0
      %2796 = vmatmul.mubr.f32.gmra.mrb[0].mxu0 %v2270
      %v2797 = vpop.f32.mrb[0].mxu0
      %v2798 = vadd.f32 0.0, %v2797
      %v2799 = vpop.f32.mrb[0].mxu0
      %2800 = vmatprep.mubr.f32.mxu0 0.0
      %2801 = vmatmul.mubr.f32.gmra.mrb[0].mxu0 %v2273
      %v2802 = vpop.f32.mrb[0].mxu0
      %v2803 = vadd.f32 0.0, %v2802
      %v2804 = vpop.f32.mrb[0].mxu0
      %2805 = vmatprep.mubr.f32.mxu0 0.0
      %2806 = vmatmul.mubr.f32.gmra.mrb[0].mxu0 %v2276
      %v2807 = vpop.f32.mrb[0].mxu0
      %v2808 = vadd.f32 0.0, %v2807
      %v2809 = vpop.f32.mrb[0].mxu0
      %2810 = vmatprep.mubr.f32.mxu0 0.0
      %2811 = vmatmul.mubr.f32.gmra.mrb[0].mxu0 %v2279
      %v2812 = vpop.f32.mrb[0].mxu0
      %v2813 = vadd.f32 0.0, %v2812
      %v2814 = vpop.f32.mrb[0].mxu0
      %2815 = vmatprep.mubr.f32.mxu0 0.0
      %2816 = vmatmul.mubr.f32.gmra.mrb[0].mxu0 %v2282
      %v2817 = vpop.f32.mrb[0].mxu0
      %v2818 = vadd.f32 0.0, %v2817
      %v2819 = vpop.f32.mrb[0].mxu0
      %2820 = vmatprep.mubr.f32.mxu0 0.0
      %2821 = vmatmul.mubr.f32.gmra.mrb[0].mxu0 %v2285
      %v2822 = vpop.f32.mrb[0].mxu0
      %v2823 = vadd.f32 0.0, %v2822
      %v2824 = vpop.f32.mrb[0].mxu0
      %2825 = vmatprep.mubr.f32.mxu0 0.0
      %2826 = vmatmul.mubr.f32.gmra.mrb[0].mxu0 %v2288
      %v2827 = vpop.f32.mrb[0].mxu0
      %v2828 = vadd.f32 0.0, %v2827
      %v2829 = vpop.f32.mrb[0].mxu0
      %2830 = vmatprep.mubr.f32.mxu0 0.0
      %2831 = vmatmul.mubr.f32.gmra.mrb[0].mxu0 %v2291
      %v2832 = vpop.f32.mrb[0].mxu0
      %v2833 = vadd.f32 0.0, %v2832
      %v2834 = vpop.f32.mrb[0].mxu0
      %2835 = vmatprep.mubr.f32.mxu0 0.0
      %2836 = vmatmul.mubr.f32.gmra.mrb[0].mxu0 %v2294
      %v2837 = vpop.f32.mrb[0].mxu0
      %v2838 = vadd.f32 0.0, %v2837
      %v2839 = vpop.f32.mrb[0].mxu0
      %2840 = vmatprep.mubr.f32.mxu0 0.0
      %2841 = vmatmul.mubr.f32.gmra.mrb[0].mxu0 %v2297
      %v2842 = vpop.f32.mrb[0].mxu0
      %v2843 = vadd.f32 0.0, %v2842
      %v2844 = vpop.f32.mrb[0].mxu0
      %2845 = vmatprep.mubr.f32.mxu0 0.0
      %2846 = vmatmul.mubr.f32.gmra.mrb[0].mxu0 %v2300
      %v2847 = vpop.f32.mrb[0].mxu0
      %v2848 = vadd.f32 0.0, %v2847
      %v2849 = vpop.f32.mrb[0].mxu0
      %2850 = vmatprep.mubr.f32.mxu0 0.0
      %2851 = vmatmul.mubr.f32.gmra.mrb[0].mxu0 %v2303
      %v2852 = vpop.f32.mrb[0].mxu0
      %v2853 = vadd.f32 0.0, %v2852
      %v2854 = vpop.f32.mrb[0].mxu0
      %2855 = vmatprep.mubr.f32.mxu0 0.0
      %2856 = vmatmul.mubr.f32.gmra.mrb[0].mxu0 %v2306
      %v2857 = vpop.f32.mrb[0].mxu0
      %v2858 = vadd.f32 0.0, %v2857
      %v2859 = vpop.f32.mrb[0].mxu0
      %2860 = vmatprep.mubr.f32.mxu0 0.0
      %2861 = vmatmul.mubr.f32.gmra.mrb[0].mxu0 %v2309
      %v2862 = vpop.f32.mrb[0].mxu0
      %v2863 = vadd.f32 0.0, %v2862
      %v2864 = vpop.f32.mrb[0].mxu0
      %2865 = vmatprep.mubr.f32.mxu0 0.0
      %2866 = vmatmul.mubr.f32.gmra.mrb[0].mxu0 %v2312
      %v2867 = vpop.f32.mrb[0].mxu0
      %v2868 = vadd.f32 0.0, %v2867
      %v2869 = vpop.f32.mrb[0].mxu0
      %2870 = vmatprep.mubr.f32.mxu0 0.0
      %2871 = vmatmul.mubr.f32.gmra.mrb[0].mxu0 %v2315
      %v2872 = vpop.f32.mrb[0].mxu0
      %v2873 = vadd.f32 0.0, %v2872
      %v2874 = vpop.f32.mrb[0].mxu0
      %2875 = vmatprep.mubr.f32.mxu0 0.0
      %2876 = vmatmul.mubr.f32.gmra.mrb[0].mxu0 %v2318
      %v2877 = vpop.f32.mrb[0].mxu0
      %v2878 = vadd.f32 0.0, %v2877
      %v2879 = vpop.f32.mrb[0].mxu0
      %2880 = vmatprep.mubr.f32.mxu0 0.0
      %2881 = vmatmul.mubr.f32.gmra.mrb[0].mxu0 %v2321
      %v2882 = vpop.f32.mrb[0].mxu0
      %v2883 = vadd.f32 0.0, %v2882
      %v2884 = vpop.f32.mrb[0].mxu0
      %2885 = vmatprep.mubr.f32.mxu0 0.0
      %2886 = vmatmul.mubr.f32.gmra.mrb[0].mxu0 %v2324
      %v2887 = vpop.f32.mrb[0].mxu0
      %v2888 = vadd.f32 0.0, %v2887
      %v2889 = vpop.f32.mrb[0].mxu0
      %2890 = vmatprep.mubr.f32.mxu0 0.0
      %2891 = vmatmul.mubr.f32.gmra.mrb[0].mxu0 %v2327
      %v2892 = vpop.f32.mrb[0].mxu0
      %v2893 = vadd.f32 0.0, %v2892
      %v2894 = vpop.f32.mrb[0].mxu0
      %2895 = vmatprep.mubr.f32.mxu0 0.0
      %2896 = vmatmul.mubr.f32.gmra.mrb[0].mxu0 %v2330
      %v2897 = vpop.f32.mrb[0].mxu0
      %v2898 = vadd.f32 0.0, %v2897
      %v2899 = vpop.f32.mrb[0].mxu0
      %2900 = vmatprep.mubr.f32.mxu0 0.0
      %2901 = vmatmul.mubr.f32.gmra.mrb[0].mxu0 %v2333
      %v2902 = vpop.f32.mrb[0].mxu0
      %v2903 = vadd.f32 0.0, %v2902
      %v2904 = vpop.f32.mrb[0].mxu0
      %2905 = vmatprep.mubr.f32.mxu0 0.0
      %2906 = vmatmul.mubr.f32.gmra.mrb[0].mxu0 %v2336
      %v2907 = vpop.f32.mrb[0].mxu0
      %v2908 = vadd.f32 0.0, %v2907
      %v2909 = vpop.f32.mrb[0].mxu0
      %2910 = vmatprep.mubr.f32.mxu0 0.0
      %2911 = vmatmul.mubr.f32.gmra.mrb[0].mxu0 %v2339
      %v2912 = vpop.f32.mrb[0].mxu0
      %v2913 = vadd.f32 0.0, %v2912
      %v2914 = vpop.f32.mrb[0].mxu0
      %2915 = vmatprep.mubr.f32.mxu0 0.0
      %2916 = vmatmul.mubr.f32.gmra.mrb[0].mxu0 %v2342
      %v2917 = vpop.f32.mrb[0].mxu0
      %v2918 = vadd.f32 0.0, %v2917
      %v2919 = vpop.f32.mrb[0].mxu0
      %2920 = vmatprep.mubr.f32.mxu0 0.0
      %2921 = vmatmul.mubr.f32.gmra.mrb[0].mxu0 %v2345
      %v2922 = vpop.f32.mrb[0].mxu0
      %v2923 = vadd.f32 0.0, %v2922
      %v2924 = vpop.f32.mrb[0].mxu0
      %2925 = vmatprep.mubr.f32.mxu0 0.0
      %2926 = vmatmul.mubr.f32.gmra.mrb[0].mxu0 %v2348
      %v2927 = vpop.f32.mrb[0].mxu0
      %v2928 = vadd.f32 0.0, %v2927
      %v2929 = vpop.f32.mrb[0].mxu0
      %2930 = vmatprep.mubr.f32.mxu0 0.0
      %2931 = vmatmul.mubr.f32.gmra.mrb[0].mxu0 %v2351
      %v2932 = vpop.f32.mrb[0].mxu0
      %v2933 = vadd.f32 0.0, %v2932
      %v2934 = vpop.f32.mrb[0].mxu0
      %2935 = vmatprep.mubr.f32.mxu0 0.0
      %2936 = vmatmul.mubr.f32.gmra.mrb[0].mxu0 %v2354
      %v2937 = vpop.f32.mrb[0].mxu0
      %v2938 = vadd.f32 0.0, %v2937
      %v2939 = vpop.f32.mrb[0].mxu0
      %2940 = vmatprep.mubr.f32.mxu0 0.0
      %2941 = vmatmul.mubr.f32.gmra.mrb[0].mxu0 %v2357
      %v2942 = vpop.f32.mrb[0].mxu0
      %v2943 = vadd.f32 0.0, %v2942
      %v2944 = vpop.f32.mrb[0].mxu0
      %2945 = vmatprep.mubr.f32.mxu0 0.0
      %2946 = vmatmul.mubr.f32.gmra.mrb[0].mxu0 %v2360
      %v2947 = vpop.f32.mrb[0].mxu0
      %v2948 = vadd.f32 0.0, %v2947
      %v2949 = vpop.f32.mrb[0].mxu0
      %2950 = vmatprep.mubr.f32.mxu0 0.0
      %2951 = vmatmul.mubr.f32.gmra.mrb[0].mxu0 %v2363
      %v2952 = vpop.f32.mrb[0].mxu0
      %v2953 = vadd.f32 0.0, %v2952
      %v2954 = vpop.f32.mrb[0].mxu0
      %2955 = vmatprep.mubr.f32.mxu0 0.0
      %2956 = vmatmul.mubr.f32.gmra.mrb[0].mxu0 %v2366
      %v2957 = vpop.f32.mrb[0].mxu0
      %v2958 = vadd.f32 0.0, %v2957
      %v2959 = vpop.f32.mrb[0].mxu0
      %2960 = vmatprep.mubr.f32.mxu0 0.0
      %2961 = vmatmul.mubr.f32.gmra.mrb[0].mxu0 %v2369
      %v2962 = vpop.f32.mrb[0].mxu0
      %v2963 = vadd.f32 0.0, %v2962
      %v2964 = vpop.f32.mrb[0].mxu0
      %2965 = vmatprep.mubr.f32.mxu0 0.0
      %2966 = vmatmul.mubr.f32.gmra.mrb[0].mxu0 %v2372
      %v2967 = vpop.f32.mrb[0].mxu0
      %v2968 = vadd.f32 0.0, %v2967
      %v2969 = vpop.f32.mrb[0].mxu0
      %2970 = vmatprep.mubr.f32.mxu0 0.0
      %2971 = vmatmul.mubr.f32.gmra.mrb[0].mxu0 %v2375
      %v2972 = vpop.f32.mrb[0].mxu0
      %v2973 = vadd.f32 0.0, %v2972
      %v2974 = vpop.f32.mrb[0].mxu0
      %2975 = vmatprep.mubr.f32.mxu0 0.0
      %2976 = vmatmul.mubr.f32.gmra.mrb[0].mxu0 %v2378
      %v2977 = vpop.f32.mrb[0].mxu0
      %v2978 = vadd.f32 0.0, %v2977
      %v2979 = vpop.f32.mrb[0].mxu0
      %2980 = vmatprep.mubr.f32.mxu0 0.0
      %2981 = vmatmul.mubr.f32.gmra.mrb[0].mxu0 %v2381
      %v2982 = vpop.f32.mrb[0].mxu0
      %v2983 = vadd.f32 0.0, %v2982
      %v2984 = vpop.f32.mrb[0].mxu0
      %2985 = vmatprep.mubr.f32.mxu0 0.0
      %2986 = vmatmul.mubr.f32.gmra.mrb[0].mxu0 %v2384
      %v2987 = vpop.f32.mrb[0].mxu0
      %v2988 = vadd.f32 0.0, %v2987
      %v2989 = vpop.f32.mrb[0].mxu0
      %2990 = vmatprep.mubr.f32.mxu0 0.0
      %2991 = vmatmul.mubr.f32.gmra.mrb[0].mxu0 %v2387
      %v2992 = vpop.f32.mrb[0].mxu0
      %v2993 = vadd.f32 0.0, %v2992
      %v2994 = vpop.f32.mrb[0].mxu0
      %2995 = vmatprep.mubr.f32.mxu0 0.0
      %2996 = vmatmul.mubr.f32.gmra.mrb[0].mxu0 %v2390
      %v2997 = vpop.f32.mrb[0].mxu0
      %v2998 = vadd.f32 0.0, %v2997
      %v2999 = vpop.f32.mrb[0].mxu0
      %3000 = vmatprep.mubr.f32.mxu0 0.0
      %3001 = vmatmul.mubr.f32.gmra.mrb[0].mxu0 %v2393
      %v3002 = vpop.f32.mrb[0].mxu0
      %v3003 = vadd.f32 0.0, %v3002
      %v3004 = vpop.f32.mrb[0].mxu0
      %3005 = vmatprep.mubr.f32.mxu0 0.0
      %3006 = vmatmul.mubr.f32.gmra.mrb[0].mxu0 %v2396
      %v3007 = vpop.f32.mrb[0].mxu0
      %v3008 = vadd.f32 0.0, %v3007
      %v3009 = vpop.f32.mrb[0].mxu0
      %3010 = vmatprep.mubr.f32.mxu0 0.0
      %3011 = vmatmul.mubr.f32.gmra.mrb[0].mxu0 %v2399
      %v3012 = vpop.f32.mrb[0].mxu0
      %v3013 = vadd.f32 0.0, %v3012
      %v3014 = vpop.f32.mrb[0].mxu0
      %3015 = vmatprep.mubr.f32.mxu0 0.0
      %3016 = vmatmul.mubr.f32.gmra.mrb[0].mxu0 %v2402
      %v3017 = vpop.f32.mrb[0].mxu0
      %v3018 = vadd.f32 0.0, %v3017
      %v3019 = vpop.f32.mrb[0].mxu0
      %3020 = vmatprep.mubr.f32.mxu0 0.0
      %3021 = vmatmul.mubr.f32.gmra.mrb[0].mxu0 %v2405
      %v3022 = vpop.f32.mrb[0].mxu0
      %v3023 = vadd.f32 0.0, %v3022
      %v3024 = vpop.f32.mrb[0].mxu0
      %3025 = vmatprep.mubr.f32.mxu0 0.0
      %3026 = vmatmul.mubr.f32.gmra.mrb[0].mxu0 %v2408
      %v3027 = vpop.f32.mrb[0].mxu0
      %v3028 = vadd.f32 0.0, %v3027
      %v3029 = vpop.f32.mrb[0].mxu0
      %3030 = vmatprep.mubr.f32.mxu0 0.0
      %3031 = vmatmul.mubr.f32.gmra.mrb[0].mxu0 %v2411
      %v3032 = vpop.f32.mrb[0].mxu0
      %v3033 = vadd.f32 0.0, %v3032
      %v3034 = vpop.f32.mrb[0].mxu0
      %3035 = vmatprep.mubr.f32.mxu0 0.0
      %3036 = vmatmul.mubr.f32.gmra.mrb[0].mxu0 %v2414
      %v3037 = vpop.f32.mrb[0].mxu0
      %v3038 = vadd.f32 0.0, %v3037
      %v3039 = vpop.f32.mrb[0].mxu0
      %3040 = vmatprep.mubr.f32.mxu0 0.0
      %3041 = vmatmul.mubr.f32.gmra.mrb[0].mxu0 %v2417
      %v3042 = vpop.f32.mrb[0].mxu0
      %v3043 = vadd.f32 0.0, %v3042
      %v3044 = vpop.f32.mrb[0].mxu0
      %3045 = vmatprep.mubr.f32.mxu0 0.0
      %3046 = vmatmul.mubr.f32.gmra.mrb[0].mxu0 %v2420
      %v3047 = vpop.f32.mrb[0].mxu0
      %v3048 = vadd.f32 0.0, %v3047
      %v3049 = vpop.f32.mrb[0].mxu0
      %3050 = vmatprep.mubr.f32.mxu0 0.0
      %3051 = vmatmul.mubr.f32.gmra.mrb[0].mxu0 %v2423
      %v3052 = vpop.f32.mrb[0].mxu0
      %v3053 = vadd.f32 0.0, %v3052
      %v3054 = vpop.f32.mrb[0].mxu0
      %3055 = vmatprep.mubr.f32.mxu0 0.0
      %3056 = vmatmul.mubr.f32.gmra.mrb[0].mxu0 %v2426
      %v3057 = vpop.f32.mrb[0].mxu0
      %v3058 = vadd.f32 0.0, %v3057
      %v3059 = vpop.f32.mrb[0].mxu0
      %3060 = vmatprep.mubr.f32.mxu0 0.0
      %3061 = vmatmul.mubr.f32.gmra.mrb[0].mxu0 %v2429
      %v3062 = vpop.f32.mrb[0].mxu0
      %v3063 = vadd.f32 0.0, %v3062
      %v3064 = vpop.f32.mrb[0].mxu0
      %3065 = vmatprep.mubr.f32.mxu0 0.0
      %3066 = vmatmul.mubr.f32.gmra.mrb[0].mxu0 %v2432
      %v3067 = vpop.f32.mrb[0].mxu0
      %v3068 = vadd.f32 0.0, %v3067
      %v3069 = vpop.f32.mrb[0].mxu0
      %3070 = vmatprep.mubr.f32.mxu0 0.0
      %3071 = vmatmul.mubr.f32.gmra.mrb[0].mxu0 %v2435
      %v3072 = vpop.f32.mrb[0].mxu0
      %v3073 = vadd.f32 0.0, %v3072
      %v3074 = vpop.f32.mrb[0].mxu0
      %3075 = vmatprep.mubr.f32.mxu0 0.0
      %3076 = vmatmul.mubr.f32.gmra.mrb[0].mxu0 %v2438
      %v3077 = vpop.f32.mrb[0].mxu0
      %v3078 = vadd.f32 0.0, %v3077
      %v3079 = vpop.f32.mrb[0].mxu0
      %3080 = vmatprep.mubr.f32.mxu0 0.0
      %3081 = vmatmul.mubr.f32.gmra.mrb[0].mxu0 %v2441
      %v3082 = vpop.f32.mrb[0].mxu0
      %v3083 = vadd.f32 0.0, %v3082
      %v3084 = vpop.f32.mrb[0].mxu0
      %3085 = vmatprep.mubr.f32.mxu0 0.0
      %3086 = vmatmul.mubr.f32.gmra.mrb[0].mxu0 %v2444
      %v3087 = vpop.f32.mrb[0].mxu0
      %v3088 = vadd.f32 0.0, %v3087
      %v3089 = vpop.f32.mrb[0].mxu0
      %3090 = vmatprep.mubr.f32.mxu0 0.0
      %3091 = vmatmul.mubr.f32.gmra.mrb[0].mxu0 %v2447
      %v3092 = vpop.f32.mrb[0].mxu0
      %v3093 = vadd.f32 0.0, %v3092
      %v3094 = vpop.f32.mrb[0].mxu0
      %3095 = vmatprep.mubr.f32.mxu0 0.0
      %3096 = vmatmul.mubr.f32.gmra.mrb[0].mxu0 %v2450
      %v3097 = vpop.f32.mrb[0].mxu0
      %v3098 = vadd.f32 0.0, %v3097
      %v3099 = vpop.f32.mrb[0].mxu0
      %3100 = vmatprep.mubr.f32.mxu0 0.0
      %3101 = vmatmul.mubr.f32.gmra.mrb[0].mxu0 %v2453
      %v3102 = vpop.f32.mrb[0].mxu0
      %v3103 = vadd.f32 0.0, %v3102
      %v3104 = vpop.f32.mrb[0].mxu0
      %3105 = vmatprep.mubr.f32.mxu0 0.0
      %3106 = vmatmul.mubr.f32.gmra.mrb[0].mxu0 %v2456
      %v3107 = vpop.f32.mrb[0].mxu0
      %v3108 = vadd.f32 0.0, %v3107
      %v3109 = vpop.f32.mrb[0].mxu0
      %3110 = vmatprep.mubr.f32.mxu0 0.0
      %3111 = vmatmul.mubr.f32.gmra.mrb[0].mxu0 %v2459
      %v3112 = vpop.f32.mrb[0].mxu0
      %v3113 = vadd.f32 0.0, %v3112
      %v3114 = vpop.f32.mrb[0].mxu0
      %3115 = vmatprep.mubr.f32.mxu0 0.0
      %3116 = vmatmul.mubr.f32.gmra.mrb[0].mxu0 %v2462
      %v3117 = vpop.f32.mrb[0].mxu0
      %v3118 = vadd.f32 0.0, %v3117
      %v3119 = vpop.f32.mrb[0].mxu0
      %3120 = vmatprep.mubr.f32.mxu0 0.0
      %3121 = vmatmul.mubr.f32.gmra.mrb[0].mxu0 %v2465
      %v3122 = vpop.f32.mrb[0].mxu0
      %v3123 = vadd.f32 0.0, %v3122
      %v3124 = vpop.f32.mrb[0].mxu0
      %3125 = vmatprep.mubr.f32.mxu0 0.0
      %3126 = vmatmul.mubr.f32.gmra.mrb[0].mxu0 %v2468
      %v3127 = vpop.f32.mrb[0].mxu0
      %v3128 = vadd.f32 0.0, %v3127
      %v3129 = vpop.f32.mrb[0].mxu0
      %3130 = vmatprep.mubr.f32.mxu0 0.0
      %3131 = vmatmul.mubr.f32.gmra.mrb[0].mxu0 %v2471
      %v3132 = vpop.f32.mrb[0].mxu0
      %v3133 = vadd.f32 0.0, %v3132
      %v3134 = vpop.f32.mrb[0].mxu0
      %3135 = vmatprep.mubr.f32.mxu0 0.0
      %3136 = vmatmul.mubr.f32.gmra.mrb[0].mxu0 %v2474
      %v3137 = vpop.f32.mrb[0].mxu0
      %v3138 = vadd.f32 0.0, %v3137
      %v3139 = vpop.f32.mrb[0].mxu0
      %3140 = vmatprep.mubr.f32.mxu0 0.0
      %3141 = vmatmul.mubr.f32.gmra.mrb[0].mxu0 %v2477
      %v3142 = vpop.f32.mrb[0].mxu0
      %v3143 = vadd.f32 0.0, %v3142
      %v3144 = vpop.f32.mrb[0].mxu0
      %3145 = vmatprep.mubr.f32.mxu0 0.0
      %3146 = vmatmul.mubr.f32.gmra.mrb[0].mxu0 %v2480
      %v3147 = vpop.f32.mrb[0].mxu0
      %v3148 = vadd.f32 0.0, %v3147
      %v3149 = vpop.f32.mrb[0].mxu0
      %3150 = vmatprep.mubr.f32.mxu0 0.0
      %3151 = vmatmul.mubr.f32.gmra.mrb[0].mxu0 %v2483
      %v3152 = vpop.f32.mrb[0].mxu0
      %v3153 = vadd.f32 0.0, %v3152
      %v3154 = vpop.f32.mrb[0].mxu0
      %3155 = vmatprep.mubr.f32.mxu0 0.0
      %3156 = vmatmul.mubr.f32.gmra.mrb[0].mxu0 %v2486
      %v3157 = vpop.f32.mrb[0].mxu0
      %v3158 = vadd.f32 0.0, %v3157
      %v3159 = vpop.f32.mrb[0].mxu0
      %3160 = vmatprep.mubr.f32.mxu0 0.0
      %3161 = vmatmul.mubr.f32.gmra.mrb[0].mxu0 %v2489
      %v3162 = vpop.f32.mrb[0].mxu0
      %v3163 = vadd.f32 0.0, %v3162
      %v3164 = vpop.f32.mrb[0].mxu0
      %3165 = vmatprep.mubr.f32.mxu0 0.0
      %3166 = vmatmul.mubr.f32.gmra.mrb[0].mxu0 %v2492
      %v3167 = vpop.f32.mrb[0].mxu0
      %v3168 = vadd.f32 0.0, %v3167
      %v3169 = vpop.f32.mrb[0].mxu0
      %3170 = vmatprep.mubr.f32.mxu0 0.0
      %3171 = vmatmul.mubr.f32.gmra.mrb[0].mxu0 %v2495
      %v3172 = vpop.f32.mrb[0].mxu0
      %v3173 = vadd.f32 0.0, %v3172
      %v3174 = vpop.f32.mrb[0].mxu0
      %3175 = vmatprep.mubr.f32.mxu0 0.0
      %3176 = vmatmul.mubr.f32.gmra.mrb[0].mxu0 %v2498
      %v3177 = vpop.f32.mrb[0].mxu0
      %v3178 = vadd.f32 0.0, %v3177
      %v3179 = vpop.f32.mrb[0].mxu0
      %3180 = vmatprep.mubr.f32.mxu0 0.0
      %3181 = vmatmul.mubr.f32.gmra.mrb[0].mxu0 %v2501
      %v3182 = vpop.f32.mrb[0].mxu0
      %v3183 = vadd.f32 0.0, %v3182
      %v3184 = vpop.f32.mrb[0].mxu0
      %3185 = vmatprep.mubr.f32.mxu0 0.0
      %3186 = vmatmul.mubr.f32.gmra.mrb[0].mxu0 %v2504
      %v3187 = vpop.f32.mrb[0].mxu0
      %v3188 = vadd.f32 0.0, %v3187
      %v3189 = vpop.f32.mrb[0].mxu0
      %3190 = vmatprep.mubr.f32.mxu0 0.0
      %3191 = vmatmul.mubr.f32.gmra.mrb[0].mxu0 %v2507
      %v3192 = vpop.f32.mrb[0].mxu0
      %v3193 = vadd.f32 0.0, %v3192
      %v3194 = vpop.f32.mrb[0].mxu0
      %3195 = vmatprep.mubr.f32.mxu0 0.0
      %3196 = vmatmul.mubr.f32.gmra.mrb[0].mxu0 %v2510
      %v3197 = vpop.f32.mrb[0].mxu0
      %v3198 = vadd.f32 0.0, %v3197
      %v3199 = vpop.f32.mrb[0].mxu0
      %3200 = vmatprep.mubr.f32.mxu0 0.0
      %3201 = vmatmul.mubr.f32.gmra.mrb[0].mxu0 %v2513
      %v3202 = vpop.f32.mrb[0].mxu0
      %v3203 = vadd.f32 0.0, %v3202
      %v3204 = vpop.f32.mrb[0].mxu0
      %3205 = vmatprep.mubr.f32.mxu0 0.0
      %3206 = vmatmul.mubr.f32.gmra.mrb[0].mxu0 %v2516
      %v3207 = vpop.f32.mrb[0].mxu0
      %v3208 = vadd.f32 0.0, %v3207
      %v3209 = vpop.f32.mrb[0].mxu0
      %3210 = vmatprep.mubr.f32.mxu0 0.0
      %3211 = vmatmul.mubr.f32.gmra.mrb[0].mxu0 %v2519
      %v3212 = vpop.f32.mrb[0].mxu0
      %v3213 = vadd.f32 0.0, %v3212
      %v3214 = vpop.f32.mrb[0].mxu0
      %3215 = vmatprep.mubr.f32.mxu0 0.0
      %3216 = vmatmul.mubr.f32.gmra.mrb[0].mxu0 %v2522
      %v3217 = vpop.f32.mrb[0].mxu0
      %v3218 = vadd.f32 0.0, %v3217
      %v3219 = vpop.f32.mrb[0].mxu0
      %3220 = vmatprep.mubr.f32.mxu0 0.0
      %3221 = vmatmul.mubr.f32.gmra.mrb[0].mxu0 %v2525
      %v3222 = vpop.f32.mrb[0].mxu0
      %v3223 = vadd.f32 0.0, %v3222
      %v3224 = vpop.f32.mrb[0].mxu0
      %3225 = vmatprep.mubr.f32.mxu0 0.0
      %3226 = vmatmul.mubr.f32.gmra.mrb[0].mxu0 %v2528
      %v3227 = vpop.f32.mrb[0].mxu0
      %v3228 = vadd.f32 0.0, %v3227
      %v3229 = vpop.f32.mrb[0].mxu0
      %3230 = vmatprep.mubr.f32.mxu0 0.0
      %3231 = vmatmul.mubr.f32.gmra.mrb[0].mxu0 %v2531
      %v3232 = vpop.f32.mrb[0].mxu0
      %v3233 = vadd.f32 0.0, %v3232
      %v3234 = vpop.f32.mrb[0].mxu0
      %3235 = vmatprep.mubr.f32.mxu0 0.0
      %3236 = vmatmul.mubr.f32.gmra.mrb[0].mxu0 %v2534
      %v3237 = vpop.f32.mrb[0].mxu0
      %v3238 = vadd.f32 0.0, %v3237
      %v3239 = vpop.f32.mrb[0].mxu0
      %3240 = vdwg.mxu0
      %v3241 = vmax.f32 %v2603, %v2643
      %v3242 = vmax.f32 %v2608, %v2648
      %v3243 = vmax.f32 %v2613, %v2653
      %v3244 = vmax.f32 %v2618, %v2658
      %v3245 = vmax.f32 %v2623, %v2663
      %v3246 = vmax.f32 %v2628, %v2668
      %v3247 = vmax.f32 %v2633, %v2673
      %v3248 = vmax.f32 %v2638, %v2678
      %v3249 = vmax.f32 %v3241, %v2683
      %v3250 = vmax.f32 %v3242, %v2688
      %v3251 = vmax.f32 %v3243, %v2693
      %v3252 = vmax.f32 %v3244, %v2698
      %v3253 = vmax.f32 %v3245, %v2703
      %v3254 = vmax.f32 %v3246, %v2708
      %v3255 = vmax.f32 %v3247, %v2713
      %v3256 = vmax.f32 %v3248, %v2718
      %v3257 = vmax.f32 %v3249, %v2723
      %v3258 = vmax.f32 %v3250, %v2728
      %v3259 = vmax.f32 %v3251, %v2733
      %v3260 = vmax.f32 %v3252, %v2738
      %v3261 = vmax.f32 %v3253, %v2743
      %v3262 = vmax.f32 %v3254, %v2748
      %v3263 = vmax.f32 %v3255, %v2753
      %v3264 = vmax.f32 %v3256, %v2758
      %v3265 = vmax.f32 %v3257, %v2763
      %v3266 = vmax.f32 %v3258, %v2768
      %v3267 = vmax.f32 %v3259, %v2773
      %v3268 = vmax.f32 %v3260, %v2778
      %v3269 = vmax.f32 %v3261, %v2783
      %v3270 = vmax.f32 %v3262, %v2788
      %v3271 = vmax.f32 %v3263, %v2793
      %v3272 = vmax.f32 %v3264, %v2798
      %v3273 = vmax.f32 %v3265, %v2803
      %v3274 = vmax.f32 %v3266, %v2808
      %v3275 = vmax.f32 %v3267, %v2813
      %v3276 = vmax.f32 %v3268, %v2818
      %v3277 = vmax.f32 %v3269, %v2823
      %v3278 = vmax.f32 %v3270, %v2828
      %v3279 = vmax.f32 %v3271, %v2833
      %v3280 = vmax.f32 %v3272, %v2838
      %v3281 = vmax.f32 %v3273, %v2843
      %v3282 = vmax.f32 %v3274, %v2848
      %v3283 = vmax.f32 %v3275, %v2853
      %v3284 = vmax.f32 %v3276, %v2858
      %v3285 = vmax.f32 %v3277, %v2863
      %v3286 = vmax.f32 %v3278, %v2868
      %v3287 = vmax.f32 %v3279, %v2873
      %v3288 = vmax.f32 %v3280, %v2878
      %v3289 = vmax.f32 %v3281, %v2883
      %v3290 = vmax.f32 %v3282, %v2888
      %v3291 = vmax.f32 %v3283, %v2893
      %v3292 = vmax.f32 %v3284, %v2898
      %v3293 = vmax.f32 %v3285, %v2903
      %v3294 = vmax.f32 %v3286, %v2908
      %v3295 = vmax.f32 %v3287, %v2913
      %v3296 = vmax.f32 %v3288, %v2918
      %v3297 = vmax.f32 %v3289, %v2923
      %v3298 = vmax.f32 %v3290, %v2928
      %v3299 = vmax.f32 %v3291, %v2933
      %v3300 = vmax.f32 %v3292, %v2938
      %v3301 = vmax.f32 %v3293, %v2943
      %v3302 = vmax.f32 %v3294, %v2948
      %v3303 = vmax.f32 %v3295, %v2953
      %v3304 = vmax.f32 %v3296, %v2958
      %v3305 = vmax.f32 %v3297, %v2963
      %v3306 = vmax.f32 %v3298, %v2968
      %v3307 = vmax.f32 %v3299, %v2973
      %v3308 = vmax.f32 %v3300, %v2978
      %v3309 = vmax.f32 %v3301, %v2983
      %v3310 = vmax.f32 %v3302, %v2988
      %v3311 = vmax.f32 %v3303, %v2993
      %v3312 = vmax.f32 %v3304, %v2998
      %v3313 = vmax.f32 %v3305, %v3003
      %v3314 = vmax.f32 %v3306, %v3008
      %v3315 = vmax.f32 %v3307, %v3013
      %v3316 = vmax.f32 %v3308, %v3018
      %v3317 = vmax.f32 %v3309, %v3023
      %v3318 = vmax.f32 %v3310, %v3028
      %v3319 = vmax.f32 %v3311, %v3033
      %v3320 = vmax.f32 %v3312, %v3038
      %v3321 = vmax.f32 %v3313, %v3043
      %v3322 = vmax.f32 %v3314, %v3048
      %v3323 = vmax.f32 %v3315, %v3053
      %v3324 = vmax.f32 %v3316, %v3058
      %v3325 = vmax.f32 %v3317, %v3063
      %v3326 = vmax.f32 %v3318, %v3068
      %v3327 = vmax.f32 %v3319, %v3073
      %v3328 = vmax.f32 %v3320, %v3078
      %v3329 = vmax.f32 %v3321, %v3083
      %v3330 = vmax.f32 %v3322, %v3088
      %v3331 = vmax.f32 %v3323, %v3093
      %v3332 = vmax.f32 %v3324, %v3098
      %v3333 = vmax.f32 %v3325, %v3103
      %v3334 = vmax.f32 %v3326, %v3108
      %v3335 = vmax.f32 %v3327, %v3113
      %v3336 = vmax.f32 %v3328, %v3118
      %v3337 = vmax.f32 %v3329, %v3123
      %v3338 = vmax.f32 %v3330, %v3128
      %v3339 = vmax.f32 %v3331, %v3133
      %v3340 = vmax.f32 %v3332, %v3138
      %v3341 = vmax.f32 %v3333, %v3143
      %v3342 = vmax.f32 %v3334, %v3148
      %v3343 = vmax.f32 %v3335, %v3153
      %v3344 = vmax.f32 %v3336, %v3158
      %v3345 = vmax.f32 %v3337, %v3163
      %v3346 = vmax.f32 %v3338, %v3168
      %v3347 = vmax.f32 %v3339, %v3173
      %v3348 = vmax.f32 %v3340, %v3178
      %v3349 = vmax.f32 %v3341, %v3183
      %v3350 = vmax.f32 %v3342, %v3188
      %v3351 = vmax.f32 %v3343, %v3193
      %v3352 = vmax.f32 %v3344, %v3198
      %v3353 = vmax.f32 %v3345, %v3203
      %v3354 = vmax.f32 %v3346, %v3208
      %v3355 = vmax.f32 %v3347, %v3213
      %v3356 = vmax.f32 %v3348, %v3218
      %v3357 = vmax.f32 %v3349, %v3223
      %v3358 = vmax.f32 %v3350, %v3228
      %v3359 = vmax.f32 %v3351, %v3233
      %v3360 = vmax.f32 %v3352, %v3238
      %v3361 = vld [vmem:[%s2 + $0x8c] sm:$0xff]
      %v3362 = vld [vmem:[%s2 + $0x94] sm:$0xff]
      %v3363 = vld [vmem:[%s2 + $0x9c] sm:$0xff]
      %v3364 = vld [vmem:[%s2 + $0xa4] sm:$0xff]
      %v3365 = vld [vmem:[%s2 + $0xac] sm:$0xff]
      %v3366 = vld [vmem:[%s2 + $0xb4] sm:$0xff]
      %v3367 = vld [vmem:[%s2 + $0xbc] sm:$0xff]
      %v3368 = vld [vmem:[%s2 + $0xc4] sm:$0xff]
      %v3369 = vld [vmem:[%s2 + $0xcf] sm:$0x1]
      %v3370 = vlaneseq
      %v3371 = vshrl.u32 %v3370, 7
      %v3372 = vsub.s32 0, %v3371
      %v3373 = vrot.slane %v3369, %v3372
      %v3375 = vsel %vm1055, %v3353, 0
      %v3378 = vsel %vm1055, %v3354, 0
      %v3381 = vsel %vm1055, %v3355, 0
      %v3384 = vsel %vm1055, %v3356, 0
      %v3387 = vsel %vm1055, %v3357, 0
      %v3390 = vsel %vm1055, %v3358, 0
      %v3393 = vsel %vm1055, %v3359, 0
      %v3396 = vsel %vm1055, %v3360, 0
      %3398 = vmatprep.subr.mxu0 0.0
      %3399 = vmatpush1.msra.mxu0 %v3361
      %3400 = vmatprep.subr.mxu0 0.0
      %3401 = vmatpush1.msra.mxu0 %v3362
      %3402 = vmatprep.subr.mxu0 0.0
      %3403 = vmatpush1.msra.mxu0 %v3363
      %3404 = vmatprep.subr.mxu0 0.0
      %3405 = vmatpush1.msra.mxu0 %v3364
      %3406 = vmatprep.subr.mxu0 0.0
      %3407 = vmatpush1.msra.mxu0 %v3365
      %3408 = vmatprep.subr.mxu0 0.0
      %3409 = vmatpush1.msra.mxu0 %v3366
      %3410 = vmatprep.subr.mxu0 0.0
      %3411 = vmatpush1.msra.mxu0 %v3367
      %3412 = vmatprep.subr.mxu0 0.0
      %3413 = vmatpush1.msra.mxu0 %v3368
      %3414 = vmatprep.subr.mxu0 0.0
      %3415 = vmatpush1.msra.mxu0 0.0
      %3416 = vmatprep.subr.mxu0 0.0
      %3417 = vmatpush1.msra.mxu0 0.0
      %3418 = vmatprep.subr.mxu0 0.0
      %3419 = vmatpush1.msra.mxu0 0.0
      %3420 = vmatprep.subr.mxu0 0.0
      %3421 = vmatpush1.msra.mxu0 0.0
      %3422 = vmatprep.subr.mxu0 0.0
      %3423 = vmatpush1.msra.mxu0 0.0
      %3424 = vmatprep.subr.mxu0 0.0
      %3425 = vmatpush1.msra.mxu0 0.0
      %3426 = vmatprep.subr.mxu0 0.0
      %3427 = vmatpush1.msra.mxu0 0.0
      %3428 = vmatprep.subr.mxu0 0.0
      %3429 = vmatpush1.msra.mxu0 0.0
      %3430 = vmatprep.subr.mxu0 0.0
      %3431 = vmatpush1.msra.mxu0 0.0
      %3432 = vmatprep.subr.mxu0 0.0
      %3433 = vmatpush1.msra.mxu0 0.0
      %3434 = vmatprep.subr.mxu0 0.0
      %3435 = vmatpush1.msra.mxu0 0.0
      %3436 = vmatprep.subr.mxu0 0.0
      %3437 = vmatpush1.msra.mxu0 0.0
      %3438 = vmatprep.subr.mxu0 0.0
      %3439 = vmatpush1.msra.mxu0 0.0
      %3440 = vmatprep.subr.mxu0 0.0
      %3441 = vmatpush1.msra.mxu0 0.0
      %3442 = vmatprep.subr.mxu0 0.0
      %3443 = vmatpush1.msra.mxu0 0.0
      %3444 = vmatprep.subr.mxu0 0.0
      %3445 = vmatpush1.msra.mxu0 0.0
      %3446 = vmatprep.subr.mxu0 0.0
      %3447 = vmatpush1.msra.mxu0 0.0
      %3448 = vmatprep.subr.mxu0 0.0
      %3449 = vmatpush1.msra.mxu0 0.0
      %3450 = vmatprep.subr.mxu0 0.0
      %3451 = vmatpush1.msra.mxu0 0.0
      %3452 = vmatprep.subr.mxu0 0.0
      %3453 = vmatpush1.msra.mxu0 0.0
      %3454 = vmatprep.subr.mxu0 0.0
      %3455 = vmatpush1.msra.mxu0 0.0
      %3456 = vmatprep.subr.mxu0 0.0
      %3457 = vmatpush1.msra.mxu0 0.0
      %3458 = vmatprep.subr.mxu0 0.0
      %3459 = vmatpush1.msra.mxu0 0.0
      %3460 = vmatprep.subr.mxu0 0.0
      %3461 = vmatpush1.msra.mxu0 0.0
      %3462 = vmatprep.mubr.f32.mxu0 0.0
      %3463 = vmatmul.mubr.f32.gmra.mrb[0].mxu0 %v3375
      %v3464 = vpop.f32.mrb[0].mxu0
      %v3465 = vadd.f32 %v3373, %v3464
      %v3466 = vpop.f32.mrb[0].mxu0
      %3467 = vmatprep.mubr.f32.mxu0 0.0
      %3468 = vmatmul.mubr.f32.gmra.mrb[0].mxu0 %v3378
      %v3469 = vpop.f32.mrb[0].mxu0
      %v3470 = vadd.f32 %v3373, %v3469
      %v3471 = vpop.f32.mrb[0].mxu0
      %3472 = vmatprep.mubr.f32.mxu0 0.0
      %3473 = vmatmul.mubr.f32.gmra.mrb[0].mxu0 %v3381
      %v3474 = vpop.f32.mrb[0].mxu0
      %v3475 = vadd.f32 %v3373, %v3474
      %v3476 = vpop.f32.mrb[0].mxu0
      %3477 = vmatprep.mubr.f32.mxu0 0.0
      %3478 = vmatmul.mubr.f32.gmra.mrb[0].mxu0 %v3384
      %v3479 = vpop.f32.mrb[0].mxu0
      %v3480 = vadd.f32 %v3373, %v3479
      %v3481 = vpop.f32.mrb[0].mxu0
      %3482 = vmatprep.mubr.f32.mxu0 0.0
      %3483 = vmatmul.mubr.f32.gmra.mrb[0].mxu0 %v3387
      %v3484 = vpop.f32.mrb[0].mxu0
      %v3485 = vadd.f32 %v3373, %v3484
      %v3486 = vpop.f32.mrb[0].mxu0
      %3487 = vmatprep.mubr.f32.mxu0 0.0
      %3488 = vmatmul.mubr.f32.gmra.mrb[0].mxu0 %v3390
      %v3489 = vpop.f32.mrb[0].mxu0
      %v3490 = vadd.f32 %v3373, %v3489
      %v3491 = vpop.f32.mrb[0].mxu0
      %3492 = vmatprep.mubr.f32.mxu0 0.0
      %3493 = vmatmul.mubr.f32.gmra.mrb[0].mxu0 %v3393
      %v3494 = vpop.f32.mrb[0].mxu0
      %v3495 = vadd.f32 %v3373, %v3494
      %v3496 = vpop.f32.mrb[0].mxu0
      %3497 = vmatprep.mubr.f32.mxu0 0.0
      %3498 = vmatmul.mubr.f32.gmra.mrb[0].mxu0 %v3396
      %v3499 = vpop.f32.mrb[0].mxu0
      %v3500 = vadd.f32 %v3373, %v3499
      %v3501 = vpop.f32.mrb[0].mxu0
      %3502 = vdwg.mxu0
      %v3503 = vld [vmem:[%s3] sm:$0xff]
      %v3504 = vld [vmem:[%s3 + $0x8] sm:$0xff]
      %v3505 = vld [vmem:[%s3 + $0x10] sm:$0xff]
      %v3506 = vld [vmem:[%s3 + $0x18] sm:$0xff]
      %v3507 = vld [vmem:[%s3 + $0x20] sm:$0xff]
      %v3508 = vld [vmem:[%s3 + $0x28] sm:$0xff]
      %v3509 = vld [vmem:[%s3 + $0x30] sm:$0xff]
      %v3510 = vld [vmem:[%s3 + $0x38] sm:$0xff]
      %v3511 = vld [vmem:[%s3 + $0xc0] sm:$0x1]
      %v3512 = vlaneseq
      %v3513 = vshrl.u32 %v3512, 7
      %v3514 = vsub.s32 0, %v3513
      %v3515 = vrot.slane %v3511, %v3514
      %v3517 = vsel %vm1055, %v3465, 0
      %v3520 = vsel %vm1055, %v3470, 0
      %v3523 = vsel %vm1055, %v3475, 0
      %v3526 = vsel %vm1055, %v3480, 0
      %v3529 = vsel %vm1055, %v3485, 0
      %v3532 = vsel %vm1055, %v3490, 0
      %v3535 = vsel %vm1055, %v3495, 0
      %v3538 = vsel %vm1055, %v3500, 0
      %3540 = vmatprep.subr.mxu0 0.0
      %3541 = vmatpush1.msra.mxu0 %v3503
      %3542 = vmatprep.subr.mxu0 0.0
      %3543 = vmatpush1.msra.mxu0 %v3504
      %3544 = vmatprep.subr.mxu0 0.0
      %3545 = vmatpush1.msra.mxu0 %v3505
      %3546 = vmatprep.subr.mxu0 0.0
      %3547 = vmatpush1.msra.mxu0 %v3506
      %3548 = vmatprep.subr.mxu0 0.0
      %3549 = vmatpush1.msra.mxu0 %v3507
      %3550 = vmatprep.subr.mxu0 0.0
      %3551 = vmatpush1.msra.mxu0 %v3508
      %3552 = vmatprep.subr.mxu0 0.0
      %3553 = vmatpush1.msra.mxu0 %v3509
      %3554 = vmatprep.subr.mxu0 0.0
      %3555 = vmatpush1.msra.mxu0 %v3510
      %3556 = vmatprep.subr.mxu0 0.0
      %3557 = vmatpush1.msra.mxu0 0.0
      %3558 = vmatprep.subr.mxu0 0.0
      %3559 = vmatpush1.msra.mxu0 0.0
      %3560 = vmatprep.subr.mxu0 0.0
      %3561 = vmatpush1.msra.mxu0 0.0
      %3562 = vmatprep.subr.mxu0 0.0
      %3563 = vmatpush1.msra.mxu0 0.0
      %3564 = vmatprep.subr.mxu0 0.0
      %3565 = vmatpush1.msra.mxu0 0.0
      %3566 = vmatprep.subr.mxu0 0.0
      %3567 = vmatpush1.msra.mxu0 0.0
      %3568 = vmatprep.subr.mxu0 0.0
      %3569 = vmatpush1.msra.mxu0 0.0
      %3570 = vmatprep.subr.mxu0 0.0
      %3571 = vmatpush1.msra.mxu0 0.0
      %3572 = vmatprep.subr.mxu0 0.0
      %3573 = vmatpush1.msra.mxu0 0.0
      %3574 = vmatprep.subr.mxu0 0.0
      %3575 = vmatpush1.msra.mxu0 0.0
      %3576 = vmatprep.subr.mxu0 0.0
      %3577 = vmatpush1.msra.mxu0 0.0
      %3578 = vmatprep.subr.mxu0 0.0
      %3579 = vmatpush1.msra.mxu0 0.0
      %3580 = vmatprep.subr.mxu0 0.0
      %3581 = vmatpush1.msra.mxu0 0.0
      %3582 = vmatprep.subr.mxu0 0.0
      %3583 = vmatpush1.msra.mxu0 0.0
      %3584 = vmatprep.subr.mxu0 0.0
      %3585 = vmatpush1.msra.mxu0 0.0
      %3586 = vmatprep.subr.mxu0 0.0
      %3587 = vmatpush1.msra.mxu0 0.0
      %3588 = vmatprep.subr.mxu0 0.0
      %3589 = vmatpush1.msra.mxu0 0.0
      %3590 = vmatprep.subr.mxu0 0.0
      %3591 = vmatpush1.msra.mxu0 0.0
      %3592 = vmatprep.subr.mxu0 0.0
      %3593 = vmatpush1.msra.mxu0 0.0
      %3594 = vmatprep.subr.mxu0 0.0
      %3595 = vmatpush1.msra.mxu0 0.0
      %3596 = vmatprep.subr.mxu0 0.0
      %3597 = vmatpush1.msra.mxu0 0.0
      %3598 = vmatprep.subr.mxu0 0.0
      %3599 = vmatpush1.msra.mxu0 0.0
      %3600 = vmatprep.subr.mxu0 0.0
      %3601 = vmatpush1.msra.mxu0 0.0
      %3602 = vmatprep.subr.mxu0 0.0
      %3603 = vmatpush1.msra.mxu0 0.0
      %3604 = vmatprep.mubr.f32.mxu0 0.0
      %3605 = vmatmul.mubr.f32.gmra.mrb[0].mxu0 %v3517
      %v3606 = vpop.f32.mrb[0].mxu0
      %v3607 = vadd.f32 %v3515, %v3606
      %v3608 = vpop.f32.mrb[0].mxu0
      %3609 = vmatprep.mubr.f32.mxu0 0.0
      %3610 = vmatmul.mubr.f32.gmra.mrb[0].mxu0 %v3520
      %v3611 = vpop.f32.mrb[0].mxu0
      %v3612 = vadd.f32 %v3515, %v3611
      %v3613 = vpop.f32.mrb[0].mxu0
      %3614 = vmatprep.mubr.f32.mxu0 0.0
      %3615 = vmatmul.mubr.f32.gmra.mrb[0].mxu0 %v3523
      %v3616 = vpop.f32.mrb[0].mxu0
      %v3617 = vadd.f32 %v3515, %v3616
      %v3618 = vpop.f32.mrb[0].mxu0
      %3619 = vmatprep.mubr.f32.mxu0 0.0
      %3620 = vmatmul.mubr.f32.gmra.mrb[0].mxu0 %v3526
      %v3621 = vpop.f32.mrb[0].mxu0
      %v3622 = vadd.f32 %v3515, %v3621
      %v3623 = vpop.f32.mrb[0].mxu0
      %3624 = vmatprep.mubr.f32.mxu0 0.0
      %3625 = vmatmul.mubr.f32.gmra.mrb[0].mxu0 %v3529
      %v3626 = vpop.f32.mrb[0].mxu0
      %v3627 = vadd.f32 %v3515, %v3626
      %v3628 = vpop.f32.mrb[0].mxu0
      %3629 = vmatprep.mubr.f32.mxu0 0.0
      %3630 = vmatmul.mubr.f32.gmra.mrb[0].mxu0 %v3532
      %v3631 = vpop.f32.mrb[0].mxu0
      %v3632 = vadd.f32 %v3515, %v3631
      %v3633 = vpop.f32.mrb[0].mxu0
      %3634 = vmatprep.mubr.f32.mxu0 0.0
      %3635 = vmatmul.mubr.f32.gmra.mrb[0].mxu0 %v3535
      %v3636 = vpop.f32.mrb[0].mxu0
      %v3637 = vadd.f32 %v3515, %v3636
      %v3638 = vpop.f32.mrb[0].mxu0
      %3639 = vmatprep.mubr.f32.mxu0 0.0
      %3640 = vmatmul.mubr.f32.gmra.mrb[0].mxu0 %v3538
      %v3641 = vpop.f32.mrb[0].mxu0
      %v3642 = vadd.f32 %v3515, %v3641
      %v3643 = vpop.f32.mrb[0].mxu0
      %3644 = vdwg.mxu0
      %v3645 = vmax.f32 %v3607, 0.0
      %v3646 = vmax.f32 %v3612, 0.0
      %v3647 = vmax.f32 %v3617, 0.0
      %v3648 = vmax.f32 %v3622, 0.0
      %v3649 = vmax.f32 %v3627, 0.0
      %v3650 = vmax.f32 %v3632, 0.0
      %v3651 = vmax.f32 %v3637, 0.0
      %v3652 = vmax.f32 %v3642, 0.0
      %3653 = vmatprep.subr.mxu0 0.0
      %3654 = vmatpush1.msra.mxu0 %v3645
      %3655 = vmatprep.subr.mxu0 0.0
      %3656 = vmatpush1.msra.mxu0 %v3646
      %3657 = vmatprep.subr.mxu0 0.0
      %3658 = vmatpush1.msra.mxu0 %v3647
      %3659 = vmatprep.subr.mxu0 0.0
      %3660 = vmatpush1.msra.mxu0 %v3648
      %3661 = vmatprep.subr.mxu0 0.0
      %3662 = vmatpush1.msra.mxu0 %v3649
      %3663 = vmatprep.subr.mxu0 0.0
      %3664 = vmatpush1.msra.mxu0 %v3650
      %3665 = vmatprep.subr.mxu0 0.0
      %3666 = vmatpush1.msra.mxu0 %v3651
      %3667 = vmatprep.subr.mxu0 0.0
      %3668 = vmatpush1.msra.mxu0 %v3652
      %3669 = vmatprep.subr.mxu0 0.0
      %3670 = vmatpush1.msra.mxu0 0.0
      %3671 = vmatprep.subr.mxu0 0.0
      %3672 = vmatpush1.msra.mxu0 0.0
      %3673 = vmatprep.subr.mxu0 0.0
      %3674 = vmatpush1.msra.mxu0 0.0
      %3675 = vmatprep.subr.mxu0 0.0
      %3676 = vmatpush1.msra.mxu0 0.0
      %3677 = vmatprep.subr.mxu0 0.0
      %3678 = vmatpush1.msra.mxu0 0.0
      %3679 = vmatprep.subr.mxu0 0.0
      %3680 = vmatpush1.msra.mxu0 0.0
      %3681 = vmatprep.subr.mxu0 0.0
      %3682 = vmatpush1.msra.mxu0 0.0
      %3683 = vmatprep.subr.mxu0 0.0
      %3684 = vmatpush1.msra.mxu0 0.0
      %3685 = vmatprep.subr.mxu0 0.0
      %3686 = vmatpush1.msra.mxu0 0.0
      %3687 = vmatprep.subr.mxu0 0.0
      %3688 = vmatpush1.msra.mxu0 0.0
      %3689 = vmatprep.subr.mxu0 0.0
      %3690 = vmatpush1.msra.mxu0 0.0
      %3691 = vmatprep.subr.mxu0 0.0
      %3692 = vmatpush1.msra.mxu0 0.0
      %3693 = vmatprep.subr.mxu0 0.0
      %3694 = vmatpush1.msra.mxu0 0.0
      %3695 = vmatprep.subr.mxu0 0.0
      %3696 = vmatpush1.msra.mxu0 0.0
      %3697 = vmatprep.subr.mxu0 0.0
      %3698 = vmatpush1.msra.mxu0 0.0
      %3699 = vmatprep.subr.mxu0 0.0
      %3700 = vmatpush1.msra.mxu0 0.0
      %3701 = vmatprep.subr.mxu0 0.0
      %3702 = vmatpush1.msra.mxu0 0.0
      %3703 = vmatprep.subr.mxu0 0.0
      %3704 = vmatpush1.msra.mxu0 0.0
      %3705 = vmatprep.subr.mxu0 0.0
      %3706 = vmatpush1.msra.mxu0 0.0
      %3707 = vmatprep.subr.mxu0 0.0
      %3708 = vmatpush1.msra.mxu0 0.0
      %3709 = vmatprep.subr.mxu0 0.0
      %3710 = vmatpush1.msra.mxu0 0.0
      %3711 = vmatprep.subr.mxu0 0.0
      %3712 = vmatpush1.msra.mxu0 0.0
      %3713 = vmatprep.subr.mxu0 0.0
      %3714 = vmatpush1.msra.mxu0 0.0
      %3715 = vmatprep.subr.mxu0 0.0
      %3716 = vmatpush1.msra.mxu0 0.0
      %3717 = vmatprep.mubr.f32.mxu0 0.0
      %3718 = vmatmul.mubr.f32.gmra.mrb[0].mxu0 %v1057
      %v3719 = vpop.f32.mrb[0].mxu0
      %v3720 = vadd.f32 0.0, %v3719
      %v3721 = vpop.f32.mrb[0].mxu0
      %3722 = vmatprep.mubr.f32.mxu0 0.0
      %3723 = vmatmul.mubr.f32.gmra.mrb[0].mxu0 %v1060
      %v3724 = vpop.f32.mrb[0].mxu0
      %v3725 = vadd.f32 0.0, %v3724
      %v3726 = vpop.f32.mrb[0].mxu0
      %3727 = vmatprep.mubr.f32.mxu0 0.0
      %3728 = vmatmul.mubr.f32.gmra.mrb[0].mxu0 %v1063
      %v3729 = vpop.f32.mrb[0].mxu0
      %v3730 = vadd.f32 0.0, %v3729
      %v3731 = vpop.f32.mrb[0].mxu0
      %3732 = vmatprep.mubr.f32.mxu0 0.0
      %3733 = vmatmul.mubr.f32.gmra.mrb[0].mxu0 %v1066
      %v3734 = vpop.f32.mrb[0].mxu0
      %v3735 = vadd.f32 0.0, %v3734
      %v3736 = vpop.f32.mrb[0].mxu0
      %3737 = vmatprep.mubr.f32.mxu0 0.0
      %3738 = vmatmul.mubr.f32.gmra.mrb[0].mxu0 %v1069
      %v3739 = vpop.f32.mrb[0].mxu0
      %v3740 = vadd.f32 0.0, %v3739
      %v3741 = vpop.f32.mrb[0].mxu0
      %3742 = vmatprep.mubr.f32.mxu0 0.0
      %3743 = vmatmul.mubr.f32.gmra.mrb[0].mxu0 %v1072
      %v3744 = vpop.f32.mrb[0].mxu0
      %v3745 = vadd.f32 0.0, %v3744
      %v3746 = vpop.f32.mrb[0].mxu0
      %3747 = vmatprep.mubr.f32.mxu0 0.0
      %3748 = vmatmul.mubr.f32.gmra.mrb[0].mxu0 %v1075
      %v3749 = vpop.f32.mrb[0].mxu0
      %v3750 = vadd.f32 0.0, %v3749
      %v3751 = vpop.f32.mrb[0].mxu0
      %3752 = vmatprep.mubr.f32.mxu0 0.0
      %3753 = vmatmul.mubr.f32.gmra.mrb[0].mxu0 %v1078
      %v3754 = vpop.f32.mrb[0].mxu0
      %v3755 = vadd.f32 0.0, %v3754
      %v3756 = vpop.f32.mrb[0].mxu0
      %3757 = vmatprep.mubr.f32.mxu0 0.0
      %3758 = vmatmul.mubr.f32.gmra.mrb[0].mxu0 %v1081
      %v3759 = vpop.f32.mrb[0].mxu0
      %v3760 = vadd.f32 0.0, %v3759
      %v3761 = vpop.f32.mrb[0].mxu0
      %3762 = vmatprep.mubr.f32.mxu0 0.0
      %3763 = vmatmul.mubr.f32.gmra.mrb[0].mxu0 %v1084
      %v3764 = vpop.f32.mrb[0].mxu0
      %v3765 = vadd.f32 0.0, %v3764
      %v3766 = vpop.f32.mrb[0].mxu0
      %3767 = vmatprep.mubr.f32.mxu0 0.0
      %3768 = vmatmul.mubr.f32.gmra.mrb[0].mxu0 %v1087
      %v3769 = vpop.f32.mrb[0].mxu0
      %v3770 = vadd.f32 0.0, %v3769
      %v3771 = vpop.f32.mrb[0].mxu0
      %3772 = vmatprep.mubr.f32.mxu0 0.0
      %3773 = vmatmul.mubr.f32.gmra.mrb[0].mxu0 %v1090
      %v3774 = vpop.f32.mrb[0].mxu0
      %v3775 = vadd.f32 0.0, %v3774
      %v3776 = vpop.f32.mrb[0].mxu0
      %3777 = vmatprep.mubr.f32.mxu0 0.0
      %3778 = vmatmul.mubr.f32.gmra.mrb[0].mxu0 %v1093
      %v3779 = vpop.f32.mrb[0].mxu0
      %v3780 = vadd.f32 0.0, %v3779
      %v3781 = vpop.f32.mrb[0].mxu0
      %3782 = vmatprep.mubr.f32.mxu0 0.0
      %3783 = vmatmul.mubr.f32.gmra.mrb[0].mxu0 %v1096
      %v3784 = vpop.f32.mrb[0].mxu0
      %v3785 = vadd.f32 0.0, %v3784
      %v3786 = vpop.f32.mrb[0].mxu0
      %3787 = vmatprep.mubr.f32.mxu0 0.0
      %3788 = vmatmul.mubr.f32.gmra.mrb[0].mxu0 %v1099
      %v3789 = vpop.f32.mrb[0].mxu0
      %v3790 = vadd.f32 0.0, %v3789
      %v3791 = vpop.f32.mrb[0].mxu0
      %3792 = vmatprep.mubr.f32.mxu0 0.0
      %3793 = vmatmul.mubr.f32.gmra.mrb[0].mxu0 %v1102
      %v3794 = vpop.f32.mrb[0].mxu0
      %v3795 = vadd.f32 0.0, %v3794
      %v3796 = vpop.f32.mrb[0].mxu0
      %3797 = vmatprep.mubr.f32.mxu0 0.0
      %3798 = vmatmul.mubr.f32.gmra.mrb[0].mxu0 %v2201
      %v3799 = vpop.f32.mrb[0].mxu0
      %v3800 = vadd.f32 0.0, %v3799
      %v3801 = vpop.f32.mrb[0].mxu0
      %3802 = vmatprep.mubr.f32.mxu0 0.0
      %3803 = vmatmul.mubr.f32.gmra.mrb[0].mxu0 %v2204
      %v3804 = vpop.f32.mrb[0].mxu0
      %v3805 = vadd.f32 0.0, %v3804
      %v3806 = vpop.f32.mrb[0].mxu0
      %3807 = vmatprep.mubr.f32.mxu0 0.0
      %3808 = vmatmul.mubr.f32.gmra.mrb[0].mxu0 %v2207
      %v3809 = vpop.f32.mrb[0].mxu0
      %v3810 = vadd.f32 0.0, %v3809
      %v3811 = vpop.f32.mrb[0].mxu0
      %3812 = vmatprep.mubr.f32.mxu0 0.0
      %3813 = vmatmul.mubr.f32.gmra.mrb[0].mxu0 %v2210
      %v3814 = vpop.f32.mrb[0].mxu0
      %v3815 = vadd.f32 0.0, %v3814
      %v3816 = vpop.f32.mrb[0].mxu0
      %3817 = vmatprep.mubr.f32.mxu0 0.0
      %3818 = vmatmul.mubr.f32.gmra.mrb[0].mxu0 %v2213
      %v3819 = vpop.f32.mrb[0].mxu0
      %v3820 = vadd.f32 0.0, %v3819
      %v3821 = vpop.f32.mrb[0].mxu0
      %3822 = vmatprep.mubr.f32.mxu0 0.0
      %3823 = vmatmul.mubr.f32.gmra.mrb[0].mxu0 %v2216
      %v3824 = vpop.f32.mrb[0].mxu0
      %v3825 = vadd.f32 0.0, %v3824
      %v3826 = vpop.f32.mrb[0].mxu0
      %3827 = vmatprep.mubr.f32.mxu0 0.0
      %3828 = vmatmul.mubr.f32.gmra.mrb[0].mxu0 %v2219
      %v3829 = vpop.f32.mrb[0].mxu0
      %v3830 = vadd.f32 0.0, %v3829
      %v3831 = vpop.f32.mrb[0].mxu0
      %3832 = vmatprep.mubr.f32.mxu0 0.0
      %3833 = vmatmul.mubr.f32.gmra.mrb[0].mxu0 %v2222
      %v3834 = vpop.f32.mrb[0].mxu0
      %v3835 = vadd.f32 0.0, %v3834
      %v3836 = vpop.f32.mrb[0].mxu0
      %3837 = vmatprep.mubr.f32.mxu0 0.0
      %3838 = vmatmul.mubr.f32.gmra.mrb[0].mxu0 %v2225
      %v3839 = vpop.f32.mrb[0].mxu0
      %v3840 = vadd.f32 0.0, %v3839
      %v3841 = vpop.f32.mrb[0].mxu0
      %3842 = vmatprep.mubr.f32.mxu0 0.0
      %3843 = vmatmul.mubr.f32.gmra.mrb[0].mxu0 %v2228
      %v3844 = vpop.f32.mrb[0].mxu0
      %v3845 = vadd.f32 0.0, %v3844
      %v3846 = vpop.f32.mrb[0].mxu0
      %3847 = vmatprep.mubr.f32.mxu0 0.0
      %3848 = vmatmul.mubr.f32.gmra.mrb[0].mxu0 %v2231
      %v3849 = vpop.f32.mrb[0].mxu0
      %v3850 = vadd.f32 0.0, %v3849
      %v3851 = vpop.f32.mrb[0].mxu0
      %3852 = vmatprep.mubr.f32.mxu0 0.0
      %3853 = vmatmul.mubr.f32.gmra.mrb[0].mxu0 %v2234
      %v3854 = vpop.f32.mrb[0].mxu0
      %v3855 = vadd.f32 0.0, %v3854
      %v3856 = vpop.f32.mrb[0].mxu0
      %3857 = vmatprep.mubr.f32.mxu0 0.0
      %3858 = vmatmul.mubr.f32.gmra.mrb[0].mxu0 %v2237
      %v3859 = vpop.f32.mrb[0].mxu0
      %v3860 = vadd.f32 0.0, %v3859
      %v3861 = vpop.f32.mrb[0].mxu0
      %3862 = vmatprep.mubr.f32.mxu0 0.0
      %3863 = vmatmul.mubr.f32.gmra.mrb[0].mxu0 %v2240
      %v3864 = vpop.f32.mrb[0].mxu0
      %v3865 = vadd.f32 0.0, %v3864
      %v3866 = vpop.f32.mrb[0].mxu0
      %3867 = vmatprep.mubr.f32.mxu0 0.0
      %3868 = vmatmul.mubr.f32.gmra.mrb[0].mxu0 %v2243
      %v3869 = vpop.f32.mrb[0].mxu0
      %v3870 = vadd.f32 0.0, %v3869
      %v3871 = vpop.f32.mrb[0].mxu0
      %3872 = vmatprep.mubr.f32.mxu0 0.0
      %3873 = vmatmul.mubr.f32.gmra.mrb[0].mxu0 %v2246
      %v3874 = vpop.f32.mrb[0].mxu0
      %v3875 = vadd.f32 0.0, %v3874
      %v3876 = vpop.f32.mrb[0].mxu0
      %3877 = vmatprep.mubr.f32.mxu0 0.0
      %3878 = vmatmul.mubr.f32.gmra.mrb[0].mxu0 %v2249
      %v3879 = vpop.f32.mrb[0].mxu0
      %v3880 = vadd.f32 0.0, %v3879
      %v3881 = vpop.f32.mrb[0].mxu0
      %3882 = vmatprep.mubr.f32.mxu0 0.0
      %3883 = vmatmul.mubr.f32.gmra.mrb[0].mxu0 %v2252
      %v3884 = vpop.f32.mrb[0].mxu0
      %v3885 = vadd.f32 0.0, %v3884
      %v3886 = vpop.f32.mrb[0].mxu0
      %3887 = vmatprep.mubr.f32.mxu0 0.0
      %3888 = vmatmul.mubr.f32.gmra.mrb[0].mxu0 %v2255
      %v3889 = vpop.f32.mrb[0].mxu0
      %v3890 = vadd.f32 0.0, %v3889
      %v3891 = vpop.f32.mrb[0].mxu0
      %3892 = vmatprep.mubr.f32.mxu0 0.0
      %3893 = vmatmul.mubr.f32.gmra.mrb[0].mxu0 %v2258
      %v3894 = vpop.f32.mrb[0].mxu0
      %v3895 = vadd.f32 0.0, %v3894
      %v3896 = vpop.f32.mrb[0].mxu0
      %3897 = vmatprep.mubr.f32.mxu0 0.0
      %3898 = vmatmul.mubr.f32.gmra.mrb[0].mxu0 %v2261
      %v3899 = vpop.f32.mrb[0].mxu0
      %v3900 = vadd.f32 0.0, %v3899
      %v3901 = vpop.f32.mrb[0].mxu0
      %3902 = vmatprep.mubr.f32.mxu0 0.0
      %3903 = vmatmul.mubr.f32.gmra.mrb[0].mxu0 %v2264
      %v3904 = vpop.f32.mrb[0].mxu0
      %v3905 = vadd.f32 0.0, %v3904
      %v3906 = vpop.f32.mrb[0].mxu0
      %3907 = vmatprep.mubr.f32.mxu0 0.0
      %3908 = vmatmul.mubr.f32.gmra.mrb[0].mxu0 %v2267
      %v3909 = vpop.f32.mrb[0].mxu0
      %v3910 = vadd.f32 0.0, %v3909
      %v3911 = vpop.f32.mrb[0].mxu0
      %3912 = vmatprep.mubr.f32.mxu0 0.0
      %3913 = vmatmul.mubr.f32.gmra.mrb[0].mxu0 %v2270
      %v3914 = vpop.f32.mrb[0].mxu0
      %v3915 = vadd.f32 0.0, %v3914
      %v3916 = vpop.f32.mrb[0].mxu0
      %3917 = vmatprep.mubr.f32.mxu0 0.0
      %3918 = vmatmul.mubr.f32.gmra.mrb[0].mxu0 %v2273
      %v3919 = vpop.f32.mrb[0].mxu0
      %v3920 = vadd.f32 0.0, %v3919
      %v3921 = vpop.f32.mrb[0].mxu0
      %3922 = vmatprep.mubr.f32.mxu0 0.0
      %3923 = vmatmul.mubr.f32.gmra.mrb[0].mxu0 %v2276
      %v3924 = vpop.f32.mrb[0].mxu0
      %v3925 = vadd.f32 0.0, %v3924
      %v3926 = vpop.f32.mrb[0].mxu0
      %3927 = vmatprep.mubr.f32.mxu0 0.0
      %3928 = vmatmul.mubr.f32.gmra.mrb[0].mxu0 %v2279
      %v3929 = vpop.f32.mrb[0].mxu0
      %v3930 = vadd.f32 0.0, %v3929
      %v3931 = vpop.f32.mrb[0].mxu0
      %3932 = vmatprep.mubr.f32.mxu0 0.0
      %3933 = vmatmul.mubr.f32.gmra.mrb[0].mxu0 %v2282
      %v3934 = vpop.f32.mrb[0].mxu0
      %v3935 = vadd.f32 0.0, %v3934
      %v3936 = vpop.f32.mrb[0].mxu0
      %3937 = vmatprep.mubr.f32.mxu0 0.0
      %3938 = vmatmul.mubr.f32.gmra.mrb[0].mxu0 %v2285
      %v3939 = vpop.f32.mrb[0].mxu0
      %v3940 = vadd.f32 0.0, %v3939
      %v3941 = vpop.f32.mrb[0].mxu0
      %3942 = vmatprep.mubr.f32.mxu0 0.0
      %3943 = vmatmul.mubr.f32.gmra.mrb[0].mxu0 %v2288
      %v3944 = vpop.f32.mrb[0].mxu0
      %v3945 = vadd.f32 0.0, %v3944
      %v3946 = vpop.f32.mrb[0].mxu0
      %3947 = vmatprep.mubr.f32.mxu0 0.0
      %3948 = vmatmul.mubr.f32.gmra.mrb[0].mxu0 %v2291
      %v3949 = vpop.f32.mrb[0].mxu0
      %v3950 = vadd.f32 0.0, %v3949
      %v3951 = vpop.f32.mrb[0].mxu0
      %3952 = vmatprep.mubr.f32.mxu0 0.0
      %3953 = vmatmul.mubr.f32.gmra.mrb[0].mxu0 %v2294
      %v3954 = vpop.f32.mrb[0].mxu0
      %v3955 = vadd.f32 0.0, %v3954
      %v3956 = vpop.f32.mrb[0].mxu0
      %3957 = vmatprep.mubr.f32.mxu0 0.0
      %3958 = vmatmul.mubr.f32.gmra.mrb[0].mxu0 %v2297
      %v3959 = vpop.f32.mrb[0].mxu0
      %v3960 = vadd.f32 0.0, %v3959
      %v3961 = vpop.f32.mrb[0].mxu0
      %3962 = vmatprep.mubr.f32.mxu0 0.0
      %3963 = vmatmul.mubr.f32.gmra.mrb[0].mxu0 %v2300
      %v3964 = vpop.f32.mrb[0].mxu0
      %v3965 = vadd.f32 0.0, %v3964
      %v3966 = vpop.f32.mrb[0].mxu0
      %3967 = vmatprep.mubr.f32.mxu0 0.0
      %3968 = vmatmul.mubr.f32.gmra.mrb[0].mxu0 %v2303
      %v3969 = vpop.f32.mrb[0].mxu0
      %v3970 = vadd.f32 0.0, %v3969
      %v3971 = vpop.f32.mrb[0].mxu0
      %3972 = vmatprep.mubr.f32.mxu0 0.0
      %3973 = vmatmul.mubr.f32.gmra.mrb[0].mxu0 %v2306
      %v3974 = vpop.f32.mrb[0].mxu0
      %v3975 = vadd.f32 0.0, %v3974
      %v3976 = vpop.f32.mrb[0].mxu0
      %3977 = vmatprep.mubr.f32.mxu0 0.0
      %3978 = vmatmul.mubr.f32.gmra.mrb[0].mxu0 %v2309
      %v3979 = vpop.f32.mrb[0].mxu0
      %v3980 = vadd.f32 0.0, %v3979
      %v3981 = vpop.f32.mrb[0].mxu0
      %3982 = vmatprep.mubr.f32.mxu0 0.0
      %3983 = vmatmul.mubr.f32.gmra.mrb[0].mxu0 %v2312
      %v3984 = vpop.f32.mrb[0].mxu0
      %v3985 = vadd.f32 0.0, %v3984
      %v3986 = vpop.f32.mrb[0].mxu0
      %3987 = vmatprep.mubr.f32.mxu0 0.0
      %3988 = vmatmul.mubr.f32.gmra.mrb[0].mxu0 %v2315
      %v3989 = vpop.f32.mrb[0].mxu0
      %v3990 = vadd.f32 0.0, %v3989
      %v3991 = vpop.f32.mrb[0].mxu0
      %3992 = vmatprep.mubr.f32.mxu0 0.0
      %3993 = vmatmul.mubr.f32.gmra.mrb[0].mxu0 %v2318
      %v3994 = vpop.f32.mrb[0].mxu0
      %v3995 = vadd.f32 0.0, %v3994
      %v3996 = vpop.f32.mrb[0].mxu0
      %3997 = vmatprep.mubr.f32.mxu0 0.0
      %3998 = vmatmul.mubr.f32.gmra.mrb[0].mxu0 %v2321
      %v3999 = vpop.f32.mrb[0].mxu0
      %v4000 = vadd.f32 0.0, %v3999
      %v4001 = vpop.f32.mrb[0].mxu0
      %4002 = vmatprep.mubr.f32.mxu0 0.0
      %4003 = vmatmul.mubr.f32.gmra.mrb[0].mxu0 %v2324
      %v4004 = vpop.f32.mrb[0].mxu0
      %v4005 = vadd.f32 0.0, %v4004
      %v4006 = vpop.f32.mrb[0].mxu0
      %4007 = vmatprep.mubr.f32.mxu0 0.0
      %4008 = vmatmul.mubr.f32.gmra.mrb[0].mxu0 %v2327
      %v4009 = vpop.f32.mrb[0].mxu0
      %v4010 = vadd.f32 0.0, %v4009
      %v4011 = vpop.f32.mrb[0].mxu0
      %4012 = vmatprep.mubr.f32.mxu0 0.0
      %4013 = vmatmul.mubr.f32.gmra.mrb[0].mxu0 %v2330
      %v4014 = vpop.f32.mrb[0].mxu0
      %v4015 = vadd.f32 0.0, %v4014
      %v4016 = vpop.f32.mrb[0].mxu0
      %4017 = vmatprep.mubr.f32.mxu0 0.0
      %4018 = vmatmul.mubr.f32.gmra.mrb[0].mxu0 %v2333
      %v4019 = vpop.f32.mrb[0].mxu0
      %v4020 = vadd.f32 0.0, %v4019
      %v4021 = vpop.f32.mrb[0].mxu0
      %4022 = vmatprep.mubr.f32.mxu0 0.0
      %4023 = vmatmul.mubr.f32.gmra.mrb[0].mxu0 %v2336
      %v4024 = vpop.f32.mrb[0].mxu0
      %v4025 = vadd.f32 0.0, %v4024
      %v4026 = vpop.f32.mrb[0].mxu0
      %4027 = vmatprep.mubr.f32.mxu0 0.0
      %4028 = vmatmul.mubr.f32.gmra.mrb[0].mxu0 %v2339
      %v4029 = vpop.f32.mrb[0].mxu0
      %v4030 = vadd.f32 0.0, %v4029
      %v4031 = vpop.f32.mrb[0].mxu0
      %4032 = vmatprep.mubr.f32.mxu0 0.0
      %4033 = vmatmul.mubr.f32.gmra.mrb[0].mxu0 %v2342
      %v4034 = vpop.f32.mrb[0].mxu0
      %v4035 = vadd.f32 0.0, %v4034
      %v4036 = vpop.f32.mrb[0].mxu0
      %4037 = vmatprep.mubr.f32.mxu0 0.0
      %4038 = vmatmul.mubr.f32.gmra.mrb[0].mxu0 %v2345
      %v4039 = vpop.f32.mrb[0].mxu0
      %v4040 = vadd.f32 0.0, %v4039
      %v4041 = vpop.f32.mrb[0].mxu0
      %4042 = vmatprep.mubr.f32.mxu0 0.0
      %4043 = vmatmul.mubr.f32.gmra.mrb[0].mxu0 %v2348
      %v4044 = vpop.f32.mrb[0].mxu0
      %v4045 = vadd.f32 0.0, %v4044
      %v4046 = vpop.f32.mrb[0].mxu0
      %4047 = vmatprep.mubr.f32.mxu0 0.0
      %4048 = vmatmul.mubr.f32.gmra.mrb[0].mxu0 %v2351
      %v4049 = vpop.f32.mrb[0].mxu0
      %v4050 = vadd.f32 0.0, %v4049
      %v4051 = vpop.f32.mrb[0].mxu0
      %4052 = vmatprep.mubr.f32.mxu0 0.0
      %4053 = vmatmul.mubr.f32.gmra.mrb[0].mxu0 %v2354
      %v4054 = vpop.f32.mrb[0].mxu0
      %v4055 = vadd.f32 0.0, %v4054
      %v4056 = vpop.f32.mrb[0].mxu0
      %4057 = vmatprep.mubr.f32.mxu0 0.0
      %4058 = vmatmul.mubr.f32.gmra.mrb[0].mxu0 %v2357
      %v4059 = vpop.f32.mrb[0].mxu0
      %v4060 = vadd.f32 0.0, %v4059
      %v4061 = vpop.f32.mrb[0].mxu0
      %4062 = vmatprep.mubr.f32.mxu0 0.0
      %4063 = vmatmul.mubr.f32.gmra.mrb[0].mxu0 %v2360
      %v4064 = vpop.f32.mrb[0].mxu0
      %v4065 = vadd.f32 0.0, %v4064
      %v4066 = vpop.f32.mrb[0].mxu0
      %4067 = vmatprep.mubr.f32.mxu0 0.0
      %4068 = vmatmul.mubr.f32.gmra.mrb[0].mxu0 %v2363
      %v4069 = vpop.f32.mrb[0].mxu0
      %v4070 = vadd.f32 0.0, %v4069
      %v4071 = vpop.f32.mrb[0].mxu0
      %4072 = vmatprep.mubr.f32.mxu0 0.0
      %4073 = vmatmul.mubr.f32.gmra.mrb[0].mxu0 %v2366
      %v4074 = vpop.f32.mrb[0].mxu0
      %v4075 = vadd.f32 0.0, %v4074
      %v4076 = vpop.f32.mrb[0].mxu0
      %4077 = vmatprep.mubr.f32.mxu0 0.0
      %4078 = vmatmul.mubr.f32.gmra.mrb[0].mxu0 %v2369
      %v4079 = vpop.f32.mrb[0].mxu0
      %v4080 = vadd.f32 0.0, %v4079
      %v4081 = vpop.f32.mrb[0].mxu0
      %4082 = vmatprep.mubr.f32.mxu0 0.0
      %4083 = vmatmul.mubr.f32.gmra.mrb[0].mxu0 %v2372
      %v4084 = vpop.f32.mrb[0].mxu0
      %v4085 = vadd.f32 0.0, %v4084
      %v4086 = vpop.f32.mrb[0].mxu0
      %4087 = vmatprep.mubr.f32.mxu0 0.0
      %4088 = vmatmul.mubr.f32.gmra.mrb[0].mxu0 %v2375
      %v4089 = vpop.f32.mrb[0].mxu0
      %v4090 = vadd.f32 0.0, %v4089
      %v4091 = vpop.f32.mrb[0].mxu0
      %4092 = vmatprep.mubr.f32.mxu0 0.0
      %4093 = vmatmul.mubr.f32.gmra.mrb[0].mxu0 %v2378
      %v4094 = vpop.f32.mrb[0].mxu0
      %v4095 = vadd.f32 0.0, %v4094
      %v4096 = vpop.f32.mrb[0].mxu0
      %4097 = vmatprep.mubr.f32.mxu0 0.0
      %4098 = vmatmul.mubr.f32.gmra.mrb[0].mxu0 %v2381
      %v4099 = vpop.f32.mrb[0].mxu0
      %v4100 = vadd.f32 0.0, %v4099
      %v4101 = vpop.f32.mrb[0].mxu0
      %4102 = vmatprep.mubr.f32.mxu0 0.0
      %4103 = vmatmul.mubr.f32.gmra.mrb[0].mxu0 %v2384
      %v4104 = vpop.f32.mrb[0].mxu0
      %v4105 = vadd.f32 0.0, %v4104
      %v4106 = vpop.f32.mrb[0].mxu0
      %4107 = vmatprep.mubr.f32.mxu0 0.0
      %4108 = vmatmul.mubr.f32.gmra.mrb[0].mxu0 %v2387
      %v4109 = vpop.f32.mrb[0].mxu0
      %v4110 = vadd.f32 0.0, %v4109
      %v4111 = vpop.f32.mrb[0].mxu0
      %4112 = vmatprep.mubr.f32.mxu0 0.0
      %4113 = vmatmul.mubr.f32.gmra.mrb[0].mxu0 %v2390
      %v4114 = vpop.f32.mrb[0].mxu0
      %v4115 = vadd.f32 0.0, %v4114
      %v4116 = vpop.f32.mrb[0].mxu0
      %4117 = vmatprep.mubr.f32.mxu0 0.0
      %4118 = vmatmul.mubr.f32.gmra.mrb[0].mxu0 %v2393
      %v4119 = vpop.f32.mrb[0].mxu0
      %v4120 = vadd.f32 0.0, %v4119
      %v4121 = vpop.f32.mrb[0].mxu0
      %4122 = vmatprep.mubr.f32.mxu0 0.0
      %4123 = vmatmul.mubr.f32.gmra.mrb[0].mxu0 %v2396
      %v4124 = vpop.f32.mrb[0].mxu0
      %v4125 = vadd.f32 0.0, %v4124
      %v4126 = vpop.f32.mrb[0].mxu0
      %4127 = vmatprep.mubr.f32.mxu0 0.0
      %4128 = vmatmul.mubr.f32.gmra.mrb[0].mxu0 %v2399
      %v4129 = vpop.f32.mrb[0].mxu0
      %v4130 = vadd.f32 0.0, %v4129
      %v4131 = vpop.f32.mrb[0].mxu0
      %4132 = vmatprep.mubr.f32.mxu0 0.0
      %4133 = vmatmul.mubr.f32.gmra.mrb[0].mxu0 %v2402
      %v4134 = vpop.f32.mrb[0].mxu0
      %v4135 = vadd.f32 0.0, %v4134
      %v4136 = vpop.f32.mrb[0].mxu0
      %4137 = vmatprep.mubr.f32.mxu0 0.0
      %4138 = vmatmul.mubr.f32.gmra.mrb[0].mxu0 %v2405
      %v4139 = vpop.f32.mrb[0].mxu0
      %v4140 = vadd.f32 0.0, %v4139
      %v4141 = vpop.f32.mrb[0].mxu0
      %4142 = vmatprep.mubr.f32.mxu0 0.0
      %4143 = vmatmul.mubr.f32.gmra.mrb[0].mxu0 %v2408
      %v4144 = vpop.f32.mrb[0].mxu0
      %v4145 = vadd.f32 0.0, %v4144
      %v4146 = vpop.f32.mrb[0].mxu0
      %4147 = vmatprep.mubr.f32.mxu0 0.0
      %4148 = vmatmul.mubr.f32.gmra.mrb[0].mxu0 %v2411
      %v4149 = vpop.f32.mrb[0].mxu0
      %v4150 = vadd.f32 0.0, %v4149
      %v4151 = vpop.f32.mrb[0].mxu0
      %4152 = vmatprep.mubr.f32.mxu0 0.0
      %4153 = vmatmul.mubr.f32.gmra.mrb[0].mxu0 %v2414
      %v4154 = vpop.f32.mrb[0].mxu0
      %v4155 = vadd.f32 0.0, %v4154
      %v4156 = vpop.f32.mrb[0].mxu0
      %4157 = vmatprep.mubr.f32.mxu0 0.0
      %4158 = vmatmul.mubr.f32.gmra.mrb[0].mxu0 %v2417
      %v4159 = vpop.f32.mrb[0].mxu0
      %v4160 = vadd.f32 0.0, %v4159
      %v4161 = vpop.f32.mrb[0].mxu0
      %4162 = vmatprep.mubr.f32.mxu0 0.0
      %4163 = vmatmul.mubr.f32.gmra.mrb[0].mxu0 %v2420
      %v4164 = vpop.f32.mrb[0].mxu0
      %v4165 = vadd.f32 0.0, %v4164
      %v4166 = vpop.f32.mrb[0].mxu0
      %4167 = vmatprep.mubr.f32.mxu0 0.0
      %4168 = vmatmul.mubr.f32.gmra.mrb[0].mxu0 %v2423
      %v4169 = vpop.f32.mrb[0].mxu0
      %v4170 = vadd.f32 0.0, %v4169
      %v4171 = vpop.f32.mrb[0].mxu0
      %4172 = vmatprep.mubr.f32.mxu0 0.0
      %4173 = vmatmul.mubr.f32.gmra.mrb[0].mxu0 %v2426
      %v4174 = vpop.f32.mrb[0].mxu0
      %v4175 = vadd.f32 0.0, %v4174
      %v4176 = vpop.f32.mrb[0].mxu0
      %4177 = vmatprep.mubr.f32.mxu0 0.0
      %4178 = vmatmul.mubr.f32.gmra.mrb[0].mxu0 %v2429
      %v4179 = vpop.f32.mrb[0].mxu0
      %v4180 = vadd.f32 0.0, %v4179
      %v4181 = vpop.f32.mrb[0].mxu0
      %4182 = vmatprep.mubr.f32.mxu0 0.0
      %4183 = vmatmul.mubr.f32.gmra.mrb[0].mxu0 %v2432
      %v4184 = vpop.f32.mrb[0].mxu0
      %v4185 = vadd.f32 0.0, %v4184
      %v4186 = vpop.f32.mrb[0].mxu0
      %4187 = vmatprep.mubr.f32.mxu0 0.0
      %4188 = vmatmul.mubr.f32.gmra.mrb[0].mxu0 %v2435
      %v4189 = vpop.f32.mrb[0].mxu0
      %v4190 = vadd.f32 0.0, %v4189
      %v4191 = vpop.f32.mrb[0].mxu0
      %4192 = vmatprep.mubr.f32.mxu0 0.0
      %4193 = vmatmul.mubr.f32.gmra.mrb[0].mxu0 %v2438
      %v4194 = vpop.f32.mrb[0].mxu0
      %v4195 = vadd.f32 0.0, %v4194
      %v4196 = vpop.f32.mrb[0].mxu0
      %4197 = vmatprep.mubr.f32.mxu0 0.0
      %4198 = vmatmul.mubr.f32.gmra.mrb[0].mxu0 %v2441
      %v4199 = vpop.f32.mrb[0].mxu0
      %v4200 = vadd.f32 0.0, %v4199
      %v4201 = vpop.f32.mrb[0].mxu0
      %4202 = vmatprep.mubr.f32.mxu0 0.0
      %4203 = vmatmul.mubr.f32.gmra.mrb[0].mxu0 %v2444
      %v4204 = vpop.f32.mrb[0].mxu0
      %v4205 = vadd.f32 0.0, %v4204
      %v4206 = vpop.f32.mrb[0].mxu0
      %4207 = vmatprep.mubr.f32.mxu0 0.0
      %4208 = vmatmul.mubr.f32.gmra.mrb[0].mxu0 %v2447
      %v4209 = vpop.f32.mrb[0].mxu0
      %v4210 = vadd.f32 0.0, %v4209
      %v4211 = vpop.f32.mrb[0].mxu0
      %4212 = vmatprep.mubr.f32.mxu0 0.0
      %4213 = vmatmul.mubr.f32.gmra.mrb[0].mxu0 %v2450
      %v4214 = vpop.f32.mrb[0].mxu0
      %v4215 = vadd.f32 0.0, %v4214
      %v4216 = vpop.f32.mrb[0].mxu0
      %4217 = vmatprep.mubr.f32.mxu0 0.0
      %4218 = vmatmul.mubr.f32.gmra.mrb[0].mxu0 %v2453
      %v4219 = vpop.f32.mrb[0].mxu0
      %v4220 = vadd.f32 0.0, %v4219
      %v4221 = vpop.f32.mrb[0].mxu0
      %4222 = vmatprep.mubr.f32.mxu0 0.0
      %4223 = vmatmul.mubr.f32.gmra.mrb[0].mxu0 %v2456
      %v4224 = vpop.f32.mrb[0].mxu0
      %v4225 = vadd.f32 0.0, %v4224
      %v4226 = vpop.f32.mrb[0].mxu0
      %4227 = vmatprep.mubr.f32.mxu0 0.0
      %4228 = vmatmul.mubr.f32.gmra.mrb[0].mxu0 %v2459
      %v4229 = vpop.f32.mrb[0].mxu0
      %v4230 = vadd.f32 0.0, %v4229
      %v4231 = vpop.f32.mrb[0].mxu0
      %4232 = vmatprep.mubr.f32.mxu0 0.0
      %4233 = vmatmul.mubr.f32.gmra.mrb[0].mxu0 %v2462
      %v4234 = vpop.f32.mrb[0].mxu0
      %v4235 = vadd.f32 0.0, %v4234
      %v4236 = vpop.f32.mrb[0].mxu0
      %4237 = vmatprep.mubr.f32.mxu0 0.0
      %4238 = vmatmul.mubr.f32.gmra.mrb[0].mxu0 %v2465
      %v4239 = vpop.f32.mrb[0].mxu0
      %v4240 = vadd.f32 0.0, %v4239
      %v4241 = vpop.f32.mrb[0].mxu0
      %4242 = vmatprep.mubr.f32.mxu0 0.0
      %4243 = vmatmul.mubr.f32.gmra.mrb[0].mxu0 %v2468
      %v4244 = vpop.f32.mrb[0].mxu0
      %v4245 = vadd.f32 0.0, %v4244
      %v4246 = vpop.f32.mrb[0].mxu0
      %4247 = vmatprep.mubr.f32.mxu0 0.0
      %4248 = vmatmul.mubr.f32.gmra.mrb[0].mxu0 %v2471
      %v4249 = vpop.f32.mrb[0].mxu0
      %v4250 = vadd.f32 0.0, %v4249
      %v4251 = vpop.f32.mrb[0].mxu0
      %4252 = vmatprep.mubr.f32.mxu0 0.0
      %4253 = vmatmul.mubr.f32.gmra.mrb[0].mxu0 %v2474
      %v4254 = vpop.f32.mrb[0].mxu0
      %v4255 = vadd.f32 0.0, %v4254
      %v4256 = vpop.f32.mrb[0].mxu0
      %4257 = vmatprep.mubr.f32.mxu0 0.0
      %4258 = vmatmul.mubr.f32.gmra.mrb[0].mxu0 %v2477
      %v4259 = vpop.f32.mrb[0].mxu0
      %v4260 = vadd.f32 0.0, %v4259
      %v4261 = vpop.f32.mrb[0].mxu0
      %4262 = vmatprep.mubr.f32.mxu0 0.0
      %4263 = vmatmul.mubr.f32.gmra.mrb[0].mxu0 %v2480
      %v4264 = vpop.f32.mrb[0].mxu0
      %v4265 = vadd.f32 0.0, %v4264
      %v4266 = vpop.f32.mrb[0].mxu0
      %4267 = vmatprep.mubr.f32.mxu0 0.0
      %4268 = vmatmul.mubr.f32.gmra.mrb[0].mxu0 %v2483
      %v4269 = vpop.f32.mrb[0].mxu0
      %v4270 = vadd.f32 0.0, %v4269
      %v4271 = vpop.f32.mrb[0].mxu0
      %4272 = vmatprep.mubr.f32.mxu0 0.0
      %4273 = vmatmul.mubr.f32.gmra.mrb[0].mxu0 %v2486
      %v4274 = vpop.f32.mrb[0].mxu0
      %v4275 = vadd.f32 0.0, %v4274
      %v4276 = vpop.f32.mrb[0].mxu0
      %4277 = vmatprep.mubr.f32.mxu0 0.0
      %4278 = vmatmul.mubr.f32.gmra.mrb[0].mxu0 %v2489
      %v4279 = vpop.f32.mrb[0].mxu0
      %v4280 = vadd.f32 0.0, %v4279
      %v4281 = vpop.f32.mrb[0].mxu0
      %4282 = vmatprep.mubr.f32.mxu0 0.0
      %4283 = vmatmul.mubr.f32.gmra.mrb[0].mxu0 %v2492
      %v4284 = vpop.f32.mrb[0].mxu0
      %v4285 = vadd.f32 0.0, %v4284
      %v4286 = vpop.f32.mrb[0].mxu0
      %4287 = vmatprep.mubr.f32.mxu0 0.0
      %4288 = vmatmul.mubr.f32.gmra.mrb[0].mxu0 %v2495
      %v4289 = vpop.f32.mrb[0].mxu0
      %v4290 = vadd.f32 0.0, %v4289
      %v4291 = vpop.f32.mrb[0].mxu0
      %4292 = vmatprep.mubr.f32.mxu0 0.0
      %4293 = vmatmul.mubr.f32.gmra.mrb[0].mxu0 %v2498
      %v4294 = vpop.f32.mrb[0].mxu0
      %v4295 = vadd.f32 0.0, %v4294
      %v4296 = vpop.f32.mrb[0].mxu0
      %4297 = vmatprep.mubr.f32.mxu0 0.0
      %4298 = vmatmul.mubr.f32.gmra.mrb[0].mxu0 %v2501
      %v4299 = vpop.f32.mrb[0].mxu0
      %v4300 = vadd.f32 0.0, %v4299
      %v4301 = vpop.f32.mrb[0].mxu0
      %4302 = vmatprep.mubr.f32.mxu0 0.0
      %4303 = vmatmul.mubr.f32.gmra.mrb[0].mxu0 %v2504
      %v4304 = vpop.f32.mrb[0].mxu0
      %v4305 = vadd.f32 0.0, %v4304
      %v4306 = vpop.f32.mrb[0].mxu0
      %4307 = vmatprep.mubr.f32.mxu0 0.0
      %4308 = vmatmul.mubr.f32.gmra.mrb[0].mxu0 %v2507
      %v4309 = vpop.f32.mrb[0].mxu0
      %v4310 = vadd.f32 0.0, %v4309
      %v4311 = vpop.f32.mrb[0].mxu0
      %4312 = vmatprep.mubr.f32.mxu0 0.0
      %4313 = vmatmul.mubr.f32.gmra.mrb[0].mxu0 %v2510
      %v4314 = vpop.f32.mrb[0].mxu0
      %v4315 = vadd.f32 0.0, %v4314
      %v4316 = vpop.f32.mrb[0].mxu0
      %4317 = vmatprep.mubr.f32.mxu0 0.0
      %4318 = vmatmul.mubr.f32.gmra.mrb[0].mxu0 %v2513
      %v4319 = vpop.f32.mrb[0].mxu0
      %v4320 = vadd.f32 0.0, %v4319
      %v4321 = vpop.f32.mrb[0].mxu0
      %4322 = vmatprep.mubr.f32.mxu0 0.0
      %4323 = vmatmul.mubr.f32.gmra.mrb[0].mxu0 %v2516
      %v4324 = vpop.f32.mrb[0].mxu0
      %v4325 = vadd.f32 0.0, %v4324
      %v4326 = vpop.f32.mrb[0].mxu0
      %4327 = vmatprep.mubr.f32.mxu0 0.0
      %4328 = vmatmul.mubr.f32.gmra.mrb[0].mxu0 %v2519
      %v4329 = vpop.f32.mrb[0].mxu0
      %v4330 = vadd.f32 0.0, %v4329
      %v4331 = vpop.f32.mrb[0].mxu0
      %4332 = vmatprep.mubr.f32.mxu0 0.0
      %4333 = vmatmul.mubr.f32.gmra.mrb[0].mxu0 %v2522
      %v4334 = vpop.f32.mrb[0].mxu0
      %v4335 = vadd.f32 0.0, %v4334
      %v4336 = vpop.f32.mrb[0].mxu0
      %4337 = vmatprep.mubr.f32.mxu0 0.0
      %4338 = vmatmul.mubr.f32.gmra.mrb[0].mxu0 %v2525
      %v4339 = vpop.f32.mrb[0].mxu0
      %v4340 = vadd.f32 0.0, %v4339
      %v4341 = vpop.f32.mrb[0].mxu0
      %4342 = vmatprep.mubr.f32.mxu0 0.0
      %4343 = vmatmul.mubr.f32.gmra.mrb[0].mxu0 %v2528
      %v4344 = vpop.f32.mrb[0].mxu0
      %v4345 = vadd.f32 0.0, %v4344
      %v4346 = vpop.f32.mrb[0].mxu0
      %4347 = vmatprep.mubr.f32.mxu0 0.0
      %4348 = vmatmul.mubr.f32.gmra.mrb[0].mxu0 %v2531
      %v4349 = vpop.f32.mrb[0].mxu0
      %v4350 = vadd.f32 0.0, %v4349
      %v4351 = vpop.f32.mrb[0].mxu0
      %4352 = vmatprep.mubr.f32.mxu0 0.0
      %4353 = vmatmul.mubr.f32.gmra.mrb[0].mxu0 %v2534
      %v4354 = vpop.f32.mrb[0].mxu0
      %v4355 = vadd.f32 0.0, %v4354
      %v4356 = vpop.f32.mrb[0].mxu0
      %4357 = vdwg.mxu0
      %v4358 = vmax.f32 %v3720, %v3760
      %v4359 = vmax.f32 %v3725, %v3765
      %v4360 = vmax.f32 %v3730, %v3770
      %v4361 = vmax.f32 %v3735, %v3775
      %v4362 = vmax.f32 %v3740, %v3780
      %v4363 = vmax.f32 %v3745, %v3785
      %v4364 = vmax.f32 %v3750, %v3790
      %v4365 = vmax.f32 %v3755, %v3795
      %v4366 = vmax.f32 %v4358, %v3800
      %v4367 = vmax.f32 %v4359, %v3805
      %v4368 = vmax.f32 %v4360, %v3810
      %v4369 = vmax.f32 %v4361, %v3815
      %v4370 = vmax.f32 %v4362, %v3820
      %v4371 = vmax.f32 %v4363, %v3825
      %v4372 = vmax.f32 %v4364, %v3830
      %v4373 = vmax.f32 %v4365, %v3835
      %v4374 = vmax.f32 %v4366, %v3840
      %v4375 = vmax.f32 %v4367, %v3845
      %v4376 = vmax.f32 %v4368, %v3850
      %v4377 = vmax.f32 %v4369, %v3855
      %v4378 = vmax.f32 %v4370, %v3860
      %v4379 = vmax.f32 %v4371, %v3865
      %v4380 = vmax.f32 %v4372, %v3870
      %v4381 = vmax.f32 %v4373, %v3875
      %v4382 = vmax.f32 %v4374, %v3880
      %v4383 = vmax.f32 %v4375, %v3885
      %v4384 = vmax.f32 %v4376, %v3890
      %v4385 = vmax.f32 %v4377, %v3895
      %v4386 = vmax.f32 %v4378, %v3900
      %v4387 = vmax.f32 %v4379, %v3905
      %v4388 = vmax.f32 %v4380, %v3910
      %v4389 = vmax.f32 %v4381, %v3915
      %v4390 = vmax.f32 %v4382, %v3920
      %v4391 = vmax.f32 %v4383, %v3925
      %v4392 = vmax.f32 %v4384, %v3930
      %v4393 = vmax.f32 %v4385, %v3935
      %v4394 = vmax.f32 %v4386, %v3940
      %v4395 = vmax.f32 %v4387, %v3945
      %v4396 = vmax.f32 %v4388, %v3950
      %v4397 = vmax.f32 %v4389, %v3955
      %v4398 = vmax.f32 %v4390, %v3960
      %v4399 = vmax.f32 %v4391, %v3965
      %v4400 = vmax.f32 %v4392, %v3970
      %v4401 = vmax.f32 %v4393, %v3975
      %v4402 = vmax.f32 %v4394, %v3980
      %v4403 = vmax.f32 %v4395, %v3985
      %v4404 = vmax.f32 %v4396, %v3990
      %v4405 = vmax.f32 %v4397, %v3995
      %v4406 = vmax.f32 %v4398, %v4000
      %v4407 = vmax.f32 %v4399, %v4005
      %v4408 = vmax.f32 %v4400, %v4010
      %v4409 = vmax.f32 %v4401, %v4015
      %v4410 = vmax.f32 %v4402, %v4020
      %v4411 = vmax.f32 %v4403, %v4025
      %v4412 = vmax.f32 %v4404, %v4030
      %v4413 = vmax.f32 %v4405, %v4035
      %v4414 = vmax.f32 %v4406, %v4040
      %v4415 = vmax.f32 %v4407, %v4045
      %v4416 = vmax.f32 %v4408, %v4050
      %v4417 = vmax.f32 %v4409, %v4055
      %v4418 = vmax.f32 %v4410, %v4060
      %v4419 = vmax.f32 %v4411, %v4065
      %v4420 = vmax.f32 %v4412, %v4070
      %v4421 = vmax.f32 %v4413, %v4075
      %v4422 = vmax.f32 %v4414, %v4080
      %v4423 = vmax.f32 %v4415, %v4085
      %v4424 = vmax.f32 %v4416, %v4090
      %v4425 = vmax.f32 %v4417, %v4095
      %v4426 = vmax.f32 %v4418, %v4100
      %v4427 = vmax.f32 %v4419, %v4105
      %v4428 = vmax.f32 %v4420, %v4110
      %v4429 = vmax.f32 %v4421, %v4115
      %v4430 = vmax.f32 %v4422, %v4120
      %v4431 = vmax.f32 %v4423, %v4125
      %v4432 = vmax.f32 %v4424, %v4130
      %v4433 = vmax.f32 %v4425, %v4135
      %v4434 = vmax.f32 %v4426, %v4140
      %v4435 = vmax.f32 %v4427, %v4145
      %v4436 = vmax.f32 %v4428, %v4150
      %v4437 = vmax.f32 %v4429, %v4155
      %v4438 = vmax.f32 %v4430, %v4160
      %v4439 = vmax.f32 %v4431, %v4165
      %v4440 = vmax.f32 %v4432, %v4170
      %v4441 = vmax.f32 %v4433, %v4175
      %v4442 = vmax.f32 %v4434, %v4180
      %v4443 = vmax.f32 %v4435, %v4185
      %v4444 = vmax.f32 %v4436, %v4190
      %v4445 = vmax.f32 %v4437, %v4195
      %v4446 = vmax.f32 %v4438, %v4200
      %v4447 = vmax.f32 %v4439, %v4205
      %v4448 = vmax.f32 %v4440, %v4210
      %v4449 = vmax.f32 %v4441, %v4215
      %v4450 = vmax.f32 %v4442, %v4220
      %v4451 = vmax.f32 %v4443, %v4225
      %v4452 = vmax.f32 %v4444, %v4230
      %v4453 = vmax.f32 %v4445, %v4235
      %v4454 = vmax.f32 %v4446, %v4240
      %v4455 = vmax.f32 %v4447, %v4245
      %v4456 = vmax.f32 %v4448, %v4250
      %v4457 = vmax.f32 %v4449, %v4255
      %v4458 = vmax.f32 %v4450, %v4260
      %v4459 = vmax.f32 %v4451, %v4265
      %v4460 = vmax.f32 %v4452, %v4270
      %v4461 = vmax.f32 %v4453, %v4275
      %v4462 = vmax.f32 %v4454, %v4280
      %v4463 = vmax.f32 %v4455, %v4285
      %v4464 = vmax.f32 %v4456, %v4290
      %v4465 = vmax.f32 %v4457, %v4295
      %v4466 = vmax.f32 %v4458, %v4300
      %v4467 = vmax.f32 %v4459, %v4305
      %v4468 = vmax.f32 %v4460, %v4310
      %v4469 = vmax.f32 %v4461, %v4315
      %v4470 = vmax.f32 %v4462, %v4320
      %v4471 = vmax.f32 %v4463, %v4325
      %v4472 = vmax.f32 %v4464, %v4330
      %v4473 = vmax.f32 %v4465, %v4335
      %v4474 = vmax.f32 %v4466, %v4340
      %v4475 = vmax.f32 %v4467, %v4345
      %v4476 = vmax.f32 %v4468, %v4350
      %v4477 = vmax.f32 %v4469, %v4355
      %v4478 = vld [vmem:[%s3 + $0x40] sm:$0xff]
      %v4479 = vld [vmem:[%s3 + $0x48] sm:$0xff]
      %v4480 = vld [vmem:[%s3 + $0x50] sm:$0xff]
      %v4481 = vld [vmem:[%s3 + $0x58] sm:$0xff]
      %v4482 = vld [vmem:[%s3 + $0x60] sm:$0xff]
      %v4483 = vld [vmem:[%s3 + $0x68] sm:$0xff]
      %v4484 = vld [vmem:[%s3 + $0x70] sm:$0xff]
      %v4485 = vld [vmem:[%s3 + $0x78] sm:$0xff]
      %v4486 = vld [vmem:[%s3 + $0x80] sm:$0xff]
      %v4487 = vld [vmem:[%s3 + $0x88] sm:$0xff]
      %v4488 = vld [vmem:[%s3 + $0x90] sm:$0xff]
      %v4489 = vld [vmem:[%s3 + $0x98] sm:$0xff]
      %v4490 = vld [vmem:[%s3 + $0xa0] sm:$0xff]
      %v4491 = vld [vmem:[%s3 + $0xa8] sm:$0xff]
      %v4492 = vld [vmem:[%s3 + $0xb0] sm:$0xff]
      %v4493 = vld [vmem:[%s3 + $0xb8] sm:$0xff]
      %v4494 = vld [vmem:[%s3 + $0xc1] sm:$0x1]
      %v4495 = vlaneseq
      %v4496 = vshrl.u32 %v4495, 7
      %v4497 = vsub.s32 0, %v4496
      %v4498 = vrot.slane %v4494, %v4497
      %4499 = vmatprep.subr.mxu0 0.0
      %4500 = vmatpush1.msra.mxu0 %v4478
      %4501 = vmatprep.subr.mxu0 0.0
      %4502 = vmatpush1.msra.mxu0 %v4479
      %4503 = vmatprep.subr.mxu0 0.0
      %4504 = vmatpush1.msra.mxu0 %v4480
      %4505 = vmatprep.subr.mxu0 0.0
      %4506 = vmatpush1.msra.mxu0 %v4481
      %4507 = vmatprep.subr.mxu0 0.0
      %4508 = vmatpush1.msra.mxu0 %v4482
      %4509 = vmatprep.subr.mxu0 0.0
      %4510 = vmatpush1.msra.mxu0 %v4483
      %4511 = vmatprep.subr.mxu0 0.0
      %4512 = vmatpush1.msra.mxu0 %v4484
      %4513 = vmatprep.subr.mxu0 0.0
      %4514 = vmatpush1.msra.mxu0 %v4485
      %4515 = vmatprep.subr.mxu0 0.0
      %4516 = vmatpush1.msra.mxu0 %v4486
      %4517 = vmatprep.subr.mxu0 0.0
      %4518 = vmatpush1.msra.mxu0 %v4487
      %4519 = vmatprep.subr.mxu0 0.0
      %4520 = vmatpush1.msra.mxu0 %v4488
      %4521 = vmatprep.subr.mxu0 0.0
      %4522 = vmatpush1.msra.mxu0 %v4489
      %4523 = vmatprep.subr.mxu0 0.0
      %4524 = vmatpush1.msra.mxu0 %v4490
      %4525 = vmatprep.subr.mxu0 0.0
      %4526 = vmatpush1.msra.mxu0 %v4491
      %4527 = vmatprep.subr.mxu0 0.0
      %4528 = vmatpush1.msra.mxu0 %v4492
      %4529 = vmatprep.subr.mxu0 0.0
      %4530 = vmatpush1.msra.mxu0 %v4493
      %4531 = vmatprep.subr.mxu0 0.0
      %4532 = vmatpush1.msra.mxu0 0.0
      %4533 = vmatprep.subr.mxu0 0.0
      %4534 = vmatpush1.msra.mxu0 0.0
      %4535 = vmatprep.subr.mxu0 0.0
      %4536 = vmatpush1.msra.mxu0 0.0
      %4537 = vmatprep.subr.mxu0 0.0
      %4538 = vmatpush1.msra.mxu0 0.0
      %4539 = vmatprep.subr.mxu0 0.0
      %4540 = vmatpush1.msra.mxu0 0.0
      %4541 = vmatprep.subr.mxu0 0.0
      %4542 = vmatpush1.msra.mxu0 0.0
      %4543 = vmatprep.subr.mxu0 0.0
      %4544 = vmatpush1.msra.mxu0 0.0
      %4545 = vmatprep.subr.mxu0 0.0
      %4546 = vmatpush1.msra.mxu0 0.0
      %4547 = vmatprep.subr.mxu0 0.0
      %4548 = vmatpush1.msra.mxu0 0.0
      %4549 = vmatprep.subr.mxu0 0.0
      %4550 = vmatpush1.msra.mxu0 0.0
      %4551 = vmatprep.subr.mxu0 0.0
      %4552 = vmatpush1.msra.mxu0 0.0
      %4553 = vmatprep.subr.mxu0 0.0
      %4554 = vmatpush1.msra.mxu0 0.0
      %4555 = vmatprep.subr.mxu0 0.0
      %4556 = vmatpush1.msra.mxu0 0.0
      %4557 = vmatprep.subr.mxu0 0.0
      %4558 = vmatpush1.msra.mxu0 0.0
      %4559 = vmatprep.subr.mxu0 0.0
      %4560 = vmatpush1.msra.mxu0 0.0
      %4561 = vmatprep.subr.mxu0 0.0
      %4562 = vmatpush1.msra.mxu0 0.0
      %4563 = vmatprep.mubr.f32.mxu0 0.0
      %4564 = vmatmul.mubr.f32.gmra.mrb[0].mxu0 %v4470
      %v4565 = vpop.f32.mrb[0].mxu0
      %v4566 = vadd.f32 %v4498, %v4565
      %v4567 = vpop.f32.mrb[0].mxu0
      %4568 = vmatprep.mubr.f32.mxu0 0.0
      %4569 = vmatmul.mubr.f32.gmra.mrb[0].mxu0 %v4471
      %v4570 = vpop.f32.mrb[0].mxu0
      %v4571 = vadd.f32 %v4498, %v4570
      %v4572 = vpop.f32.mrb[0].mxu0
      %4573 = vmatprep.mubr.f32.mxu0 0.0
      %4574 = vmatmul.mubr.f32.gmra.mrb[0].mxu0 %v4472
      %v4575 = vpop.f32.mrb[0].mxu0
      %v4576 = vadd.f32 %v4498, %v4575
      %v4577 = vpop.f32.mrb[0].mxu0
      %4578 = vmatprep.mubr.f32.mxu0 0.0
      %4579 = vmatmul.mubr.f32.gmra.mrb[0].mxu0 %v4473
      %v4580 = vpop.f32.mrb[0].mxu0
      %v4581 = vadd.f32 %v4498, %v4580
      %v4582 = vpop.f32.mrb[0].mxu0
      %4583 = vmatprep.mubr.f32.mxu0 0.0
      %4584 = vmatmul.mubr.f32.gmra.mrb[0].mxu0 %v4474
      %v4585 = vpop.f32.mrb[0].mxu0
      %v4586 = vadd.f32 %v4498, %v4585
      %v4587 = vpop.f32.mrb[0].mxu0
      %4588 = vmatprep.mubr.f32.mxu0 0.0
      %4589 = vmatmul.mubr.f32.gmra.mrb[0].mxu0 %v4475
      %v4590 = vpop.f32.mrb[0].mxu0
      %v4591 = vadd.f32 %v4498, %v4590
      %v4592 = vpop.f32.mrb[0].mxu0
      %4593 = vmatprep.mubr.f32.mxu0 0.0
      %4594 = vmatmul.mubr.f32.gmra.mrb[0].mxu0 %v4476
      %v4595 = vpop.f32.mrb[0].mxu0
      %v4596 = vadd.f32 %v4498, %v4595
      %v4597 = vpop.f32.mrb[0].mxu0
      %4598 = vmatprep.mubr.f32.mxu0 0.0
      %4599 = vmatmul.mubr.f32.gmra.mrb[0].mxu0 %v4477
      %v4600 = vpop.f32.mrb[0].mxu0
      %v4601 = vadd.f32 %v4498, %v4600
      %v4602 = vpop.f32.mrb[0].mxu0
      %4603 = vdwg.mxu0
      %v4604 = vpack.c.bf16 %v4571, %v4566
      %v4605 = vpack.c.bf16 %v4581, %v4576
      %v4606 = vpack.c.bf16 %v4591, %v4586
      %v4607 = vpack.c.bf16 %v4601, %v4596
      %v4608 = vld [vmem:[%s4] sm:$0xff]
      %v4609 = vld [vmem:[%s4 + $0x8] sm:$0xff]
      %v4610 = vld [vmem:[%s4 + $0x10] sm:$0xff]
      %v4611 = vld [vmem:[%s4 + $0x18] sm:$0xff]
      %v4612 = vld [vmem:[%s4 + $0x20] sm:$0xff]
      %v4613 = vld [vmem:[%s4 + $0x28] sm:$0xff]
      %v4614 = vld [vmem:[%s4 + $0x30] sm:$0xff]
      %v4615 = vld [vmem:[%s4 + $0x38] sm:$0xff]
      %v4616 = vld [vmem:[%s4 + $0x40] sm:$0xff]
      %v4617 = vld [vmem:[%s4 + $0x48] sm:$0xff]
      %v4618 = vld [vmem:[%s4 + $0x50] sm:$0xff]
      %v4619 = vld [vmem:[%s4 + $0x58] sm:$0xff]
      %v4620 = vld [vmem:[%s4 + $0x60] sm:$0xff]
      %v4621 = vld [vmem:[%s4 + $0x68] sm:$0xff]
      %v4622 = vld [vmem:[%s4 + $0x70] sm:$0xff]
      %v4623 = vld [vmem:[%s4 + $0x78] sm:$0xff]
      %v4624 = vld [vmem:[%s4 + $0x80] sm:$0xff]
      %v4625 = vld [vmem:[%s4 + $0x88] sm:$0xff]
      %v4626 = vld [vmem:[%s4 + $0x90] sm:$0xff]
      %v4627 = vld [vmem:[%s4 + $0x98] sm:$0xff]
      %v4628 = vld [vmem:[%s4 + $0xa0] sm:$0xff]
      %v4629 = vld [vmem:[%s4 + $0xa8] sm:$0xff]
      %v4630 = vld [vmem:[%s4 + $0xb0] sm:$0xff]
      %v4631 = vld [vmem:[%s4 + $0xb8] sm:$0xff]
      %v4632 = vld [vmem:[%s4 + $0xc0] sm:$0xff]
      %v4633 = vld [vmem:[%s4 + $0xc8] sm:$0xff]
      %v4634 = vld [vmem:[%s4 + $0xd0] sm:$0xff]
      %v4635 = vld [vmem:[%s4 + $0xd8] sm:$0xff]
      %v4636 = vld [vmem:[%s4 + $0xe0] sm:$0xff]
      %v4637 = vld [vmem:[%s4 + $0xe8] sm:$0xff]
      %v4638 = vld [vmem:[%s4 + $0xf0] sm:$0xff]
      %v4639 = vld [vmem:[%s4 + $0xf8] sm:$0xff]
      %v4640 = vld [vmem:[%s4 + $0x100] sm:$0xff]
      %v4641 = vld [vmem:[%s4 + $0x108] sm:$0xff]
      %v4642 = vld [vmem:[%s4 + $0x110] sm:$0xff]
      %v4643 = vld [vmem:[%s4 + $0x118] sm:$0xff]
      %v4644 = vld [vmem:[%s4 + $0x120] sm:$0xff]
      %v4645 = vld [vmem:[%s4 + $0x128] sm:$0xff]
      %v4646 = vld [vmem:[%s4 + $0x130] sm:$0xff]
      %v4647 = vld [vmem:[%s4 + $0x138] sm:$0xff]
      %v4648 = vld [vmem:[%s4 + $0x140] sm:$0xff]
      %v4649 = vld [vmem:[%s4 + $0x148] sm:$0xff]
      %v4650 = vld [vmem:[%s4 + $0x150] sm:$0xff]
      %v4651 = vld [vmem:[%s4 + $0x158] sm:$0xff]
      %v4652 = vld [vmem:[%s4 + $0x160] sm:$0xff]
      %v4653 = vld [vmem:[%s4 + $0x168] sm:$0xff]
      %v4654 = vld [vmem:[%s4 + $0x170] sm:$0xff]
      %v4655 = vld [vmem:[%s4 + $0x178] sm:$0xff]
      %v4656 = vld [vmem:[%s4 + $0x180] sm:$0xff]
      %v4657 = vld [vmem:[%s4 + $0x188] sm:$0xff]
      %v4658 = vld [vmem:[%s4 + $0x190] sm:$0xff]
      %v4659 = vld [vmem:[%s4 + $0x198] sm:$0xff]
      %v4660 = vld [vmem:[%s4 + $0x1a0] sm:$0xff]
      %v4661 = vld [vmem:[%s4 + $0x1a8] sm:$0xff]
      %v4662 = vld [vmem:[%s4 + $0x1b0] sm:$0xff]
      %v4663 = vld [vmem:[%s4 + $0x1b8] sm:$0xff]
      %v4664 = vld [vmem:[%s4 + $0x1c0] sm:$0xff]
      %v4665 = vld [vmem:[%s4 + $0x1c8] sm:$0xff]
      %v4666 = vld [vmem:[%s4 + $0x1d0] sm:$0xff]
      %v4667 = vld [vmem:[%s4 + $0x1d8] sm:$0xff]
      %v4668 = vld [vmem:[%s4 + $0x1e0] sm:$0xff]
      %v4669 = vld [vmem:[%s4 + $0x1e8] sm:$0xff]
      %v4670 = vld [vmem:[%s4 + $0x1f0] sm:$0xff]
      %v4671 = vld [vmem:[%s4 + $0x1f8] sm:$0xff]
      %v4672 = vld [vmem:[%s4 + $0x200] sm:$0x11]
      %v4673 = vld [vmem:[%s4 + $0x208] sm:$0x11]
      %v4674 = vld [vmem:[%s4 + $0x210] sm:$0x11]
      %v4675 = vld [vmem:[%s4 + $0x218] sm:$0x11]
      %v4676 = vunpack.c.l.bf16 %v4672
      %v4677 = vunpack.c.h.bf16 %v4672
      %v4678 = vunpack.c.l.bf16 %v4673
      %v4679 = vunpack.c.h.bf16 %v4673
      %v4680 = vunpack.c.l.bf16 %v4674
      %v4681 = vunpack.c.h.bf16 %v4674
      %v4682 = vunpack.c.l.bf16 %v4675
      %v4683 = vunpack.c.h.bf16 %v4675
      %v4684 = vlaneseq
      %v4685 = vshrl.u32 %v4684, 7
      %v4686 = vsub.s32 0, %v4685
      %v4687 = vrot.slane %v4676, %v4686
      %v4688 = vlaneseq
      %v4689 = vshrl.u32 %v4688, 7
      %v4690 = vsub.s32 0, %v4689
      %v4691 = vrot.slane %v4677, %v4690
      %v4692 = vlaneseq
      %v4693 = vshrl.u32 %v4692, 7
      %v4694 = vsub.s32 0, %v4693
      %v4695 = vrot.slane %v4678, %v4694
      %v4696 = vlaneseq
      %v4697 = vshrl.u32 %v4696, 7
      %v4698 = vsub.s32 0, %v4697
      %v4699 = vrot.slane %v4679, %v4698
      %v4700 = vlaneseq
      %v4701 = vshrl.u32 %v4700, 7
      %v4702 = vsub.s32 0, %v4701
      %v4703 = vrot.slane %v4680, %v4702
      %v4704 = vlaneseq
      %v4705 = vshrl.u32 %v4704, 7
      %v4706 = vsub.s32 0, %v4705
      %v4707 = vrot.slane %v4681, %v4706
      %v4708 = vlaneseq
      %v4709 = vshrl.u32 %v4708, 7
      %v4710 = vsub.s32 0, %v4709
      %v4711 = vrot.slane %v4682, %v4710
      %v4712 = vlaneseq
      %v4713 = vshrl.u32 %v4712, 7
      %v4714 = vsub.s32 0, %v4713
      %v4715 = vrot.slane %v4683, %v4714
      %v4780 = vunpack.c.l.b16 %v4608
      %v4781 = vunpack.c.h.b16 %v4608
      %v4782 = vunpack.c.l.b16 %v4609
      %v4783 = vunpack.c.h.b16 %v4609
      %v4784 = vunpack.c.l.b16 %v4610
      %v4785 = vunpack.c.h.b16 %v4610
      %v4786 = vunpack.c.l.b16 %v4611
      %v4787 = vunpack.c.h.b16 %v4611
      %v4788 = vunpack.c.l.b16 %v4612
      %v4789 = vunpack.c.h.b16 %v4612
      %v4790 = vunpack.c.l.b16 %v4613
      %v4791 = vunpack.c.h.b16 %v4613
      %v4792 = vunpack.c.l.b16 %v4614
      %v4793 = vunpack.c.h.b16 %v4614
      %v4794 = vunpack.c.l.b16 %v4615
      %v4795 = vunpack.c.h.b16 %v4615
      %v4796 = vunpack.c.l.b16 %v4616
      %v4797 = vunpack.c.h.b16 %v4616
      %v4798 = vunpack.c.l.b16 %v4617
      %v4799 = vunpack.c.h.b16 %v4617
      %v4800 = vunpack.c.l.b16 %v4618
      %v4801 = vunpack.c.h.b16 %v4618
      %v4802 = vunpack.c.l.b16 %v4619
      %v4803 = vunpack.c.h.b16 %v4619
      %v4804 = vunpack.c.l.b16 %v4620
      %v4805 = vunpack.c.h.b16 %v4620
      %v4806 = vunpack.c.l.b16 %v4621
      %v4807 = vunpack.c.h.b16 %v4621
      %v4808 = vunpack.c.l.b16 %v4622
      %v4809 = vunpack.c.h.b16 %v4622
      %v4810 = vunpack.c.l.b16 %v4623
      %v4811 = vunpack.c.h.b16 %v4623
      %v4812 = vunpack.c.l.b16 %v4624
      %v4813 = vunpack.c.h.b16 %v4624
      %v4814 = vunpack.c.l.b16 %v4625
      %v4815 = vunpack.c.h.b16 %v4625
      %v4816 = vunpack.c.l.b16 %v4626
      %v4817 = vunpack.c.h.b16 %v4626
      %v4818 = vunpack.c.l.b16 %v4627
      %v4819 = vunpack.c.h.b16 %v4627
      %v4820 = vunpack.c.l.b16 %v4628
      %v4821 = vunpack.c.h.b16 %v4628
      %v4822 = vunpack.c.l.b16 %v4629
      %v4823 = vunpack.c.h.b16 %v4629
      %v4824 = vunpack.c.l.b16 %v4630
      %v4825 = vunpack.c.h.b16 %v4630
      %v4826 = vunpack.c.l.b16 %v4631
      %v4827 = vunpack.c.h.b16 %v4631
      %v4828 = vunpack.c.l.b16 %v4632
      %v4829 = vunpack.c.h.b16 %v4632
      %v4830 = vunpack.c.l.b16 %v4633
      %v4831 = vunpack.c.h.b16 %v4633
      %v4832 = vunpack.c.l.b16 %v4634
      %v4833 = vunpack.c.h.b16 %v4634
      %v4834 = vunpack.c.l.b16 %v4635
      %v4835 = vunpack.c.h.b16 %v4635
      %v4836 = vunpack.c.l.b16 %v4636
      %v4837 = vunpack.c.h.b16 %v4636
      %v4838 = vunpack.c.l.b16 %v4637
      %v4839 = vunpack.c.h.b16 %v4637
      %v4840 = vunpack.c.l.b16 %v4638
      %v4841 = vunpack.c.h.b16 %v4638
      %v4842 = vunpack.c.l.b16 %v4639
      %v4843 = vunpack.c.h.b16 %v4639
      %v4844 = vunpack.c.l.b16 %v4640
      %v4845 = vunpack.c.h.b16 %v4640
      %v4846 = vunpack.c.l.b16 %v4641
      %v4847 = vunpack.c.h.b16 %v4641
      %v4848 = vunpack.c.l.b16 %v4642
      %v4849 = vunpack.c.h.b16 %v4642
      %v4850 = vunpack.c.l.b16 %v4643
      %v4851 = vunpack.c.h.b16 %v4643
      %v4852 = vunpack.c.l.b16 %v4644
      %v4853 = vunpack.c.h.b16 %v4644
      %v4854 = vunpack.c.l.b16 %v4645
      %v4855 = vunpack.c.h.b16 %v4645
      %v4856 = vunpack.c.l.b16 %v4646
      %v4857 = vunpack.c.h.b16 %v4646
      %v4858 = vunpack.c.l.b16 %v4647
      %v4859 = vunpack.c.h.b16 %v4647
      %v4860 = vunpack.c.l.b16 %v4648
      %v4861 = vunpack.c.h.b16 %v4648
      %v4862 = vunpack.c.l.b16 %v4649
      %v4863 = vunpack.c.h.b16 %v4649
      %v4864 = vunpack.c.l.b16 %v4650
      %v4865 = vunpack.c.h.b16 %v4650
      %v4866 = vunpack.c.l.b16 %v4651
      %v4867 = vunpack.c.h.b16 %v4651
      %v4868 = vunpack.c.l.b16 %v4652
      %v4869 = vunpack.c.h.b16 %v4652
      %v4870 = vunpack.c.l.b16 %v4653
      %v4871 = vunpack.c.h.b16 %v4653
      %v4872 = vunpack.c.l.b16 %v4654
      %v4873 = vunpack.c.h.b16 %v4654
      %v4874 = vunpack.c.l.b16 %v4655
      %v4875 = vunpack.c.h.b16 %v4655
      %v4876 = vunpack.c.l.b16 %v4656
      %v4877 = vunpack.c.h.b16 %v4656
      %v4878 = vunpack.c.l.b16 %v4657
      %v4879 = vunpack.c.h.b16 %v4657
      %v4880 = vunpack.c.l.b16 %v4658
      %v4881 = vunpack.c.h.b16 %v4658
      %v4882 = vunpack.c.l.b16 %v4659
      %v4883 = vunpack.c.h.b16 %v4659
      %v4884 = vunpack.c.l.b16 %v4660
      %v4885 = vunpack.c.h.b16 %v4660
      %v4886 = vunpack.c.l.b16 %v4661
      %v4887 = vunpack.c.h.b16 %v4661
      %v4888 = vunpack.c.l.b16 %v4662
      %v4889 = vunpack.c.h.b16 %v4662
      %v4890 = vunpack.c.l.b16 %v4663
      %v4891 = vunpack.c.h.b16 %v4663
      %v4892 = vunpack.c.l.b16 %v4664
      %v4893 = vunpack.c.h.b16 %v4664
      %v4894 = vunpack.c.l.b16 %v4665
      %v4895 = vunpack.c.h.b16 %v4665
      %v4896 = vunpack.c.l.b16 %v4666
      %v4897 = vunpack.c.h.b16 %v4666
      %v4898 = vunpack.c.l.b16 %v4667
      %v4899 = vunpack.c.h.b16 %v4667
      %v4900 = vunpack.c.l.b16 %v4668
      %v4901 = vunpack.c.h.b16 %v4668
      %v4902 = vunpack.c.l.b16 %v4669
      %v4903 = vunpack.c.h.b16 %v4669
      %v4904 = vunpack.c.l.b16 %v4670
      %v4905 = vunpack.c.h.b16 %v4670
      %v4906 = vunpack.c.l.b16 %v4671
      %v4907 = vunpack.c.h.b16 %v4671
      %v4908 = vpack.c.b16 %v4788, %v4780
      %v4909 = vpack.c.b16 %v4789, %v4781
      %v4910 = vpack.c.b16 %v4790, %v4782
      %v4911 = vpack.c.b16 %v4791, %v4783
      %v4912 = vpack.c.b16 %v4792, %v4784
      %v4913 = vpack.c.b16 %v4793, %v4785
      %v4914 = vpack.c.b16 %v4794, %v4786
      %v4915 = vpack.c.b16 %v4795, %v4787
      %v4916 = vpack.c.b16 %v4804, %v4796
      %v4917 = vpack.c.b16 %v4805, %v4797
      %v4918 = vpack.c.b16 %v4806, %v4798
      %v4919 = vpack.c.b16 %v4807, %v4799
      %v4920 = vpack.c.b16 %v4808, %v4800
      %v4921 = vpack.c.b16 %v4809, %v4801
      %v4922 = vpack.c.b16 %v4810, %v4802
      %v4923 = vpack.c.b16 %v4811, %v4803
      %v4924 = vpack.c.b16 %v4820, %v4812
      %v4925 = vpack.c.b16 %v4821, %v4813
      %v4926 = vpack.c.b16 %v4822, %v4814
      %v4927 = vpack.c.b16 %v4823, %v4815
      %v4928 = vpack.c.b16 %v4824, %v4816
      %v4929 = vpack.c.b16 %v4825, %v4817
      %v4930 = vpack.c.b16 %v4826, %v4818
      %v4931 = vpack.c.b16 %v4827, %v4819
      %v4932 = vpack.c.b16 %v4836, %v4828
      %v4933 = vpack.c.b16 %v4837, %v4829
      %v4934 = vpack.c.b16 %v4838, %v4830
      %v4935 = vpack.c.b16 %v4839, %v4831
      %v4936 = vpack.c.b16 %v4840, %v4832
      %v4937 = vpack.c.b16 %v4841, %v4833
      %v4938 = vpack.c.b16 %v4842, %v4834
      %v4939 = vpack.c.b16 %v4843, %v4835
      %v4940 = vpack.c.b16 %v4852, %v4844
      %v4941 = vpack.c.b16 %v4853, %v4845
      %v4942 = vpack.c.b16 %v4854, %v4846
      %v4943 = vpack.c.b16 %v4855, %v4847
      %v4944 = vpack.c.b16 %v4856, %v4848
      %v4945 = vpack.c.b16 %v4857, %v4849
      %v4946 = vpack.c.b16 %v4858, %v4850
      %v4947 = vpack.c.b16 %v4859, %v4851
      %v4948 = vpack.c.b16 %v4868, %v4860
      %v4949 = vpack.c.b16 %v4869, %v4861
      %v4950 = vpack.c.b16 %v4870, %v4862
      %v4951 = vpack.c.b16 %v4871, %v4863
      %v4952 = vpack.c.b16 %v4872, %v4864
      %v4953 = vpack.c.b16 %v4873, %v4865
      %v4954 = vpack.c.b16 %v4874, %v4866
      %v4955 = vpack.c.b16 %v4875, %v4867
      %v4956 = vpack.c.b16 %v4884, %v4876
      %v4957 = vpack.c.b16 %v4885, %v4877
      %v4958 = vpack.c.b16 %v4886, %v4878
      %v4959 = vpack.c.b16 %v4887, %v4879
      %v4960 = vpack.c.b16 %v4888, %v4880
      %v4961 = vpack.c.b16 %v4889, %v4881
      %v4962 = vpack.c.b16 %v4890, %v4882
      %v4963 = vpack.c.b16 %v4891, %v4883
      %v4964 = vpack.c.b16 %v4900, %v4892
      %v4965 = vpack.c.b16 %v4901, %v4893
      %v4966 = vpack.c.b16 %v4902, %v4894
      %v4967 = vpack.c.b16 %v4903, %v4895
      %v4968 = vpack.c.b16 %v4904, %v4896
      %v4969 = vpack.c.b16 %v4905, %v4897
      %v4970 = vpack.c.b16 %v4906, %v4898
      %v4971 = vpack.c.b16 %v4907, %v4899
      %5036 = vmatprep.subr.bf16.mxu0 %v4909
      %5037 = vmatpush1.bf16.msra.mxu0 %v4908
      %5038 = vmatprep.subr.bf16.mxu0 %v4917
      %5039 = vmatpush1.bf16.msra.mxu0 %v4916
      %5040 = vmatprep.subr.bf16.mxu0 %v4925
      %5041 = vmatpush1.bf16.msra.mxu0 %v4924
      %5042 = vmatprep.subr.bf16.mxu0 %v4933
      %5043 = vmatpush1.bf16.msra.mxu0 %v4932
      %5044 = vmatprep.subr.bf16.mxu0 %v4941
      %5045 = vmatpush1.bf16.msra.mxu0 %v4940
      %5046 = vmatprep.subr.bf16.mxu0 %v4949
      %5047 = vmatpush1.bf16.msra.mxu0 %v4948
      %5048 = vmatprep.subr.bf16.mxu0 %v4957
      %5049 = vmatpush1.bf16.msra.mxu0 %v4956
      %5050 = vmatprep.subr.bf16.mxu0 %v4965
      %5051 = vmatpush1.bf16.msra.mxu0 %v4964
      %5052 = vmatprep.subr.bf16.mxu0 0
      %5053 = vmatpush1.bf16.msra.mxu0 0
      %5054 = vmatprep.subr.bf16.mxu0 0
      %5055 = vmatpush1.bf16.msra.mxu0 0
      %5056 = vmatprep.subr.bf16.mxu0 0
      %5057 = vmatpush1.bf16.msra.mxu0 0
      %5058 = vmatprep.subr.bf16.mxu0 0
      %5059 = vmatpush1.bf16.msra.mxu0 0
      %5060 = vmatprep.subr.bf16.mxu0 0
      %5061 = vmatpush1.bf16.msra.mxu0 0
      %5062 = vmatprep.subr.bf16.mxu0 0
      %5063 = vmatpush1.bf16.msra.mxu0 0
      %5064 = vmatprep.subr.bf16.mxu0 0
      %5065 = vmatpush1.bf16.msra.mxu0 0
      %5066 = vmatprep.subr.bf16.mxu0 0
      %5067 = vmatpush1.bf16.msra.mxu0 0
      %5068 = vmatprep.mubr.bf16.mxu0 0
      %5069 = vmatmul.mubr.bf16.gmra.mrb[0].mxu0 %v4604
      %v5070 = vpop.f32.mrb[0].mxu0
      %v5071 = vadd.f32 %v4687, %v5070
      %v5072 = vpop.f32.mrb[0].mxu0
      %v5073 = vadd.f32 %v4691, %v5072
      %v5074 = vpop.f32.mrb[0].mxu0
      %v5075 = vadd.f32 %v4687, %v5074
      %v5076 = vpop.f32.mrb[0].mxu0
      %v5077 = vadd.f32 %v4691, %v5076
      %5078 = vmatprep.mubr.bf16.mxu0 0
      %5079 = vmatmul.mubr.bf16.gmra.mrb[0].mxu0 %v4605
      %v5080 = vpop.f32.mrb[0].mxu0
      %v5081 = vadd.f32 %v4687, %v5080
      %v5082 = vpop.f32.mrb[0].mxu0
      %v5083 = vadd.f32 %v4691, %v5082
      %v5084 = vpop.f32.mrb[0].mxu0
      %v5085 = vadd.f32 %v4687, %v5084
      %v5086 = vpop.f32.mrb[0].mxu0
      %v5087 = vadd.f32 %v4691, %v5086
      %5088 = vmatprep.mubr.bf16.mxu0 0
      %5089 = vmatmul.mubr.bf16.gmra.mrb[0].mxu0 %v4606
      %v5090 = vpop.f32.mrb[0].mxu0
      %v5091 = vadd.f32 %v4687, %v5090
      %v5092 = vpop.f32.mrb[0].mxu0
      %v5093 = vadd.f32 %v4691, %v5092
      %v5094 = vpop.f32.mrb[0].mxu0
      %v5095 = vadd.f32 %v4687, %v5094
      %v5096 = vpop.f32.mrb[0].mxu0
      %v5097 = vadd.f32 %v4691, %v5096
      %5098 = vmatprep.mubr.bf16.mxu0 0
      %5099 = vmatmul.mubr.bf16.gmra.mrb[0].mxu0 %v4607
      %v5100 = vpop.f32.mrb[0].mxu0
      %v5101 = vadd.f32 %v4687, %v5100
      %v5102 = vpop.f32.mrb[0].mxu0
      %v5103 = vadd.f32 %v4691, %v5102
      %v5104 = vpop.f32.mrb[0].mxu0
      %v5105 = vadd.f32 %v4687, %v5104
      %v5106 = vpop.f32.mrb[0].mxu0
      %v5107 = vadd.f32 %v4691, %v5106
      %5108 = vdwg.mxu0
      %5109 = vmatprep.subr.bf16.mxu0 %v4911
      %5110 = vmatpush1.bf16.msra.mxu0 %v4910
      %5111 = vmatprep.subr.bf16.mxu0 %v4919
      %5112 = vmatpush1.bf16.msra.mxu0 %v4918
      %5113 = vmatprep.subr.bf16.mxu0 %v4927
      %5114 = vmatpush1.bf16.msra.mxu0 %v4926
      %5115 = vmatprep.subr.bf16.mxu0 %v4935
      %5116 = vmatpush1.bf16.msra.mxu0 %v4934
      %5117 = vmatprep.subr.bf16.mxu0 %v4943
      %5118 = vmatpush1.bf16.msra.mxu0 %v4942
      %5119 = vmatprep.subr.bf16.mxu0 %v4951
      %5120 = vmatpush1.bf16.msra.mxu0 %v4950
      %5121 = vmatprep.subr.bf16.mxu0 %v4959
      %5122 = vmatpush1.bf16.msra.mxu0 %v4958
      %5123 = vmatprep.subr.bf16.mxu0 %v4967
      %5124 = vmatpush1.bf16.msra.mxu0 %v4966
      %5125 = vmatprep.subr.bf16.mxu0 0
      %5126 = vmatpush1.bf16.msra.mxu0 0
      %5127 = vmatprep.subr.bf16.mxu0 0
      %5128 = vmatpush1.bf16.msra.mxu0 0
      %5129 = vmatprep.subr.bf16.mxu0 0
      %5130 = vmatpush1.bf16.msra.mxu0 0
      %5131 = vmatprep.subr.bf16.mxu0 0
      %5132 = vmatpush1.bf16.msra.mxu0 0
      %5133 = vmatprep.subr.bf16.mxu0 0
      %5134 = vmatpush1.bf16.msra.mxu0 0
      %5135 = vmatprep.subr.bf16.mxu0 0
      %5136 = vmatpush1.bf16.msra.mxu0 0
      %5137 = vmatprep.subr.bf16.mxu0 0
      %5138 = vmatpush1.bf16.msra.mxu0 0
      %5139 = vmatprep.subr.bf16.mxu0 0
      %5140 = vmatpush1.bf16.msra.mxu0 0
      %5141 = vmatprep.mubr.bf16.mxu0 0
      %5142 = vmatmul.mubr.bf16.gmra.mrb[0].mxu0 %v4604
      %v5143 = vpop.f32.mrb[0].mxu0
      %v5144 = vadd.f32 %v4695, %v5143
      %v5145 = vpop.f32.mrb[0].mxu0
      %v5146 = vadd.f32 %v4699, %v5145
      %v5147 = vpop.f32.mrb[0].mxu0
      %v5148 = vadd.f32 %v4695, %v5147
      %v5149 = vpop.f32.mrb[0].mxu0
      %v5150 = vadd.f32 %v4699, %v5149
      %5151 = vmatprep.mubr.bf16.mxu0 0
      %5152 = vmatmul.mubr.bf16.gmra.mrb[0].mxu0 %v4605
      %v5153 = vpop.f32.mrb[0].mxu0
      %v5154 = vadd.f32 %v4695, %v5153
      %v5155 = vpop.f32.mrb[0].mxu0
      %v5156 = vadd.f32 %v4699, %v5155
      %v5157 = vpop.f32.mrb[0].mxu0
      %v5158 = vadd.f32 %v4695, %v5157
      %v5159 = vpop.f32.mrb[0].mxu0
      %v5160 = vadd.f32 %v4699, %v5159
      %5161 = vmatprep.mubr.bf16.mxu0 0
      %5162 = vmatmul.mubr.bf16.gmra.mrb[0].mxu0 %v4606
      %v5163 = vpop.f32.mrb[0].mxu0
      %v5164 = vadd.f32 %v4695, %v5163
      %v5165 = vpop.f32.mrb[0].mxu0
      %v5166 = vadd.f32 %v4699, %v5165
      %v5167 = vpop.f32.mrb[0].mxu0
      %v5168 = vadd.f32 %v4695, %v5167
      %v5169 = vpop.f32.mrb[0].mxu0
      %v5170 = vadd.f32 %v4699, %v5169
      %5171 = vmatprep.mubr.bf16.mxu0 0
      %5172 = vmatmul.mubr.bf16.gmra.mrb[0].mxu0 %v4607
      %v5173 = vpop.f32.mrb[0].mxu0
      %v5174 = vadd.f32 %v4695, %v5173
      %v5175 = vpop.f32.mrb[0].mxu0
      %v5176 = vadd.f32 %v4699, %v5175
      %v5177 = vpop.f32.mrb[0].mxu0
      %v5178 = vadd.f32 %v4695, %v5177
      %v5179 = vpop.f32.mrb[0].mxu0
      %v5180 = vadd.f32 %v4699, %v5179
      %5181 = vdwg.mxu0
      %5182 = vmatprep.subr.bf16.mxu0 %v4913
      %5183 = vmatpush1.bf16.msra.mxu0 %v4912
      %5184 = vmatprep.subr.bf16.mxu0 %v4921
      %5185 = vmatpush1.bf16.msra.mxu0 %v4920
      %5186 = vmatprep.subr.bf16.mxu0 %v4929
      %5187 = vmatpush1.bf16.msra.mxu0 %v4928
      %5188 = vmatprep.subr.bf16.mxu0 %v4937
      %5189 = vmatpush1.bf16.msra.mxu0 %v4936
      %5190 = vmatprep.subr.bf16.mxu0 %v4945
      %5191 = vmatpush1.bf16.msra.mxu0 %v4944
      %5192 = vmatprep.subr.bf16.mxu0 %v4953
      %5193 = vmatpush1.bf16.msra.mxu0 %v4952
      %5194 = vmatprep.subr.bf16.mxu0 %v4961
      %5195 = vmatpush1.bf16.msra.mxu0 %v4960
      %5196 = vmatprep.subr.bf16.mxu0 %v4969
      %5197 = vmatpush1.bf16.msra.mxu0 %v4968
      %5198 = vmatprep.subr.bf16.mxu0 0
      %5199 = vmatpush1.bf16.msra.mxu0 0
      %5200 = vmatprep.subr.bf16.mxu0 0
      %5201 = vmatpush1.bf16.msra.mxu0 0
      %5202 = vmatprep.subr.bf16.mxu0 0
      %5203 = vmatpush1.bf16.msra.mxu0 0
      %5204 = vmatprep.subr.bf16.mxu0 0
      %5205 = vmatpush1.bf16.msra.mxu0 0
      %5206 = vmatprep.subr.bf16.mxu0 0
      %5207 = vmatpush1.bf16.msra.mxu0 0
      %5208 = vmatprep.subr.bf16.mxu0 0
      %5209 = vmatpush1.bf16.msra.mxu0 0
      %5210 = vmatprep.subr.bf16.mxu0 0
      %5211 = vmatpush1.bf16.msra.mxu0 0
      %5212 = vmatprep.subr.bf16.mxu0 0
      %5213 = vmatpush1.bf16.msra.mxu0 0
      %5214 = vmatprep.mubr.bf16.mxu0 0
      %5215 = vmatmul.mubr.bf16.gmra.mrb[0].mxu0 %v4604
      %v5216 = vpop.f32.mrb[0].mxu0
      %v5217 = vadd.f32 %v4703, %v5216
      %v5218 = vpop.f32.mrb[0].mxu0
      %v5219 = vadd.f32 %v4707, %v5218
      %v5220 = vpop.f32.mrb[0].mxu0
      %v5221 = vadd.f32 %v4703, %v5220
      %v5222 = vpop.f32.mrb[0].mxu0
      %v5223 = vadd.f32 %v4707, %v5222
      %5224 = vmatprep.mubr.bf16.mxu0 0
      %5225 = vmatmul.mubr.bf16.gmra.mrb[0].mxu0 %v4605
      %v5226 = vpop.f32.mrb[0].mxu0
      %v5227 = vadd.f32 %v4703, %v5226
      %v5228 = vpop.f32.mrb[0].mxu0
      %v5229 = vadd.f32 %v4707, %v5228
      %v5230 = vpop.f32.mrb[0].mxu0
      %v5231 = vadd.f32 %v4703, %v5230
      %v5232 = vpop.f32.mrb[0].mxu0
      %v5233 = vadd.f32 %v4707, %v5232
      %5234 = vmatprep.mubr.bf16.mxu0 0
      %5235 = vmatmul.mubr.bf16.gmra.mrb[0].mxu0 %v4606
      %v5236 = vpop.f32.mrb[0].mxu0
      %v5237 = vadd.f32 %v4703, %v5236
      %v5238 = vpop.f32.mrb[0].mxu0
      %v5239 = vadd.f32 %v4707, %v5238
      %v5240 = vpop.f32.mrb[0].mxu0
      %v5241 = vadd.f32 %v4703, %v5240
      %v5242 = vpop.f32.mrb[0].mxu0
      %v5243 = vadd.f32 %v4707, %v5242
      %5244 = vmatprep.mubr.bf16.mxu0 0
      %5245 = vmatmul.mubr.bf16.gmra.mrb[0].mxu0 %v4607
      %v5246 = vpop.f32.mrb[0].mxu0
      %v5247 = vadd.f32 %v4703, %v5246
      %v5248 = vpop.f32.mrb[0].mxu0
      %v5249 = vadd.f32 %v4707, %v5248
      %v5250 = vpop.f32.mrb[0].mxu0
      %v5251 = vadd.f32 %v4703, %v5250
      %v5252 = vpop.f32.mrb[0].mxu0
      %v5253 = vadd.f32 %v4707, %v5252
      %5254 = vdwg.mxu0
      %5255 = vmatprep.subr.bf16.mxu0 %v4915
      %5256 = vmatpush1.bf16.msra.mxu0 %v4914
      %5257 = vmatprep.subr.bf16.mxu0 %v4923
      %5258 = vmatpush1.bf16.msra.mxu0 %v4922
      %5259 = vmatprep.subr.bf16.mxu0 %v4931
      %5260 = vmatpush1.bf16.msra.mxu0 %v4930
      %5261 = vmatprep.subr.bf16.mxu0 %v4939
      %5262 = vmatpush1.bf16.msra.mxu0 %v4938
      %5263 = vmatprep.subr.bf16.mxu0 %v4947
      %5264 = vmatpush1.bf16.msra.mxu0 %v4946
      %5265 = vmatprep.subr.bf16.mxu0 %v4955
      %5266 = vmatpush1.bf16.msra.mxu0 %v4954
      %5267 = vmatprep.subr.bf16.mxu0 %v4963
      %5268 = vmatpush1.bf16.msra.mxu0 %v4962
      %5269 = vmatprep.subr.bf16.mxu0 %v4971
      %5270 = vmatpush1.bf16.msra.mxu0 %v4970
      %5271 = vmatprep.subr.bf16.mxu0 0
      %5272 = vmatpush1.bf16.msra.mxu0 0
      %5273 = vmatprep.subr.bf16.mxu0 0
      %5274 = vmatpush1.bf16.msra.mxu0 0
      %5275 = vmatprep.subr.bf16.mxu0 0
      %5276 = vmatpush1.bf16.msra.mxu0 0
      %5277 = vmatprep.subr.bf16.mxu0 0
      %5278 = vmatpush1.bf16.msra.mxu0 0
      %5279 = vmatprep.subr.bf16.mxu0 0
      %5280 = vmatpush1.bf16.msra.mxu0 0
      %5281 = vmatprep.subr.bf16.mxu0 0
      %5282 = vmatpush1.bf16.msra.mxu0 0
      %5283 = vmatprep.subr.bf16.mxu0 0
      %5284 = vmatpush1.bf16.msra.mxu0 0
      %5285 = vmatprep.subr.bf16.mxu0 0
      %5286 = vmatpush1.bf16.msra.mxu0 0
      %5287 = vmatprep.mubr.bf16.mxu0 0
      %5288 = vmatmul.mubr.bf16.gmra.mrb[0].mxu0 %v4604
      %v5289 = vpop.f32.mrb[0].mxu0
      %v5290 = vadd.f32 %v4711, %v5289
      %v5291 = vpop.f32.mrb[0].mxu0
      %v5292 = vadd.f32 %v4715, %v5291
      %v5293 = vpop.f32.mrb[0].mxu0
      %v5294 = vadd.f32 %v4711, %v5293
      %v5295 = vpop.f32.mrb[0].mxu0
      %v5296 = vadd.f32 %v4715, %v5295
      %5297 = vmatprep.mubr.bf16.mxu0 0
      %5298 = vmatmul.mubr.bf16.gmra.mrb[0].mxu0 %v4605
      %v5299 = vpop.f32.mrb[0].mxu0
      %v5300 = vadd.f32 %v4711, %v5299
      %v5301 = vpop.f32.mrb[0].mxu0
      %v5302 = vadd.f32 %v4715, %v5301
      %v5303 = vpop.f32.mrb[0].mxu0
      %v5304 = vadd.f32 %v4711, %v5303
      %v5305 = vpop.f32.mrb[0].mxu0
      %v5306 = vadd.f32 %v4715, %v5305
      %5307 = vmatprep.mubr.bf16.mxu0 0
      %5308 = vmatmul.mubr.bf16.gmra.mrb[0].mxu0 %v4606
      %v5309 = vpop.f32.mrb[0].mxu0
      %v5310 = vadd.f32 %v4711, %v5309
      %v5311 = vpop.f32.mrb[0].mxu0
      %v5312 = vadd.f32 %v4715, %v5311
      %v5313 = vpop.f32.mrb[0].mxu0
      %v5314 = vadd.f32 %v4711, %v5313
      %v5315 = vpop.f32.mrb[0].mxu0
      %v5316 = vadd.f32 %v4715, %v5315
      %5317 = vmatprep.mubr.bf16.mxu0 0
      %5318 = vmatmul.mubr.bf16.gmra.mrb[0].mxu0 %v4607
      %v5319 = vpop.f32.mrb[0].mxu0
      %v5320 = vadd.f32 %v4711, %v5319
      %v5321 = vpop.f32.mrb[0].mxu0
      %v5322 = vadd.f32 %v4715, %v5321
      %v5323 = vpop.f32.mrb[0].mxu0
      %v5324 = vadd.f32 %v4711, %v5323
      %v5325 = vpop.f32.mrb[0].mxu0
      %v5326 = vadd.f32 %v4715, %v5325
      %5327 = vdwg.mxu0
      %v5328 = vsel %vm1055, %v2192, -inf
      %v5329 = vsel %vm1055, %v2193, -inf
      %v5330 = vsel %vm1055, %v2194, -inf
      %v5331 = vsel %vm1055, %v2195, -inf
      %v5332 = vsel %vm1055, %v2196, -inf
      %v5333 = vmax.f32 %v5328, %v5332
      %v5334 = vsel %vm1055, %v2197, -inf
      %v5335 = vmax.f32 %v5329, %v5334
      %v5336 = vsel %vm1055, %v2198, -inf
      %v5337 = vmax.f32 %v5330, %v5336
      %v5338 = vsel %vm1055, %v2199, -inf
      %v5339 = vmax.f32 %v5331, %v5338
      %v5340 = vmax.f32 %v5333, %v5335
      %v5341 = vmax.f32 %v5337, %v5339
      %v5342 = vmax.f32 %v5340, %v5341
      %v5343 = vrot.slane %v5342, 4
      %v5344 = vmax.f32 %v5342, %v5343
      %v5345 = vrot.slane %v5344, 2
      %v5346 = vmax.f32 %v5344, %v5345
      %v5347 = vrot.slane %v5346, 1
      %v5348 = vmax.f32 %v5346, %v5347
      %v5349 = vmax.f32 %v5071, %v5075
      %v5350 = vmax.f32 %v5349, %v5081
      %v5351 = vmax.f32 %v5350, %v5085
      %v5352 = vmax.f32 %v5351, %v5091
      %v5353 = vmax.f32 %v5352, %v5095
      %v5354 = vmax.f32 %v5353, %v5101
      %v5355 = vmax.f32 %v5354, %v5105
      %v5356 = vrot.slane %v5355, 4
      %v5357 = vmax.f32 %v5355, %v5356
      %v5358 = vrot.slane %v5357, 2
      %v5359 = vmax.f32 %v5357, %v5358
      %v5360 = vrot.slane %v5359, 1
      %v5361 = vmax.f32 %v5359, %v5360
      %v5362 = vmax.f32 %v5073, %v5077
      %v5363 = vmax.f32 %v5362, %v5083
      %v5364 = vmax.f32 %v5363, %v5087
      %v5365 = vmax.f32 %v5364, %v5093
      %v5366 = vmax.f32 %v5365, %v5097
      %v5367 = vmax.f32 %v5366, %v5103
      %v5368 = vmax.f32 %v5367, %v5107
      %v5369 = vrot.slane %v5368, 4
      %v5370 = vmax.f32 %v5368, %v5369
      %v5371 = vrot.slane %v5370, 2
      %v5372 = vmax.f32 %v5370, %v5371
      %v5373 = vrot.slane %v5372, 1
      %v5374 = vmax.f32 %v5372, %v5373
      %v5375 = vmax.f32 %v5144, %v5148
      %v5376 = vmax.f32 %v5375, %v5154
      %v5377 = vmax.f32 %v5376, %v5158
      %v5378 = vmax.f32 %v5377, %v5164
      %v5379 = vmax.f32 %v5378, %v5168
      %v5380 = vmax.f32 %v5379, %v5174
      %v5381 = vmax.f32 %v5380, %v5178
      %v5382 = vrot.slane %v5381, 4
      %v5383 = vmax.f32 %v5381, %v5382
      %v5384 = vrot.slane %v5383, 2
      %v5385 = vmax.f32 %v5383, %v5384
      %v5386 = vrot.slane %v5385, 1
      %v5387 = vmax.f32 %v5385, %v5386
      %v5388 = vmax.f32 %v5146, %v5150
      %v5389 = vmax.f32 %v5388, %v5156
      %v5390 = vmax.f32 %v5389, %v5160
      %v5391 = vmax.f32 %v5390, %v5166
      %v5392 = vmax.f32 %v5391, %v5170
      %v5393 = vmax.f32 %v5392, %v5176
      %v5394 = vmax.f32 %v5393, %v5180
      %v5395 = vrot.slane %v5394, 4
      %v5396 = vmax.f32 %v5394, %v5395
      %v5397 = vrot.slane %v5396, 2
      %v5398 = vmax.f32 %v5396, %v5397
      %v5399 = vrot.slane %v5398, 1
      %v5400 = vmax.f32 %v5398, %v5399
      %v5401 = vmax.f32 %v5217, %v5221
      %v5402 = vmax.f32 %v5401, %v5227
      %v5403 = vmax.f32 %v5402, %v5231
      %v5404 = vmax.f32 %v5403, %v5237
      %v5405 = vmax.f32 %v5404, %v5241
      %v5406 = vmax.f32 %v5405, %v5247
      %v5407 = vmax.f32 %v5406, %v5251
      %v5408 = vrot.slane %v5407, 4
      %v5409 = vmax.f32 %v5407, %v5408
      %v5410 = vrot.slane %v5409, 2
      %v5411 = vmax.f32 %v5409, %v5410
      %v5412 = vrot.slane %v5411, 1
      %v5413 = vmax.f32 %v5411, %v5412
      %v5414 = vmax.f32 %v5219, %v5223
      %v5415 = vmax.f32 %v5414, %v5229
      %v5416 = vmax.f32 %v5415, %v5233
      %v5417 = vmax.f32 %v5416, %v5239
      %v5418 = vmax.f32 %v5417, %v5243
      %v5419 = vmax.f32 %v5418, %v5249
      %v5420 = vmax.f32 %v5419, %v5253
      %v5421 = vrot.slane %v5420, 4
      %v5422 = vmax.f32 %v5420, %v5421
      %v5423 = vrot.slane %v5422, 2
      %v5424 = vmax.f32 %v5422, %v5423
      %v5425 = vrot.slane %v5424, 1
      %v5426 = vmax.f32 %v5424, %v5425
      %v5427 = vmax.f32 %v5290, %v5294
      %v5428 = vmax.f32 %v5427, %v5300
      %v5429 = vmax.f32 %v5428, %v5304
      %v5430 = vmax.f32 %v5429, %v5310
      %v5431 = vmax.f32 %v5430, %v5314
      %v5432 = vmax.f32 %v5431, %v5320
      %v5433 = vmax.f32 %v5432, %v5324
      %v5434 = vrot.slane %v5433, 4
      %v5435 = vmax.f32 %v5433, %v5434
      %v5436 = vrot.slane %v5435, 2
      %v5437 = vmax.f32 %v5435, %v5436
      %v5438 = vrot.slane %v5437, 1
      %v5439 = vmax.f32 %v5437, %v5438
      %v5440 = vmax.f32 %v5292, %v5296
      %v5441 = vmax.f32 %v5440, %v5302
      %v5442 = vmax.f32 %v5441, %v5306
      %v5443 = vmax.f32 %v5442, %v5312
      %v5444 = vmax.f32 %v5443, %v5316
      %v5445 = vmax.f32 %v5444, %v5322
      %v5446 = vmax.f32 %v5445, %v5326
      %v5447 = vrot.slane %v5446, 4
      %v5448 = vmax.f32 %v5446, %v5447
      %v5449 = vrot.slane %v5448, 2
      %v5450 = vmax.f32 %v5448, %v5449
      %v5451 = vrot.slane %v5450, 1
      %v5452 = vmax.f32 %v5450, %v5451
      %v5453 = vld [vmem:[%s5] sm:$0xff]
      %v5454 = vld [vmem:[%s5 + $0x8] sm:$0xff]
      %v5455 = vld [vmem:[%s5 + $0x10] sm:$0xff]
      %v5456 = vld [vmem:[%s5 + $0x18] sm:$0xff]
      %v5457 = vld [vmem:[%s5 + $0x20] sm:$0xff]
      %v5458 = vld [vmem:[%s5 + $0x28] sm:$0xff]
      %v5459 = vld [vmem:[%s5 + $0x30] sm:$0xff]
      %v5460 = vld [vmem:[%s5 + $0x38] sm:$0xff]
      %v5461 = vld [vmem:[%s5 + $0x40] sm:$0xff]
      %v5462 = vld [vmem:[%s5 + $0x48] sm:$0xff]
      %v5463 = vld [vmem:[%s5 + $0x50] sm:$0xff]
      %v5464 = vld [vmem:[%s5 + $0x58] sm:$0xff]
      %v5465 = vld [vmem:[%s5 + $0x60] sm:$0xff]
      %v5466 = vld [vmem:[%s5 + $0x68] sm:$0xff]
      %v5467 = vld [vmem:[%s5 + $0x70] sm:$0xff]
      %v5468 = vld [vmem:[%s5 + $0x78] sm:$0xff]
      %v5469 = vld [vmem:[%s5 + $0x80] sm:$0xff]
      %v5470 = vld [vmem:[%s5 + $0x88] sm:$0xff]
      %v5471 = vld [vmem:[%s5 + $0x90] sm:$0xff]
      %v5472 = vld [vmem:[%s5 + $0x98] sm:$0xff]
      %v5473 = vld [vmem:[%s5 + $0xa0] sm:$0xff]
      %v5474 = vld [vmem:[%s5 + $0xa8] sm:$0xff]
      %v5475 = vld [vmem:[%s5 + $0xb0] sm:$0xff]
      %v5476 = vld [vmem:[%s5 + $0xb8] sm:$0xff]
      %v5477 = vld [vmem:[%s5 + $0xc0] sm:$0xff]
      %v5478 = vld [vmem:[%s5 + $0xc8] sm:$0xff]
      %v5479 = vld [vmem:[%s5 + $0xd0] sm:$0xff]
      %v5480 = vld [vmem:[%s5 + $0xd8] sm:$0xff]
      %v5481 = vld [vmem:[%s5 + $0xe0] sm:$0xff]
      %v5482 = vld [vmem:[%s5 + $0xe8] sm:$0xff]
      %v5483 = vld [vmem:[%s5 + $0xf0] sm:$0xff]
      %v5484 = vld [vmem:[%s5 + $0xf8] sm:$0xff]
      %v5485 = vld [vmem:[%s5 + $0x100] sm:$0xff]
      %v5486 = vld [vmem:[%s5 + $0x108] sm:$0xff]
      %v5487 = vld [vmem:[%s5 + $0x110] sm:$0xff]
      %v5488 = vld [vmem:[%s5 + $0x118] sm:$0xff]
      %v5489 = vld [vmem:[%s5 + $0x120] sm:$0xff]
      %v5490 = vld [vmem:[%s5 + $0x128] sm:$0xff]
      %v5491 = vld [vmem:[%s5 + $0x130] sm:$0xff]
      %v5492 = vld [vmem:[%s5 + $0x138] sm:$0xff]
      %v5493 = vld [vmem:[%s5 + $0x140] sm:$0xff]
      %v5494 = vld [vmem:[%s5 + $0x148] sm:$0xff]
      %v5495 = vld [vmem:[%s5 + $0x150] sm:$0xff]
      %v5496 = vld [vmem:[%s5 + $0x158] sm:$0xff]
      %v5497 = vld [vmem:[%s5 + $0x160] sm:$0xff]
      %v5498 = vld [vmem:[%s5 + $0x168] sm:$0xff]
      %v5499 = vld [vmem:[%s5 + $0x170] sm:$0xff]
      %v5500 = vld [vmem:[%s5 + $0x178] sm:$0xff]
      %v5501 = vld [vmem:[%s5 + $0x180] sm:$0xff]
      %v5502 = vld [vmem:[%s5 + $0x188] sm:$0xff]
      %v5503 = vld [vmem:[%s5 + $0x190] sm:$0xff]
      %v5504 = vld [vmem:[%s5 + $0x198] sm:$0xff]
      %v5505 = vld [vmem:[%s5 + $0x1a0] sm:$0xff]
      %v5506 = vld [vmem:[%s5 + $0x1a8] sm:$0xff]
      %v5507 = vld [vmem:[%s5 + $0x1b0] sm:$0xff]
      %v5508 = vld [vmem:[%s5 + $0x1b8] sm:$0xff]
      %v5509 = vld [vmem:[%s5 + $0x1c0] sm:$0xff]
      %v5510 = vld [vmem:[%s5 + $0x1c8] sm:$0xff]
      %v5511 = vld [vmem:[%s5 + $0x1d0] sm:$0xff]
      %v5512 = vld [vmem:[%s5 + $0x1d8] sm:$0xff]
      %v5513 = vld [vmem:[%s5 + $0x1e0] sm:$0xff]
      %v5514 = vld [vmem:[%s5 + $0x1e8] sm:$0xff]
      %v5515 = vld [vmem:[%s5 + $0x1f0] sm:$0xff]
      %v5516 = vld [vmem:[%s5 + $0x1f8] sm:$0xff]
      %v5517 = vld [vmem:[%s5 + $0x200] sm:$0xff]
      %v5518 = vld [vmem:[%s5 + $0x208] sm:$0xff]
      %v5519 = vld [vmem:[%s5 + $0x210] sm:$0xff]
      %v5520 = vld [vmem:[%s5 + $0x218] sm:$0xff]
      %v5521 = vld [vmem:[%s5 + $0x220] sm:$0xff]
      %v5522 = vld [vmem:[%s5 + $0x228] sm:$0xff]
      %v5523 = vld [vmem:[%s5 + $0x230] sm:$0xff]
      %v5524 = vld [vmem:[%s5 + $0x238] sm:$0xff]
      %v5525 = vld [vmem:[%s5 + $0x240] sm:$0xff]
      %v5526 = vld [vmem:[%s5 + $0x248] sm:$0xff]
      %v5527 = vld [vmem:[%s5 + $0x250] sm:$0xff]
      %v5528 = vld [vmem:[%s5 + $0x258] sm:$0xff]
      %v5529 = vld [vmem:[%s5 + $0x260] sm:$0xff]
      %v5530 = vld [vmem:[%s5 + $0x268] sm:$0xff]
      %v5531 = vld [vmem:[%s5 + $0x270] sm:$0xff]
      %v5532 = vld [vmem:[%s5 + $0x278] sm:$0xff]
      %v5533 = vld [vmem:[%s5 + $0x280] sm:$0xff]
      %v5534 = vld [vmem:[%s5 + $0x288] sm:$0xff]
      %v5535 = vld [vmem:[%s5 + $0x290] sm:$0xff]
      %v5536 = vld [vmem:[%s5 + $0x298] sm:$0xff]
      %v5537 = vld [vmem:[%s5 + $0x2a0] sm:$0xff]
      %v5538 = vld [vmem:[%s5 + $0x2a8] sm:$0xff]
      %v5539 = vld [vmem:[%s5 + $0x2b0] sm:$0xff]
      %v5540 = vld [vmem:[%s5 + $0x2b8] sm:$0xff]
      %v5541 = vld [vmem:[%s5 + $0x2c0] sm:$0xff]
      %v5542 = vld [vmem:[%s5 + $0x2c8] sm:$0xff]
      %v5543 = vld [vmem:[%s5 + $0x2d0] sm:$0xff]
      %v5544 = vld [vmem:[%s5 + $0x2d8] sm:$0xff]
      %v5545 = vld [vmem:[%s5 + $0x2e0] sm:$0xff]
      %v5546 = vld [vmem:[%s5 + $0x2e8] sm:$0xff]
      %v5547 = vld [vmem:[%s5 + $0x2f0] sm:$0xff]
      %v5548 = vld [vmem:[%s5 + $0x2f8] sm:$0xff]
      %v5549 = vld [vmem:[%s5 + $0x300] sm:$0xff]
      %v5550 = vld [vmem:[%s5 + $0x308] sm:$0xff]
      %v5551 = vld [vmem:[%s5 + $0x310] sm:$0xff]
      %v5552 = vld [vmem:[%s5 + $0x318] sm:$0xff]
      %v5553 = vld [vmem:[%s5 + $0x320] sm:$0xff]
      %v5554 = vld [vmem:[%s5 + $0x328] sm:$0xff]
      %v5555 = vld [vmem:[%s5 + $0x330] sm:$0xff]
      %v5556 = vld [vmem:[%s5 + $0x338] sm:$0xff]
      %v5557 = vld [vmem:[%s5 + $0x340] sm:$0xff]
      %v5558 = vld [vmem:[%s5 + $0x348] sm:$0xff]
      %v5559 = vld [vmem:[%s5 + $0x350] sm:$0xff]
      %v5560 = vld [vmem:[%s5 + $0x358] sm:$0xff]
      %v5561 = vld [vmem:[%s5 + $0x360] sm:$0xff]
      %v5562 = vld [vmem:[%s5 + $0x368] sm:$0xff]
      %v5563 = vld [vmem:[%s5 + $0x370] sm:$0xff]
      %v5564 = vld [vmem:[%s5 + $0x378] sm:$0xff]
      %v5565 = vld [vmem:[%s5 + $0x380] sm:$0xff]
      %v5566 = vld [vmem:[%s5 + $0x388] sm:$0xff]
      %v5567 = vld [vmem:[%s5 + $0x390] sm:$0xff]
      %v5568 = vld [vmem:[%s5 + $0x398] sm:$0xff]
      %v5569 = vld [vmem:[%s5 + $0x3a0] sm:$0xff]
      %v5570 = vld [vmem:[%s5 + $0x3a8] sm:$0xff]
      %v5571 = vld [vmem:[%s5 + $0x3b0] sm:$0xff]
      %v5572 = vld [vmem:[%s5 + $0x3b8] sm:$0xff]
      %v5573 = vld [vmem:[%s5 + $0x3c0] sm:$0xff]
      %v5574 = vld [vmem:[%s5 + $0x3c8] sm:$0xff]
      %v5575 = vld [vmem:[%s5 + $0x3d0] sm:$0xff]
      %v5576 = vld [vmem:[%s5 + $0x3d8] sm:$0xff]
      %v5577 = vld [vmem:[%s5 + $0x3e0] sm:$0xff]
      %v5578 = vld [vmem:[%s5 + $0x3e8] sm:$0xff]
      %v5579 = vld [vmem:[%s5 + $0x3f0] sm:$0xff]
      %v5580 = vld [vmem:[%s5 + $0x3f8] sm:$0xff]
      %v5581 = vld [vmem:[%s5 + $0x400] sm:$0xff]
      %v5582 = vld [vmem:[%s5 + $0x408] sm:$0xff]
      %v5583 = vld [vmem:[%s5 + $0x410] sm:$0xff]
      %v5584 = vld [vmem:[%s5 + $0x418] sm:$0xff]
      %v5585 = vld [vmem:[%s5 + $0x420] sm:$0xff]
      %v5586 = vld [vmem:[%s5 + $0x428] sm:$0xff]
      %v5587 = vld [vmem:[%s5 + $0x430] sm:$0xff]
      %v5588 = vld [vmem:[%s5 + $0x438] sm:$0xff]
      %5589 = vmatprep.subr.mxu0 0.0
      %5590 = vmatpush1.msra.mxu0 %v5461
      %5591 = vmatprep.subr.mxu0 0.0
      %5592 = vmatpush1.msra.mxu0 %v5462
      %5593 = vmatprep.subr.mxu0 0.0
      %5594 = vmatpush1.msra.mxu0 %v5463
      %5595 = vmatprep.subr.mxu0 0.0
      %5596 = vmatpush1.msra.mxu0 %v5464
      %5597 = vmatprep.subr.mxu0 0.0
      %5598 = vmatpush1.msra.mxu0 %v5465
      %5599 = vmatprep.subr.mxu0 0.0
      %5600 = vmatpush1.msra.mxu0 %v5466
      %5601 = vmatprep.subr.mxu0 0.0
      %5602 = vmatpush1.msra.mxu0 %v5467
      %5603 = vmatprep.subr.mxu0 0.0
      %5604 = vmatpush1.msra.mxu0 %v5468
      %5605 = vmatprep.subr.mxu0 0.0
      %5606 = vmatpush1.msra.mxu0 %v5469
      %5607 = vmatprep.subr.mxu0 0.0
      %5608 = vmatpush1.msra.mxu0 %v5470
      %5609 = vmatprep.subr.mxu0 0.0
      %5610 = vmatpush1.msra.mxu0 %v5471
      %5611 = vmatprep.subr.mxu0 0.0
      %5612 = vmatpush1.msra.mxu0 %v5472
      %5613 = vmatprep.subr.mxu0 0.0
      %5614 = vmatpush1.msra.mxu0 %v5473
      %5615 = vmatprep.subr.mxu0 0.0
      %5616 = vmatpush1.msra.mxu0 %v5474
      %5617 = vmatprep.subr.mxu0 0.0
      %5618 = vmatpush1.msra.mxu0 %v5475
      %5619 = vmatprep.subr.mxu0 0.0
      %5620 = vmatpush1.msra.mxu0 %v5476
      %5621 = vmatprep.subr.mxu0 0.0
      %5622 = vmatpush1.msra.mxu0 %v5477
      %5623 = vmatprep.subr.mxu0 0.0
      %5624 = vmatpush1.msra.mxu0 %v5478
      %5625 = vmatprep.subr.mxu0 0.0
      %5626 = vmatpush1.msra.mxu0 %v5479
      %5627 = vmatprep.subr.mxu0 0.0
      %5628 = vmatpush1.msra.mxu0 %v5480
      %5629 = vmatprep.subr.mxu0 0.0
      %5630 = vmatpush1.msra.mxu0 %v5481
      %5631 = vmatprep.subr.mxu0 0.0
      %5632 = vmatpush1.msra.mxu0 %v5482
      %5633 = vmatprep.subr.mxu0 0.0
      %5634 = vmatpush1.msra.mxu0 %v5483
      %5635 = vmatprep.subr.mxu0 0.0
      %5636 = vmatpush1.msra.mxu0 %v5484
      %5637 = vmatprep.subr.mxu0 0.0
      %5638 = vmatpush1.msra.mxu0 %v5485
      %5639 = vmatprep.subr.mxu0 0.0
      %5640 = vmatpush1.msra.mxu0 %v5486
      %5641 = vmatprep.subr.mxu0 0.0
      %5642 = vmatpush1.msra.mxu0 %v5487
      %5643 = vmatprep.subr.mxu0 0.0
      %5644 = vmatpush1.msra.mxu0 %v5488
      %5645 = vmatprep.subr.mxu0 0.0
      %5646 = vmatpush1.msra.mxu0 %v5489
      %5647 = vmatprep.subr.mxu0 0.0
      %5648 = vmatpush1.msra.mxu0 %v5490
      %5649 = vmatprep.subr.mxu0 0.0
      %5650 = vmatpush1.msra.mxu0 %v5491
      %5651 = vmatprep.subr.mxu0 0.0
      %5652 = vmatpush1.msra.mxu0 %v5492
      %5653 = vmatprep.mubr.f32.mxu0 %v5374
      %5654 = vmatmul.mubr.f32.gmra.mrb[0].mxu0 %v5361
      %v5655 = vpop.f32.mrb[0].mxu0
      %v5656 = vadd.f32 0.0, %v5655
      %v5657 = vpop.f32.mrb[0].mxu0
      %5658 = vdwg.mxu0
      %5659 = vmatprep.subr.mxu0 0.0
      %5660 = vmatpush1.msra.mxu0 %v5493
      %5661 = vmatprep.subr.mxu0 0.0
      %5662 = vmatpush1.msra.mxu0 %v5494
      %5663 = vmatprep.subr.mxu0 0.0
      %5664 = vmatpush1.msra.mxu0 %v5495
      %5665 = vmatprep.subr.mxu0 0.0
      %5666 = vmatpush1.msra.mxu0 %v5496
      %5667 = vmatprep.subr.mxu0 0.0
      %5668 = vmatpush1.msra.mxu0 %v5497
      %5669 = vmatprep.subr.mxu0 0.0
      %5670 = vmatpush1.msra.mxu0 %v5498
      %5671 = vmatprep.subr.mxu0 0.0
      %5672 = vmatpush1.msra.mxu0 %v5499
      %5673 = vmatprep.subr.mxu0 0.0
      %5674 = vmatpush1.msra.mxu0 %v5500
      %5675 = vmatprep.subr.mxu0 0.0
      %5676 = vmatpush1.msra.mxu0 %v5501
      %5677 = vmatprep.subr.mxu0 0.0
      %5678 = vmatpush1.msra.mxu0 %v5502
      %5679 = vmatprep.subr.mxu0 0.0
      %5680 = vmatpush1.msra.mxu0 %v5503
      %5681 = vmatprep.subr.mxu0 0.0
      %5682 = vmatpush1.msra.mxu0 %v5504
      %5683 = vmatprep.subr.mxu0 0.0
      %5684 = vmatpush1.msra.mxu0 %v5505
      %5685 = vmatprep.subr.mxu0 0.0
      %5686 = vmatpush1.msra.mxu0 %v5506
      %5687 = vmatprep.subr.mxu0 0.0
      %5688 = vmatpush1.msra.mxu0 %v5507
      %5689 = vmatprep.subr.mxu0 0.0
      %5690 = vmatpush1.msra.mxu0 %v5508
      %5691 = vmatprep.subr.mxu0 0.0
      %5692 = vmatpush1.msra.mxu0 %v5509
      %5693 = vmatprep.subr.mxu0 0.0
      %5694 = vmatpush1.msra.mxu0 %v5510
      %5695 = vmatprep.subr.mxu0 0.0
      %5696 = vmatpush1.msra.mxu0 %v5511
      %5697 = vmatprep.subr.mxu0 0.0
      %5698 = vmatpush1.msra.mxu0 %v5512
      %5699 = vmatprep.subr.mxu0 0.0
      %5700 = vmatpush1.msra.mxu0 %v5513
      %5701 = vmatprep.subr.mxu0 0.0
      %5702 = vmatpush1.msra.mxu0 %v5514
      %5703 = vmatprep.subr.mxu0 0.0
      %5704 = vmatpush1.msra.mxu0 %v5515
      %5705 = vmatprep.subr.mxu0 0.0
      %5706 = vmatpush1.msra.mxu0 %v5516
      %5707 = vmatprep.subr.mxu0 0.0
      %5708 = vmatpush1.msra.mxu0 %v5517
      %5709 = vmatprep.subr.mxu0 0.0
      %5710 = vmatpush1.msra.mxu0 %v5518
      %5711 = vmatprep.subr.mxu0 0.0
      %5712 = vmatpush1.msra.mxu0 %v5519
      %5713 = vmatprep.subr.mxu0 0.0
      %5714 = vmatpush1.msra.mxu0 %v5520
      %5715 = vmatprep.subr.mxu0 0.0
      %5716 = vmatpush1.msra.mxu0 %v5521
      %5717 = vmatprep.subr.mxu0 0.0
      %5718 = vmatpush1.msra.mxu0 %v5522
      %5719 = vmatprep.subr.mxu0 0.0
      %5720 = vmatpush1.msra.mxu0 %v5523
      %5721 = vmatprep.subr.mxu0 0.0
      %5722 = vmatpush1.msra.mxu0 %v5524
      %5723 = vmatprep.mubr.f32.mxu0 %v5400
      %5724 = vmatmul.mubr.f32.gmra.mrb[0].mxu0 %v5387
      %v5725 = vpop.f32.mrb[0].mxu0
      %v5726 = vadd.f32 %v5656, %v5725
      %v5727 = vpop.f32.mrb[0].mxu0
      %5728 = vdwg.mxu0
      %5729 = vmatprep.subr.mxu0 0.0
      %5730 = vmatpush1.msra.mxu0 %v5525
      %5731 = vmatprep.subr.mxu0 0.0
      %5732 = vmatpush1.msra.mxu0 %v5526
      %5733 = vmatprep.subr.mxu0 0.0
      %5734 = vmatpush1.msra.mxu0 %v5527
      %5735 = vmatprep.subr.mxu0 0.0
      %5736 = vmatpush1.msra.mxu0 %v5528
      %5737 = vmatprep.subr.mxu0 0.0
      %5738 = vmatpush1.msra.mxu0 %v5529
      %5739 = vmatprep.subr.mxu0 0.0
      %5740 = vmatpush1.msra.mxu0 %v5530
      %5741 = vmatprep.subr.mxu0 0.0
      %5742 = vmatpush1.msra.mxu0 %v5531
      %5743 = vmatprep.subr.mxu0 0.0
      %5744 = vmatpush1.msra.mxu0 %v5532
      %5745 = vmatprep.subr.mxu0 0.0
      %5746 = vmatpush1.msra.mxu0 %v5533
      %5747 = vmatprep.subr.mxu0 0.0
      %5748 = vmatpush1.msra.mxu0 %v5534
      %5749 = vmatprep.subr.mxu0 0.0
      %5750 = vmatpush1.msra.mxu0 %v5535
      %5751 = vmatprep.subr.mxu0 0.0
      %5752 = vmatpush1.msra.mxu0 %v5536
      %5753 = vmatprep.subr.mxu0 0.0
      %5754 = vmatpush1.msra.mxu0 %v5537
      %5755 = vmatprep.subr.mxu0 0.0
      %5756 = vmatpush1.msra.mxu0 %v5538
      %5757 = vmatprep.subr.mxu0 0.0
      %5758 = vmatpush1.msra.mxu0 %v5539
      %5759 = vmatprep.subr.mxu0 0.0
      %5760 = vmatpush1.msra.mxu0 %v5540
      %5761 = vmatprep.subr.mxu0 0.0
      %5762 = vmatpush1.msra.mxu0 %v5541
      %5763 = vmatprep.subr.mxu0 0.0
      %5764 = vmatpush1.msra.mxu0 %v5542
      %5765 = vmatprep.subr.mxu0 0.0
      %5766 = vmatpush1.msra.mxu0 %v5543
      %5767 = vmatprep.subr.mxu0 0.0
      %5768 = vmatpush1.msra.mxu0 %v5544
      %5769 = vmatprep.subr.mxu0 0.0
      %5770 = vmatpush1.msra.mxu0 %v5545
      %5771 = vmatprep.subr.mxu0 0.0
      %5772 = vmatpush1.msra.mxu0 %v5546
      %5773 = vmatprep.subr.mxu0 0.0
      %5774 = vmatpush1.msra.mxu0 %v5547
      %5775 = vmatprep.subr.mxu0 0.0
      %5776 = vmatpush1.msra.mxu0 %v5548
      %5777 = vmatprep.subr.mxu0 0.0
      %5778 = vmatpush1.msra.mxu0 %v5549
      %5779 = vmatprep.subr.mxu0 0.0
      %5780 = vmatpush1.msra.mxu0 %v5550
      %5781 = vmatprep.subr.mxu0 0.0
      %5782 = vmatpush1.msra.mxu0 %v5551
      %5783 = vmatprep.subr.mxu0 0.0
      %5784 = vmatpush1.msra.mxu0 %v5552
      %5785 = vmatprep.subr.mxu0 0.0
      %5786 = vmatpush1.msra.mxu0 %v5553
      %5787 = vmatprep.subr.mxu0 0.0
      %5788 = vmatpush1.msra.mxu0 %v5554
      %5789 = vmatprep.subr.mxu0 0.0
      %5790 = vmatpush1.msra.mxu0 %v5555
      %5791 = vmatprep.subr.mxu0 0.0
      %5792 = vmatpush1.msra.mxu0 %v5556
      %5793 = vmatprep.mubr.f32.mxu0 %v5426
      %5794 = vmatmul.mubr.f32.gmra.mrb[0].mxu0 %v5413
      %v5795 = vpop.f32.mrb[0].mxu0
      %v5796 = vadd.f32 %v5726, %v5795
      %v5797 = vpop.f32.mrb[0].mxu0
      %5798 = vdwg.mxu0
      %5799 = vmatprep.subr.mxu0 0.0
      %5800 = vmatpush1.msra.mxu0 %v5557
      %5801 = vmatprep.subr.mxu0 0.0
      %5802 = vmatpush1.msra.mxu0 %v5558
      %5803 = vmatprep.subr.mxu0 0.0
      %5804 = vmatpush1.msra.mxu0 %v5559
      %5805 = vmatprep.subr.mxu0 0.0
      %5806 = vmatpush1.msra.mxu0 %v5560
      %5807 = vmatprep.subr.mxu0 0.0
      %5808 = vmatpush1.msra.mxu0 %v5561
      %5809 = vmatprep.subr.mxu0 0.0
      %5810 = vmatpush1.msra.mxu0 %v5562
      %5811 = vmatprep.subr.mxu0 0.0
      %5812 = vmatpush1.msra.mxu0 %v5563
      %5813 = vmatprep.subr.mxu0 0.0
      %5814 = vmatpush1.msra.mxu0 %v5564
      %5815 = vmatprep.subr.mxu0 0.0
      %5816 = vmatpush1.msra.mxu0 %v5565
      %5817 = vmatprep.subr.mxu0 0.0
      %5818 = vmatpush1.msra.mxu0 %v5566
      %5819 = vmatprep.subr.mxu0 0.0
      %5820 = vmatpush1.msra.mxu0 %v5567
      %5821 = vmatprep.subr.mxu0 0.0
      %5822 = vmatpush1.msra.mxu0 %v5568
      %5823 = vmatprep.subr.mxu0 0.0
      %5824 = vmatpush1.msra.mxu0 %v5569
      %5825 = vmatprep.subr.mxu0 0.0
      %5826 = vmatpush1.msra.mxu0 %v5570
      %5827 = vmatprep.subr.mxu0 0.0
      %5828 = vmatpush1.msra.mxu0 %v5571
      %5829 = vmatprep.subr.mxu0 0.0
      %5830 = vmatpush1.msra.mxu0 %v5572
      %5831 = vmatprep.subr.mxu0 0.0
      %5832 = vmatpush1.msra.mxu0 %v5573
      %5833 = vmatprep.subr.mxu0 0.0
      %5834 = vmatpush1.msra.mxu0 %v5574
      %5835 = vmatprep.subr.mxu0 0.0
      %5836 = vmatpush1.msra.mxu0 %v5575
      %5837 = vmatprep.subr.mxu0 0.0
      %5838 = vmatpush1.msra.mxu0 %v5576
      %5839 = vmatprep.subr.mxu0 0.0
      %5840 = vmatpush1.msra.mxu0 %v5577
      %5841 = vmatprep.subr.mxu0 0.0
      %5842 = vmatpush1.msra.mxu0 %v5578
      %5843 = vmatprep.subr.mxu0 0.0
      %5844 = vmatpush1.msra.mxu0 %v5579
      %5845 = vmatprep.subr.mxu0 0.0
      %5846 = vmatpush1.msra.mxu0 %v5580
      %5847 = vmatprep.subr.mxu0 0.0
      %5848 = vmatpush1.msra.mxu0 %v5581
      %5849 = vmatprep.subr.mxu0 0.0
      %5850 = vmatpush1.msra.mxu0 %v5582
      %5851 = vmatprep.subr.mxu0 0.0
      %5852 = vmatpush1.msra.mxu0 %v5583
      %5853 = vmatprep.subr.mxu0 0.0
      %5854 = vmatpush1.msra.mxu0 %v5584
      %5855 = vmatprep.subr.mxu0 0.0
      %5856 = vmatpush1.msra.mxu0 %v5585
      %5857 = vmatprep.subr.mxu0 0.0
      %5858 = vmatpush1.msra.mxu0 %v5586
      %5859 = vmatprep.subr.mxu0 0.0
      %5860 = vmatpush1.msra.mxu0 %v5587
      %5861 = vmatprep.subr.mxu0 0.0
      %5862 = vmatpush1.msra.mxu0 %v5588
      %5863 = vmatprep.mubr.f32.mxu0 %v5452
      %5864 = vmatmul.mubr.f32.gmra.mrb[0].mxu0 %v5439
      %v5865 = vpop.f32.mrb[0].mxu0
      %v5866 = vadd.f32 %v5796, %v5865
      %v5867 = vpop.f32.mrb[0].mxu0
      %5868 = vdwg.mxu0
      %v5870 = vsel %vm1055, %v5348, 0
      %5872 = vmatprep.subr.mxu0 0.0
      %5873 = vmatpush1.msra.mxu0 %v5453
      %5874 = vmatprep.subr.mxu0 0.0
      %5875 = vmatpush1.msra.mxu0 %v5454
      %5876 = vmatprep.subr.mxu0 0.0
      %5877 = vmatpush1.msra.mxu0 %v5455
      %5878 = vmatprep.subr.mxu0 0.0
      %5879 = vmatpush1.msra.mxu0 %v5456
      %5880 = vmatprep.subr.mxu0 0.0
      %5881 = vmatpush1.msra.mxu0 %v5457
      %5882 = vmatprep.subr.mxu0 0.0
      %5883 = vmatpush1.msra.mxu0 %v5458
      %5884 = vmatprep.subr.mxu0 0.0
      %5885 = vmatpush1.msra.mxu0 %v5459
      %5886 = vmatprep.subr.mxu0 0.0
      %5887 = vmatpush1.msra.mxu0 %v5460
      %5888 = vmatprep.subr.mxu0 0.0
      %5889 = vmatpush1.msra.mxu0 0.0
      %5890 = vmatprep.subr.mxu0 0.0
      %5891 = vmatpush1.msra.mxu0 0.0
      %5892 = vmatprep.subr.mxu0 0.0
      %5893 = vmatpush1.msra.mxu0 0.0
      %5894 = vmatprep.subr.mxu0 0.0
      %5895 = vmatpush1.msra.mxu0 0.0
      %5896 = vmatprep.subr.mxu0 0.0
      %5897 = vmatpush1.msra.mxu0 0.0
      %5898 = vmatprep.subr.mxu0 0.0
      %5899 = vmatpush1.msra.mxu0 0.0
      %5900 = vmatprep.subr.mxu0 0.0
      %5901 = vmatpush1.msra.mxu0 0.0
      %5902 = vmatprep.subr.mxu0 0.0
      %5903 = vmatpush1.msra.mxu0 0.0
      %5904 = vmatprep.subr.mxu0 0.0
      %5905 = vmatpush1.msra.mxu0 0.0
      %5906 = vmatprep.subr.mxu0 0.0
      %5907 = vmatpush1.msra.mxu0 0.0
      %5908 = vmatprep.subr.mxu0 0.0
      %5909 = vmatpush1.msra.mxu0 0.0
      %5910 = vmatprep.subr.mxu0 0.0
      %5911 = vmatpush1.msra.mxu0 0.0
      %5912 = vmatprep.subr.mxu0 0.0
      %5913 = vmatpush1.msra.mxu0 0.0
      %5914 = vmatprep.subr.mxu0 0.0
      %5915 = vmatpush1.msra.mxu0 0.0
      %5916 = vmatprep.subr.mxu0 0.0
      %5917 = vmatpush1.msra.mxu0 0.0
      %5918 = vmatprep.subr.mxu0 0.0
      %5919 = vmatpush1.msra.mxu0 0.0
      %5920 = vmatprep.subr.mxu0 0.0
      %5921 = vmatpush1.msra.mxu0 0.0
      %5922 = vmatprep.subr.mxu0 0.0
      %5923 = vmatpush1.msra.mxu0 0.0
      %5924 = vmatprep.subr.mxu0 0.0
      %5925 = vmatpush1.msra.mxu0 0.0
      %5926 = vmatprep.subr.mxu0 0.0
      %5927 = vmatpush1.msra.mxu0 0.0
      %5928 = vmatprep.subr.mxu0 0.0
      %5929 = vmatpush1.msra.mxu0 0.0
      %5930 = vmatprep.subr.mxu0 0.0
      %5931 = vmatpush1.msra.mxu0 0.0
      %5932 = vmatprep.subr.mxu0 0.0
      %5933 = vmatpush1.msra.mxu0 0.0
      %5934 = vmatprep.subr.mxu0 0.0
      %5935 = vmatpush1.msra.mxu0 0.0
      %5936 = vmatprep.mubr.f32.mxu0 0.0
      %5937 = vmatmul.mubr.f32.gmra.mrb[0].mxu0 %v5870
      %v5938 = vpop.f32.mrb[0].mxu0
      %v5939 = vadd.f32 %v5866, %v5938
      %v5940 = vpop.f32.mrb[0].mxu0
      %5941 = vdwg.mxu0
      %v5942 = vld [vmem:[%s5 + $0x460] sm:$0x1]
      %v5943 = vadd.f32 %v5939, %v5942
      %v5944 = vmax.f32 %v5943, 0.0
      %v5945 = vld [vmem:[%s5 + $0x440] sm:$0xff]
      %v5946 = vld [vmem:[%s5 + $0x448] sm:$0xff]
      %v5947 = vld [vmem:[%s5 + $0x450] sm:$0xff]
      %v5948 = vld [vmem:[%s5 + $0x458] sm:$0xff]
      %v5949 = vld [vmem:[%s5 + $0x461] sm:$0x1]
      %vm5950 = vcmask 261120
      %v5952 = vsel %vm5950, %v5944, 0
      %5954 = vmatprep.subr.mxu0 0.0
      %5955 = vmatpush1.msra.mxu0 %v5945
      %5956 = vmatprep.subr.mxu0 0.0
      %5957 = vmatpush1.msra.mxu0 %v5946
      %5958 = vmatprep.subr.mxu0 0.0
      %5959 = vmatpush1.msra.mxu0 %v5947
      %5960 = vmatprep.subr.mxu0 0.0
      %5961 = vmatpush1.msra.mxu0 %v5948
      %5962 = vmatprep.subr.mxu0 0.0
      %5963 = vmatpush1.msra.mxu0 0.0
      %5964 = vmatprep.subr.mxu0 0.0
      %5965 = vmatpush1.msra.mxu0 0.0
      %5966 = vmatprep.subr.mxu0 0.0
      %5967 = vmatpush1.msra.mxu0 0.0
      %5968 = vmatprep.subr.mxu0 0.0
      %5969 = vmatpush1.msra.mxu0 0.0
      %5970 = vmatprep.subr.mxu0 0.0
      %5971 = vmatpush1.msra.mxu0 0.0
      %5972 = vmatprep.subr.mxu0 0.0
      %5973 = vmatpush1.msra.mxu0 0.0
      %5974 = vmatprep.subr.mxu0 0.0
      %5975 = vmatpush1.msra.mxu0 0.0
      %5976 = vmatprep.subr.mxu0 0.0
      %5977 = vmatpush1.msra.mxu0 0.0
      %5978 = vmatprep.subr.mxu0 0.0
      %5979 = vmatpush1.msra.mxu0 0.0
      %5980 = vmatprep.subr.mxu0 0.0
      %5981 = vmatpush1.msra.mxu0 0.0
      %5982 = vmatprep.subr.mxu0 0.0
      %5983 = vmatpush1.msra.mxu0 0.0
      %5984 = vmatprep.subr.mxu0 0.0
      %5985 = vmatpush1.msra.mxu0 0.0
      %5986 = vmatprep.subr.mxu0 0.0
      %5987 = vmatpush1.msra.mxu0 0.0
      %5988 = vmatprep.subr.mxu0 0.0
      %5989 = vmatpush1.msra.mxu0 0.0
      %5990 = vmatprep.subr.mxu0 0.0
      %5991 = vmatpush1.msra.mxu0 0.0
      %5992 = vmatprep.subr.mxu0 0.0
      %5993 = vmatpush1.msra.mxu0 0.0
      %5994 = vmatprep.subr.mxu0 0.0
      %5995 = vmatpush1.msra.mxu0 0.0
      %5996 = vmatprep.subr.mxu0 0.0
      %5997 = vmatpush1.msra.mxu0 0.0
      %5998 = vmatprep.subr.mxu0 0.0
      %5999 = vmatpush1.msra.mxu0 0.0
      %6000 = vmatprep.subr.mxu0 0.0
      %6001 = vmatpush1.msra.mxu0 0.0
      %6002 = vmatprep.subr.mxu0 0.0
      %6003 = vmatpush1.msra.mxu0 0.0
      %6004 = vmatprep.subr.mxu0 0.0
      %6005 = vmatpush1.msra.mxu0 0.0
      %6006 = vmatprep.subr.mxu0 0.0
      %6007 = vmatpush1.msra.mxu0 0.0
      %6008 = vmatprep.subr.mxu0 0.0
      %6009 = vmatpush1.msra.mxu0 0.0
      %6010 = vmatprep.subr.mxu0 0.0
      %6011 = vmatpush1.msra.mxu0 0.0
      %6012 = vmatprep.subr.mxu0 0.0
      %6013 = vmatpush1.msra.mxu0 0.0
      %6014 = vmatprep.subr.mxu0 0.0
      %6015 = vmatpush1.msra.mxu0 0.0
      %6016 = vmatprep.subr.mxu0 0.0
      %6017 = vmatpush1.msra.mxu0 0.0
      %6018 = vmatprep.mubr.f32.mxu0 0.0
      %6019 = vmatmul.mubr.f32.gmra.mrb[0].mxu0 %v5952
      %v6020 = vpop.f32.mrb[0].mxu0
      %v6021 = vadd.f32 %v5949, %v6020
      %v6022 = vpop.f32.mrb[0].mxu0
      %6023 = vdwg.mxu0
      %vm6024 = vcmask 253952
      %6025 = vst.msk [vmem:[%s267] sm:$0x1] %vm6024, %v6021
      %p6026 = scmp.lt.s32.totalorder %s17, 1
      %s6027 = scalar_select %p6026, %s17, 1
      %s6028 = scalar_lea.vmem %s6, %s6027
      // Predicated region
      $region45: #{skip_foldingnet_forward.2} parent=43 // pred_check
        %p6029 = pneg %p171
      $region46: #{skip_foldingnet_forward.2} parent=43 // pred_check_branch
        %6031 = sbr.rel (%p6029) target = $region48
      $region47: #{skip_foldingnet_forward.2} parent=43 // pred_region
        _
      $region48: #{skip_foldingnet_forward.2} parent=43 // pred_fallthru
        _
    $region44: #{skip_foldingnet_forward.2} parent=5 // pred_fallthru
      _
    %p6032 = scmp.le.s32.totalorder 2, %s12
    // Predicated region
    $region49: #{skip_foldingnet_forward.2} parent=5 // pred_check
      %p6033 = pneg %p6032
    $region50: #{skip_foldingnet_forward.2} parent=5 // pred_check_branch
      %6035 = sbr.rel (%p6033) target = $region52
    $region51: #{skip_foldingnet_forward.2} parent=5 // pred_region
      %s6036 = ssub.s32 %s12, 2
      // Predicated region
      $region53: #{skip_foldingnet_forward.2} parent=51 // pred_check
        %p6037 = pneg %p177
      $region54: #{skip_foldingnet_forward.2} parent=51 // pred_check_branch
        %6039 = sbr.rel (%p6037) target = $region56
      $region55: #{skip_foldingnet_forward.2} parent=51 // pred_region
        %p6040 = scmp.lt.s32.totalorder %s18, 1
        %s6041 = scalar_select %p6040, %s18, 1
        %s6042 = scalar_lea.vmem %s6, %s6041
      $region56: #{skip_foldingnet_forward.2} parent=51 // pred_fallthru
        _
    $region52: #{skip_foldingnet_forward.2} parent=5 // pred_fallthru
      _
  $region6: #{skip_foldingnet_forward.2} parent=0 // loop_footer
    %s16 = sadd.s32 1, %s12
  $region7: #{skip_foldingnet_forward.2} parent=0 // loop_footer_branch
    %11 = sbr.rel target = $region3
  $region8: #{skip_foldingnet_forward.2} parent=0 // loop_exit
    _

</llo_original>
